<compile_context>
chip_gen: v6e
topology: v6e:2x2x1
jax: 0.10.0
libtpu: 0.0.40
codegen_flags: <defaults>
</compile_context>

<pallas_src>
import functools
import numpy as np
import jax
import jax.numpy as jnp
from jax.experimental import pallas as pl
from jax.experimental.pallas import tpu as pltpu


# --------------------------- in-kernel helpers ---------------------------

def _attn_core(x, wqkv, bqkv, wop, bop, num_heads):
    """LayerNorm (affine folded into wqkv/bqkv host-side) -> MHSA with the
    reference's multiplicative diagonal-zeroing mask -> folded
    out_proj∘output_proj -> + residual (pre-norm input).
    1/sqrt(head_dim) is pre-folded into the Q columns of wqkv/bqkv."""
    m, hdim = x.shape
    hd = hdim // num_heads

    # LayerNorm (eps=1e-5, biased variance); gamma/beta folded into wqkv/bqkv.
    mu = jnp.mean(x, axis=-1, keepdims=True)
    var = jnp.mean(jnp.square(x - mu), axis=-1, keepdims=True)
    xn = (x - mu) * jax.lax.rsqrt(var + 1e-5)

    # Fused Q|K|V projection: one MXU push with 3H output lanes.
    qkv = jnp.dot(xn, wqkv, preferred_element_type=jnp.float32) + bqkv
    q = qkv[:, 0 * hdim:1 * hdim]
    k = qkv[:, 1 * hdim:2 * hdim]
    v = qkv[:, 2 * hdim:3 * hdim]

    # ones.triu(1) + ones.tril(-1): zero the DIAGONAL scores (not -inf).
    row = jax.lax.broadcasted_iota(jnp.int32, (m, m), 0)
    col = jax.lax.broadcasted_iota(jnp.int32, (m, m), 1)
    offdiag = (row != col).astype(jnp.float32)

    # Static head loop; per-head out_proj accumulation instead of a lane
    # concatenate (avoids an XLU relayout; the MXU is otherwise idle here).
    acc = jnp.zeros((m, hdim), jnp.float32)
    for h_i in range(num_heads):
        qh = q[:, h_i * hd:(h_i + 1) * hd]
        kh = k[:, h_i * hd:(h_i + 1) * hd]
        vh = v[:, h_i * hd:(h_i + 1) * hd]
        s = jax.lax.dot_general(qh, kh, (((1,), (1,)), ((), ())),
                                preferred_element_type=jnp.float32)
        s = s * offdiag
        s = s - jnp.max(s, axis=-1, keepdims=True)
        p = jnp.exp(s)
        p = p / jnp.sum(p, axis=-1, keepdims=True)   # exact softmax denominator
        # TODO(synk): attention dropout (p=0.1) is identity in eval mode.
        ctx_h = jnp.dot(p, vh, preferred_element_type=jnp.float32)
        acc = acc + jnp.dot(ctx_h, wop[h_i * hd:(h_i + 1) * hd, :],
                            preferred_element_type=jnp.float32)
    return acc + bop + x


def _hhgf_kernel(x_ref, subf_ref, blkmask_ref,
                 rw1_ref, rb1_ref, rw2_ref, rb2_ref,
                 rwqkv_ref, rbqkv_ref, rwop_ref, rbop_ref,
                 sw1w_ref, sb1w_ref, sw2s_ref, sb2_ref,
                 swqkv_ref, sbqkv_ref, swop_ref, sbop_ref,
                 cw1_ref, cb1_ref, cw2_ref, cb2_ref,
                 o_ref, *, num_heads):
    """Full HHGraphFormer forward for `bp` samples (one grid step):
    region embedding + region attention block + subnet embeddings + subnet
    attention block + fused classifier.  Only the logits leave VMEM."""
    M, H = rw1_ref.shape
    S = sb2_ref.shape[0]
    bp = o_ref.shape[0]

    # ---- Region MLP, all bp samples stacked as (bp*M, M) sublanes.
    #      conv(1x1)+channel-mean+residual folded into rw1/rb1 host-side. ----
    h = jnp.dot(x_ref[...], rw1_ref[...], preferred_element_type=jnp.float32) + rb1_ref[...]
    h = jnp.maximum(h, 0.0)
    xreg_all = jnp.dot(h, rw2_ref[...], preferred_element_type=jnp.float32) + rb2_ref[...]

    for b in range(bp):
        # -------- region attention block --------
        x_reg = xreg_all[b * M:(b + 1) * M, :]
        region_out = _attn_core(x_reg, rwqkv_ref[...], rbqkv_ref[...],
                                rwop_ref[...], rbop_ref[...], num_heads)

        # ---- all subnet MLPs: two lane-dense matmuls + 0/1 block mask ----
        # (S,RR)@(RR,S*H) -> +bias -> ReLU -> zero off-block cols -> @(S*H,H)
        sub_b = subf_ref[b]                                    # (S, RR)
        hs = jnp.dot(sub_b, sw1w_ref[...],
                     preferred_element_type=jnp.float32) + sb1w_ref[...]
        hs = jnp.maximum(hs, 0.0) * blkmask_ref[...]
        x_sub = jnp.dot(hs, sw2s_ref[...],
                        preferred_element_type=jnp.float32) + sb2_ref[...]
        subnet_out = _attn_core(x_sub, swqkv_ref[...], sbqkv_ref[...],
                                swop_ref[...], sbop_ref[...], num_heads)

        # -------- fused classifier (Linear -> ReLU -> Linear) --------
        # flatten(concat(region_out, subnet_out)) @ W1
        #   == sum_t combined[t] @ W1[t*H:(t+1)*H]   (exact row-block split)
        h1 = cb1_ref[...]
        for t in range(M):
            h1 = h1 + jnp.dot(region_out[t:t + 1, :],
                              cw1_ref[t * H:(t + 1) * H, :],
                              preferred_element_type=jnp.float32)
        for s_i in range(S):
            h1 = h1 + jnp.dot(subnet_out[s_i:s_i + 1, :],
                              cw1_ref[(M + s_i) * H:(M + s_i + 1) * H, :],
                              preferred_element_type=jnp.float32)
        h1 = jnp.maximum(h1, 0.0)
        # TODO(synk): classifier Dropout(0.5) is identity in eval mode.
        logits = jnp.dot(h1, cw2_ref[...],
                         preferred_element_type=jnp.float32) + cb2_ref[...]
        o_ref[b] = logits


# --------------------------- host-side wrappers ---------------------------

def _tensorcores_per_chip():
    """2 on megacore parts (v4/v5p/v7x-class), 1 on v5e/v6e; safe fallback 1."""
    try:
        kind = jax.devices()[0].device_kind.lower()
    except Exception:
        return 1
    return 2 if any(t in kind for t in ("v7", "v4", "v5p")) else 1


def _block_mask(S, H):
    """(S, S*H) mask keeping only the diagonal (subnet-own) column block."""
    m = np.zeros((S, S * H), np.float32)
    for s in range(S):
        m[s, s * H:(s + 1) * H] = 1.0
    return jnp.asarray(m)


def hhgraphformer_fused(x_flat, subf, blkmask, fw, num_heads, grid_steps):
    _, M = x_flat.shape
    B, S, RR = subf.shape
    C = fw['cls_w2'].shape[1]
    bp = B // grid_steps

    weights = (fw['reg_w1'], fw['reg_b1'], fw['reg_w2'], fw['reg_b2'],
               fw['reg_wqkv'], fw['reg_bqkv'], fw['reg_wop'], fw['reg_bop'],
               fw['sub_w1w'], fw['sub_b1w'], fw['sub_w2s'], fw['sub_b2'],
               fw['sub_wqkv'], fw['sub_bqkv'], fw['sub_wop'], fw['sub_bop'],
               fw['cls_w1'], fw['cls_b1'], fw['cls_w2'], fw['cls_b2'])

    in_specs = [pl.BlockSpec((bp * M, M), lambda i: (i, 0)),
                pl.BlockSpec((bp, S, RR), lambda i: (i, 0, 0)),
                pl.BlockSpec(blkmask.shape, lambda i: (0, 0))]
    for w in weights:
        in_specs.append(pl.BlockSpec(w.shape, lambda i, nd=w.ndim: (0,) * nd))

    out = pl.pallas_call(
        functools.partial(_hhgf_kernel, num_heads=num_heads),
        out_shape=jax.ShapeDtypeStruct((B, 1, C), jnp.float32),
        grid=(grid_steps,),
        in_specs=in_specs,
        out_specs=pl.BlockSpec((bp, 1, C), lambda i: (i, 0, 0)),
        compiler_params=pltpu.CompilerParams(
            dimension_semantics=("parallel",)),
    )(x_flat, subf, blkmask, *weights)
    return out.reshape(B, C)


def hhgraphformer_forward(fw, x, roi_indices_list, num_heads):
    B, M, _ = x.shape
    RR = fw['sub_w1w'].shape[0]
    S = fw['sub_b2'].shape[0]
    H = fw['reg_w2'].shape[1]

    # Static ROI gather (host/XLA glue; equivalent of torch
    # unique(mask.nonzero()[:, 0]) + the subnet slicing/flatten).
    flats = []
    for idx in roi_indices_list:
        sub = x[:, idx][:, :, idx].reshape(B, -1)
        if sub.shape[1] < RR:                        # zero-pad to packed width
            sub = jnp.pad(sub, ((0, 0), (0, RR - sub.shape[1])))
        flats.append(sub)
    subf = jnp.stack(flats, axis=1)                  # (B, S, RR)

    # Generation-aware grid: single step on 1-TC chips (v5e/v6e); one
    # "parallel" step per TensorCore on megacore parts (v7x) so no core idles.
    ntc = _tensorcores_per_chip()
    grid_steps = ntc if (ntc > 1 and B % ntc == 0) else 1

    x_flat = x.reshape(B * M, M)                     # free contiguous reshape
    blkmask = _block_mask(S, H)
    return hhgraphformer_fused(x_flat, subf, blkmask, fw, num_heads, grid_steps)


# ---------------- parameter init (deterministic, synthetic) ----------------

def init_linear(key, din, dout):
    kw, kb = jax.random.split(key)
    w = jax.random.normal(kw, (din, dout), jnp.float32) * 0.1
    b = jax.random.normal(kb, (1, dout), jnp.float32) * 0.1
    return w, b


def init_attn(key, h):
    ks = jax.random.split(key, 5)
    p = {'lng': jnp.ones((1, h), jnp.float32),
         'lnb': jnp.zeros((1, h), jnp.float32)}
    p['wq'], p['bq'] = init_linear(ks[0], h, h)
    p['wk'], p['bk'] = init_linear(ks[1], h, h)
    p['wv'], p['bv'] = init_linear(ks[2], h, h)
    p['wo'], p['bo'] = init_linear(ks[3], h, h)      # MHSA.out_proj
    p['wp'], p['bp'] = init_linear(ks[4], h, h)      # block output_proj
    return p


def init_params(key, num_regions, num_subnets, region_per_subnet, hidden_dim, num_classes):
    keys = jax.random.split(key, 8 + 2 * num_subnets)
    p = {}
    # RegionConvolution: Conv2d(1, hidden_dim, 1) -> weight (hidden,), bias (hidden,)
    p['conv_w'] = jax.random.normal(keys[0], (hidden_dim,), jnp.float32) * 0.1
    p['conv_b'] = jax.random.normal(keys[1], (hidden_dim,), jnp.float32) * 0.1
    p['reg_w1'], p['reg_b1'] = init_linear(keys[2], num_regions, hidden_dim)
    p['reg_w2'], p['reg_b2'] = init_linear(keys[3], hidden_dim, hidden_dim)
    p['reg_attn'] = init_attn(keys[4], hidden_dim)
    p['sub_mlps'] = []
    for i, r in enumerate(region_per_subnet):
        w1, b1 = init_linear(keys[5 + 2 * i], r * r, hidden_dim)
        w2, b2 = init_linear(keys[6 + 2 * i], hidden_dim, hidden_dim)
        p['sub_mlps'].append((w1, b1, w2, b2))
    p['sub_attn'] = init_attn(keys[5 + 2 * num_subnets], hidden_dim)
    p['cls_w1'], p['cls_b1'] = init_linear(
        keys[6 + 2 * num_subnets], hidden_dim * (num_regions + num_subnets), hidden_dim)
    p['cls_w2'], p['cls_b2'] = init_linear(keys[7 + 2 * num_subnets], hidden_dim, num_classes)
    return p


# ---------------- host-side exact algebraic folds ----------------

def _fold_attn(a, num_heads):
    h = a['wq'].shape[0]
    inv_sqrt = 1.0 / ((h // num_heads) ** 0.5)
    # 1/sqrt(head_dim) folded into the Q columns (mask multiply & softmax commute).
    wqkv = jnp.concatenate([a['wq'] * inv_sqrt, a['wk'], a['wv']], axis=1)   # (H, 3H)
    bqkv = jnp.concatenate([a['bq'] * inv_sqrt, a['bk'], a['bv']], axis=1)   # (1, 3H)
    # (xhat*g + beta) @ W + b  ==  xhat @ (g[:,None]*W) + (beta @ W + b)
    wqkv_f = a['lng'].reshape(-1, 1) * wqkv
    bqkv_f = bqkv + jnp.dot(a['lnb'], wqkv)
    # out_proj followed by output_proj (no nonlinearity in between): one matmul
    wop = jnp.dot(a['wo'], a['wp'])
    bop = jnp.dot(a['bo'], a['wp']) + a['bp']
    return wqkv_f, bqkv_f, wop, bop


def fold_params(p, num_heads):
    fw = {}
    a = jnp.mean(p['conv_w'])
    b = jnp.mean(p['conv_b'])
    # conv(1x1)+channel-mean+residual: x2 = (1+a)*x + b, folded into region MLP L1.
    fw['reg_w1'] = (1.0 + a) * p['reg_w1']
    fw['reg_b1'] = p['reg_b1'] + b * jnp.sum(p['reg_w1'], axis=0, keepdims=True)
    fw['reg_w2'], fw['reg_b2'] = p['reg_w2'], p['reg_b2']
    (fw['reg_wqkv'], fw['reg_bqkv'],
     fw['reg_wop'], fw['reg_bop']) = _fold_attn(p['reg_attn'], num_heads)
    # Subnet MLPs packed lane-dense:
    #   W1_wide (RR, S*H) block-columns, b1_wide (1, S*H),
    #   W2_stacked (S*H, H) block-rows, b2 rows (S, H).
    rr_max = max(w1.shape[0] for (w1, _, _, _) in p['sub_mlps'])
    fw['sub_w1w'] = jnp.concatenate(
        [jnp.pad(w1, ((0, rr_max - w1.shape[0]), (0, 0)))
         for (w1, _, _, _) in p['sub_mlps']], axis=1)
    fw['sub_b1w'] = jnp.concatenate([b1 for (_, b1, _, _) in p['sub_mlps']], axis=1)
    fw['sub_w2s'] = jnp.concatenate([w2 for (_, _, w2, _) in p['sub_mlps']], axis=0)
    fw['sub_b2'] = jnp.concatenate([b2 for (_, _, _, b2) in p['sub_mlps']], axis=0)
    (fw['sub_wqkv'], fw['sub_bqkv'],
     fw['sub_wop'], fw['sub_bop']) = _fold_attn(p['sub_attn'], num_heads)
    fw['cls_w1'], fw['cls_b1'] = p['cls_w1'], p['cls_b1']
    fw['cls_w2'], fw['cls_b2'] = p['cls_w2'], p['cls_b2']
    return fw


# ---------------- pure-JAX reference (mirrors the PyTorch module) ----------------

def _ref_attn_block(x_in, a, num_heads):
    B, m, H = x_in.shape
    hd = H // num_heads
    mu = jnp.mean(x_in, axis=-1, keepdims=True)
    var = jnp.mean(jnp.square(x_in - mu), axis=-1, keepdims=True)
    xn = (x_in - mu) / jnp.sqrt(var + 1e-5) * a['lng'] + a['lnb']
    q = (xn @ a['wq'] + a['bq']).reshape(B, m, num_heads, hd).transpose(0, 2, 1, 3)
    k = (xn @ a['wk'] + a['bk']).reshape(B, m, num_heads, hd).transpose(0, 2, 1, 3)
    v = (xn @ a['wv'] + a['bv']).reshape(B, m, num_heads, hd).transpose(0, 2, 1, 3)
    scores = jnp.einsum('bhqd,bhkd->bhqk', q, k) / (hd ** 0.5)
    offdiag = 1.0 - jnp.eye(m, dtype=scores.dtype)
    scores = scores * offdiag[None, None]
    attn = jax.nn.softmax(scores, axis=-1)
    ctx = jnp.einsum('bhqk,bhkd->bhqd', attn, v)
    ctx = ctx.transpose(0, 2, 1, 3).reshape(B, m, H)
    out = (ctx @ a['wo'] + a['bo']) @ a['wp'] + a['bp']
    return out + x_in


def reference_forward(p, x, roi_indices_list, num_heads):
    B, M, _ = x.shape
    H = p['reg_w2'].shape[1]
    xc = x[:, None, :, :] * p['conv_w'][None, :, None, None] \
        + p['conv_b'][None, :, None, None]
    x2 = x + jnp.mean(xc, axis=1)
    hr = jax.nn.relu(x2.reshape(B * M, M) @ p['reg_w1'] + p['reg_b1'])
    x_reg = (hr @ p['reg_w2'] + p['reg_b2']).reshape(B, M, H)
    region_out = _ref_attn_block(x_reg, p['reg_attn'], num_heads)
    feats = []
    for i, idx in enumerate(roi_indices_list):
        sub = x[:, idx][:, :, idx].reshape(B, -1)     # original x, as in PyTorch
        w1, b1, w2, b2 = p['sub_mlps'][i]
        feats.append(jax.nn.relu(sub @ w1 + b1) @ w2 + b2)
    x_sub = jnp.stack(feats, axis=1)
    subnet_out = _ref_attn_block(x_sub, p['sub_attn'], num_heads)
    combined = jnp.concatenate([region_out.reshape(B, -1),
                                subnet_out.reshape(B, -1)], axis=1)
    h1 = jax.nn.relu(combined @ p['cls_w1'] + p['cls_b1'])
    return h1 @ p['cls_w2'] + p['cls_b2']


if __name__ == "__main__":
    B = 2
    num_regions = 16
    num_subnets = 4
    region_per_subnet = [4, 4, 4, 4]
    hidden_dim = 32
    num_heads = 4
    num_classes = 2

    key = jax.random.PRNGKey(0)
    kx, kp = jax.random.split(key)
    x = jax.random.normal(kx, (B, num_regions, num_regions), jnp.float32)

    # subnet masks (M, M): ones on the rows/cols of that subnet's regions
    roi_np = [np.arange(i * 4, (i + 1) * 4) for i in range(num_subnets)]
    subnet_masks = []
    for idx in roi_np:
        m = np.zeros((num_regions, num_regions), np.float32)
        m[np.ix_(idx, idx)] = 1.0
        subnet_masks.append(m)
    # static equivalent of torch: unique(mask.nonzero()[:, 0])  (host-side glue)
    roi_static = [jnp.asarray(np.unique(m.nonzero()[0]), jnp.int32)
                  for m in subnet_masks]

    raw_params = init_params(kp, num_regions, num_subnets, region_per_subnet,
                             hidden_dim, num_classes)
    fw = fold_params(raw_params, num_heads)

    fwd = jax.jit(hhgraphformer_forward, static_argnums=(3,))
    logits = fwd(fw, x, roi_static, num_heads)
    jax.block_until_ready(logits)

    # correctness check vs an op-for-op pure-JAX reference (accurate matmuls)
    with jax.default_matmul_precision("float32"):
        ref = reference_forward(raw_params, x, roi_static, num_heads)
        ref = jax.block_until_ready(ref)

    assert logits.shape == (B, num_classes)
    assert bool(jnp.all(jnp.isfinite(logits)))
    assert np.allclose(np.asarray(logits), np.asarray(ref), atol=2e-2, rtol=2e-2), (
        float(np.max(np.abs(np.asarray(logits) - np.asarray(ref)))))
    print("KERNEL_OK")
</pallas_src>

<mosaic_0001>
module attributes {stable_mosaic.version = 11 : i64} {
  func.func @_hhgf_kernel(%arg0: i32, %arg1: memref<32x16xf32, #tpu.memory_space<vmem>>, %arg2: memref<2x4x16xf32, #tpu.memory_space<vmem>>, %arg3: memref<4x128xf32, #tpu.memory_space<vmem>>, %arg4: memref<16x32xf32, #tpu.memory_space<vmem>>, %arg5: memref<1x32xf32, #tpu.memory_space<vmem>>, %arg6: memref<32x32xf32, #tpu.memory_space<vmem>>, %arg7: memref<1x32xf32, #tpu.memory_space<vmem>>, %arg8: memref<32x96xf32, #tpu.memory_space<vmem>>, %arg9: memref<1x96xf32, #tpu.memory_space<vmem>>, %arg10: memref<32x32xf32, #tpu.memory_space<vmem>>, %arg11: memref<1x32xf32, #tpu.memory_space<vmem>>, %arg12: memref<16x128xf32, #tpu.memory_space<vmem>>, %arg13: memref<1x128xf32, #tpu.memory_space<vmem>>, %arg14: memref<128x32xf32, #tpu.memory_space<vmem>>, %arg15: memref<4x32xf32, #tpu.memory_space<vmem>>, %arg16: memref<32x96xf32, #tpu.memory_space<vmem>>, %arg17: memref<1x96xf32, #tpu.memory_space<vmem>>, %arg18: memref<32x32xf32, #tpu.memory_space<vmem>>, %arg19: memref<1x32xf32, #tpu.memory_space<vmem>>, %arg20: memref<640x32xf32, #tpu.memory_space<vmem>>, %arg21: memref<1x32xf32, #tpu.memory_space<vmem>>, %arg22: memref<32x2xf32, #tpu.memory_space<vmem>>, %arg23: memref<1x2xf32, #tpu.memory_space<vmem>>, %arg24: memref<2x1x2xf32, #tpu.memory_space<vmem>>) attributes {dimension_semantics = [#tpu.dimension_semantics<parallel>], iteration_bounds = array<i64: 1>, scalar_prefetch = 0 : i64, scratch_operands = 0 : i64, tpu.core_type = #tpu.core_type<tc>, window_params = [{transform_indices = @transform_0, window_bounds = array<i64: 32, 16>}, {transform_indices = @transform_1, window_bounds = array<i64: 2, 4, 16>}, {pipeline_mode = #tpu.pipeline_mode<synchronous>, transform_indices = @transform_2, window_bounds = array<i64: 4, 128>}, {pipeline_mode = #tpu.pipeline_mode<synchronous>, transform_indices = @transform_3, window_bounds = array<i64: 16, 32>}, {pipeline_mode = #tpu.pipeline_mode<synchronous>, transform_indices = @transform_4, window_bounds = array<i64: 1, 32>}, {pipeline_mode = #tpu.pipeline_mode<synchronous>, transform_indices = @transform_5, window_bounds = array<i64: 32, 32>}, {pipeline_mode = #tpu.pipeline_mode<synchronous>, transform_indices = @transform_6, window_bounds = array<i64: 1, 32>}, {pipeline_mode = #tpu.pipeline_mode<synchronous>, transform_indices = @transform_7, window_bounds = array<i64: 32, 96>}, {pipeline_mode = #tpu.pipeline_mode<synchronous>, transform_indices = @transform_8, window_bounds = array<i64: 1, 96>}, {pipeline_mode = #tpu.pipeline_mode<synchronous>, transform_indices = @transform_9, window_bounds = array<i64: 32, 32>}, {pipeline_mode = #tpu.pipeline_mode<synchronous>, transform_indices = @transform_10, window_bounds = array<i64: 1, 32>}, {pipeline_mode = #tpu.pipeline_mode<synchronous>, transform_indices = @transform_11, window_bounds = array<i64: 16, 128>}, {pipeline_mode = #tpu.pipeline_mode<synchronous>, transform_indices = @transform_12, window_bounds = array<i64: 1, 128>}, {pipeline_mode = #tpu.pipeline_mode<synchronous>, transform_indices = @transform_13, window_bounds = array<i64: 128, 32>}, {pipeline_mode = #tpu.pipeline_mode<synchronous>, transform_indices = @transform_14, window_bounds = array<i64: 4, 32>}, {pipeline_mode = #tpu.pipeline_mode<synchronous>, transform_indices = @transform_15, window_bounds = array<i64: 32, 96>}, {pipeline_mode = #tpu.pipeline_mode<synchronous>, transform_indices = @transform_16, window_bounds = array<i64: 1, 96>}, {pipeline_mode = #tpu.pipeline_mode<synchronous>, transform_indices = @transform_17, window_bounds = array<i64: 32, 32>}, {pipeline_mode = #tpu.pipeline_mode<synchronous>, transform_indices = @transform_18, window_bounds = array<i64: 1, 32>}, {pipeline_mode = #tpu.pipeline_mode<synchronous>, transform_indices = @transform_19, window_bounds = array<i64: 640, 32>}, {pipeline_mode = #tpu.pipeline_mode<synchronous>, transform_indices = @transform_20, window_bounds = array<i64: 1, 32>}, {pipeline_mode = #tpu.pipeline_mode<synchronous>, transform_indices = @transform_21, window_bounds = array<i64: 32, 2>}, {pipeline_mode = #tpu.pipeline_mode<synchronous>, transform_indices = @transform_22, window_bounds = array<i64: 1, 2>}, {transform_indices = @transform_23, window_bounds = array<i64: 2, 1, 2>}]} {
    %c0 = arith.constant 0 : index
    %c0_0 = arith.constant 0 : index
    %0 = vector.load %arg1[%c0, %c0_0] : memref<32x16xf32, #tpu.memory_space<vmem>>, vector<32x16xf32>
    %c0_1 = arith.constant 0 : index
    %c0_2 = arith.constant 0 : index
    %1 = vector.load %arg4[%c0_1, %c0_2] : memref<16x32xf32, #tpu.memory_space<vmem>>, vector<16x32xf32>
    %cst = arith.constant dense<0.000000e+00> : vector<32x32xf32>
    %2 = tpu.matmul %0, %1, %cst {dimension_numbers = #tpu.dot_dimension_numbers<[1], [0], [0], [1], [0, 0, 1, 1], [], []>} : vector<32x16xf32>, vector<16x32xf32>, vector<32x32xf32> -> vector<32x32xf32>
    %c0_3 = arith.constant 0 : index
    %c0_4 = arith.constant 0 : index
    %3 = vector.load %arg5[%c0_3, %c0_4] : memref<1x32xf32, #tpu.memory_space<vmem>>, vector<1x32xf32>
    %4 = vector.broadcast %3 : vector<1x32xf32> to vector<32x32xf32>
    %5 = arith.addf %2, %4 : vector<32x32xf32>
    %cst_5 = arith.constant 0.000000e+00 : f32
    %6 = vector.broadcast %cst_5 : f32 to vector<32x32xf32>
    %7 = arith.maximumf %5, %6 : vector<32x32xf32>
    %c0_6 = arith.constant 0 : index
    %c0_7 = arith.constant 0 : index
    %8 = vector.load %arg6[%c0_6, %c0_7] : memref<32x32xf32, #tpu.memory_space<vmem>>, vector<32x32xf32>
    %cst_8 = arith.constant dense<0.000000e+00> : vector<32x32xf32>
    %9 = tpu.matmul %7, %8, %cst_8 {dimension_numbers = #tpu.dot_dimension_numbers<[1], [0], [0], [1], [0, 0, 1, 1], [], []>} : vector<32x32xf32>, vector<32x32xf32>, vector<32x32xf32> -> vector<32x32xf32>
    %c0_9 = arith.constant 0 : index
    %c0_10 = arith.constant 0 : index
    %10 = vector.load %arg7[%c0_9, %c0_10] : memref<1x32xf32, #tpu.memory_space<vmem>>, vector<1x32xf32>
    %11 = vector.broadcast %10 : vector<1x32xf32> to vector<32x32xf32>
    %12 = arith.addf %9, %11 : vector<32x32xf32>
    %13 = vector.extract_strided_slice %12 {offsets = [0, 0], sizes = [16, 32], strides = [1, 1]} : vector<32x32xf32> to vector<16x32xf32>
    %c0_11 = arith.constant 0 : index
    %c0_12 = arith.constant 0 : index
    %14 = vector.load %arg8[%c0_11, %c0_12] : memref<32x96xf32, #tpu.memory_space<vmem>>, vector<32x96xf32>
    %c0_13 = arith.constant 0 : index
    %c0_14 = arith.constant 0 : index
    %15 = vector.load %arg9[%c0_13, %c0_14] : memref<1x96xf32, #tpu.memory_space<vmem>>, vector<1x96xf32>
    %c0_15 = arith.constant 0 : index
    %c0_16 = arith.constant 0 : index
    %16 = vector.load %arg10[%c0_15, %c0_16] : memref<32x32xf32, #tpu.memory_space<vmem>>, vector<32x32xf32>
    %c0_17 = arith.constant 0 : index
    %c0_18 = arith.constant 0 : index
    %17 = vector.load %arg11[%c0_17, %c0_18] : memref<1x32xf32, #tpu.memory_space<vmem>>, vector<1x32xf32>
    %cst_19 = arith.constant dense<0.000000e+00> : vector<16xf32>
    %18 = vector.multi_reduction <add>, %13, %cst_19 [1] : vector<16x32xf32> to vector<16xf32>
    %19 = vector.shape_cast %18 : vector<16xf32> to vector<16x1xf32>
    %cst_20 = arith.constant 3.200000e+01 : f32
    %20 = vector.broadcast %cst_20 : f32 to vector<16x1xf32>
    %21 = arith.divf %19, %20 : vector<16x1xf32>
    %22 = vector.broadcast %21 : vector<16x1xf32> to vector<16x32xf32>
    %23 = arith.subf %13, %22 : vector<16x32xf32>
    %24 = arith.mulf %23, %23 : vector<16x32xf32>
    %cst_21 = arith.constant dense<0.000000e+00> : vector<16xf32>
    %25 = vector.multi_reduction <add>, %24, %cst_21 [1] : vector<16x32xf32> to vector<16xf32>
    %26 = vector.shape_cast %25 : vector<16xf32> to vector<16x1xf32>
    %cst_22 = arith.constant 3.200000e+01 : f32
    %27 = vector.broadcast %cst_22 : f32 to vector<16x1xf32>
    %28 = arith.divf %26, %27 : vector<16x1xf32>
    %29 = vector.broadcast %21 : vector<16x1xf32> to vector<16x32xf32>
    %30 = arith.subf %13, %29 : vector<16x32xf32>
    %cst_23 = arith.constant 9.99999974E-6 : f32
    %31 = vector.broadcast %cst_23 : f32 to vector<16x1xf32>
    %32 = arith.addf %28, %31 : vector<16x1xf32>
    %33 = math.rsqrt %32 : vector<16x1xf32>
    %34 = vector.broadcast %33 : vector<16x1xf32> to vector<16x32xf32>
    %35 = arith.mulf %30, %34 : vector<16x32xf32>
    %cst_24 = arith.constant dense<0.000000e+00> : vector<16x96xf32>
    %36 = tpu.matmul %35, %14, %cst_24 {dimension_numbers = #tpu.dot_dimension_numbers<[1], [0], [0], [1], [0, 0, 1, 1], [], []>} : vector<16x32xf32>, vector<32x96xf32>, vector<16x96xf32> -> vector<16x96xf32>
    %37 = vector.broadcast %15 : vector<1x96xf32> to vector<16x96xf32>
    %38 = arith.addf %36, %37 : vector<16x96xf32>
    %39 = vector.extract_strided_slice %38 {offsets = [0, 0], sizes = [16, 32], strides = [1, 1]} : vector<16x96xf32> to vector<16x32xf32>
    %40 = vector.extract_strided_slice %38 {offsets = [0, 32], sizes = [16, 32], strides = [1, 1]} : vector<16x96xf32> to vector<16x32xf32>
    %41 = vector.extract_strided_slice %38 {offsets = [0, 64], sizes = [16, 32], strides = [1, 1]} : vector<16x96xf32> to vector<16x32xf32>
    %42 = tpu.iota {dimensions = array<i32: 0>} : vector<16x16xi32>
    %43 = tpu.iota {dimensions = array<i32: 1>} : vector<16x16xi32>
    %44 = arith.cmpi ne, %42, %43 : vector<16x16xi32>
    %45 = arith.extui %44 : vector<16x16xi1> to vector<16x16xi32>
    %46 = arith.sitofp %45 : vector<16x16xi32> to vector<16x16xf32>
    %cst_25 = arith.constant 0.000000e+00 : f32
    %47 = vector.broadcast %cst_25 : f32 to vector<16x32xf32>
    %48 = vector.extract_strided_slice %39 {offsets = [0, 0], sizes = [16, 8], strides = [1, 1]} : vector<16x32xf32> to vector<16x8xf32>
    %49 = vector.extract_strided_slice %40 {offsets = [0, 0], sizes = [16, 8], strides = [1, 1]} : vector<16x32xf32> to vector<16x8xf32>
    %50 = vector.extract_strided_slice %41 {offsets = [0, 0], sizes = [16, 8], strides = [1, 1]} : vector<16x32xf32> to vector<16x8xf32>
    %cst_26 = arith.constant dense<0.000000e+00> : vector<16x16xf32>
    %51 = tpu.matmul %48, %49, %cst_26 {dimension_numbers = #tpu.dot_dimension_numbers<[1], [1], [0], [0], [0, 0, 1, 0], [], []>} : vector<16x8xf32>, vector<16x8xf32>, vector<16x16xf32> -> vector<16x16xf32>
    %52 = arith.mulf %51, %46 : vector<16x16xf32>
    %cst_27 = arith.constant dense<0xFF800000> : vector<16xf32>
    %53 = vector.multi_reduction <maximumf>, %52, %cst_27 [1] : vector<16x16xf32> to vector<16xf32>
    %54 = vector.shape_cast %53 : vector<16xf32> to vector<16x1xf32>
    %55 = vector.broadcast %54 : vector<16x1xf32> to vector<16x16xf32>
    %56 = arith.subf %52, %55 : vector<16x16xf32>
    %57 = math.exp %56 : vector<16x16xf32>
    %cst_28 = arith.constant dense<0.000000e+00> : vector<16xf32>
    %58 = vector.multi_reduction <add>, %57, %cst_28 [1] : vector<16x16xf32> to vector<16xf32>
    %59 = vector.shape_cast %58 : vector<16xf32> to vector<16x1xf32>
    %60 = vector.broadcast %59 : vector<16x1xf32> to vector<16x16xf32>
    %61 = arith.divf %57, %60 : vector<16x16xf32>
    %cst_29 = arith.constant dense<0.000000e+00> : vector<16x8xf32>
    %62 = tpu.matmul %61, %50, %cst_29 {dimension_numbers = #tpu.dot_dimension_numbers<[1], [0], [0], [1], [0, 0, 1, 1], [], []>} : vector<16x16xf32>, vector<16x8xf32>, vector<16x8xf32> -> vector<16x8xf32>
    %63 = vector.extract_strided_slice %16 {offsets = [0, 0], sizes = [8, 32], strides = [1, 1]} : vector<32x32xf32> to vector<8x32xf32>
    %cst_30 = arith.constant dense<0.000000e+00> : vector<16x32xf32>
    %64 = tpu.matmul %62, %63, %cst_30 {dimension_numbers = #tpu.dot_dimension_numbers<[1], [0], [0], [1], [0, 0, 1, 1], [], []>} : vector<16x8xf32>, vector<8x32xf32>, vector<16x32xf32> -> vector<16x32xf32>
    %65 = arith.addf %47, %64 : vector<16x32xf32>
    %66 = vector.extract_strided_slice %39 {offsets = [0, 8], sizes = [16, 8], strides = [1, 1]} : vector<16x32xf32> to vector<16x8xf32>
    %67 = vector.extract_strided_slice %40 {offsets = [0, 8], sizes = [16, 8], strides = [1, 1]} : vector<16x32xf32> to vector<16x8xf32>
    %68 = vector.extract_strided_slice %41 {offsets = [0, 8], sizes = [16, 8], strides = [1, 1]} : vector<16x32xf32> to vector<16x8xf32>
    %cst_31 = arith.constant dense<0.000000e+00> : vector<16x16xf32>
    %69 = tpu.matmul %66, %67, %cst_31 {dimension_numbers = #tpu.dot_dimension_numbers<[1], [1], [0], [0], [0, 0, 1, 0], [], []>} : vector<16x8xf32>, vector<16x8xf32>, vector<16x16xf32> -> vector<16x16xf32>
    %70 = arith.mulf %69, %46 : vector<16x16xf32>
    %cst_32 = arith.constant dense<0xFF800000> : vector<16xf32>
    %71 = vector.multi_reduction <maximumf>, %70, %cst_32 [1] : vector<16x16xf32> to vector<16xf32>
    %72 = vector.shape_cast %71 : vector<16xf32> to vector<16x1xf32>
    %73 = vector.broadcast %72 : vector<16x1xf32> to vector<16x16xf32>
    %74 = arith.subf %70, %73 : vector<16x16xf32>
    %75 = math.exp %74 : vector<16x16xf32>
    %cst_33 = arith.constant dense<0.000000e+00> : vector<16xf32>
    %76 = vector.multi_reduction <add>, %75, %cst_33 [1] : vector<16x16xf32> to vector<16xf32>
    %77 = vector.shape_cast %76 : vector<16xf32> to vector<16x1xf32>
    %78 = vector.broadcast %77 : vector<16x1xf32> to vector<16x16xf32>
    %79 = arith.divf %75, %78 : vector<16x16xf32>
    %cst_34 = arith.constant dense<0.000000e+00> : vector<16x8xf32>
    %80 = tpu.matmul %79, %68, %cst_34 {dimension_numbers = #tpu.dot_dimension_numbers<[1], [0], [0], [1], [0, 0, 1, 1], [], []>} : vector<16x16xf32>, vector<16x8xf32>, vector<16x8xf32> -> vector<16x8xf32>
    %81 = vector.extract_strided_slice %16 {offsets = [8, 0], sizes = [8, 32], strides = [1, 1]} : vector<32x32xf32> to vector<8x32xf32>
    %cst_35 = arith.constant dense<0.000000e+00> : vector<16x32xf32>
    %82 = tpu.matmul %80, %81, %cst_35 {dimension_numbers = #tpu.dot_dimension_numbers<[1], [0], [0], [1], [0, 0, 1, 1], [], []>} : vector<16x8xf32>, vector<8x32xf32>, vector<16x32xf32> -> vector<16x32xf32>
    %83 = arith.addf %65, %82 : vector<16x32xf32>
    %84 = vector.extract_strided_slice %39 {offsets = [0, 16], sizes = [16, 8], strides = [1, 1]} : vector<16x32xf32> to vector<16x8xf32>
    %85 = vector.extract_strided_slice %40 {offsets = [0, 16], sizes = [16, 8], strides = [1, 1]} : vector<16x32xf32> to vector<16x8xf32>
    %86 = vector.extract_strided_slice %41 {offsets = [0, 16], sizes = [16, 8], strides = [1, 1]} : vector<16x32xf32> to vector<16x8xf32>
    %cst_36 = arith.constant dense<0.000000e+00> : vector<16x16xf32>
    %87 = tpu.matmul %84, %85, %cst_36 {dimension_numbers = #tpu.dot_dimension_numbers<[1], [1], [0], [0], [0, 0, 1, 0], [], []>} : vector<16x8xf32>, vector<16x8xf32>, vector<16x16xf32> -> vector<16x16xf32>
    %88 = arith.mulf %87, %46 : vector<16x16xf32>
    %cst_37 = arith.constant dense<0xFF800000> : vector<16xf32>
    %89 = vector.multi_reduction <maximumf>, %88, %cst_37 [1] : vector<16x16xf32> to vector<16xf32>
    %90 = vector.shape_cast %89 : vector<16xf32> to vector<16x1xf32>
    %91 = vector.broadcast %90 : vector<16x1xf32> to vector<16x16xf32>
    %92 = arith.subf %88, %91 : vector<16x16xf32>
    %93 = math.exp %92 : vector<16x16xf32>
    %cst_38 = arith.constant dense<0.000000e+00> : vector<16xf32>
    %94 = vector.multi_reduction <add>, %93, %cst_38 [1] : vector<16x16xf32> to vector<16xf32>
    %95 = vector.shape_cast %94 : vector<16xf32> to vector<16x1xf32>
    %96 = vector.broadcast %95 : vector<16x1xf32> to vector<16x16xf32>
    %97 = arith.divf %93, %96 : vector<16x16xf32>
    %cst_39 = arith.constant dense<0.000000e+00> : vector<16x8xf32>
    %98 = tpu.matmul %97, %86, %cst_39 {dimension_numbers = #tpu.dot_dimension_numbers<[1], [0], [0], [1], [0, 0, 1, 1], [], []>} : vector<16x16xf32>, vector<16x8xf32>, vector<16x8xf32> -> vector<16x8xf32>
    %99 = vector.extract_strided_slice %16 {offsets = [16, 0], sizes = [8, 32], strides = [1, 1]} : vector<32x32xf32> to vector<8x32xf32>
    %cst_40 = arith.constant dense<0.000000e+00> : vector<16x32xf32>
    %100 = tpu.matmul %98, %99, %cst_40 {dimension_numbers = #tpu.dot_dimension_numbers<[1], [0], [0], [1], [0, 0, 1, 1], [], []>} : vector<16x8xf32>, vector<8x32xf32>, vector<16x32xf32> -> vector<16x32xf32>
    %101 = arith.addf %83, %100 : vector<16x32xf32>
    %102 = vector.extract_strided_slice %39 {offsets = [0, 24], sizes = [16, 8], strides = [1, 1]} : vector<16x32xf32> to vector<16x8xf32>
    %103 = vector.extract_strided_slice %40 {offsets = [0, 24], sizes = [16, 8], strides = [1, 1]} : vector<16x32xf32> to vector<16x8xf32>
    %104 = vector.extract_strided_slice %41 {offsets = [0, 24], sizes = [16, 8], strides = [1, 1]} : vector<16x32xf32> to vector<16x8xf32>
    %cst_41 = arith.constant dense<0.000000e+00> : vector<16x16xf32>
    %105 = tpu.matmul %102, %103, %cst_41 {dimension_numbers = #tpu.dot_dimension_numbers<[1], [1], [0], [0], [0, 0, 1, 0], [], []>} : vector<16x8xf32>, vector<16x8xf32>, vector<16x16xf32> -> vector<16x16xf32>
    %106 = arith.mulf %105, %46 : vector<16x16xf32>
    %cst_42 = arith.constant dense<0xFF800000> : vector<16xf32>
    %107 = vector.multi_reduction <maximumf>, %106, %cst_42 [1] : vector<16x16xf32> to vector<16xf32>
    %108 = vector.shape_cast %107 : vector<16xf32> to vector<16x1xf32>
    %109 = vector.broadcast %108 : vector<16x1xf32> to vector<16x16xf32>
    %110 = arith.subf %106, %109 : vector<16x16xf32>
    %111 = math.exp %110 : vector<16x16xf32>
    %cst_43 = arith.constant dense<0.000000e+00> : vector<16xf32>
    %112 = vector.multi_reduction <add>, %111, %cst_43 [1] : vector<16x16xf32> to vector<16xf32>
    %113 = vector.shape_cast %112 : vector<16xf32> to vector<16x1xf32>
    %114 = vector.broadcast %113 : vector<16x1xf32> to vector<16x16xf32>
    %115 = arith.divf %111, %114 : vector<16x16xf32>
    %cst_44 = arith.constant dense<0.000000e+00> : vector<16x8xf32>
    %116 = tpu.matmul %115, %104, %cst_44 {dimension_numbers = #tpu.dot_dimension_numbers<[1], [0], [0], [1], [0, 0, 1, 1], [], []>} : vector<16x16xf32>, vector<16x8xf32>, vector<16x8xf32> -> vector<16x8xf32>
    %117 = vector.extract_strided_slice %16 {offsets = [24, 0], sizes = [8, 32], strides = [1, 1]} : vector<32x32xf32> to vector<8x32xf32>
    %cst_45 = arith.constant dense<0.000000e+00> : vector<16x32xf32>
    %118 = tpu.matmul %116, %117, %cst_45 {dimension_numbers = #tpu.dot_dimension_numbers<[1], [0], [0], [1], [0, 0, 1, 1], [], []>} : vector<16x8xf32>, vector<8x32xf32>, vector<16x32xf32> -> vector<16x32xf32>
    %119 = arith.addf %101, %118 : vector<16x32xf32>
    %120 = vector.broadcast %17 : vector<1x32xf32> to vector<16x32xf32>
    %121 = arith.addf %119, %120 : vector<16x32xf32>
    %122 = arith.addf %121, %13 : vector<16x32xf32>
    %c0_46 = arith.constant 0 : index
    %c0_47 = arith.constant 0 : index
    %c0_48 = arith.constant 0 : index
    %123 = vector.load %arg2[%c0_46, %c0_47, %c0_48] : memref<2x4x16xf32, #tpu.memory_space<vmem>>, vector<1x4x16xf32>
    %124 = vector.shape_cast %123 : vector<1x4x16xf32> to vector<4x16xf32>
    %c0_49 = arith.constant 0 : index
    %c0_50 = arith.constant 0 : index
    %125 = vector.load %arg12[%c0_49, %c0_50] : memref<16x128xf32, #tpu.memory_space<vmem>>, vector<16x128xf32>
    %cst_51 = arith.constant dense<0.000000e+00> : vector<4x128xf32>
    %126 = tpu.matmul %124, %125, %cst_51 {dimension_numbers = #tpu.dot_dimension_numbers<[1], [0], [0], [1], [0, 0, 1, 1], [], []>} : vector<4x16xf32>, vector<16x128xf32>, vector<4x128xf32> -> vector<4x128xf32>
    %c0_52 = arith.constant 0 : index
    %c0_53 = arith.constant 0 : index
    %127 = vector.load %arg13[%c0_52, %c0_53] : memref<1x128xf32, #tpu.memory_space<vmem>>, vector<1x128xf32>
    %128 = vector.broadcast %127 : vector<1x128xf32> to vector<4x128xf32>
    %129 = arith.addf %126, %128 : vector<4x128xf32>
    %cst_54 = arith.constant 0.000000e+00 : f32
    %130 = vector.broadcast %cst_54 : f32 to vector<4x128xf32>
    %131 = arith.maximumf %129, %130 : vector<4x128xf32>
    %c0_55 = arith.constant 0 : index
    %c0_56 = arith.constant 0 : index
    %132 = vector.load %arg3[%c0_55, %c0_56] : memref<4x128xf32, #tpu.memory_space<vmem>>, vector<4x128xf32>
    %133 = arith.mulf %131, %132 : vector<4x128xf32>
    %c0_57 = arith.constant 0 : index
    %c0_58 = arith.constant 0 : index
    %134 = vector.load %arg14[%c0_57, %c0_58] : memref<128x32xf32, #tpu.memory_space<vmem>>, vector<128x32xf32>
    %cst_59 = arith.constant dense<0.000000e+00> : vector<4x32xf32>
    %135 = tpu.matmul %133, %134, %cst_59 {dimension_numbers = #tpu.dot_dimension_numbers<[1], [0], [0], [1], [0, 0, 1, 1], [], []>} : vector<4x128xf32>, vector<128x32xf32>, vector<4x32xf32> -> vector<4x32xf32>
    %c0_60 = arith.constant 0 : index
    %c0_61 = arith.constant 0 : index
    %136 = vector.load %arg15[%c0_60, %c0_61] : memref<4x32xf32, #tpu.memory_space<vmem>>, vector<4x32xf32>
    %137 = arith.addf %135, %136 : vector<4x32xf32>
    %c0_62 = arith.constant 0 : index
    %c0_63 = arith.constant 0 : index
    %138 = vector.load %arg16[%c0_62, %c0_63] : memref<32x96xf32, #tpu.memory_space<vmem>>, vector<32x96xf32>
    %c0_64 = arith.constant 0 : index
    %c0_65 = arith.constant 0 : index
    %139 = vector.load %arg17[%c0_64, %c0_65] : memref<1x96xf32, #tpu.memory_space<vmem>>, vector<1x96xf32>
    %c0_66 = arith.constant 0 : index
    %c0_67 = arith.constant 0 : index
    %140 = vector.load %arg18[%c0_66, %c0_67] : memref<32x32xf32, #tpu.memory_space<vmem>>, vector<32x32xf32>
    %c0_68 = arith.constant 0 : index
    %c0_69 = arith.constant 0 : index
    %141 = vector.load %arg19[%c0_68, %c0_69] : memref<1x32xf32, #tpu.memory_space<vmem>>, vector<1x32xf32>
    %cst_70 = arith.constant dense<0.000000e+00> : vector<4xf32>
    %142 = vector.multi_reduction <add>, %137, %cst_70 [1] : vector<4x32xf32> to vector<4xf32>
    %143 = vector.shape_cast %142 : vector<4xf32> to vector<4x1xf32>
    %cst_71 = arith.constant 3.200000e+01 : f32
    %144 = vector.broadcast %cst_71 : f32 to vector<4x1xf32>
    %145 = arith.divf %143, %144 : vector<4x1xf32>
    %146 = vector.broadcast %145 : vector<4x1xf32> to vector<4x32xf32>
    %147 = arith.subf %137, %146 : vector<4x32xf32>
    %148 = arith.mulf %147, %147 : vector<4x32xf32>
    %cst_72 = arith.constant dense<0.000000e+00> : vector<4xf32>
    %149 = vector.multi_reduction <add>, %148, %cst_72 [1] : vector<4x32xf32> to vector<4xf32>
    %150 = vector.shape_cast %149 : vector<4xf32> to vector<4x1xf32>
    %cst_73 = arith.constant 3.200000e+01 : f32
    %151 = vector.broadcast %cst_73 : f32 to vector<4x1xf32>
    %152 = arith.divf %150, %151 : vector<4x1xf32>
    %153 = vector.broadcast %145 : vector<4x1xf32> to vector<4x32xf32>
    %154 = arith.subf %137, %153 : vector<4x32xf32>
    %cst_74 = arith.constant 9.99999974E-6 : f32
    %155 = vector.broadcast %cst_74 : f32 to vector<4x1xf32>
    %156 = arith.addf %152, %155 : vector<4x1xf32>
    %157 = math.rsqrt %156 : vector<4x1xf32>
    %158 = vector.broadcast %157 : vector<4x1xf32> to vector<4x32xf32>
    %159 = arith.mulf %154, %158 : vector<4x32xf32>
    %cst_75 = arith.constant dense<0.000000e+00> : vector<4x96xf32>
    %160 = tpu.matmul %159, %138, %cst_75 {dimension_numbers = #tpu.dot_dimension_numbers<[1], [0], [0], [1], [0, 0, 1, 1], [], []>} : vector<4x32xf32>, vector<32x96xf32>, vector<4x96xf32> -> vector<4x96xf32>
    %161 = vector.broadcast %139 : vector<1x96xf32> to vector<4x96xf32>
    %162 = arith.addf %160, %161 : vector<4x96xf32>
    %163 = vector.extract_strided_slice %162 {offsets = [0, 0], sizes = [4, 32], strides = [1, 1]} : vector<4x96xf32> to vector<4x32xf32>
    %164 = vector.extract_strided_slice %162 {offsets = [0, 32], sizes = [4, 32], strides = [1, 1]} : vector<4x96xf32> to vector<4x32xf32>
    %165 = vector.extract_strided_slice %162 {offsets = [0, 64], sizes = [4, 32], strides = [1, 1]} : vector<4x96xf32> to vector<4x32xf32>
    %166 = tpu.iota {dimensions = array<i32: 0>} : vector<4x4xi32>
    %167 = tpu.iota {dimensions = array<i32: 1>} : vector<4x4xi32>
    %168 = arith.cmpi ne, %166, %167 : vector<4x4xi32>
    %169 = arith.extui %168 : vector<4x4xi1> to vector<4x4xi32>
    %170 = arith.sitofp %169 : vector<4x4xi32> to vector<4x4xf32>
    %cst_76 = arith.constant 0.000000e+00 : f32
    %171 = vector.broadcast %cst_76 : f32 to vector<4x32xf32>
    %172 = vector.extract_strided_slice %163 {offsets = [0, 0], sizes = [4, 8], strides = [1, 1]} : vector<4x32xf32> to vector<4x8xf32>
    %173 = vector.extract_strided_slice %164 {offsets = [0, 0], sizes = [4, 8], strides = [1, 1]} : vector<4x32xf32> to vector<4x8xf32>
    %174 = vector.extract_strided_slice %165 {offsets = [0, 0], sizes = [4, 8], strides = [1, 1]} : vector<4x32xf32> to vector<4x8xf32>
    %cst_77 = arith.constant dense<0.000000e+00> : vector<4x4xf32>
    %175 = tpu.matmul %172, %173, %cst_77 {dimension_numbers = #tpu.dot_dimension_numbers<[1], [1], [0], [0], [0, 0, 1, 0], [], []>} : vector<4x8xf32>, vector<4x8xf32>, vector<4x4xf32> -> vector<4x4xf32>
    %176 = arith.mulf %175, %170 : vector<4x4xf32>
    %cst_78 = arith.constant dense<0xFF800000> : vector<4xf32>
    %177 = vector.multi_reduction <maximumf>, %176, %cst_78 [1] : vector<4x4xf32> to vector<4xf32>
    %178 = vector.shape_cast %177 : vector<4xf32> to vector<4x1xf32>
    %179 = vector.broadcast %178 : vector<4x1xf32> to vector<4x4xf32>
    %180 = arith.subf %176, %179 : vector<4x4xf32>
    %181 = math.exp %180 : vector<4x4xf32>
    %cst_79 = arith.constant dense<0.000000e+00> : vector<4xf32>
    %182 = vector.multi_reduction <add>, %181, %cst_79 [1] : vector<4x4xf32> to vector<4xf32>
    %183 = vector.shape_cast %182 : vector<4xf32> to vector<4x1xf32>
    %184 = vector.broadcast %183 : vector<4x1xf32> to vector<4x4xf32>
    %185 = arith.divf %181, %184 : vector<4x4xf32>
    %cst_80 = arith.constant dense<0.000000e+00> : vector<4x8xf32>
    %186 = tpu.matmul %185, %174, %cst_80 {dimension_numbers = #tpu.dot_dimension_numbers<[1], [0], [0], [1], [0, 0, 1, 1], [], []>} : vector<4x4xf32>, vector<4x8xf32>, vector<4x8xf32> -> vector<4x8xf32>
    %187 = vector.extract_strided_slice %140 {offsets = [0, 0], sizes = [8, 32], strides = [1, 1]} : vector<32x32xf32> to vector<8x32xf32>
    %cst_81 = arith.constant dense<0.000000e+00> : vector<4x32xf32>
    %188 = tpu.matmul %186, %187, %cst_81 {dimension_numbers = #tpu.dot_dimension_numbers<[1], [0], [0], [1], [0, 0, 1, 1], [], []>} : vector<4x8xf32>, vector<8x32xf32>, vector<4x32xf32> -> vector<4x32xf32>
    %189 = arith.addf %171, %188 : vector<4x32xf32>
    %190 = vector.extract_strided_slice %163 {offsets = [0, 8], sizes = [4, 8], strides = [1, 1]} : vector<4x32xf32> to vector<4x8xf32>
    %191 = vector.extract_strided_slice %164 {offsets = [0, 8], sizes = [4, 8], strides = [1, 1]} : vector<4x32xf32> to vector<4x8xf32>
    %192 = vector.extract_strided_slice %165 {offsets = [0, 8], sizes = [4, 8], strides = [1, 1]} : vector<4x32xf32> to vector<4x8xf32>
    %cst_82 = arith.constant dense<0.000000e+00> : vector<4x4xf32>
    %193 = tpu.matmul %190, %191, %cst_82 {dimension_numbers = #tpu.dot_dimension_numbers<[1], [1], [0], [0], [0, 0, 1, 0], [], []>} : vector<4x8xf32>, vector<4x8xf32>, vector<4x4xf32> -> vector<4x4xf32>
    %194 = arith.mulf %193, %170 : vector<4x4xf32>
    %cst_83 = arith.constant dense<0xFF800000> : vector<4xf32>
    %195 = vector.multi_reduction <maximumf>, %194, %cst_83 [1] : vector<4x4xf32> to vector<4xf32>
    %196 = vector.shape_cast %195 : vector<4xf32> to vector<4x1xf32>
    %197 = vector.broadcast %196 : vector<4x1xf32> to vector<4x4xf32>
    %198 = arith.subf %194, %197 : vector<4x4xf32>
    %199 = math.exp %198 : vector<4x4xf32>
    %cst_84 = arith.constant dense<0.000000e+00> : vector<4xf32>
    %200 = vector.multi_reduction <add>, %199, %cst_84 [1] : vector<4x4xf32> to vector<4xf32>
    %201 = vector.shape_cast %200 : vector<4xf32> to vector<4x1xf32>
    %202 = vector.broadcast %201 : vector<4x1xf32> to vector<4x4xf32>
    %203 = arith.divf %199, %202 : vector<4x4xf32>
    %cst_85 = arith.constant dense<0.000000e+00> : vector<4x8xf32>
    %204 = tpu.matmul %203, %192, %cst_85 {dimension_numbers = #tpu.dot_dimension_numbers<[1], [0], [0], [1], [0, 0, 1, 1], [], []>} : vector<4x4xf32>, vector<4x8xf32>, vector<4x8xf32> -> vector<4x8xf32>
    %205 = vector.extract_strided_slice %140 {offsets = [8, 0], sizes = [8, 32], strides = [1, 1]} : vector<32x32xf32> to vector<8x32xf32>
    %cst_86 = arith.constant dense<0.000000e+00> : vector<4x32xf32>
    %206 = tpu.matmul %204, %205, %cst_86 {dimension_numbers = #tpu.dot_dimension_numbers<[1], [0], [0], [1], [0, 0, 1, 1], [], []>} : vector<4x8xf32>, vector<8x32xf32>, vector<4x32xf32> -> vector<4x32xf32>
    %207 = arith.addf %189, %206 : vector<4x32xf32>
    %208 = vector.extract_strided_slice %163 {offsets = [0, 16], sizes = [4, 8], strides = [1, 1]} : vector<4x32xf32> to vector<4x8xf32>
    %209 = vector.extract_strided_slice %164 {offsets = [0, 16], sizes = [4, 8], strides = [1, 1]} : vector<4x32xf32> to vector<4x8xf32>
    %210 = vector.extract_strided_slice %165 {offsets = [0, 16], sizes = [4, 8], strides = [1, 1]} : vector<4x32xf32> to vector<4x8xf32>
    %cst_87 = arith.constant dense<0.000000e+00> : vector<4x4xf32>
    %211 = tpu.matmul %208, %209, %cst_87 {dimension_numbers = #tpu.dot_dimension_numbers<[1], [1], [0], [0], [0, 0, 1, 0], [], []>} : vector<4x8xf32>, vector<4x8xf32>, vector<4x4xf32> -> vector<4x4xf32>
    %212 = arith.mulf %211, %170 : vector<4x4xf32>
    %cst_88 = arith.constant dense<0xFF800000> : vector<4xf32>
    %213 = vector.multi_reduction <maximumf>, %212, %cst_88 [1] : vector<4x4xf32> to vector<4xf32>
    %214 = vector.shape_cast %213 : vector<4xf32> to vector<4x1xf32>
    %215 = vector.broadcast %214 : vector<4x1xf32> to vector<4x4xf32>
    %216 = arith.subf %212, %215 : vector<4x4xf32>
    %217 = math.exp %216 : vector<4x4xf32>
    %cst_89 = arith.constant dense<0.000000e+00> : vector<4xf32>
    %218 = vector.multi_reduction <add>, %217, %cst_89 [1] : vector<4x4xf32> to vector<4xf32>
    %219 = vector.shape_cast %218 : vector<4xf32> to vector<4x1xf32>
    %220 = vector.broadcast %219 : vector<4x1xf32> to vector<4x4xf32>
    %221 = arith.divf %217, %220 : vector<4x4xf32>
    %cst_90 = arith.constant dense<0.000000e+00> : vector<4x8xf32>
    %222 = tpu.matmul %221, %210, %cst_90 {dimension_numbers = #tpu.dot_dimension_numbers<[1], [0], [0], [1], [0, 0, 1, 1], [], []>} : vector<4x4xf32>, vector<4x8xf32>, vector<4x8xf32> -> vector<4x8xf32>
    %223 = vector.extract_strided_slice %140 {offsets = [16, 0], sizes = [8, 32], strides = [1, 1]} : vector<32x32xf32> to vector<8x32xf32>
    %cst_91 = arith.constant dense<0.000000e+00> : vector<4x32xf32>
    %224 = tpu.matmul %222, %223, %cst_91 {dimension_numbers = #tpu.dot_dimension_numbers<[1], [0], [0], [1], [0, 0, 1, 1], [], []>} : vector<4x8xf32>, vector<8x32xf32>, vector<4x32xf32> -> vector<4x32xf32>
    %225 = arith.addf %207, %224 : vector<4x32xf32>
    %226 = vector.extract_strided_slice %163 {offsets = [0, 24], sizes = [4, 8], strides = [1, 1]} : vector<4x32xf32> to vector<4x8xf32>
    %227 = vector.extract_strided_slice %164 {offsets = [0, 24], sizes = [4, 8], strides = [1, 1]} : vector<4x32xf32> to vector<4x8xf32>
    %228 = vector.extract_strided_slice %165 {offsets = [0, 24], sizes = [4, 8], strides = [1, 1]} : vector<4x32xf32> to vector<4x8xf32>
    %cst_92 = arith.constant dense<0.000000e+00> : vector<4x4xf32>
    %229 = tpu.matmul %226, %227, %cst_92 {dimension_numbers = #tpu.dot_dimension_numbers<[1], [1], [0], [0], [0, 0, 1, 0], [], []>} : vector<4x8xf32>, vector<4x8xf32>, vector<4x4xf32> -> vector<4x4xf32>
    %230 = arith.mulf %229, %170 : vector<4x4xf32>
    %cst_93 = arith.constant dense<0xFF800000> : vector<4xf32>
    %231 = vector.multi_reduction <maximumf>, %230, %cst_93 [1] : vector<4x4xf32> to vector<4xf32>
    %232 = vector.shape_cast %231 : vector<4xf32> to vector<4x1xf32>
    %233 = vector.broadcast %232 : vector<4x1xf32> to vector<4x4xf32>
    %234 = arith.subf %230, %233 : vector<4x4xf32>
    %235 = math.exp %234 : vector<4x4xf32>
    %cst_94 = arith.constant dense<0.000000e+00> : vector<4xf32>
    %236 = vector.multi_reduction <add>, %235, %cst_94 [1] : vector<4x4xf32> to vector<4xf32>
    %237 = vector.shape_cast %236 : vector<4xf32> to vector<4x1xf32>
    %238 = vector.broadcast %237 : vector<4x1xf32> to vector<4x4xf32>
    %239 = arith.divf %235, %238 : vector<4x4xf32>
    %cst_95 = arith.constant dense<0.000000e+00> : vector<4x8xf32>
    %240 = tpu.matmul %239, %228, %cst_95 {dimension_numbers = #tpu.dot_dimension_numbers<[1], [0], [0], [1], [0, 0, 1, 1], [], []>} : vector<4x4xf32>, vector<4x8xf32>, vector<4x8xf32> -> vector<4x8xf32>
    %241 = vector.extract_strided_slice %140 {offsets = [24, 0], sizes = [8, 32], strides = [1, 1]} : vector<32x32xf32> to vector<8x32xf32>
    %cst_96 = arith.constant dense<0.000000e+00> : vector<4x32xf32>
    %242 = tpu.matmul %240, %241, %cst_96 {dimension_numbers = #tpu.dot_dimension_numbers<[1], [0], [0], [1], [0, 0, 1, 1], [], []>} : vector<4x8xf32>, vector<8x32xf32>, vector<4x32xf32> -> vector<4x32xf32>
    %243 = arith.addf %225, %242 : vector<4x32xf32>
    %244 = vector.broadcast %141 : vector<1x32xf32> to vector<4x32xf32>
    %245 = arith.addf %243, %244 : vector<4x32xf32>
    %246 = arith.addf %245, %137 : vector<4x32xf32>
    %c0_97 = arith.constant 0 : index
    %c0_98 = arith.constant 0 : index
    %247 = vector.load %arg21[%c0_97, %c0_98] : memref<1x32xf32, #tpu.memory_space<vmem>>, vector<1x32xf32>
    %248 = vector.extract_strided_slice %122 {offsets = [0, 0], sizes = [1, 32], strides = [1, 1]} : vector<16x32xf32> to vector<1x32xf32>
    %c0_99 = arith.constant 0 : index
    %c0_100 = arith.constant 0 : index
    %249 = vector.load %arg20[%c0_99, %c0_100] : memref<640x32xf32, #tpu.memory_space<vmem>>, vector<32x32xf32>
    %cst_101 = arith.constant dense<0.000000e+00> : vector<1x32xf32>
    %250 = tpu.matmul %248, %249, %cst_101 {dimension_numbers = #tpu.dot_dimension_numbers<[1], [0], [0], [1], [0, 0, 1, 1], [], []>} : vector<1x32xf32>, vector<32x32xf32>, vector<1x32xf32> -> vector<1x32xf32>
    %251 = arith.addf %247, %250 : vector<1x32xf32>
    %252 = vector.extract_strided_slice %122 {offsets = [1, 0], sizes = [1, 32], strides = [1, 1]} : vector<16x32xf32> to vector<1x32xf32>
    %c32 = arith.constant 32 : index
    %c0_102 = arith.constant 0 : index
    %253 = vector.load %arg20[%c32, %c0_102] : memref<640x32xf32, #tpu.memory_space<vmem>>, vector<32x32xf32>
    %cst_103 = arith.constant dense<0.000000e+00> : vector<1x32xf32>
    %254 = tpu.matmul %252, %253, %cst_103 {dimension_numbers = #tpu.dot_dimension_numbers<[1], [0], [0], [1], [0, 0, 1, 1], [], []>} : vector<1x32xf32>, vector<32x32xf32>, vector<1x32xf32> -> vector<1x32xf32>
    %255 = arith.addf %251, %254 : vector<1x32xf32>
    %256 = vector.extract_strided_slice %122 {offsets = [2, 0], sizes = [1, 32], strides = [1, 1]} : vector<16x32xf32> to vector<1x32xf32>
    %c64 = arith.constant 64 : index
    %c0_104 = arith.constant 0 : index
    %257 = vector.load %arg20[%c64, %c0_104] : memref<640x32xf32, #tpu.memory_space<vmem>>, vector<32x32xf32>
    %cst_105 = arith.constant dense<0.000000e+00> : vector<1x32xf32>
    %258 = tpu.matmul %256, %257, %cst_105 {dimension_numbers = #tpu.dot_dimension_numbers<[1], [0], [0], [1], [0, 0, 1, 1], [], []>} : vector<1x32xf32>, vector<32x32xf32>, vector<1x32xf32> -> vector<1x32xf32>
    %259 = arith.addf %255, %258 : vector<1x32xf32>
    %260 = vector.extract_strided_slice %122 {offsets = [3, 0], sizes = [1, 32], strides = [1, 1]} : vector<16x32xf32> to vector<1x32xf32>
    %c96 = arith.constant 96 : index
    %c0_106 = arith.constant 0 : index
    %261 = vector.load %arg20[%c96, %c0_106] : memref<640x32xf32, #tpu.memory_space<vmem>>, vector<32x32xf32>
    %cst_107 = arith.constant dense<0.000000e+00> : vector<1x32xf32>
    %262 = tpu.matmul %260, %261, %cst_107 {dimension_numbers = #tpu.dot_dimension_numbers<[1], [0], [0], [1], [0, 0, 1, 1], [], []>} : vector<1x32xf32>, vector<32x32xf32>, vector<1x32xf32> -> vector<1x32xf32>
    %263 = arith.addf %259, %262 : vector<1x32xf32>
    %264 = vector.extract_strided_slice %122 {offsets = [4, 0], sizes = [1, 32], strides = [1, 1]} : vector<16x32xf32> to vector<1x32xf32>
    %c128 = arith.constant 128 : index
    %c0_108 = arith.constant 0 : index
    %265 = vector.load %arg20[%c128, %c0_108] : memref<640x32xf32, #tpu.memory_space<vmem>>, vector<32x32xf32>
    %cst_109 = arith.constant dense<0.000000e+00> : vector<1x32xf32>
    %266 = tpu.matmul %264, %265, %cst_109 {dimension_numbers = #tpu.dot_dimension_numbers<[1], [0], [0], [1], [0, 0, 1, 1], [], []>} : vector<1x32xf32>, vector<32x32xf32>, vector<1x32xf32> -> vector<1x32xf32>
    %267 = arith.addf %263, %266 : vector<1x32xf32>
    %268 = vector.extract_strided_slice %122 {offsets = [5, 0], sizes = [1, 32], strides = [1, 1]} : vector<16x32xf32> to vector<1x32xf32>
    %c160 = arith.constant 160 : index
    %c0_110 = arith.constant 0 : index
    %269 = vector.load %arg20[%c160, %c0_110] : memref<640x32xf32, #tpu.memory_space<vmem>>, vector<32x32xf32>
    %cst_111 = arith.constant dense<0.000000e+00> : vector<1x32xf32>
    %270 = tpu.matmul %268, %269, %cst_111 {dimension_numbers = #tpu.dot_dimension_numbers<[1], [0], [0], [1], [0, 0, 1, 1], [], []>} : vector<1x32xf32>, vector<32x32xf32>, vector<1x32xf32> -> vector<1x32xf32>
    %271 = arith.addf %267, %270 : vector<1x32xf32>
    %272 = vector.extract_strided_slice %122 {offsets = [6, 0], sizes = [1, 32], strides = [1, 1]} : vector<16x32xf32> to vector<1x32xf32>
    %c192 = arith.constant 192 : index
    %c0_112 = arith.constant 0 : index
    %273 = vector.load %arg20[%c192, %c0_112] : memref<640x32xf32, #tpu.memory_space<vmem>>, vector<32x32xf32>
    %cst_113 = arith.constant dense<0.000000e+00> : vector<1x32xf32>
    %274 = tpu.matmul %272, %273, %cst_113 {dimension_numbers = #tpu.dot_dimension_numbers<[1], [0], [0], [1], [0, 0, 1, 1], [], []>} : vector<1x32xf32>, vector<32x32xf32>, vector<1x32xf32> -> vector<1x32xf32>
    %275 = arith.addf %271, %274 : vector<1x32xf32>
    %276 = vector.extract_strided_slice %122 {offsets = [7, 0], sizes = [1, 32], strides = [1, 1]} : vector<16x32xf32> to vector<1x32xf32>
    %c224 = arith.constant 224 : index
    %c0_114 = arith.constant 0 : index
    %277 = vector.load %arg20[%c224, %c0_114] : memref<640x32xf32, #tpu.memory_space<vmem>>, vector<32x32xf32>
    %cst_115 = arith.constant dense<0.000000e+00> : vector<1x32xf32>
    %278 = tpu.matmul %276, %277, %cst_115 {dimension_numbers = #tpu.dot_dimension_numbers<[1], [0], [0], [1], [0, 0, 1, 1], [], []>} : vector<1x32xf32>, vector<32x32xf32>, vector<1x32xf32> -> vector<1x32xf32>
    %279 = arith.addf %275, %278 : vector<1x32xf32>
    %280 = vector.extract_strided_slice %122 {offsets = [8, 0], sizes = [1, 32], strides = [1, 1]} : vector<16x32xf32> to vector<1x32xf32>
    %c256 = arith.constant 256 : index
    %c0_116 = arith.constant 0 : index
    %281 = vector.load %arg20[%c256, %c0_116] : memref<640x32xf32, #tpu.memory_space<vmem>>, vector<32x32xf32>
    %cst_117 = arith.constant dense<0.000000e+00> : vector<1x32xf32>
    %282 = tpu.matmul %280, %281, %cst_117 {dimension_numbers = #tpu.dot_dimension_numbers<[1], [0], [0], [1], [0, 0, 1, 1], [], []>} : vector<1x32xf32>, vector<32x32xf32>, vector<1x32xf32> -> vector<1x32xf32>
    %283 = arith.addf %279, %282 : vector<1x32xf32>
    %284 = vector.extract_strided_slice %122 {offsets = [9, 0], sizes = [1, 32], strides = [1, 1]} : vector<16x32xf32> to vector<1x32xf32>
    %c288 = arith.constant 288 : index
    %c0_118 = arith.constant 0 : index
    %285 = vector.load %arg20[%c288, %c0_118] : memref<640x32xf32, #tpu.memory_space<vmem>>, vector<32x32xf32>
    %cst_119 = arith.constant dense<0.000000e+00> : vector<1x32xf32>
    %286 = tpu.matmul %284, %285, %cst_119 {dimension_numbers = #tpu.dot_dimension_numbers<[1], [0], [0], [1], [0, 0, 1, 1], [], []>} : vector<1x32xf32>, vector<32x32xf32>, vector<1x32xf32> -> vector<1x32xf32>
    %287 = arith.addf %283, %286 : vector<1x32xf32>
    %288 = vector.extract_strided_slice %122 {offsets = [10, 0], sizes = [1, 32], strides = [1, 1]} : vector<16x32xf32> to vector<1x32xf32>
    %c320 = arith.constant 320 : index
    %c0_120 = arith.constant 0 : index
    %289 = vector.load %arg20[%c320, %c0_120] : memref<640x32xf32, #tpu.memory_space<vmem>>, vector<32x32xf32>
    %cst_121 = arith.constant dense<0.000000e+00> : vector<1x32xf32>
    %290 = tpu.matmul %288, %289, %cst_121 {dimension_numbers = #tpu.dot_dimension_numbers<[1], [0], [0], [1], [0, 0, 1, 1], [], []>} : vector<1x32xf32>, vector<32x32xf32>, vector<1x32xf32> -> vector<1x32xf32>
    %291 = arith.addf %287, %290 : vector<1x32xf32>
    %292 = vector.extract_strided_slice %122 {offsets = [11, 0], sizes = [1, 32], strides = [1, 1]} : vector<16x32xf32> to vector<1x32xf32>
    %c352 = arith.constant 352 : index
    %c0_122 = arith.constant 0 : index
    %293 = vector.load %arg20[%c352, %c0_122] : memref<640x32xf32, #tpu.memory_space<vmem>>, vector<32x32xf32>
    %cst_123 = arith.constant dense<0.000000e+00> : vector<1x32xf32>
    %294 = tpu.matmul %292, %293, %cst_123 {dimension_numbers = #tpu.dot_dimension_numbers<[1], [0], [0], [1], [0, 0, 1, 1], [], []>} : vector<1x32xf32>, vector<32x32xf32>, vector<1x32xf32> -> vector<1x32xf32>
    %295 = arith.addf %291, %294 : vector<1x32xf32>
    %296 = vector.extract_strided_slice %122 {offsets = [12, 0], sizes = [1, 32], strides = [1, 1]} : vector<16x32xf32> to vector<1x32xf32>
    %c384 = arith.constant 384 : index
    %c0_124 = arith.constant 0 : index
    %297 = vector.load %arg20[%c384, %c0_124] : memref<640x32xf32, #tpu.memory_space<vmem>>, vector<32x32xf32>
    %cst_125 = arith.constant dense<0.000000e+00> : vector<1x32xf32>
    %298 = tpu.matmul %296, %297, %cst_125 {dimension_numbers = #tpu.dot_dimension_numbers<[1], [0], [0], [1], [0, 0, 1, 1], [], []>} : vector<1x32xf32>, vector<32x32xf32>, vector<1x32xf32> -> vector<1x32xf32>
    %299 = arith.addf %295, %298 : vector<1x32xf32>
    %300 = vector.extract_strided_slice %122 {offsets = [13, 0], sizes = [1, 32], strides = [1, 1]} : vector<16x32xf32> to vector<1x32xf32>
    %c416 = arith.constant 416 : index
    %c0_126 = arith.constant 0 : index
    %301 = vector.load %arg20[%c416, %c0_126] : memref<640x32xf32, #tpu.memory_space<vmem>>, vector<32x32xf32>
    %cst_127 = arith.constant dense<0.000000e+00> : vector<1x32xf32>
    %302 = tpu.matmul %300, %301, %cst_127 {dimension_numbers = #tpu.dot_dimension_numbers<[1], [0], [0], [1], [0, 0, 1, 1], [], []>} : vector<1x32xf32>, vector<32x32xf32>, vector<1x32xf32> -> vector<1x32xf32>
    %303 = arith.addf %299, %302 : vector<1x32xf32>
    %304 = vector.extract_strided_slice %122 {offsets = [14, 0], sizes = [1, 32], strides = [1, 1]} : vector<16x32xf32> to vector<1x32xf32>
    %c448 = arith.constant 448 : index
    %c0_128 = arith.constant 0 : index
    %305 = vector.load %arg20[%c448, %c0_128] : memref<640x32xf32, #tpu.memory_space<vmem>>, vector<32x32xf32>
    %cst_129 = arith.constant dense<0.000000e+00> : vector<1x32xf32>
    %306 = tpu.matmul %304, %305, %cst_129 {dimension_numbers = #tpu.dot_dimension_numbers<[1], [0], [0], [1], [0, 0, 1, 1], [], []>} : vector<1x32xf32>, vector<32x32xf32>, vector<1x32xf32> -> vector<1x32xf32>
    %307 = arith.addf %303, %306 : vector<1x32xf32>
    %308 = vector.extract_strided_slice %122 {offsets = [15, 0], sizes = [1, 32], strides = [1, 1]} : vector<16x32xf32> to vector<1x32xf32>
    %c480 = arith.constant 480 : index
    %c0_130 = arith.constant 0 : index
    %309 = vector.load %arg20[%c480, %c0_130] : memref<640x32xf32, #tpu.memory_space<vmem>>, vector<32x32xf32>
    %cst_131 = arith.constant dense<0.000000e+00> : vector<1x32xf32>
    %310 = tpu.matmul %308, %309, %cst_131 {dimension_numbers = #tpu.dot_dimension_numbers<[1], [0], [0], [1], [0, 0, 1, 1], [], []>} : vector<1x32xf32>, vector<32x32xf32>, vector<1x32xf32> -> vector<1x32xf32>
    %311 = arith.addf %307, %310 : vector<1x32xf32>
    %312 = vector.extract_strided_slice %246 {offsets = [0, 0], sizes = [1, 32], strides = [1, 1]} : vector<4x32xf32> to vector<1x32xf32>
    %c512 = arith.constant 512 : index
    %c0_132 = arith.constant 0 : index
    %313 = vector.load %arg20[%c512, %c0_132] : memref<640x32xf32, #tpu.memory_space<vmem>>, vector<32x32xf32>
    %cst_133 = arith.constant dense<0.000000e+00> : vector<1x32xf32>
    %314 = tpu.matmul %312, %313, %cst_133 {dimension_numbers = #tpu.dot_dimension_numbers<[1], [0], [0], [1], [0, 0, 1, 1], [], []>} : vector<1x32xf32>, vector<32x32xf32>, vector<1x32xf32> -> vector<1x32xf32>
    %315 = arith.addf %311, %314 : vector<1x32xf32>
    %316 = vector.extract_strided_slice %246 {offsets = [1, 0], sizes = [1, 32], strides = [1, 1]} : vector<4x32xf32> to vector<1x32xf32>
    %c544 = arith.constant 544 : index
    %c0_134 = arith.constant 0 : index
    %317 = vector.load %arg20[%c544, %c0_134] : memref<640x32xf32, #tpu.memory_space<vmem>>, vector<32x32xf32>
    %cst_135 = arith.constant dense<0.000000e+00> : vector<1x32xf32>
    %318 = tpu.matmul %316, %317, %cst_135 {dimension_numbers = #tpu.dot_dimension_numbers<[1], [0], [0], [1], [0, 0, 1, 1], [], []>} : vector<1x32xf32>, vector<32x32xf32>, vector<1x32xf32> -> vector<1x32xf32>
    %319 = arith.addf %315, %318 : vector<1x32xf32>
    %320 = vector.extract_strided_slice %246 {offsets = [2, 0], sizes = [1, 32], strides = [1, 1]} : vector<4x32xf32> to vector<1x32xf32>
    %c576 = arith.constant 576 : index
    %c0_136 = arith.constant 0 : index
    %321 = vector.load %arg20[%c576, %c0_136] : memref<640x32xf32, #tpu.memory_space<vmem>>, vector<32x32xf32>
    %cst_137 = arith.constant dense<0.000000e+00> : vector<1x32xf32>
    %322 = tpu.matmul %320, %321, %cst_137 {dimension_numbers = #tpu.dot_dimension_numbers<[1], [0], [0], [1], [0, 0, 1, 1], [], []>} : vector<1x32xf32>, vector<32x32xf32>, vector<1x32xf32> -> vector<1x32xf32>
    %323 = arith.addf %319, %322 : vector<1x32xf32>
    %324 = vector.extract_strided_slice %246 {offsets = [3, 0], sizes = [1, 32], strides = [1, 1]} : vector<4x32xf32> to vector<1x32xf32>
    %c608 = arith.constant 608 : index
    %c0_138 = arith.constant 0 : index
    %325 = vector.load %arg20[%c608, %c0_138] : memref<640x32xf32, #tpu.memory_space<vmem>>, vector<32x32xf32>
    %cst_139 = arith.constant dense<0.000000e+00> : vector<1x32xf32>
    %326 = tpu.matmul %324, %325, %cst_139 {dimension_numbers = #tpu.dot_dimension_numbers<[1], [0], [0], [1], [0, 0, 1, 1], [], []>} : vector<1x32xf32>, vector<32x32xf32>, vector<1x32xf32> -> vector<1x32xf32>
    %327 = arith.addf %323, %326 : vector<1x32xf32>
    %cst_140 = arith.constant 0.000000e+00 : f32
    %328 = vector.broadcast %cst_140 : f32 to vector<1x32xf32>
    %329 = arith.maximumf %327, %328 : vector<1x32xf32>
    %c0_141 = arith.constant 0 : index
    %c0_142 = arith.constant 0 : index
    %330 = vector.load %arg22[%c0_141, %c0_142] : memref<32x2xf32, #tpu.memory_space<vmem>>, vector<32x2xf32>
    %cst_143 = arith.constant dense<0.000000e+00> : vector<1x2xf32>
    %331 = tpu.matmul %329, %330, %cst_143 {dimension_numbers = #tpu.dot_dimension_numbers<[1], [0], [0], [1], [0, 0, 1, 1], [], []>} : vector<1x32xf32>, vector<32x2xf32>, vector<1x2xf32> -> vector<1x2xf32>
    %c0_144 = arith.constant 0 : index
    %c0_145 = arith.constant 0 : index
    %332 = vector.load %arg23[%c0_144, %c0_145] : memref<1x2xf32, #tpu.memory_space<vmem>>, vector<1x2xf32>
    %333 = arith.addf %331, %332 : vector<1x2xf32>
    %c0_146 = arith.constant 0 : index
    %c0_147 = arith.constant 0 : index
    %c0_148 = arith.constant 0 : index
    %334 = vector.load %arg24[%c0_146, %c0_147, %c0_148] : memref<2x1x2xf32, #tpu.memory_space<vmem>>, vector<1x1x2xf32>
    %335 = vector.shape_cast %334 : vector<1x1x2xf32> to vector<1x2xf32>
    %336 = vector.shape_cast %333 : vector<1x2xf32> to vector<1x1x2xf32>
    tpu.vector_store %arg24[%c0_146, %c0_147, %c0_148], %336 {strides = array<i32>} : memref<2x1x2xf32, #tpu.memory_space<vmem>>, vector<1x1x2xf32>,
    %337 = vector.extract_strided_slice %12 {offsets = [16, 0], sizes = [16, 32], strides = [1, 1]} : vector<32x32xf32> to vector<16x32xf32>
    %c0_149 = arith.constant 0 : index
    %c0_150 = arith.constant 0 : index
    %338 = vector.load %arg8[%c0_149, %c0_150] : memref<32x96xf32, #tpu.memory_space<vmem>>, vector<32x96xf32>
    %c0_151 = arith.constant 0 : index
    %c0_152 = arith.constant 0 : index
    %339 = vector.load %arg9[%c0_151, %c0_152] : memref<1x96xf32, #tpu.memory_space<vmem>>, vector<1x96xf32>
    %c0_153 = arith.constant 0 : index
    %c0_154 = arith.constant 0 : index
    %340 = vector.load %arg10[%c0_153, %c0_154] : memref<32x32xf32, #tpu.memory_space<vmem>>, vector<32x32xf32>
    %c0_155 = arith.constant 0 : index
    %c0_156 = arith.constant 0 : index
    %341 = vector.load %arg11[%c0_155, %c0_156] : memref<1x32xf32, #tpu.memory_space<vmem>>, vector<1x32xf32>
    %cst_157 = arith.constant dense<0.000000e+00> : vector<16xf32>
    %342 = vector.multi_reduction <add>, %337, %cst_157 [1] : vector<16x32xf32> to vector<16xf32>
    %343 = vector.shape_cast %342 : vector<16xf32> to vector<16x1xf32>
    %cst_158 = arith.constant 3.200000e+01 : f32
    %344 = vector.broadcast %cst_158 : f32 to vector<16x1xf32>
    %345 = arith.divf %343, %344 : vector<16x1xf32>
    %346 = vector.broadcast %345 : vector<16x1xf32> to vector<16x32xf32>
    %347 = arith.subf %337, %346 : vector<16x32xf32>
    %348 = arith.mulf %347, %347 : vector<16x32xf32>
    %cst_159 = arith.constant dense<0.000000e+00> : vector<16xf32>
    %349 = vector.multi_reduction <add>, %348, %cst_159 [1] : vector<16x32xf32> to vector<16xf32>
    %350 = vector.shape_cast %349 : vector<16xf32> to vector<16x1xf32>
    %cst_160 = arith.constant 3.200000e+01 : f32
    %351 = vector.broadcast %cst_160 : f32 to vector<16x1xf32>
    %352 = arith.divf %350, %351 : vector<16x1xf32>
    %353 = vector.broadcast %345 : vector<16x1xf32> to vector<16x32xf32>
    %354 = arith.subf %337, %353 : vector<16x32xf32>
    %cst_161 = arith.constant 9.99999974E-6 : f32
    %355 = vector.broadcast %cst_161 : f32 to vector<16x1xf32>
    %356 = arith.addf %352, %355 : vector<16x1xf32>
    %357 = math.rsqrt %356 : vector<16x1xf32>
    %358 = vector.broadcast %357 : vector<16x1xf32> to vector<16x32xf32>
    %359 = arith.mulf %354, %358 : vector<16x32xf32>
    %cst_162 = arith.constant dense<0.000000e+00> : vector<16x96xf32>
    %360 = tpu.matmul %359, %338, %cst_162 {dimension_numbers = #tpu.dot_dimension_numbers<[1], [0], [0], [1], [0, 0, 1, 1], [], []>} : vector<16x32xf32>, vector<32x96xf32>, vector<16x96xf32> -> vector<16x96xf32>
    %361 = vector.broadcast %339 : vector<1x96xf32> to vector<16x96xf32>
    %362 = arith.addf %360, %361 : vector<16x96xf32>
    %363 = vector.extract_strided_slice %362 {offsets = [0, 0], sizes = [16, 32], strides = [1, 1]} : vector<16x96xf32> to vector<16x32xf32>
    %364 = vector.extract_strided_slice %362 {offsets = [0, 32], sizes = [16, 32], strides = [1, 1]} : vector<16x96xf32> to vector<16x32xf32>
    %365 = vector.extract_strided_slice %362 {offsets = [0, 64], sizes = [16, 32], strides = [1, 1]} : vector<16x96xf32> to vector<16x32xf32>
    %366 = tpu.iota {dimensions = array<i32: 0>} : vector<16x16xi32>
    %367 = tpu.iota {dimensions = array<i32: 1>} : vector<16x16xi32>
    %368 = arith.cmpi ne, %366, %367 : vector<16x16xi32>
    %369 = arith.extui %368 : vector<16x16xi1> to vector<16x16xi32>
    %370 = arith.sitofp %369 : vector<16x16xi32> to vector<16x16xf32>
    %cst_163 = arith.constant 0.000000e+00 : f32
    %371 = vector.broadcast %cst_163 : f32 to vector<16x32xf32>
    %372 = vector.extract_strided_slice %363 {offsets = [0, 0], sizes = [16, 8], strides = [1, 1]} : vector<16x32xf32> to vector<16x8xf32>
    %373 = vector.extract_strided_slice %364 {offsets = [0, 0], sizes = [16, 8], strides = [1, 1]} : vector<16x32xf32> to vector<16x8xf32>
    %374 = vector.extract_strided_slice %365 {offsets = [0, 0], sizes = [16, 8], strides = [1, 1]} : vector<16x32xf32> to vector<16x8xf32>
    %cst_164 = arith.constant dense<0.000000e+00> : vector<16x16xf32>
    %375 = tpu.matmul %372, %373, %cst_164 {dimension_numbers = #tpu.dot_dimension_numbers<[1], [1], [0], [0], [0, 0, 1, 0], [], []>} : vector<16x8xf32>, vector<16x8xf32>, vector<16x16xf32> -> vector<16x16xf32>
    %376 = arith.mulf %375, %370 : vector<16x16xf32>
    %cst_165 = arith.constant dense<0xFF800000> : vector<16xf32>
    %377 = vector.multi_reduction <maximumf>, %376, %cst_165 [1] : vector<16x16xf32> to vector<16xf32>
    %378 = vector.shape_cast %377 : vector<16xf32> to vector<16x1xf32>
    %379 = vector.broadcast %378 : vector<16x1xf32> to vector<16x16xf32>
    %380 = arith.subf %376, %379 : vector<16x16xf32>
    %381 = math.exp %380 : vector<16x16xf32>
    %cst_166 = arith.constant dense<0.000000e+00> : vector<16xf32>
    %382 = vector.multi_reduction <add>, %381, %cst_166 [1] : vector<16x16xf32> to vector<16xf32>
    %383 = vector.shape_cast %382 : vector<16xf32> to vector<16x1xf32>
    %384 = vector.broadcast %383 : vector<16x1xf32> to vector<16x16xf32>
    %385 = arith.divf %381, %384 : vector<16x16xf32>
    %cst_167 = arith.constant dense<0.000000e+00> : vector<16x8xf32>
    %386 = tpu.matmul %385, %374, %cst_167 {dimension_numbers = #tpu.dot_dimension_numbers<[1], [0], [0], [1], [0, 0, 1, 1], [], []>} : vector<16x16xf32>, vector<16x8xf32>, vector<16x8xf32> -> vector<16x8xf32>
    %387 = vector.extract_strided_slice %340 {offsets = [0, 0], sizes = [8, 32], strides = [1, 1]} : vector<32x32xf32> to vector<8x32xf32>
    %cst_168 = arith.constant dense<0.000000e+00> : vector<16x32xf32>
    %388 = tpu.matmul %386, %387, %cst_168 {dimension_numbers = #tpu.dot_dimension_numbers<[1], [0], [0], [1], [0, 0, 1, 1], [], []>} : vector<16x8xf32>, vector<8x32xf32>, vector<16x32xf32> -> vector<16x32xf32>
    %389 = arith.addf %371, %388 : vector<16x32xf32>
    %390 = vector.extract_strided_slice %363 {offsets = [0, 8], sizes = [16, 8], strides = [1, 1]} : vector<16x32xf32> to vector<16x8xf32>
    %391 = vector.extract_strided_slice %364 {offsets = [0, 8], sizes = [16, 8], strides = [1, 1]} : vector<16x32xf32> to vector<16x8xf32>
    %392 = vector.extract_strided_slice %365 {offsets = [0, 8], sizes = [16, 8], strides = [1, 1]} : vector<16x32xf32> to vector<16x8xf32>
    %cst_169 = arith.constant dense<0.000000e+00> : vector<16x16xf32>
    %393 = tpu.matmul %390, %391, %cst_169 {dimension_numbers = #tpu.dot_dimension_numbers<[1], [1], [0], [0], [0, 0, 1, 0], [], []>} : vector<16x8xf32>, vector<16x8xf32>, vector<16x16xf32> -> vector<16x16xf32>
    %394 = arith.mulf %393, %370 : vector<16x16xf32>
    %cst_170 = arith.constant dense<0xFF800000> : vector<16xf32>
    %395 = vector.multi_reduction <maximumf>, %394, %cst_170 [1] : vector<16x16xf32> to vector<16xf32>
    %396 = vector.shape_cast %395 : vector<16xf32> to vector<16x1xf32>
    %397 = vector.broadcast %396 : vector<16x1xf32> to vector<16x16xf32>
    %398 = arith.subf %394, %397 : vector<16x16xf32>
    %399 = math.exp %398 : vector<16x16xf32>
    %cst_171 = arith.constant dense<0.000000e+00> : vector<16xf32>
    %400 = vector.multi_reduction <add>, %399, %cst_171 [1] : vector<16x16xf32> to vector<16xf32>
    %401 = vector.shape_cast %400 : vector<16xf32> to vector<16x1xf32>
    %402 = vector.broadcast %401 : vector<16x1xf32> to vector<16x16xf32>
    %403 = arith.divf %399, %402 : vector<16x16xf32>
    %cst_172 = arith.constant dense<0.000000e+00> : vector<16x8xf32>
    %404 = tpu.matmul %403, %392, %cst_172 {dimension_numbers = #tpu.dot_dimension_numbers<[1], [0], [0], [1], [0, 0, 1, 1], [], []>} : vector<16x16xf32>, vector<16x8xf32>, vector<16x8xf32> -> vector<16x8xf32>
    %405 = vector.extract_strided_slice %340 {offsets = [8, 0], sizes = [8, 32], strides = [1, 1]} : vector<32x32xf32> to vector<8x32xf32>
    %cst_173 = arith.constant dense<0.000000e+00> : vector<16x32xf32>
    %406 = tpu.matmul %404, %405, %cst_173 {dimension_numbers = #tpu.dot_dimension_numbers<[1], [0], [0], [1], [0, 0, 1, 1], [], []>} : vector<16x8xf32>, vector<8x32xf32>, vector<16x32xf32> -> vector<16x32xf32>
    %407 = arith.addf %389, %406 : vector<16x32xf32>
    %408 = vector.extract_strided_slice %363 {offsets = [0, 16], sizes = [16, 8], strides = [1, 1]} : vector<16x32xf32> to vector<16x8xf32>
    %409 = vector.extract_strided_slice %364 {offsets = [0, 16], sizes = [16, 8], strides = [1, 1]} : vector<16x32xf32> to vector<16x8xf32>
    %410 = vector.extract_strided_slice %365 {offsets = [0, 16], sizes = [16, 8], strides = [1, 1]} : vector<16x32xf32> to vector<16x8xf32>
    %cst_174 = arith.constant dense<0.000000e+00> : vector<16x16xf32>
    %411 = tpu.matmul %408, %409, %cst_174 {dimension_numbers = #tpu.dot_dimension_numbers<[1], [1], [0], [0], [0, 0, 1, 0], [], []>} : vector<16x8xf32>, vector<16x8xf32>, vector<16x16xf32> -> vector<16x16xf32>
    %412 = arith.mulf %411, %370 : vector<16x16xf32>
    %cst_175 = arith.constant dense<0xFF800000> : vector<16xf32>
    %413 = vector.multi_reduction <maximumf>, %412, %cst_175 [1] : vector<16x16xf32> to vector<16xf32>
    %414 = vector.shape_cast %413 : vector<16xf32> to vector<16x1xf32>
    %415 = vector.broadcast %414 : vector<16x1xf32> to vector<16x16xf32>
    %416 = arith.subf %412, %415 : vector<16x16xf32>
    %417 = math.exp %416 : vector<16x16xf32>
    %cst_176 = arith.constant dense<0.000000e+00> : vector<16xf32>
    %418 = vector.multi_reduction <add>, %417, %cst_176 [1] : vector<16x16xf32> to vector<16xf32>
    %419 = vector.shape_cast %418 : vector<16xf32> to vector<16x1xf32>
    %420 = vector.broadcast %419 : vector<16x1xf32> to vector<16x16xf32>
    %421 = arith.divf %417, %420 : vector<16x16xf32>
    %cst_177 = arith.constant dense<0.000000e+00> : vector<16x8xf32>
    %422 = tpu.matmul %421, %410, %cst_177 {dimension_numbers = #tpu.dot_dimension_numbers<[1], [0], [0], [1], [0, 0, 1, 1], [], []>} : vector<16x16xf32>, vector<16x8xf32>, vector<16x8xf32> -> vector<16x8xf32>
    %423 = vector.extract_strided_slice %340 {offsets = [16, 0], sizes = [8, 32], strides = [1, 1]} : vector<32x32xf32> to vector<8x32xf32>
    %cst_178 = arith.constant dense<0.000000e+00> : vector<16x32xf32>
    %424 = tpu.matmul %422, %423, %cst_178 {dimension_numbers = #tpu.dot_dimension_numbers<[1], [0], [0], [1], [0, 0, 1, 1], [], []>} : vector<16x8xf32>, vector<8x32xf32>, vector<16x32xf32> -> vector<16x32xf32>
    %425 = arith.addf %407, %424 : vector<16x32xf32>
    %426 = vector.extract_strided_slice %363 {offsets = [0, 24], sizes = [16, 8], strides = [1, 1]} : vector<16x32xf32> to vector<16x8xf32>
    %427 = vector.extract_strided_slice %364 {offsets = [0, 24], sizes = [16, 8], strides = [1, 1]} : vector<16x32xf32> to vector<16x8xf32>
    %428 = vector.extract_strided_slice %365 {offsets = [0, 24], sizes = [16, 8], strides = [1, 1]} : vector<16x32xf32> to vector<16x8xf32>
    %cst_179 = arith.constant dense<0.000000e+00> : vector<16x16xf32>
    %429 = tpu.matmul %426, %427, %cst_179 {dimension_numbers = #tpu.dot_dimension_numbers<[1], [1], [0], [0], [0, 0, 1, 0], [], []>} : vector<16x8xf32>, vector<16x8xf32>, vector<16x16xf32> -> vector<16x16xf32>
    %430 = arith.mulf %429, %370 : vector<16x16xf32>
    %cst_180 = arith.constant dense<0xFF800000> : vector<16xf32>
    %431 = vector.multi_reduction <maximumf>, %430, %cst_180 [1] : vector<16x16xf32> to vector<16xf32>
    %432 = vector.shape_cast %431 : vector<16xf32> to vector<16x1xf32>
    %433 = vector.broadcast %432 : vector<16x1xf32> to vector<16x16xf32>
    %434 = arith.subf %430, %433 : vector<16x16xf32>
    %435 = math.exp %434 : vector<16x16xf32>
    %cst_181 = arith.constant dense<0.000000e+00> : vector<16xf32>
    %436 = vector.multi_reduction <add>, %435, %cst_181 [1] : vector<16x16xf32> to vector<16xf32>
    %437 = vector.shape_cast %436 : vector<16xf32> to vector<16x1xf32>
    %438 = vector.broadcast %437 : vector<16x1xf32> to vector<16x16xf32>
    %439 = arith.divf %435, %438 : vector<16x16xf32>
    %cst_182 = arith.constant dense<0.000000e+00> : vector<16x8xf32>
    %440 = tpu.matmul %439, %428, %cst_182 {dimension_numbers = #tpu.dot_dimension_numbers<[1], [0], [0], [1], [0, 0, 1, 1], [], []>} : vector<16x16xf32>, vector<16x8xf32>, vector<16x8xf32> -> vector<16x8xf32>
    %441 = vector.extract_strided_slice %340 {offsets = [24, 0], sizes = [8, 32], strides = [1, 1]} : vector<32x32xf32> to vector<8x32xf32>
    %cst_183 = arith.constant dense<0.000000e+00> : vector<16x32xf32>
    %442 = tpu.matmul %440, %441, %cst_183 {dimension_numbers = #tpu.dot_dimension_numbers<[1], [0], [0], [1], [0, 0, 1, 1], [], []>} : vector<16x8xf32>, vector<8x32xf32>, vector<16x32xf32> -> vector<16x32xf32>
    %443 = arith.addf %425, %442 : vector<16x32xf32>
    %444 = vector.broadcast %341 : vector<1x32xf32> to vector<16x32xf32>
    %445 = arith.addf %443, %444 : vector<16x32xf32>
    %446 = arith.addf %445, %337 : vector<16x32xf32>
    %c1 = arith.constant 1 : index
    %c0_184 = arith.constant 0 : index
    %c0_185 = arith.constant 0 : index
    %447 = vector.load %arg2[%c1, %c0_184, %c0_185] : memref<2x4x16xf32, #tpu.memory_space<vmem>>, vector<1x4x16xf32>
    %448 = vector.shape_cast %447 : vector<1x4x16xf32> to vector<4x16xf32>
    %c0_186 = arith.constant 0 : index
    %c0_187 = arith.constant 0 : index
    %449 = vector.load %arg12[%c0_186, %c0_187] : memref<16x128xf32, #tpu.memory_space<vmem>>, vector<16x128xf32>
    %cst_188 = arith.constant dense<0.000000e+00> : vector<4x128xf32>
    %450 = tpu.matmul %448, %449, %cst_188 {dimension_numbers = #tpu.dot_dimension_numbers<[1], [0], [0], [1], [0, 0, 1, 1], [], []>} : vector<4x16xf32>, vector<16x128xf32>, vector<4x128xf32> -> vector<4x128xf32>
    %c0_189 = arith.constant 0 : index
    %c0_190 = arith.constant 0 : index
    %451 = vector.load %arg13[%c0_189, %c0_190] : memref<1x128xf32, #tpu.memory_space<vmem>>, vector<1x128xf32>
    %452 = vector.broadcast %451 : vector<1x128xf32> to vector<4x128xf32>
    %453 = arith.addf %450, %452 : vector<4x128xf32>
    %cst_191 = arith.constant 0.000000e+00 : f32
    %454 = vector.broadcast %cst_191 : f32 to vector<4x128xf32>
    %455 = arith.maximumf %453, %454 : vector<4x128xf32>
    %c0_192 = arith.constant 0 : index
    %c0_193 = arith.constant 0 : index
    %456 = vector.load %arg3[%c0_192, %c0_193] : memref<4x128xf32, #tpu.memory_space<vmem>>, vector<4x128xf32>
    %457 = arith.mulf %455, %456 : vector<4x128xf32>
    %c0_194 = arith.constant 0 : index
    %c0_195 = arith.constant 0 : index
    %458 = vector.load %arg14[%c0_194, %c0_195] : memref<128x32xf32, #tpu.memory_space<vmem>>, vector<128x32xf32>
    %cst_196 = arith.constant dense<0.000000e+00> : vector<4x32xf32>
    %459 = tpu.matmul %457, %458, %cst_196 {dimension_numbers = #tpu.dot_dimension_numbers<[1], [0], [0], [1], [0, 0, 1, 1], [], []>} : vector<4x128xf32>, vector<128x32xf32>, vector<4x32xf32> -> vector<4x32xf32>
    %c0_197 = arith.constant 0 : index
    %c0_198 = arith.constant 0 : index
    %460 = vector.load %arg15[%c0_197, %c0_198] : memref<4x32xf32, #tpu.memory_space<vmem>>, vector<4x32xf32>
    %461 = arith.addf %459, %460 : vector<4x32xf32>
    %c0_199 = arith.constant 0 : index
    %c0_200 = arith.constant 0 : index
    %462 = vector.load %arg16[%c0_199, %c0_200] : memref<32x96xf32, #tpu.memory_space<vmem>>, vector<32x96xf32>
    %c0_201 = arith.constant 0 : index
    %c0_202 = arith.constant 0 : index
    %463 = vector.load %arg17[%c0_201, %c0_202] : memref<1x96xf32, #tpu.memory_space<vmem>>, vector<1x96xf32>
    %c0_203 = arith.constant 0 : index
    %c0_204 = arith.constant 0 : index
    %464 = vector.load %arg18[%c0_203, %c0_204] : memref<32x32xf32, #tpu.memory_space<vmem>>, vector<32x32xf32>
    %c0_205 = arith.constant 0 : index
    %c0_206 = arith.constant 0 : index
    %465 = vector.load %arg19[%c0_205, %c0_206] : memref<1x32xf32, #tpu.memory_space<vmem>>, vector<1x32xf32>
    %cst_207 = arith.constant dense<0.000000e+00> : vector<4xf32>
    %466 = vector.multi_reduction <add>, %461, %cst_207 [1] : vector<4x32xf32> to vector<4xf32>
    %467 = vector.shape_cast %466 : vector<4xf32> to vector<4x1xf32>
    %cst_208 = arith.constant 3.200000e+01 : f32
    %468 = vector.broadcast %cst_208 : f32 to vector<4x1xf32>
    %469 = arith.divf %467, %468 : vector<4x1xf32>
    %470 = vector.broadcast %469 : vector<4x1xf32> to vector<4x32xf32>
    %471 = arith.subf %461, %470 : vector<4x32xf32>
    %472 = arith.mulf %471, %471 : vector<4x32xf32>
    %cst_209 = arith.constant dense<0.000000e+00> : vector<4xf32>
    %473 = vector.multi_reduction <add>, %472, %cst_209 [1] : vector<4x32xf32> to vector<4xf32>
    %474 = vector.shape_cast %473 : vector<4xf32> to vector<4x1xf32>
    %cst_210 = arith.constant 3.200000e+01 : f32
    %475 = vector.broadcast %cst_210 : f32 to vector<4x1xf32>
    %476 = arith.divf %474, %475 : vector<4x1xf32>
    %477 = vector.broadcast %469 : vector<4x1xf32> to vector<4x32xf32>
    %478 = arith.subf %461, %477 : vector<4x32xf32>
    %cst_211 = arith.constant 9.99999974E-6 : f32
    %479 = vector.broadcast %cst_211 : f32 to vector<4x1xf32>
    %480 = arith.addf %476, %479 : vector<4x1xf32>
    %481 = math.rsqrt %480 : vector<4x1xf32>
    %482 = vector.broadcast %481 : vector<4x1xf32> to vector<4x32xf32>
    %483 = arith.mulf %478, %482 : vector<4x32xf32>
    %cst_212 = arith.constant dense<0.000000e+00> : vector<4x96xf32>
    %484 = tpu.matmul %483, %462, %cst_212 {dimension_numbers = #tpu.dot_dimension_numbers<[1], [0], [0], [1], [0, 0, 1, 1], [], []>} : vector<4x32xf32>, vector<32x96xf32>, vector<4x96xf32> -> vector<4x96xf32>
    %485 = vector.broadcast %463 : vector<1x96xf32> to vector<4x96xf32>
    %486 = arith.addf %484, %485 : vector<4x96xf32>
    %487 = vector.extract_strided_slice %486 {offsets = [0, 0], sizes = [4, 32], strides = [1, 1]} : vector<4x96xf32> to vector<4x32xf32>
    %488 = vector.extract_strided_slice %486 {offsets = [0, 32], sizes = [4, 32], strides = [1, 1]} : vector<4x96xf32> to vector<4x32xf32>
    %489 = vector.extract_strided_slice %486 {offsets = [0, 64], sizes = [4, 32], strides = [1, 1]} : vector<4x96xf32> to vector<4x32xf32>
    %490 = tpu.iota {dimensions = array<i32: 0>} : vector<4x4xi32>
    %491 = tpu.iota {dimensions = array<i32: 1>} : vector<4x4xi32>
    %492 = arith.cmpi ne, %490, %491 : vector<4x4xi32>
    %493 = arith.extui %492 : vector<4x4xi1> to vector<4x4xi32>
    %494 = arith.sitofp %493 : vector<4x4xi32> to vector<4x4xf32>
    %cst_213 = arith.constant 0.000000e+00 : f32
    %495 = vector.broadcast %cst_213 : f32 to vector<4x32xf32>
    %496 = vector.extract_strided_slice %487 {offsets = [0, 0], sizes = [4, 8], strides = [1, 1]} : vector<4x32xf32> to vector<4x8xf32>
    %497 = vector.extract_strided_slice %488 {offsets = [0, 0], sizes = [4, 8], strides = [1, 1]} : vector<4x32xf32> to vector<4x8xf32>
    %498 = vector.extract_strided_slice %489 {offsets = [0, 0], sizes = [4, 8], strides = [1, 1]} : vector<4x32xf32> to vector<4x8xf32>
    %cst_214 = arith.constant dense<0.000000e+00> : vector<4x4xf32>
    %499 = tpu.matmul %496, %497, %cst_214 {dimension_numbers = #tpu.dot_dimension_numbers<[1], [1], [0], [0], [0, 0, 1, 0], [], []>} : vector<4x8xf32>, vector<4x8xf32>, vector<4x4xf32> -> vector<4x4xf32>
    %500 = arith.mulf %499, %494 : vector<4x4xf32>
    %cst_215 = arith.constant dense<0xFF800000> : vector<4xf32>
    %501 = vector.multi_reduction <maximumf>, %500, %cst_215 [1] : vector<4x4xf32> to vector<4xf32>
    %502 = vector.shape_cast %501 : vector<4xf32> to vector<4x1xf32>
    %503 = vector.broadcast %502 : vector<4x1xf32> to vector<4x4xf32>
    %504 = arith.subf %500, %503 : vector<4x4xf32>
    %505 = math.exp %504 : vector<4x4xf32>
    %cst_216 = arith.constant dense<0.000000e+00> : vector<4xf32>
    %506 = vector.multi_reduction <add>, %505, %cst_216 [1] : vector<4x4xf32> to vector<4xf32>
    %507 = vector.shape_cast %506 : vector<4xf32> to vector<4x1xf32>
    %508 = vector.broadcast %507 : vector<4x1xf32> to vector<4x4xf32>
    %509 = arith.divf %505, %508 : vector<4x4xf32>
    %cst_217 = arith.constant dense<0.000000e+00> : vector<4x8xf32>
    %510 = tpu.matmul %509, %498, %cst_217 {dimension_numbers = #tpu.dot_dimension_numbers<[1], [0], [0], [1], [0, 0, 1, 1], [], []>} : vector<4x4xf32>, vector<4x8xf32>, vector<4x8xf32> -> vector<4x8xf32>
    %511 = vector.extract_strided_slice %464 {offsets = [0, 0], sizes = [8, 32], strides = [1, 1]} : vector<32x32xf32> to vector<8x32xf32>
    %cst_218 = arith.constant dense<0.000000e+00> : vector<4x32xf32>
    %512 = tpu.matmul %510, %511, %cst_218 {dimension_numbers = #tpu.dot_dimension_numbers<[1], [0], [0], [1], [0, 0, 1, 1], [], []>} : vector<4x8xf32>, vector<8x32xf32>, vector<4x32xf32> -> vector<4x32xf32>
    %513 = arith.addf %495, %512 : vector<4x32xf32>
    %514 = vector.extract_strided_slice %487 {offsets = [0, 8], sizes = [4, 8], strides = [1, 1]} : vector<4x32xf32> to vector<4x8xf32>
    %515 = vector.extract_strided_slice %488 {offsets = [0, 8], sizes = [4, 8], strides = [1, 1]} : vector<4x32xf32> to vector<4x8xf32>
    %516 = vector.extract_strided_slice %489 {offsets = [0, 8], sizes = [4, 8], strides = [1, 1]} : vector<4x32xf32> to vector<4x8xf32>
    %cst_219 = arith.constant dense<0.000000e+00> : vector<4x4xf32>
    %517 = tpu.matmul %514, %515, %cst_219 {dimension_numbers = #tpu.dot_dimension_numbers<[1], [1], [0], [0], [0, 0, 1, 0], [], []>} : vector<4x8xf32>, vector<4x8xf32>, vector<4x4xf32> -> vector<4x4xf32>
    %518 = arith.mulf %517, %494 : vector<4x4xf32>
    %cst_220 = arith.constant dense<0xFF800000> : vector<4xf32>
    %519 = vector.multi_reduction <maximumf>, %518, %cst_220 [1] : vector<4x4xf32> to vector<4xf32>
    %520 = vector.shape_cast %519 : vector<4xf32> to vector<4x1xf32>
    %521 = vector.broadcast %520 : vector<4x1xf32> to vector<4x4xf32>
    %522 = arith.subf %518, %521 : vector<4x4xf32>
    %523 = math.exp %522 : vector<4x4xf32>
    %cst_221 = arith.constant dense<0.000000e+00> : vector<4xf32>
    %524 = vector.multi_reduction <add>, %523, %cst_221 [1] : vector<4x4xf32> to vector<4xf32>
    %525 = vector.shape_cast %524 : vector<4xf32> to vector<4x1xf32>
    %526 = vector.broadcast %525 : vector<4x1xf32> to vector<4x4xf32>
    %527 = arith.divf %523, %526 : vector<4x4xf32>
    %cst_222 = arith.constant dense<0.000000e+00> : vector<4x8xf32>
    %528 = tpu.matmul %527, %516, %cst_222 {dimension_numbers = #tpu.dot_dimension_numbers<[1], [0], [0], [1], [0, 0, 1, 1], [], []>} : vector<4x4xf32>, vector<4x8xf32>, vector<4x8xf32> -> vector<4x8xf32>
    %529 = vector.extract_strided_slice %464 {offsets = [8, 0], sizes = [8, 32], strides = [1, 1]} : vector<32x32xf32> to vector<8x32xf32>
    %cst_223 = arith.constant dense<0.000000e+00> : vector<4x32xf32>
    %530 = tpu.matmul %528, %529, %cst_223 {dimension_numbers = #tpu.dot_dimension_numbers<[1], [0], [0], [1], [0, 0, 1, 1], [], []>} : vector<4x8xf32>, vector<8x32xf32>, vector<4x32xf32> -> vector<4x32xf32>
    %531 = arith.addf %513, %530 : vector<4x32xf32>
    %532 = vector.extract_strided_slice %487 {offsets = [0, 16], sizes = [4, 8], strides = [1, 1]} : vector<4x32xf32> to vector<4x8xf32>
    %533 = vector.extract_strided_slice %488 {offsets = [0, 16], sizes = [4, 8], strides = [1, 1]} : vector<4x32xf32> to vector<4x8xf32>
    %534 = vector.extract_strided_slice %489 {offsets = [0, 16], sizes = [4, 8], strides = [1, 1]} : vector<4x32xf32> to vector<4x8xf32>
    %cst_224 = arith.constant dense<0.000000e+00> : vector<4x4xf32>
    %535 = tpu.matmul %532, %533, %cst_224 {dimension_numbers = #tpu.dot_dimension_numbers<[1], [1], [0], [0], [0, 0, 1, 0], [], []>} : vector<4x8xf32>, vector<4x8xf32>, vector<4x4xf32> -> vector<4x4xf32>
    %536 = arith.mulf %535, %494 : vector<4x4xf32>
    %cst_225 = arith.constant dense<0xFF800000> : vector<4xf32>
    %537 = vector.multi_reduction <maximumf>, %536, %cst_225 [1] : vector<4x4xf32> to vector<4xf32>
    %538 = vector.shape_cast %537 : vector<4xf32> to vector<4x1xf32>
    %539 = vector.broadcast %538 : vector<4x1xf32> to vector<4x4xf32>
    %540 = arith.subf %536, %539 : vector<4x4xf32>
    %541 = math.exp %540 : vector<4x4xf32>
    %cst_226 = arith.constant dense<0.000000e+00> : vector<4xf32>
    %542 = vector.multi_reduction <add>, %541, %cst_226 [1] : vector<4x4xf32> to vector<4xf32>
    %543 = vector.shape_cast %542 : vector<4xf32> to vector<4x1xf32>
    %544 = vector.broadcast %543 : vector<4x1xf32> to vector<4x4xf32>
    %545 = arith.divf %541, %544 : vector<4x4xf32>
    %cst_227 = arith.constant dense<0.000000e+00> : vector<4x8xf32>
    %546 = tpu.matmul %545, %534, %cst_227 {dimension_numbers = #tpu.dot_dimension_numbers<[1], [0], [0], [1], [0, 0, 1, 1], [], []>} : vector<4x4xf32>, vector<4x8xf32>, vector<4x8xf32> -> vector<4x8xf32>
    %547 = vector.extract_strided_slice %464 {offsets = [16, 0], sizes = [8, 32], strides = [1, 1]} : vector<32x32xf32> to vector<8x32xf32>
    %cst_228 = arith.constant dense<0.000000e+00> : vector<4x32xf32>
    %548 = tpu.matmul %546, %547, %cst_228 {dimension_numbers = #tpu.dot_dimension_numbers<[1], [0], [0], [1], [0, 0, 1, 1], [], []>} : vector<4x8xf32>, vector<8x32xf32>, vector<4x32xf32> -> vector<4x32xf32>
    %549 = arith.addf %531, %548 : vector<4x32xf32>
    %550 = vector.extract_strided_slice %487 {offsets = [0, 24], sizes = [4, 8], strides = [1, 1]} : vector<4x32xf32> to vector<4x8xf32>
    %551 = vector.extract_strided_slice %488 {offsets = [0, 24], sizes = [4, 8], strides = [1, 1]} : vector<4x32xf32> to vector<4x8xf32>
    %552 = vector.extract_strided_slice %489 {offsets = [0, 24], sizes = [4, 8], strides = [1, 1]} : vector<4x32xf32> to vector<4x8xf32>
    %cst_229 = arith.constant dense<0.000000e+00> : vector<4x4xf32>
    %553 = tpu.matmul %550, %551, %cst_229 {dimension_numbers = #tpu.dot_dimension_numbers<[1], [1], [0], [0], [0, 0, 1, 0], [], []>} : vector<4x8xf32>, vector<4x8xf32>, vector<4x4xf32> -> vector<4x4xf32>
    %554 = arith.mulf %553, %494 : vector<4x4xf32>
    %cst_230 = arith.constant dense<0xFF800000> : vector<4xf32>
    %555 = vector.multi_reduction <maximumf>, %554, %cst_230 [1] : vector<4x4xf32> to vector<4xf32>
    %556 = vector.shape_cast %555 : vector<4xf32> to vector<4x1xf32>
    %557 = vector.broadcast %556 : vector<4x1xf32> to vector<4x4xf32>
    %558 = arith.subf %554, %557 : vector<4x4xf32>
    %559 = math.exp %558 : vector<4x4xf32>
    %cst_231 = arith.constant dense<0.000000e+00> : vector<4xf32>
    %560 = vector.multi_reduction <add>, %559, %cst_231 [1] : vector<4x4xf32> to vector<4xf32>
    %561 = vector.shape_cast %560 : vector<4xf32> to vector<4x1xf32>
    %562 = vector.broadcast %561 : vector<4x1xf32> to vector<4x4xf32>
    %563 = arith.divf %559, %562 : vector<4x4xf32>
    %cst_232 = arith.constant dense<0.000000e+00> : vector<4x8xf32>
    %564 = tpu.matmul %563, %552, %cst_232 {dimension_numbers = #tpu.dot_dimension_numbers<[1], [0], [0], [1], [0, 0, 1, 1], [], []>} : vector<4x4xf32>, vector<4x8xf32>, vector<4x8xf32> -> vector<4x8xf32>
    %565 = vector.extract_strided_slice %464 {offsets = [24, 0], sizes = [8, 32], strides = [1, 1]} : vector<32x32xf32> to vector<8x32xf32>
    %cst_233 = arith.constant dense<0.000000e+00> : vector<4x32xf32>
    %566 = tpu.matmul %564, %565, %cst_233 {dimension_numbers = #tpu.dot_dimension_numbers<[1], [0], [0], [1], [0, 0, 1, 1], [], []>} : vector<4x8xf32>, vector<8x32xf32>, vector<4x32xf32> -> vector<4x32xf32>
    %567 = arith.addf %549, %566 : vector<4x32xf32>
    %568 = vector.broadcast %465 : vector<1x32xf32> to vector<4x32xf32>
    %569 = arith.addf %567, %568 : vector<4x32xf32>
    %570 = arith.addf %569, %461 : vector<4x32xf32>
    %c0_234 = arith.constant 0 : index
    %c0_235 = arith.constant 0 : index
    %571 = vector.load %arg21[%c0_234, %c0_235] : memref<1x32xf32, #tpu.memory_space<vmem>>, vector<1x32xf32>
    %572 = vector.extract_strided_slice %446 {offsets = [0, 0], sizes = [1, 32], strides = [1, 1]} : vector<16x32xf32> to vector<1x32xf32>
    %c0_236 = arith.constant 0 : index
    %c0_237 = arith.constant 0 : index
    %573 = vector.load %arg20[%c0_236, %c0_237] : memref<640x32xf32, #tpu.memory_space<vmem>>, vector<32x32xf32>
    %cst_238 = arith.constant dense<0.000000e+00> : vector<1x32xf32>
    %574 = tpu.matmul %572, %573, %cst_238 {dimension_numbers = #tpu.dot_dimension_numbers<[1], [0], [0], [1], [0, 0, 1, 1], [], []>} : vector<1x32xf32>, vector<32x32xf32>, vector<1x32xf32> -> vector<1x32xf32>
    %575 = arith.addf %571, %574 : vector<1x32xf32>
    %576 = vector.extract_strided_slice %446 {offsets = [1, 0], sizes = [1, 32], strides = [1, 1]} : vector<16x32xf32> to vector<1x32xf32>
    %c32_239 = arith.constant 32 : index
    %c0_240 = arith.constant 0 : index
    %577 = vector.load %arg20[%c32_239, %c0_240] : memref<640x32xf32, #tpu.memory_space<vmem>>, vector<32x32xf32>
    %cst_241 = arith.constant dense<0.000000e+00> : vector<1x32xf32>
    %578 = tpu.matmul %576, %577, %cst_241 {dimension_numbers = #tpu.dot_dimension_numbers<[1], [0], [0], [1], [0, 0, 1, 1], [], []>} : vector<1x32xf32>, vector<32x32xf32>, vector<1x32xf32> -> vector<1x32xf32>
    %579 = arith.addf %575, %578 : vector<1x32xf32>
    %580 = vector.extract_strided_slice %446 {offsets = [2, 0], sizes = [1, 32], strides = [1, 1]} : vector<16x32xf32> to vector<1x32xf32>
    %c64_242 = arith.constant 64 : index
    %c0_243 = arith.constant 0 : index
    %581 = vector.load %arg20[%c64_242, %c0_243] : memref<640x32xf32, #tpu.memory_space<vmem>>, vector<32x32xf32>
    %cst_244 = arith.constant dense<0.000000e+00> : vector<1x32xf32>
    %582 = tpu.matmul %580, %581, %cst_244 {dimension_numbers = #tpu.dot_dimension_numbers<[1], [0], [0], [1], [0, 0, 1, 1], [], []>} : vector<1x32xf32>, vector<32x32xf32>, vector<1x32xf32> -> vector<1x32xf32>
    %583 = arith.addf %579, %582 : vector<1x32xf32>
    %584 = vector.extract_strided_slice %446 {offsets = [3, 0], sizes = [1, 32], strides = [1, 1]} : vector<16x32xf32> to vector<1x32xf32>
    %c96_245 = arith.constant 96 : index
    %c0_246 = arith.constant 0 : index
    %585 = vector.load %arg20[%c96_245, %c0_246] : memref<640x32xf32, #tpu.memory_space<vmem>>, vector<32x32xf32>
    %cst_247 = arith.constant dense<0.000000e+00> : vector<1x32xf32>
    %586 = tpu.matmul %584, %585, %cst_247 {dimension_numbers = #tpu.dot_dimension_numbers<[1], [0], [0], [1], [0, 0, 1, 1], [], []>} : vector<1x32xf32>, vector<32x32xf32>, vector<1x32xf32> -> vector<1x32xf32>
    %587 = arith.addf %583, %586 : vector<1x32xf32>
    %588 = vector.extract_strided_slice %446 {offsets = [4, 0], sizes = [1, 32], strides = [1, 1]} : vector<16x32xf32> to vector<1x32xf32>
    %c128_248 = arith.constant 128 : index
    %c0_249 = arith.constant 0 : index
    %589 = vector.load %arg20[%c128_248, %c0_249] : memref<640x32xf32, #tpu.memory_space<vmem>>, vector<32x32xf32>
    %cst_250 = arith.constant dense<0.000000e+00> : vector<1x32xf32>
    %590 = tpu.matmul %588, %589, %cst_250 {dimension_numbers = #tpu.dot_dimension_numbers<[1], [0], [0], [1], [0, 0, 1, 1], [], []>} : vector<1x32xf32>, vector<32x32xf32>, vector<1x32xf32> -> vector<1x32xf32>
    %591 = arith.addf %587, %590 : vector<1x32xf32>
    %592 = vector.extract_strided_slice %446 {offsets = [5, 0], sizes = [1, 32], strides = [1, 1]} : vector<16x32xf32> to vector<1x32xf32>
    %c160_251 = arith.constant 160 : index
    %c0_252 = arith.constant 0 : index
    %593 = vector.load %arg20[%c160_251, %c0_252] : memref<640x32xf32, #tpu.memory_space<vmem>>, vector<32x32xf32>
    %cst_253 = arith.constant dense<0.000000e+00> : vector<1x32xf32>
    %594 = tpu.matmul %592, %593, %cst_253 {dimension_numbers = #tpu.dot_dimension_numbers<[1], [0], [0], [1], [0, 0, 1, 1], [], []>} : vector<1x32xf32>, vector<32x32xf32>, vector<1x32xf32> -> vector<1x32xf32>
    %595 = arith.addf %591, %594 : vector<1x32xf32>
    %596 = vector.extract_strided_slice %446 {offsets = [6, 0], sizes = [1, 32], strides = [1, 1]} : vector<16x32xf32> to vector<1x32xf32>
    %c192_254 = arith.constant 192 : index
    %c0_255 = arith.constant 0 : index
    %597 = vector.load %arg20[%c192_254, %c0_255] : memref<640x32xf32, #tpu.memory_space<vmem>>, vector<32x32xf32>
    %cst_256 = arith.constant dense<0.000000e+00> : vector<1x32xf32>
    %598 = tpu.matmul %596, %597, %cst_256 {dimension_numbers = #tpu.dot_dimension_numbers<[1], [0], [0], [1], [0, 0, 1, 1], [], []>} : vector<1x32xf32>, vector<32x32xf32>, vector<1x32xf32> -> vector<1x32xf32>
    %599 = arith.addf %595, %598 : vector<1x32xf32>
    %600 = vector.extract_strided_slice %446 {offsets = [7, 0], sizes = [1, 32], strides = [1, 1]} : vector<16x32xf32> to vector<1x32xf32>
    %c224_257 = arith.constant 224 : index
    %c0_258 = arith.constant 0 : index
    %601 = vector.load %arg20[%c224_257, %c0_258] : memref<640x32xf32, #tpu.memory_space<vmem>>, vector<32x32xf32>
    %cst_259 = arith.constant dense<0.000000e+00> : vector<1x32xf32>
    %602 = tpu.matmul %600, %601, %cst_259 {dimension_numbers = #tpu.dot_dimension_numbers<[1], [0], [0], [1], [0, 0, 1, 1], [], []>} : vector<1x32xf32>, vector<32x32xf32>, vector<1x32xf32> -> vector<1x32xf32>
    %603 = arith.addf %599, %602 : vector<1x32xf32>
    %604 = vector.extract_strided_slice %446 {offsets = [8, 0], sizes = [1, 32], strides = [1, 1]} : vector<16x32xf32> to vector<1x32xf32>
    %c256_260 = arith.constant 256 : index
    %c0_261 = arith.constant 0 : index
    %605 = vector.load %arg20[%c256_260, %c0_261] : memref<640x32xf32, #tpu.memory_space<vmem>>, vector<32x32xf32>
    %cst_262 = arith.constant dense<0.000000e+00> : vector<1x32xf32>
    %606 = tpu.matmul %604, %605, %cst_262 {dimension_numbers = #tpu.dot_dimension_numbers<[1], [0], [0], [1], [0, 0, 1, 1], [], []>} : vector<1x32xf32>, vector<32x32xf32>, vector<1x32xf32> -> vector<1x32xf32>
    %607 = arith.addf %603, %606 : vector<1x32xf32>
    %608 = vector.extract_strided_slice %446 {offsets = [9, 0], sizes = [1, 32], strides = [1, 1]} : vector<16x32xf32> to vector<1x32xf32>
    %c288_263 = arith.constant 288 : index
    %c0_264 = arith.constant 0 : index
    %609 = vector.load %arg20[%c288_263, %c0_264] : memref<640x32xf32, #tpu.memory_space<vmem>>, vector<32x32xf32>
    %cst_265 = arith.constant dense<0.000000e+00> : vector<1x32xf32>
    %610 = tpu.matmul %608, %609, %cst_265 {dimension_numbers = #tpu.dot_dimension_numbers<[1], [0], [0], [1], [0, 0, 1, 1], [], []>} : vector<1x32xf32>, vector<32x32xf32>, vector<1x32xf32> -> vector<1x32xf32>
    %611 = arith.addf %607, %610 : vector<1x32xf32>
    %612 = vector.extract_strided_slice %446 {offsets = [10, 0], sizes = [1, 32], strides = [1, 1]} : vector<16x32xf32> to vector<1x32xf32>
    %c320_266 = arith.constant 320 : index
    %c0_267 = arith.constant 0 : index
    %613 = vector.load %arg20[%c320_266, %c0_267] : memref<640x32xf32, #tpu.memory_space<vmem>>, vector<32x32xf32>
    %cst_268 = arith.constant dense<0.000000e+00> : vector<1x32xf32>
    %614 = tpu.matmul %612, %613, %cst_268 {dimension_numbers = #tpu.dot_dimension_numbers<[1], [0], [0], [1], [0, 0, 1, 1], [], []>} : vector<1x32xf32>, vector<32x32xf32>, vector<1x32xf32> -> vector<1x32xf32>
    %615 = arith.addf %611, %614 : vector<1x32xf32>
    %616 = vector.extract_strided_slice %446 {offsets = [11, 0], sizes = [1, 32], strides = [1, 1]} : vector<16x32xf32> to vector<1x32xf32>
    %c352_269 = arith.constant 352 : index
    %c0_270 = arith.constant 0 : index
    %617 = vector.load %arg20[%c352_269, %c0_270] : memref<640x32xf32, #tpu.memory_space<vmem>>, vector<32x32xf32>
    %cst_271 = arith.constant dense<0.000000e+00> : vector<1x32xf32>
    %618 = tpu.matmul %616, %617, %cst_271 {dimension_numbers = #tpu.dot_dimension_numbers<[1], [0], [0], [1], [0, 0, 1, 1], [], []>} : vector<1x32xf32>, vector<32x32xf32>, vector<1x32xf32> -> vector<1x32xf32>
    %619 = arith.addf %615, %618 : vector<1x32xf32>
    %620 = vector.extract_strided_slice %446 {offsets = [12, 0], sizes = [1, 32], strides = [1, 1]} : vector<16x32xf32> to vector<1x32xf32>
    %c384_272 = arith.constant 384 : index
    %c0_273 = arith.constant 0 : index
    %621 = vector.load %arg20[%c384_272, %c0_273] : memref<640x32xf32, #tpu.memory_space<vmem>>, vector<32x32xf32>
    %cst_274 = arith.constant dense<0.000000e+00> : vector<1x32xf32>
    %622 = tpu.matmul %620, %621, %cst_274 {dimension_numbers = #tpu.dot_dimension_numbers<[1], [0], [0], [1], [0, 0, 1, 1], [], []>} : vector<1x32xf32>, vector<32x32xf32>, vector<1x32xf32> -> vector<1x32xf32>
    %623 = arith.addf %619, %622 : vector<1x32xf32>
    %624 = vector.extract_strided_slice %446 {offsets = [13, 0], sizes = [1, 32], strides = [1, 1]} : vector<16x32xf32> to vector<1x32xf32>
    %c416_275 = arith.constant 416 : index
    %c0_276 = arith.constant 0 : index
    %625 = vector.load %arg20[%c416_275, %c0_276] : memref<640x32xf32, #tpu.memory_space<vmem>>, vector<32x32xf32>
    %cst_277 = arith.constant dense<0.000000e+00> : vector<1x32xf32>
    %626 = tpu.matmul %624, %625, %cst_277 {dimension_numbers = #tpu.dot_dimension_numbers<[1], [0], [0], [1], [0, 0, 1, 1], [], []>} : vector<1x32xf32>, vector<32x32xf32>, vector<1x32xf32> -> vector<1x32xf32>
    %627 = arith.addf %623, %626 : vector<1x32xf32>
    %628 = vector.extract_strided_slice %446 {offsets = [14, 0], sizes = [1, 32], strides = [1, 1]} : vector<16x32xf32> to vector<1x32xf32>
    %c448_278 = arith.constant 448 : index
    %c0_279 = arith.constant 0 : index
    %629 = vector.load %arg20[%c448_278, %c0_279] : memref<640x32xf32, #tpu.memory_space<vmem>>, vector<32x32xf32>
    %cst_280 = arith.constant dense<0.000000e+00> : vector<1x32xf32>
    %630 = tpu.matmul %628, %629, %cst_280 {dimension_numbers = #tpu.dot_dimension_numbers<[1], [0], [0], [1], [0, 0, 1, 1], [], []>} : vector<1x32xf32>, vector<32x32xf32>, vector<1x32xf32> -> vector<1x32xf32>
    %631 = arith.addf %627, %630 : vector<1x32xf32>
    %632 = vector.extract_strided_slice %446 {offsets = [15, 0], sizes = [1, 32], strides = [1, 1]} : vector<16x32xf32> to vector<1x32xf32>
    %c480_281 = arith.constant 480 : index
    %c0_282 = arith.constant 0 : index
    %633 = vector.load %arg20[%c480_281, %c0_282] : memref<640x32xf32, #tpu.memory_space<vmem>>, vector<32x32xf32>
    %cst_283 = arith.constant dense<0.000000e+00> : vector<1x32xf32>
    %634 = tpu.matmul %632, %633, %cst_283 {dimension_numbers = #tpu.dot_dimension_numbers<[1], [0], [0], [1], [0, 0, 1, 1], [], []>} : vector<1x32xf32>, vector<32x32xf32>, vector<1x32xf32> -> vector<1x32xf32>
    %635 = arith.addf %631, %634 : vector<1x32xf32>
    %636 = vector.extract_strided_slice %570 {offsets = [0, 0], sizes = [1, 32], strides = [1, 1]} : vector<4x32xf32> to vector<1x32xf32>
    %c512_284 = arith.constant 512 : index
    %c0_285 = arith.constant 0 : index
    %637 = vector.load %arg20[%c512_284, %c0_285] : memref<640x32xf32, #tpu.memory_space<vmem>>, vector<32x32xf32>
    %cst_286 = arith.constant dense<0.000000e+00> : vector<1x32xf32>
    %638 = tpu.matmul %636, %637, %cst_286 {dimension_numbers = #tpu.dot_dimension_numbers<[1], [0], [0], [1], [0, 0, 1, 1], [], []>} : vector<1x32xf32>, vector<32x32xf32>, vector<1x32xf32> -> vector<1x32xf32>
    %639 = arith.addf %635, %638 : vector<1x32xf32>
    %640 = vector.extract_strided_slice %570 {offsets = [1, 0], sizes = [1, 32], strides = [1, 1]} : vector<4x32xf32> to vector<1x32xf32>
    %c544_287 = arith.constant 544 : index
    %c0_288 = arith.constant 0 : index
    %641 = vector.load %arg20[%c544_287, %c0_288] : memref<640x32xf32, #tpu.memory_space<vmem>>, vector<32x32xf32>
    %cst_289 = arith.constant dense<0.000000e+00> : vector<1x32xf32>
    %642 = tpu.matmul %640, %641, %cst_289 {dimension_numbers = #tpu.dot_dimension_numbers<[1], [0], [0], [1], [0, 0, 1, 1], [], []>} : vector<1x32xf32>, vector<32x32xf32>, vector<1x32xf32> -> vector<1x32xf32>
    %643 = arith.addf %639, %642 : vector<1x32xf32>
    %644 = vector.extract_strided_slice %570 {offsets = [2, 0], sizes = [1, 32], strides = [1, 1]} : vector<4x32xf32> to vector<1x32xf32>
    %c576_290 = arith.constant 576 : index
    %c0_291 = arith.constant 0 : index
    %645 = vector.load %arg20[%c576_290, %c0_291] : memref<640x32xf32, #tpu.memory_space<vmem>>, vector<32x32xf32>
    %cst_292 = arith.constant dense<0.000000e+00> : vector<1x32xf32>
    %646 = tpu.matmul %644, %645, %cst_292 {dimension_numbers = #tpu.dot_dimension_numbers<[1], [0], [0], [1], [0, 0, 1, 1], [], []>} : vector<1x32xf32>, vector<32x32xf32>, vector<1x32xf32> -> vector<1x32xf32>
    %647 = arith.addf %643, %646 : vector<1x32xf32>
    %648 = vector.extract_strided_slice %570 {offsets = [3, 0], sizes = [1, 32], strides = [1, 1]} : vector<4x32xf32> to vector<1x32xf32>
    %c608_293 = arith.constant 608 : index
    %c0_294 = arith.constant 0 : index
    %649 = vector.load %arg20[%c608_293, %c0_294] : memref<640x32xf32, #tpu.memory_space<vmem>>, vector<32x32xf32>
    %cst_295 = arith.constant dense<0.000000e+00> : vector<1x32xf32>
    %650 = tpu.matmul %648, %649, %cst_295 {dimension_numbers = #tpu.dot_dimension_numbers<[1], [0], [0], [1], [0, 0, 1, 1], [], []>} : vector<1x32xf32>, vector<32x32xf32>, vector<1x32xf32> -> vector<1x32xf32>
    %651 = arith.addf %647, %650 : vector<1x32xf32>
    %cst_296 = arith.constant 0.000000e+00 : f32
    %652 = vector.broadcast %cst_296 : f32 to vector<1x32xf32>
    %653 = arith.maximumf %651, %652 : vector<1x32xf32>
    %c0_297 = arith.constant 0 : index
    %c0_298 = arith.constant 0 : index
    %654 = vector.load %arg22[%c0_297, %c0_298] : memref<32x2xf32, #tpu.memory_space<vmem>>, vector<32x2xf32>
    %cst_299 = arith.constant dense<0.000000e+00> : vector<1x2xf32>
    %655 = tpu.matmul %653, %654, %cst_299 {dimension_numbers = #tpu.dot_dimension_numbers<[1], [0], [0], [1], [0, 0, 1, 1], [], []>} : vector<1x32xf32>, vector<32x2xf32>, vector<1x2xf32> -> vector<1x2xf32>
    %c0_300 = arith.constant 0 : index
    %c0_301 = arith.constant 0 : index
    %656 = vector.load %arg23[%c0_300, %c0_301] : memref<1x2xf32, #tpu.memory_space<vmem>>, vector<1x2xf32>
    %657 = arith.addf %655, %656 : vector<1x2xf32>
    %c1_302 = arith.constant 1 : index
    %c0_303 = arith.constant 0 : index
    %c0_304 = arith.constant 0 : index
    %658 = vector.load %arg24[%c1_302, %c0_303, %c0_304] : memref<2x1x2xf32, #tpu.memory_space<vmem>>, vector<1x1x2xf32>
    %659 = vector.shape_cast %658 : vector<1x1x2xf32> to vector<1x2xf32>
    %660 = vector.shape_cast %657 : vector<1x2xf32> to vector<1x1x2xf32>
    tpu.vector_store %arg24[%c1_302, %c0_303, %c0_304], %660 {strides = array<i32>} : memref<2x1x2xf32, #tpu.memory_space<vmem>>, vector<1x1x2xf32>,
    return
  }
  func.func @transform_0(%arg0: i32) -> (i32, i32) {
    %c0_i32 = arith.constant 0 : i32
    %c0_i32_0 = arith.constant 0 : i32
    return %arg0, %c0_i32 : i32, i32
  }
  func.func @transform_1(%arg0: i32) -> (i32, i32, i32) {
    %c0_i32 = arith.constant 0 : i32
    %c0_i32_0 = arith.constant 0 : i32
    %c0_i32_1 = arith.constant 0 : i32
    return %arg0, %c0_i32, %c0_i32_0 : i32, i32, i32
  }
  func.func @transform_2(%arg0: i32) -> (i32, i32) {
    %c0_i32 = arith.constant 0 : i32
    %c0_i32_0 = arith.constant 0 : i32
    %c0_i32_1 = arith.constant 0 : i32
    return %c0_i32, %c0_i32_0 : i32, i32
  }
  func.func @transform_3(%arg0: i32) -> (i32, i32) {
    %c0_i32 = arith.constant 0 : i32
    %c0_i32_0 = arith.constant 0 : i32
    %c0_i32_1 = arith.constant 0 : i32
    return %c0_i32, %c0_i32_0 : i32, i32
  }
  func.func @transform_4(%arg0: i32) -> (i32, i32) {
    %c0_i32 = arith.constant 0 : i32
    %c0_i32_0 = arith.constant 0 : i32
    %c0_i32_1 = arith.constant 0 : i32
    return %c0_i32, %c0_i32_0 : i32, i32
  }
  func.func @transform_5(%arg0: i32) -> (i32, i32) {
    %c0_i32 = arith.constant 0 : i32
    %c0_i32_0 = arith.constant 0 : i32
    %c0_i32_1 = arith.constant 0 : i32
    return %c0_i32, %c0_i32_0 : i32, i32
  }
  func.func @transform_6(%arg0: i32) -> (i32, i32) {
    %c0_i32 = arith.constant 0 : i32
    %c0_i32_0 = arith.constant 0 : i32
    %c0_i32_1 = arith.constant 0 : i32
    return %c0_i32, %c0_i32_0 : i32, i32
  }
  func.func @transform_7(%arg0: i32) -> (i32, i32) {
    %c0_i32 = arith.constant 0 : i32
    %c0_i32_0 = arith.constant 0 : i32
    %c0_i32_1 = arith.constant 0 : i32
    return %c0_i32, %c0_i32_0 : i32, i32
  }
  func.func @transform_8(%arg0: i32) -> (i32, i32) {
    %c0_i32 = arith.constant 0 : i32
    %c0_i32_0 = arith.constant 0 : i32
    %c0_i32_1 = arith.constant 0 : i32
    return %c0_i32, %c0_i32_0 : i32, i32
  }
  func.func @transform_9(%arg0: i32) -> (i32, i32) {
    %c0_i32 = arith.constant 0 : i32
    %c0_i32_0 = arith.constant 0 : i32
    %c0_i32_1 = arith.constant 0 : i32
    return %c0_i32, %c0_i32_0 : i32, i32
  }
  func.func @transform_10(%arg0: i32) -> (i32, i32) {
    %c0_i32 = arith.constant 0 : i32
    %c0_i32_0 = arith.constant 0 : i32
    %c0_i32_1 = arith.constant 0 : i32
    return %c0_i32, %c0_i32_0 : i32, i32
  }
  func.func @transform_11(%arg0: i32) -> (i32, i32) {
    %c0_i32 = arith.constant 0 : i32
    %c0_i32_0 = arith.constant 0 : i32
    %c0_i32_1 = arith.constant 0 : i32
    return %c0_i32, %c0_i32_0 : i32, i32
  }
  func.func @transform_12(%arg0: i32) -> (i32, i32) {
    %c0_i32 = arith.constant 0 : i32
    %c0_i32_0 = arith.constant 0 : i32
    %c0_i32_1 = arith.constant 0 : i32
    return %c0_i32, %c0_i32_0 : i32, i32
  }
  func.func @transform_13(%arg0: i32) -> (i32, i32) {
    %c0_i32 = arith.constant 0 : i32
    %c0_i32_0 = arith.constant 0 : i32
    %c0_i32_1 = arith.constant 0 : i32
    return %c0_i32, %c0_i32_0 : i32, i32
  }
  func.func @transform_14(%arg0: i32) -> (i32, i32) {
    %c0_i32 = arith.constant 0 : i32
    %c0_i32_0 = arith.constant 0 : i32
    %c0_i32_1 = arith.constant 0 : i32
    return %c0_i32, %c0_i32_0 : i32, i32
  }
  func.func @transform_15(%arg0: i32) -> (i32, i32) {
    %c0_i32 = arith.constant 0 : i32
    %c0_i32_0 = arith.constant 0 : i32
    %c0_i32_1 = arith.constant 0 : i32
    return %c0_i32, %c0_i32_0 : i32, i32
  }
  func.func @transform_16(%arg0: i32) -> (i32, i32) {
    %c0_i32 = arith.constant 0 : i32
    %c0_i32_0 = arith.constant 0 : i32
    %c0_i32_1 = arith.constant 0 : i32
    return %c0_i32, %c0_i32_0 : i32, i32
  }
  func.func @transform_17(%arg0: i32) -> (i32, i32) {
    %c0_i32 = arith.constant 0 : i32
    %c0_i32_0 = arith.constant 0 : i32
    %c0_i32_1 = arith.constant 0 : i32
    return %c0_i32, %c0_i32_0 : i32, i32
  }
  func.func @transform_18(%arg0: i32) -> (i32, i32) {
    %c0_i32 = arith.constant 0 : i32
    %c0_i32_0 = arith.constant 0 : i32
    %c0_i32_1 = arith.constant 0 : i32
    return %c0_i32, %c0_i32_0 : i32, i32
  }
  func.func @transform_19(%arg0: i32) -> (i32, i32) {
    %c0_i32 = arith.constant 0 : i32
    %c0_i32_0 = arith.constant 0 : i32
    %c0_i32_1 = arith.constant 0 : i32
    return %c0_i32, %c0_i32_0 : i32, i32
  }
  func.func @transform_20(%arg0: i32) -> (i32, i32) {
    %c0_i32 = arith.constant 0 : i32
    %c0_i32_0 = arith.constant 0 : i32
    %c0_i32_1 = arith.constant 0 : i32
    return %c0_i32, %c0_i32_0 : i32, i32
  }
  func.func @transform_21(%arg0: i32) -> (i32, i32) {
    %c0_i32 = arith.constant 0 : i32
    %c0_i32_0 = arith.constant 0 : i32
    %c0_i32_1 = arith.constant 0 : i32
    return %c0_i32, %c0_i32_0 : i32, i32
  }
  func.func @transform_22(%arg0: i32) -> (i32, i32) {
    %c0_i32 = arith.constant 0 : i32
    %c0_i32_0 = arith.constant 0 : i32
    %c0_i32_1 = arith.constant 0 : i32
    return %c0_i32, %c0_i32_0 : i32, i32
  }
  func.func @transform_23(%arg0: i32) -> (i32, i32, i32) {
    %c0_i32 = arith.constant 0 : i32
    %c0_i32_0 = arith.constant 0 : i32
    %c0_i32_1 = arith.constant 0 : i32
    return %arg0, %c0_i32, %c0_i32_0 : i32, i32, i32
  }
}

</mosaic_0001>

<llo_original>
// kernel: hhgraphformer_forward.1
$region0: #{hhgraphformer_forward.1}
  #allocation0 [shape = 'u32[]', space=smem, size = 0x4, offset = 0x4, fixed_abs, tag = 'smem constant byte address 0x4 - core index']
  #allocation1 [shape = 'u32[144,128]{1,0:T(1,128)}', space=vmem, size = 0x12000, scoped, tag = 'internal scratch']
  %s0 = inlined_call_operand.vmem [shape: f32[32,16], index: 0, kind: input, shape index: {}]
  %s1 = inlined_call_operand.vmem [shape: f32[2,4,16], index: 1, kind: input, shape index: {}]
  %s2 = inlined_call_operand.vmem [shape: f32[4,128], index: 2, kind: input, shape index: {}]
  %s3 = inlined_call_operand.vmem [shape: f32[16,32], index: 3, kind: input, shape index: {}]
  %s4 = inlined_call_operand.vmem [shape: f32[1,32], index: 4, kind: input, shape index: {}]
  %s5 = inlined_call_operand.vmem [shape: f32[32,32], index: 5, kind: input, shape index: {}]
  %s6 = inlined_call_operand.vmem [shape: f32[1,32], index: 6, kind: input, shape index: {}]
  %s7 = inlined_call_operand.vmem [shape: f32[32,96], index: 7, kind: input, shape index: {}]
  %s8 = inlined_call_operand.vmem [shape: f32[1,96], index: 8, kind: input, shape index: {}]
  %s9 = inlined_call_operand.vmem [shape: f32[32,32], index: 9, kind: input, shape index: {}]
  %s10 = inlined_call_operand.vmem [shape: f32[1,32], index: 10, kind: input, shape index: {}]
  %s11 = inlined_call_operand.vmem [shape: f32[16,128], index: 11, kind: input, shape index: {}]
  %s12 = inlined_call_operand.vmem [shape: f32[1,128], index: 12, kind: input, shape index: {}]
  %s13 = inlined_call_operand.vmem [shape: f32[128,32], index: 13, kind: input, shape index: {}]
  %s14 = inlined_call_operand.vmem [shape: f32[4,32], index: 14, kind: input, shape index: {}]
  %s15 = inlined_call_operand.vmem [shape: f32[32,96], index: 15, kind: input, shape index: {}]
  %s16 = inlined_call_operand.vmem [shape: f32[1,96], index: 16, kind: input, shape index: {}]
  %s17 = inlined_call_operand.vmem [shape: f32[32,32], index: 17, kind: input, shape index: {}]
  %s18 = inlined_call_operand.vmem [shape: f32[1,32], index: 18, kind: input, shape index: {}]
  %s19 = inlined_call_operand.vmem [shape: f32[640,32], index: 19, kind: input, shape index: {}]
  %s20 = inlined_call_operand.vmem [shape: f32[1,32], index: 20, kind: input, shape index: {}]
  %s21 = inlined_call_operand.vmem [shape: f32[32,2], index: 21, kind: input, shape index: {}]
  %s22 = inlined_call_operand.vmem [shape: f32[1,2], index: 22, kind: input, shape index: {}]
  %s23 = inlined_call_operand.hbm [shape: f32[2,1,2], index: 23, kind: output, shape index: {}]
  %s24 = sld [smem:[#allocation0]]
  $region102: #{hhgraphformer_forward.1} parent=0
    _
  %s26 = ssub.s32 1, %s24
  %s27 = scalar_select 0, %s26, %s24
  $region1: #{hhgraphformer_forward.1} parent=0
    #allocation2 [shape = 'u8[1024]{0}', space=vmem, size = 0x400, scoped, tag = 'output window, operand 0, single buffered']
    #allocation3 [shape = 's32[1]{0}', space=sflag, size = 0x4, scoped, tag = 'scoped memory for hhgraphformer_forward.1']
    %28 = vsyncpa [#allocation3], 0
    // Predicated region
    $region2: #{hhgraphformer_forward.1} parent=1 // pred_check
      _
    $region3: #{hhgraphformer_forward.1} parent=1 // pred_check_branch
      %30 = sbr.rel (0) target = $region5
    $region4: #{hhgraphformer_forward.1} parent=1 // pred_region
      _
    $region5: #{hhgraphformer_forward.1} parent=1 // pred_fallthru
      _
    // Predicated region
    $region6: #{hhgraphformer_forward.1} parent=1 // pred_check
      _
    $region7: #{hhgraphformer_forward.1} parent=1 // pred_check_branch
      %32 = sbr.rel (0) target = $region9
    $region8: #{hhgraphformer_forward.1} parent=1 // pred_region
      _
    $region9: #{hhgraphformer_forward.1} parent=1 // pred_fallthru
      _
    // Predicated region
    $region10: #{hhgraphformer_forward.1} parent=1 // pred_check
      _
    $region11: #{hhgraphformer_forward.1} parent=1 // pred_check_branch
      %34 = sbr.rel (0) target = $region13
    $region12: #{hhgraphformer_forward.1} parent=1 // pred_region
      _
    $region13: #{hhgraphformer_forward.1} parent=1 // pred_fallthru
      _
    // Predicated region
    $region14: #{hhgraphformer_forward.1} parent=1 // pred_check
      _
    $region15: #{hhgraphformer_forward.1} parent=1 // pred_check_branch
      %36 = sbr.rel (0) target = $region17
    $region16: #{hhgraphformer_forward.1} parent=1 // pred_region
      _
    $region17: #{hhgraphformer_forward.1} parent=1 // pred_fallthru
      _
    // Predicated region
    $region18: #{hhgraphformer_forward.1} parent=1 // pred_check
      _
    $region19: #{hhgraphformer_forward.1} parent=1 // pred_check_branch
      %38 = sbr.rel (0) target = $region21
    $region20: #{hhgraphformer_forward.1} parent=1 // pred_region
      _
    $region21: #{hhgraphformer_forward.1} parent=1 // pred_fallthru
      _
    // Predicated region
    $region22: #{hhgraphformer_forward.1} parent=1 // pred_check
      _
    $region23: #{hhgraphformer_forward.1} parent=1 // pred_check_branch
      %40 = sbr.rel (0) target = $region25
    $region24: #{hhgraphformer_forward.1} parent=1 // pred_region
      _
    $region25: #{hhgraphformer_forward.1} parent=1 // pred_fallthru
      _
    // Predicated region
    $region26: #{hhgraphformer_forward.1} parent=1 // pred_check
      _
    $region27: #{hhgraphformer_forward.1} parent=1 // pred_check_branch
      %42 = sbr.rel (0) target = $region29
    $region28: #{hhgraphformer_forward.1} parent=1 // pred_region
      _
    $region29: #{hhgraphformer_forward.1} parent=1 // pred_fallthru
      _
    // Predicated region
    $region30: #{hhgraphformer_forward.1} parent=1 // pred_check
      _
    $region31: #{hhgraphformer_forward.1} parent=1 // pred_check_branch
      %44 = sbr.rel (0) target = $region33
    $region32: #{hhgraphformer_forward.1} parent=1 // pred_region
      _
    $region33: #{hhgraphformer_forward.1} parent=1 // pred_fallthru
      _
    // Predicated region
    $region34: #{hhgraphformer_forward.1} parent=1 // pred_check
      _
    $region35: #{hhgraphformer_forward.1} parent=1 // pred_check_branch
      %46 = sbr.rel (0) target = $region37
    $region36: #{hhgraphformer_forward.1} parent=1 // pred_region
      _
    $region37: #{hhgraphformer_forward.1} parent=1 // pred_fallthru
      _
    // Predicated region
    $region38: #{hhgraphformer_forward.1} parent=1 // pred_check
      _
    $region39: #{hhgraphformer_forward.1} parent=1 // pred_check_branch
      %48 = sbr.rel (0) target = $region41
    $region40: #{hhgraphformer_forward.1} parent=1 // pred_region
      _
    $region41: #{hhgraphformer_forward.1} parent=1 // pred_fallthru
      _
    // Predicated region
    $region42: #{hhgraphformer_forward.1} parent=1 // pred_check
      _
    $region43: #{hhgraphformer_forward.1} parent=1 // pred_check_branch
      %50 = sbr.rel (0) target = $region45
    $region44: #{hhgraphformer_forward.1} parent=1 // pred_region
      _
    $region45: #{hhgraphformer_forward.1} parent=1 // pred_fallthru
      _
    // Predicated region
    $region46: #{hhgraphformer_forward.1} parent=1 // pred_check
      _
    $region47: #{hhgraphformer_forward.1} parent=1 // pred_check_branch
      %52 = sbr.rel (0) target = $region49
    $region48: #{hhgraphformer_forward.1} parent=1 // pred_region
      _
    $region49: #{hhgraphformer_forward.1} parent=1 // pred_fallthru
      _
    // Predicated region
    $region50: #{hhgraphformer_forward.1} parent=1 // pred_check
      _
    $region51: #{hhgraphformer_forward.1} parent=1 // pred_check_branch
      %54 = sbr.rel (0) target = $region53
    $region52: #{hhgraphformer_forward.1} parent=1 // pred_region
      _
    $region53: #{hhgraphformer_forward.1} parent=1 // pred_fallthru
      _
    // Predicated region
    $region54: #{hhgraphformer_forward.1} parent=1 // pred_check
      _
    $region55: #{hhgraphformer_forward.1} parent=1 // pred_check_branch
      %56 = sbr.rel (0) target = $region57
    $region56: #{hhgraphformer_forward.1} parent=1 // pred_region
      _
    $region57: #{hhgraphformer_forward.1} parent=1 // pred_fallthru
      _
    // Predicated region
    $region58: #{hhgraphformer_forward.1} parent=1 // pred_check
      _
    $region59: #{hhgraphformer_forward.1} parent=1 // pred_check_branch
      %58 = sbr.rel (0) target = $region61
    $region60: #{hhgraphformer_forward.1} parent=1 // pred_region
      _
    $region61: #{hhgraphformer_forward.1} parent=1 // pred_fallthru
      _
    // Predicated region
    $region62: #{hhgraphformer_forward.1} parent=1 // pred_check
      _
    $region63: #{hhgraphformer_forward.1} parent=1 // pred_check_branch
      %60 = sbr.rel (0) target = $region65
    $region64: #{hhgraphformer_forward.1} parent=1 // pred_region
      _
    $region65: #{hhgraphformer_forward.1} parent=1 // pred_fallthru
      _
    // Predicated region
    $region66: #{hhgraphformer_forward.1} parent=1 // pred_check
      _
    $region67: #{hhgraphformer_forward.1} parent=1 // pred_check_branch
      %62 = sbr.rel (0) target = $region69
    $region68: #{hhgraphformer_forward.1} parent=1 // pred_region
      _
    $region69: #{hhgraphformer_forward.1} parent=1 // pred_fallthru
      _
    // Predicated region
    $region70: #{hhgraphformer_forward.1} parent=1 // pred_check
      _
    $region71: #{hhgraphformer_forward.1} parent=1 // pred_check_branch
      %64 = sbr.rel (0) target = $region73
    $region72: #{hhgraphformer_forward.1} parent=1 // pred_region
      _
    $region73: #{hhgraphformer_forward.1} parent=1 // pred_fallthru
      _
    // Predicated region
    $region74: #{hhgraphformer_forward.1} parent=1 // pred_check
      _
    $region75: #{hhgraphformer_forward.1} parent=1 // pred_check_branch
      %66 = sbr.rel (0) target = $region77
    $region76: #{hhgraphformer_forward.1} parent=1 // pred_region
      _
    $region77: #{hhgraphformer_forward.1} parent=1 // pred_fallthru
      _
    // Predicated region
    $region78: #{hhgraphformer_forward.1} parent=1 // pred_check
      _
    $region79: #{hhgraphformer_forward.1} parent=1 // pred_check_branch
      %68 = sbr.rel (0) target = $region81
    $region80: #{hhgraphformer_forward.1} parent=1 // pred_region
      _
    $region81: #{hhgraphformer_forward.1} parent=1 // pred_fallthru
      _
    // Predicated region
    $region82: #{hhgraphformer_forward.1} parent=1 // pred_check
      _
    $region83: #{hhgraphformer_forward.1} parent=1 // pred_check_branch
      %70 = sbr.rel (0) target = $region85
    $region84: #{hhgraphformer_forward.1} parent=1 // pred_region
      _
    $region85: #{hhgraphformer_forward.1} parent=1 // pred_fallthru
      _
    // Predicated region
    $region86: #{hhgraphformer_forward.1} parent=1 // pred_check
      _
    $region87: #{hhgraphformer_forward.1} parent=1 // pred_check_branch
      %72 = sbr.rel (0) target = $region89
    $region88: #{hhgraphformer_forward.1} parent=1 // pred_region
      _
    $region89: #{hhgraphformer_forward.1} parent=1 // pred_fallthru
      _
    // Predicated region
    $region90: #{hhgraphformer_forward.1} parent=1 // pred_check
      _
    $region91: #{hhgraphformer_forward.1} parent=1 // pred_check_branch
      %74 = sbr.rel (0) target = $region93
    $region92: #{hhgraphformer_forward.1} parent=1 // pred_region
      _
    $region93: #{hhgraphformer_forward.1} parent=1 // pred_fallthru
      _
    %v75 = vld [vmem:[%s0] sm:$0xff]
    %v76 = vld [vmem:[%s0 + $0x8] sm:$0xff]
    %v77 = vld [vmem:[%s0 + $0x10] sm:$0xff]
    %v78 = vld [vmem:[%s0 + $0x18] sm:$0xff]
    %v79 = vld [vmem:[%s3] sm:$0xff]
    %v80 = vld [vmem:[%s3 + $0x8] sm:$0xff]
    %v81 = vld [vmem:[%s4] sm:$0x1]
    %v83 = vlaneseq
    %v84 = vshrl.u32 %v83, 7
    %v85 = vsub.s32 0, %v84
    %v86 = vrot.slane %v81, %v85
    %vm88 = vcmask 130048
    %v90 = vsel %vm88, %v75, 0
    %v93 = vsel %vm88, %v76, 0
    %v96 = vsel %vm88, %v77, 0
    %v99 = vsel %vm88, %v78, 0
    %101 = vmatprep.subr.mxu0 0.0
    %102 = vmatpush1.msra.mxu0 0.0
    %103 = vmatprep.subr.mxu0 0.0
    %104 = vmatpush1.msra.mxu0 0.0
    %105 = vmatprep.subr.mxu0 0.0
    %106 = vmatpush1.msra.mxu0 0.0
    %107 = vmatprep.subr.mxu0 0.0
    %108 = vmatpush1.msra.mxu0 0.0
    %109 = vmatprep.subr.mxu0 0.0
    %110 = vmatpush1.msra.mxu0 0.0
    %111 = vmatprep.subr.mxu0 0.0
    %112 = vmatpush1.msra.mxu0 0.0
    %113 = vmatprep.subr.mxu0 0.0
    %114 = vmatpush1.msra.mxu0 0.0
    %115 = vmatprep.subr.mxu0 0.0
    %116 = vmatpush1.msra.mxu0 0.0
    %117 = vmatprep.subr.mxu0 0.0
    %118 = vmatpush1.msra.mxu0 0.0
    %119 = vmatprep.subr.mxu0 0.0
    %120 = vmatpush1.msra.mxu0 0.0
    %121 = vmatprep.subr.mxu0 0.0
    %122 = vmatpush1.msra.mxu0 0.0
    %123 = vmatprep.subr.mxu0 0.0
    %124 = vmatpush1.msra.mxu0 0.0
    %125 = vmatprep.subr.mxu0 0.0
    %126 = vmatpush1.msra.mxu0 0.0
    %127 = vmatprep.subr.mxu0 0.0
    %128 = vmatpush1.msra.mxu0 0.0
    %129 = vmatprep.subr.mxu0 0.0
    %130 = vmatpush1.msra.mxu0 %v80
    %131 = vmatprep.subr.mxu0 0.0
    %132 = vmatpush1.msra.mxu0 %v79
    %133 = vmatprep.subr.mxu0 0.0
    %134 = vmatpush2.msra.mxu0 0.0
    %135 = vmatprep.subr.mxu0 0.0
    %136 = vmatpush2.msra.mxu0 0.0
    %137 = vmatprep.subr.mxu0 0.0
    %138 = vmatpush2.msra.mxu0 0.0
    %139 = vmatprep.subr.mxu0 0.0
    %140 = vmatpush2.msra.mxu0 0.0
    %141 = vmatprep.subr.mxu0 0.0
    %142 = vmatpush2.msra.mxu0 0.0
    %143 = vmatprep.subr.mxu0 0.0
    %144 = vmatpush2.msra.mxu0 0.0
    %145 = vmatprep.subr.mxu0 0.0
    %146 = vmatpush2.msra.mxu0 0.0
    %147 = vmatprep.subr.mxu0 0.0
    %148 = vmatpush2.msra.mxu0 0.0
    %149 = vmatprep.subr.mxu0 0.0
    %150 = vmatpush2.msra.mxu0 0.0
    %151 = vmatprep.subr.mxu0 0.0
    %152 = vmatpush2.msra.mxu0 0.0
    %153 = vmatprep.subr.mxu0 0.0
    %154 = vmatpush2.msra.mxu0 0.0
    %155 = vmatprep.subr.mxu0 0.0
    %156 = vmatpush2.msra.mxu0 0.0
    %157 = vmatprep.subr.mxu0 0.0
    %158 = vmatpush2.msra.mxu0 0.0
    %159 = vmatprep.subr.mxu0 0.0
    %160 = vmatpush2.msra.mxu0 0.0
    %161 = vmatprep.subr.mxu0 0.0
    %162 = vmatpush2.msra.mxu0 0.0
    %163 = vmatprep.subr.mxu0 0.0
    %164 = vmatpush2.msra.mxu0 0.0
    %165 = vmatprep.mubr.f32.mxu0 0.0
    %166 = vmatmul.mubr.f32.gmra.mxu0 %v90
    %v167 = vpop.f32.mrf.mxu0
    %v168 = vadd.f32 %v86, %v167
    %v169 = vpop.f32.mrf.mxu0
    %170 = vmatprep.mubr.f32.mxu0 0.0
    %171 = vmatmul.mubr.f32.gmra.mxu0 %v93
    %v172 = vpop.f32.mrf.mxu0
    %v173 = vadd.f32 %v86, %v172
    %v174 = vpop.f32.mrf.mxu0
    %175 = vmatprep.mubr.f32.mxu0 0.0
    %176 = vmatmul.mubr.f32.gmra.mxu0 %v96
    %v177 = vpop.f32.mrf.mxu0
    %v178 = vadd.f32 %v86, %v177
    %v179 = vpop.f32.mrf.mxu0
    %180 = vmatprep.mubr.f32.mxu0 0.0
    %181 = vmatmul.mubr.f32.gmra.mxu0 %v99
    %v182 = vpop.f32.mrf.mxu0
    %v183 = vadd.f32 %v86, %v182
    %v184 = vpop.f32.mrf.mxu0
    %185 = vdwg.mxu0
    %v186 = vmax.f32 %v168, 0.0
    %v187 = vmax.f32 %v173, 0.0
    %v188 = vmax.f32 %v178, 0.0
    %v189 = vmax.f32 %v183, 0.0
    %v190 = vld [vmem:[%s5] sm:$0xff]
    %v191 = vld [vmem:[%s5 + $0x8] sm:$0xff]
    %v192 = vld [vmem:[%s5 + $0x10] sm:$0xff]
    %v193 = vld [vmem:[%s5 + $0x18] sm:$0xff]
    %v194 = vld [vmem:[%s6] sm:$0x1]
    %v196 = vlaneseq
    %v197 = vshrl.u32 %v196, 7
    %v198 = vsub.s32 0, %v197
    %v199 = vrot.slane %v194, %v198
    %vm201 = vcmask 261120
    %v203 = vsel %vm201, %v186, 0
    %v206 = vsel %vm201, %v187, 0
    %v209 = vsel %vm201, %v188, 0
    %v212 = vsel %vm201, %v189, 0
    %214 = vmatprep.subr.mxu0 0.0
    %215 = vmatpush1.msra.mxu0 0.0
    %216 = vmatprep.subr.mxu0 0.0
    %217 = vmatpush1.msra.mxu0 0.0
    %218 = vmatprep.subr.mxu0 0.0
    %219 = vmatpush1.msra.mxu0 0.0
    %220 = vmatprep.subr.mxu0 0.0
    %221 = vmatpush1.msra.mxu0 0.0
    %222 = vmatprep.subr.mxu0 0.0
    %223 = vmatpush1.msra.mxu0 0.0
    %224 = vmatprep.subr.mxu0 0.0
    %225 = vmatpush1.msra.mxu0 0.0
    %226 = vmatprep.subr.mxu0 0.0
    %227 = vmatpush1.msra.mxu0 0.0
    %228 = vmatprep.subr.mxu0 0.0
    %229 = vmatpush1.msra.mxu0 0.0
    %230 = vmatprep.subr.mxu0 0.0
    %231 = vmatpush1.msra.mxu0 0.0
    %232 = vmatprep.subr.mxu0 0.0
    %233 = vmatpush1.msra.mxu0 0.0
    %234 = vmatprep.subr.mxu0 0.0
    %235 = vmatpush1.msra.mxu0 0.0
    %236 = vmatprep.subr.mxu0 0.0
    %237 = vmatpush1.msra.mxu0 0.0
    %238 = vmatprep.subr.mxu0 0.0
    %239 = vmatpush1.msra.mxu0 %v193
    %240 = vmatprep.subr.mxu0 0.0
    %241 = vmatpush1.msra.mxu0 %v192
    %242 = vmatprep.subr.mxu0 0.0
    %243 = vmatpush1.msra.mxu0 %v191
    %244 = vmatprep.subr.mxu0 0.0
    %245 = vmatpush1.msra.mxu0 %v190
    %246 = vmatprep.subr.mxu0 0.0
    %247 = vmatpush2.msra.mxu0 0.0
    %248 = vmatprep.subr.mxu0 0.0
    %249 = vmatpush2.msra.mxu0 0.0
    %250 = vmatprep.subr.mxu0 0.0
    %251 = vmatpush2.msra.mxu0 0.0
    %252 = vmatprep.subr.mxu0 0.0
    %253 = vmatpush2.msra.mxu0 0.0
    %254 = vmatprep.subr.mxu0 0.0
    %255 = vmatpush2.msra.mxu0 0.0
    %256 = vmatprep.subr.mxu0 0.0
    %257 = vmatpush2.msra.mxu0 0.0
    %258 = vmatprep.subr.mxu0 0.0
    %259 = vmatpush2.msra.mxu0 0.0
    %260 = vmatprep.subr.mxu0 0.0
    %261 = vmatpush2.msra.mxu0 0.0
    %262 = vmatprep.subr.mxu0 0.0
    %263 = vmatpush2.msra.mxu0 0.0
    %264 = vmatprep.subr.mxu0 0.0
    %265 = vmatpush2.msra.mxu0 0.0
    %266 = vmatprep.subr.mxu0 0.0
    %267 = vmatpush2.msra.mxu0 0.0
    %268 = vmatprep.subr.mxu0 0.0
    %269 = vmatpush2.msra.mxu0 0.0
    %270 = vmatprep.subr.mxu0 0.0
    %271 = vmatpush2.msra.mxu0 0.0
    %272 = vmatprep.subr.mxu0 0.0
    %273 = vmatpush2.msra.mxu0 0.0
    %274 = vmatprep.subr.mxu0 0.0
    %275 = vmatpush2.msra.mxu0 0.0
    %276 = vmatprep.subr.mxu0 0.0
    %277 = vmatpush2.msra.mxu0 0.0
    %278 = vmatprep.mubr.f32.mxu0 0.0
    %279 = vmatmul.mubr.f32.gmra.mxu0 %v203
    %v280 = vpop.f32.mrf.mxu0
    %v281 = vadd.f32 %v199, %v280
    %v282 = vpop.f32.mrf.mxu0
    %283 = vmatprep.mubr.f32.mxu0 0.0
    %284 = vmatmul.mubr.f32.gmra.mxu0 %v206
    %v285 = vpop.f32.mrf.mxu0
    %v286 = vadd.f32 %v199, %v285
    %v287 = vpop.f32.mrf.mxu0
    %288 = vmatprep.mubr.f32.mxu0 0.0
    %289 = vmatmul.mubr.f32.gmra.mxu0 %v209
    %v290 = vpop.f32.mrf.mxu0
    %v291 = vadd.f32 %v199, %v290
    %v292 = vpop.f32.mrf.mxu0
    %293 = vmatprep.mubr.f32.mxu0 0.0
    %294 = vmatmul.mubr.f32.gmra.mxu0 %v212
    %v295 = vpop.f32.mrf.mxu0
    %v296 = vadd.f32 %v199, %v295
    %v297 = vpop.f32.mrf.mxu0
    %298 = vdwg.mxu0
    %v299 = vld [vmem:[%s7] sm:$0xff]
    %v300 = vld [vmem:[%s7 + $0x8] sm:$0xff]
    %v301 = vld [vmem:[%s7 + $0x10] sm:$0xff]
    %v302 = vld [vmem:[%s7 + $0x18] sm:$0xff]
    %v303 = vld [vmem:[%s8] sm:$0x1]
    %v304 = vld [vmem:[%s9] sm:$0xff]
    %v305 = vld [vmem:[%s9 + $0x8] sm:$0xff]
    %v306 = vld [vmem:[%s9 + $0x10] sm:$0xff]
    %v307 = vld [vmem:[%s9 + $0x18] sm:$0xff]
    %v308 = vld [vmem:[%s10] sm:$0x1]
    %v309 = vsel %vm201, %v281, 0.0
    %310 = vadd.xlane.f32.xlu0 %v309
    %v311 = vpop.xlane.xlu0 %310
    %v312 = vsel %vm201, %v286, 0.0
    %313 = vadd.xlane.f32.xlu0 %v312
    %v314 = vpop.xlane.xlu0 %313
    %v315 = vrcp.pop 32.0
    %v316 = vmul.f32 %v311, %v315
    %v317 = vmul.f32 %v314, %v315
    %v318 = vsub.f32 %v281, %v316
    %v319 = vsub.f32 %v286, %v317
    %v320 = vmul.f32 %v318, %v318
    %v321 = vmul.f32 %v319, %v319
    %v322 = vsel %vm201, %v320, 0.0
    %323 = vadd.xlane.f32.xlu0 %v322
    %v324 = vpop.xlane.xlu0 %323
    %v325 = vsel %vm201, %v321, 0.0
    %326 = vadd.xlane.f32.xlu0 %v325
    %v327 = vpop.xlane.xlu0 %326
    %v328 = vmul.f32 %v324, %v315
    %v329 = vmul.f32 %v327, %v315
    %v330 = vadd.f32 %v328, 1e-05
    %v331 = vadd.f32 %v329, 1e-05
    %v332 = vrsqrt.pop %v330
    %v333 = vrsqrt.pop %v331
    %v334 = vmul.f32 %v318, %v332
    %v335 = vmul.f32 %v319, %v333
    %v337 = vlaneseq
    %v338 = vshrl.u32 %v337, 7
    %v339 = vsub.s32 0, %v338
    %v340 = vrot.slane %v303, %v339
    %v343 = vsel %vm201, %v334, 0
    %v346 = vsel %vm201, %v335, 0
    %348 = vmatprep.subr.mxu0 0.0
    %349 = vmatpush1.msra.mxu0 0.0
    %350 = vmatprep.subr.mxu0 0.0
    %351 = vmatpush1.msra.mxu0 0.0
    %352 = vmatprep.subr.mxu0 0.0
    %353 = vmatpush1.msra.mxu0 0.0
    %354 = vmatprep.subr.mxu0 0.0
    %355 = vmatpush1.msra.mxu0 0.0
    %356 = vmatprep.subr.mxu0 0.0
    %357 = vmatpush1.msra.mxu0 0.0
    %358 = vmatprep.subr.mxu0 0.0
    %359 = vmatpush1.msra.mxu0 0.0
    %360 = vmatprep.subr.mxu0 0.0
    %361 = vmatpush1.msra.mxu0 0.0
    %362 = vmatprep.subr.mxu0 0.0
    %363 = vmatpush1.msra.mxu0 0.0
    %364 = vmatprep.subr.mxu0 0.0
    %365 = vmatpush1.msra.mxu0 0.0
    %366 = vmatprep.subr.mxu0 0.0
    %367 = vmatpush1.msra.mxu0 0.0
    %368 = vmatprep.subr.mxu0 0.0
    %369 = vmatpush1.msra.mxu0 0.0
    %370 = vmatprep.subr.mxu0 0.0
    %371 = vmatpush1.msra.mxu0 0.0
    %372 = vmatprep.subr.mxu0 0.0
    %373 = vmatpush1.msra.mxu0 %v302
    %374 = vmatprep.subr.mxu0 0.0
    %375 = vmatpush1.msra.mxu0 %v301
    %376 = vmatprep.subr.mxu0 0.0
    %377 = vmatpush1.msra.mxu0 %v300
    %378 = vmatprep.subr.mxu0 0.0
    %379 = vmatpush1.msra.mxu0 %v299
    %380 = vmatprep.subr.mxu0 0.0
    %381 = vmatpush2.msra.mxu0 0.0
    %382 = vmatprep.subr.mxu0 0.0
    %383 = vmatpush2.msra.mxu0 0.0
    %384 = vmatprep.subr.mxu0 0.0
    %385 = vmatpush2.msra.mxu0 0.0
    %386 = vmatprep.subr.mxu0 0.0
    %387 = vmatpush2.msra.mxu0 0.0
    %388 = vmatprep.subr.mxu0 0.0
    %389 = vmatpush2.msra.mxu0 0.0
    %390 = vmatprep.subr.mxu0 0.0
    %391 = vmatpush2.msra.mxu0 0.0
    %392 = vmatprep.subr.mxu0 0.0
    %393 = vmatpush2.msra.mxu0 0.0
    %394 = vmatprep.subr.mxu0 0.0
    %395 = vmatpush2.msra.mxu0 0.0
    %396 = vmatprep.subr.mxu0 0.0
    %397 = vmatpush2.msra.mxu0 0.0
    %398 = vmatprep.subr.mxu0 0.0
    %399 = vmatpush2.msra.mxu0 0.0
    %400 = vmatprep.subr.mxu0 0.0
    %401 = vmatpush2.msra.mxu0 0.0
    %402 = vmatprep.subr.mxu0 0.0
    %403 = vmatpush2.msra.mxu0 0.0
    %404 = vmatprep.subr.mxu0 0.0
    %405 = vmatpush2.msra.mxu0 0.0
    %406 = vmatprep.subr.mxu0 0.0
    %407 = vmatpush2.msra.mxu0 0.0
    %408 = vmatprep.subr.mxu0 0.0
    %409 = vmatpush2.msra.mxu0 0.0
    %410 = vmatprep.subr.mxu0 0.0
    %411 = vmatpush2.msra.mxu0 0.0
    %412 = vmatprep.mubr.f32.mxu0 0.0
    %413 = vmatmul.mubr.f32.gmra.mxu0 %v343
    %v414 = vpop.f32.mrf.mxu0
    %v415 = vadd.f32 %v340, %v414
    %v416 = vpop.f32.mrf.mxu0
    %417 = vmatprep.mubr.f32.mxu0 0.0
    %418 = vmatmul.mubr.f32.gmra.mxu0 %v346
    %v419 = vpop.f32.mrf.mxu0
    %v420 = vadd.f32 %v340, %v419
    %v421 = vpop.f32.mrf.mxu0
    %422 = vdwg.mxu0
    %v423 = vlaneseq
    %v424 = vshrl.u32 %v423, 7
    %v425 = vadd.s32 %v424, 8
    %v426 = vlaneseq
    %v427 = vand.u32 %v426, 127
    %vm428 = vcmp.ne.s32.totalorder %v424, %v427
    %vm429 = vcmp.ne.s32.totalorder %v425, %v427
    %v430 = vsel %vm428, 1, 0
    %v431 = vsel %vm429, 1, 0
    %v432 = vcvt.s32.f32 %v430
    %v433 = vcvt.s32.f32 %v431
    %436 = vrot.lane.b32.xlu0 %v415, 96
    %v437 = vpop.permute.xlu0 %436
    %438 = vrot.lane.b32.xlu0 %v420, 96
    %v439 = vpop.permute.xlu0 %438
    %vm440 = vcmask 64512
    %v441 = vsel %vm440, %v415, 0
    %v443 = vsel %vm440, %v420, 0
    %v445 = vsel %vm440, %v437, 0
    %v447 = vsel %vm440, %v439, 0
    %449 = vmatprep.subr.mxu0 0.0
    %450 = vmatpush1.xpose.msra.mxu0 0.0
    %451 = vmatprep.subr.mxu0 0.0
    %452 = vmatpush1.xpose.msra.mxu0 0.0
    %453 = vmatprep.subr.mxu0 0.0
    %454 = vmatpush1.xpose.msra.mxu0 0.0
    %455 = vmatprep.subr.mxu0 0.0
    %456 = vmatpush1.xpose.msra.mxu0 0.0
    %457 = vmatprep.subr.mxu0 0.0
    %458 = vmatpush1.xpose.msra.mxu0 0.0
    %459 = vmatprep.subr.mxu0 0.0
    %460 = vmatpush1.xpose.msra.mxu0 0.0
    %461 = vmatprep.subr.mxu0 0.0
    %462 = vmatpush1.xpose.msra.mxu0 0.0
    %463 = vmatprep.subr.mxu0 0.0
    %464 = vmatpush1.xpose.msra.mxu0 0.0
    %465 = vmatprep.subr.mxu0 0.0
    %466 = vmatpush1.xpose.msra.mxu0 0.0
    %467 = vmatprep.subr.mxu0 0.0
    %468 = vmatpush1.xpose.msra.mxu0 0.0
    %469 = vmatprep.subr.mxu0 0.0
    %470 = vmatpush1.xpose.msra.mxu0 0.0
    %471 = vmatprep.subr.mxu0 0.0
    %472 = vmatpush1.xpose.msra.mxu0 0.0
    %473 = vmatprep.subr.mxu0 0.0
    %474 = vmatpush1.xpose.msra.mxu0 0.0
    %475 = vmatprep.subr.mxu0 0.0
    %476 = vmatpush1.xpose.msra.mxu0 0.0
    %477 = vmatprep.subr.mxu0 0.0
    %478 = vmatpush1.xpose.msra.mxu0 %v447
    %479 = vmatprep.subr.mxu0 0.0
    %480 = vmatpush1.xpose.msra.mxu0 %v445
    %481 = vmatprep.subr.mxu0 0.0
    %482 = vmatpush2.xpose.msra.mxu0 0.0
    %483 = vmatprep.subr.mxu0 0.0
    %484 = vmatpush2.xpose.msra.mxu0 0.0
    %485 = vmatprep.subr.mxu0 0.0
    %486 = vmatpush2.xpose.msra.mxu0 0.0
    %487 = vmatprep.subr.mxu0 0.0
    %488 = vmatpush2.xpose.msra.mxu0 0.0
    %489 = vmatprep.subr.mxu0 0.0
    %490 = vmatpush2.xpose.msra.mxu0 0.0
    %491 = vmatprep.subr.mxu0 0.0
    %492 = vmatpush2.xpose.msra.mxu0 0.0
    %493 = vmatprep.subr.mxu0 0.0
    %494 = vmatpush2.xpose.msra.mxu0 0.0
    %495 = vmatprep.subr.mxu0 0.0
    %496 = vmatpush2.xpose.msra.mxu0 0.0
    %497 = vmatprep.subr.mxu0 0.0
    %498 = vmatpush2.xpose.msra.mxu0 0.0
    %499 = vmatprep.subr.mxu0 0.0
    %500 = vmatpush2.xpose.msra.mxu0 0.0
    %501 = vmatprep.subr.mxu0 0.0
    %502 = vmatpush2.xpose.msra.mxu0 0.0
    %503 = vmatprep.subr.mxu0 0.0
    %504 = vmatpush2.xpose.msra.mxu0 0.0
    %505 = vmatprep.subr.mxu0 0.0
    %506 = vmatpush2.xpose.msra.mxu0 0.0
    %507 = vmatprep.subr.mxu0 0.0
    %508 = vmatpush2.xpose.msra.mxu0 0.0
    %509 = vmatprep.subr.mxu0 0.0
    %510 = vmatpush2.xpose.msra.mxu0 0.0
    %511 = vmatprep.subr.mxu0 0.0
    %512 = vmatpush2.xpose.msra.mxu0 0.0
    %513 = vmatprep.mubr.f32.mxu0 0.0
    %514 = vmatmul.mubr.f32.gmra.mxu0 %v441
    %v515 = vpop.f32.mrf.mxu0
    %v516 = vadd.f32 0.0, %v515
    %v517 = vpop.f32.mrf.mxu0
    %518 = vmatprep.mubr.f32.mxu0 0.0
    %519 = vmatmul.mubr.f32.gmra.mxu0 %v443
    %v520 = vpop.f32.mrf.mxu0
    %v521 = vadd.f32 0.0, %v520
    %v522 = vpop.f32.mrf.mxu0
    %523 = vdwg.mxu0
    %v524 = vmul.f32 %v516, %v432
    %v525 = vmul.f32 %v521, %v433
    %v526 = vsel %vm88, %v524, -inf
    %527 = vmax.xlane.f32.xlu0 %v526
    %v528 = vpop.xlane.xlu0 %527
    %v529 = vsel %vm88, %v525, -inf
    %530 = vmax.xlane.f32.xlu0 %v529
    %v531 = vpop.xlane.xlu0 %530
    %v532 = vsub.f32 %v524, %v528
    %v533 = vsub.f32 %v525, %v531
    %v534 = vmul.f32 %v532, 1.442695
    %v535 = vpow.pop %v534
    %v536 = vmul.f32 %v533, 1.442695
    %v537 = vpow.pop %v536
    %v538 = vsel %vm88, %v535, 0.0
    %539 = vadd.xlane.f32.xlu0 %v538
    %v540 = vpop.xlane.xlu0 %539
    %v541 = vsel %vm88, %v537, 0.0
    %542 = vadd.xlane.f32.xlu0 %v541
    %v543 = vpop.xlane.xlu0 %542
    %v544 = vrcp.pop %v540
    %v545 = vmul.f32 %v535, %v544
    %v546 = vrcp.pop %v543
    %v547 = vmul.f32 %v537, %v546
    %548 = vrot.lane.b32.xlu0 %v415, 64
    %v549 = vpop.permute.xlu0 %548
    %550 = vrot.lane.b32.xlu0 %v420, 64
    %v551 = vpop.permute.xlu0 %550
    %v555 = vsel %vm88, %v545, 0
    %v558 = vsel %vm88, %v547, 0
    %560 = vmatprep.subr.mxu0 0.0
    %561 = vmatpush1.msra.mxu0 0.0
    %562 = vmatprep.subr.mxu0 0.0
    %563 = vmatpush1.msra.mxu0 0.0
    %564 = vmatprep.subr.mxu0 0.0
    %565 = vmatpush1.msra.mxu0 0.0
    %566 = vmatprep.subr.mxu0 0.0
    %567 = vmatpush1.msra.mxu0 0.0
    %568 = vmatprep.subr.mxu0 0.0
    %569 = vmatpush1.msra.mxu0 0.0
    %570 = vmatprep.subr.mxu0 0.0
    %571 = vmatpush1.msra.mxu0 0.0
    %572 = vmatprep.subr.mxu0 0.0
    %573 = vmatpush1.msra.mxu0 0.0
    %574 = vmatprep.subr.mxu0 0.0
    %575 = vmatpush1.msra.mxu0 0.0
    %576 = vmatprep.subr.mxu0 0.0
    %577 = vmatpush1.msra.mxu0 0.0
    %578 = vmatprep.subr.mxu0 0.0
    %579 = vmatpush1.msra.mxu0 0.0
    %580 = vmatprep.subr.mxu0 0.0
    %581 = vmatpush1.msra.mxu0 0.0
    %582 = vmatprep.subr.mxu0 0.0
    %583 = vmatpush1.msra.mxu0 0.0
    %584 = vmatprep.subr.mxu0 0.0
    %585 = vmatpush1.msra.mxu0 0.0
    %586 = vmatprep.subr.mxu0 0.0
    %587 = vmatpush1.msra.mxu0 0.0
    %588 = vmatprep.subr.mxu0 0.0
    %589 = vmatpush1.msra.mxu0 %v551
    %590 = vmatprep.subr.mxu0 0.0
    %591 = vmatpush1.msra.mxu0 %v549
    %592 = vmatprep.subr.mxu0 0.0
    %593 = vmatpush2.msra.mxu0 0.0
    %594 = vmatprep.subr.mxu0 0.0
    %595 = vmatpush2.msra.mxu0 0.0
    %596 = vmatprep.subr.mxu0 0.0
    %597 = vmatpush2.msra.mxu0 0.0
    %598 = vmatprep.subr.mxu0 0.0
    %599 = vmatpush2.msra.mxu0 0.0
    %600 = vmatprep.subr.mxu0 0.0
    %601 = vmatpush2.msra.mxu0 0.0
    %602 = vmatprep.subr.mxu0 0.0
    %603 = vmatpush2.msra.mxu0 0.0
    %604 = vmatprep.subr.mxu0 0.0
    %605 = vmatpush2.msra.mxu0 0.0
    %606 = vmatprep.subr.mxu0 0.0
    %607 = vmatpush2.msra.mxu0 0.0
    %608 = vmatprep.subr.mxu0 0.0
    %609 = vmatpush2.msra.mxu0 0.0
    %610 = vmatprep.subr.mxu0 0.0
    %611 = vmatpush2.msra.mxu0 0.0
    %612 = vmatprep.subr.mxu0 0.0
    %613 = vmatpush2.msra.mxu0 0.0
    %614 = vmatprep.subr.mxu0 0.0
    %615 = vmatpush2.msra.mxu0 0.0
    %616 = vmatprep.subr.mxu0 0.0
    %617 = vmatpush2.msra.mxu0 0.0
    %618 = vmatprep.subr.mxu0 0.0
    %619 = vmatpush2.msra.mxu0 0.0
    %620 = vmatprep.subr.mxu0 0.0
    %621 = vmatpush2.msra.mxu0 0.0
    %622 = vmatprep.subr.mxu0 0.0
    %623 = vmatpush2.msra.mxu0 0.0
    %624 = vmatprep.mubr.f32.mxu0 0.0
    %625 = vmatmul.mubr.f32.gmra.mxu0 %v555
    %v626 = vpop.f32.mrf.mxu0
    %v627 = vadd.f32 0.0, %v626
    %v628 = vpop.f32.mrf.mxu0
    %629 = vmatprep.mubr.f32.mxu0 0.0
    %630 = vmatmul.mubr.f32.gmra.mxu0 %v558
    %v631 = vpop.f32.mrf.mxu0
    %v632 = vadd.f32 0.0, %v631
    %v633 = vpop.f32.mrf.mxu0
    %634 = vdwg.mxu0
    %635 = vrot.lane.b32.xlu0 %v415, 120
    %v636 = vpop.permute.xlu0 %635
    %637 = vrot.lane.b32.xlu0 %v420, 120
    %v638 = vpop.permute.xlu0 %637
    %639 = vrot.lane.b32.xlu0 %v415, 88
    %v640 = vpop.permute.xlu0 %639
    %641 = vrot.lane.b32.xlu0 %v420, 88
    %v642 = vpop.permute.xlu0 %641
    %v643 = vsel %vm440, %v636, 0
    %v645 = vsel %vm440, %v638, 0
    %v647 = vsel %vm440, %v640, 0
    %v649 = vsel %vm440, %v642, 0
    %651 = vmatprep.subr.mxu0 0.0
    %652 = vmatpush1.xpose.msra.mxu0 0.0
    %653 = vmatprep.subr.mxu0 0.0
    %654 = vmatpush1.xpose.msra.mxu0 0.0
    %655 = vmatprep.subr.mxu0 0.0
    %656 = vmatpush1.xpose.msra.mxu0 0.0
    %657 = vmatprep.subr.mxu0 0.0
    %658 = vmatpush1.xpose.msra.mxu0 0.0
    %659 = vmatprep.subr.mxu0 0.0
    %660 = vmatpush1.xpose.msra.mxu0 0.0
    %661 = vmatprep.subr.mxu0 0.0
    %662 = vmatpush1.xpose.msra.mxu0 0.0
    %663 = vmatprep.subr.mxu0 0.0
    %664 = vmatpush1.xpose.msra.mxu0 0.0
    %665 = vmatprep.subr.mxu0 0.0
    %666 = vmatpush1.xpose.msra.mxu0 0.0
    %667 = vmatprep.subr.mxu0 0.0
    %668 = vmatpush1.xpose.msra.mxu0 0.0
    %669 = vmatprep.subr.mxu0 0.0
    %670 = vmatpush1.xpose.msra.mxu0 0.0
    %671 = vmatprep.subr.mxu0 0.0
    %672 = vmatpush1.xpose.msra.mxu0 0.0
    %673 = vmatprep.subr.mxu0 0.0
    %674 = vmatpush1.xpose.msra.mxu0 0.0
    %675 = vmatprep.subr.mxu0 0.0
    %676 = vmatpush1.xpose.msra.mxu0 0.0
    %677 = vmatprep.subr.mxu0 0.0
    %678 = vmatpush1.xpose.msra.mxu0 0.0
    %679 = vmatprep.subr.mxu0 0.0
    %680 = vmatpush1.xpose.msra.mxu0 %v649
    %681 = vmatprep.subr.mxu0 0.0
    %682 = vmatpush1.xpose.msra.mxu0 %v647
    %683 = vmatprep.subr.mxu0 0.0
    %684 = vmatpush2.xpose.msra.mxu0 0.0
    %685 = vmatprep.subr.mxu0 0.0
    %686 = vmatpush2.xpose.msra.mxu0 0.0
    %687 = vmatprep.subr.mxu0 0.0
    %688 = vmatpush2.xpose.msra.mxu0 0.0
    %689 = vmatprep.subr.mxu0 0.0
    %690 = vmatpush2.xpose.msra.mxu0 0.0
    %691 = vmatprep.subr.mxu0 0.0
    %692 = vmatpush2.xpose.msra.mxu0 0.0
    %693 = vmatprep.subr.mxu0 0.0
    %694 = vmatpush2.xpose.msra.mxu0 0.0
    %695 = vmatprep.subr.mxu0 0.0
    %696 = vmatpush2.xpose.msra.mxu0 0.0
    %697 = vmatprep.subr.mxu0 0.0
    %698 = vmatpush2.xpose.msra.mxu0 0.0
    %699 = vmatprep.subr.mxu0 0.0
    %700 = vmatpush2.xpose.msra.mxu0 0.0
    %701 = vmatprep.subr.mxu0 0.0
    %702 = vmatpush2.xpose.msra.mxu0 0.0
    %703 = vmatprep.subr.mxu0 0.0
    %704 = vmatpush2.xpose.msra.mxu0 0.0
    %705 = vmatprep.subr.mxu0 0.0
    %706 = vmatpush2.xpose.msra.mxu0 0.0
    %707 = vmatprep.subr.mxu0 0.0
    %708 = vmatpush2.xpose.msra.mxu0 0.0
    %709 = vmatprep.subr.mxu0 0.0
    %710 = vmatpush2.xpose.msra.mxu0 0.0
    %711 = vmatprep.subr.mxu0 0.0
    %712 = vmatpush2.xpose.msra.mxu0 0.0
    %713 = vmatprep.subr.mxu0 0.0
    %714 = vmatpush2.xpose.msra.mxu0 0.0
    %715 = vmatprep.mubr.f32.mxu0 0.0
    %716 = vmatmul.mubr.f32.gmra.mxu0 %v643
    %v717 = vpop.f32.mrf.mxu0
    %v718 = vadd.f32 0.0, %v717
    %v719 = vpop.f32.mrf.mxu0
    %720 = vmatprep.mubr.f32.mxu0 0.0
    %721 = vmatmul.mubr.f32.gmra.mxu0 %v645
    %v722 = vpop.f32.mrf.mxu0
    %v723 = vadd.f32 0.0, %v722
    %v724 = vpop.f32.mrf.mxu0
    %725 = vdwg.mxu0
    %v726 = vmul.f32 %v718, %v432
    %v727 = vmul.f32 %v723, %v433
    %v728 = vsel %vm88, %v726, -inf
    %729 = vmax.xlane.f32.xlu0 %v728
    %v730 = vpop.xlane.xlu0 %729
    %v731 = vsel %vm88, %v727, -inf
    %732 = vmax.xlane.f32.xlu0 %v731
    %v733 = vpop.xlane.xlu0 %732
    %v734 = vsub.f32 %v726, %v730
    %v735 = vsub.f32 %v727, %v733
    %v736 = vmul.f32 %v734, 1.442695
    %v737 = vpow.pop %v736
    %v738 = vmul.f32 %v735, 1.442695
    %v739 = vpow.pop %v738
    %v740 = vsel %vm88, %v737, 0.0
    %741 = vadd.xlane.f32.xlu0 %v740
    %v742 = vpop.xlane.xlu0 %741
    %v743 = vsel %vm88, %v739, 0.0
    %744 = vadd.xlane.f32.xlu0 %v743
    %v745 = vpop.xlane.xlu0 %744
    %v746 = vrcp.pop %v742
    %v747 = vmul.f32 %v737, %v746
    %v748 = vrcp.pop %v745
    %v749 = vmul.f32 %v739, %v748
    %750 = vrot.lane.b32.xlu0 %v415, 56
    %v751 = vpop.permute.xlu0 %750
    %752 = vrot.lane.b32.xlu0 %v420, 56
    %v753 = vpop.permute.xlu0 %752
    %v757 = vsel %vm88, %v747, 0
    %v760 = vsel %vm88, %v749, 0
    %762 = vmatprep.subr.mxu0 0.0
    %763 = vmatpush1.msra.mxu0 0.0
    %764 = vmatprep.subr.mxu0 0.0
    %765 = vmatpush1.msra.mxu0 0.0
    %766 = vmatprep.subr.mxu0 0.0
    %767 = vmatpush1.msra.mxu0 0.0
    %768 = vmatprep.subr.mxu0 0.0
    %769 = vmatpush1.msra.mxu0 0.0
    %770 = vmatprep.subr.mxu0 0.0
    %771 = vmatpush1.msra.mxu0 0.0
    %772 = vmatprep.subr.mxu0 0.0
    %773 = vmatpush1.msra.mxu0 0.0
    %774 = vmatprep.subr.mxu0 0.0
    %775 = vmatpush1.msra.mxu0 0.0
    %776 = vmatprep.subr.mxu0 0.0
    %777 = vmatpush1.msra.mxu0 0.0
    %778 = vmatprep.subr.mxu0 0.0
    %779 = vmatpush1.msra.mxu0 0.0
    %780 = vmatprep.subr.mxu0 0.0
    %781 = vmatpush1.msra.mxu0 0.0
    %782 = vmatprep.subr.mxu0 0.0
    %783 = vmatpush1.msra.mxu0 0.0
    %784 = vmatprep.subr.mxu0 0.0
    %785 = vmatpush1.msra.mxu0 0.0
    %786 = vmatprep.subr.mxu0 0.0
    %787 = vmatpush1.msra.mxu0 0.0
    %788 = vmatprep.subr.mxu0 0.0
    %789 = vmatpush1.msra.mxu0 0.0
    %790 = vmatprep.subr.mxu0 0.0
    %791 = vmatpush1.msra.mxu0 %v753
    %792 = vmatprep.subr.mxu0 0.0
    %793 = vmatpush1.msra.mxu0 %v751
    %794 = vmatprep.subr.mxu0 0.0
    %795 = vmatpush2.msra.mxu0 0.0
    %796 = vmatprep.subr.mxu0 0.0
    %797 = vmatpush2.msra.mxu0 0.0
    %798 = vmatprep.subr.mxu0 0.0
    %799 = vmatpush2.msra.mxu0 0.0
    %800 = vmatprep.subr.mxu0 0.0
    %801 = vmatpush2.msra.mxu0 0.0
    %802 = vmatprep.subr.mxu0 0.0
    %803 = vmatpush2.msra.mxu0 0.0
    %804 = vmatprep.subr.mxu0 0.0
    %805 = vmatpush2.msra.mxu0 0.0
    %806 = vmatprep.subr.mxu0 0.0
    %807 = vmatpush2.msra.mxu0 0.0
    %808 = vmatprep.subr.mxu0 0.0
    %809 = vmatpush2.msra.mxu0 0.0
    %810 = vmatprep.subr.mxu0 0.0
    %811 = vmatpush2.msra.mxu0 0.0
    %812 = vmatprep.subr.mxu0 0.0
    %813 = vmatpush2.msra.mxu0 0.0
    %814 = vmatprep.subr.mxu0 0.0
    %815 = vmatpush2.msra.mxu0 0.0
    %816 = vmatprep.subr.mxu0 0.0
    %817 = vmatpush2.msra.mxu0 0.0
    %818 = vmatprep.subr.mxu0 0.0
    %819 = vmatpush2.msra.mxu0 0.0
    %820 = vmatprep.subr.mxu0 0.0
    %821 = vmatpush2.msra.mxu0 0.0
    %822 = vmatprep.subr.mxu0 0.0
    %823 = vmatpush2.msra.mxu0 0.0
    %824 = vmatprep.subr.mxu0 0.0
    %825 = vmatpush2.msra.mxu0 0.0
    %826 = vmatprep.mubr.f32.mxu0 0.0
    %827 = vmatmul.mubr.f32.gmra.mxu0 %v757
    %v828 = vpop.f32.mrf.mxu0
    %v829 = vadd.f32 0.0, %v828
    %v830 = vpop.f32.mrf.mxu0
    %831 = vmatprep.mubr.f32.mxu0 0.0
    %832 = vmatmul.mubr.f32.gmra.mxu0 %v760
    %v833 = vpop.f32.mrf.mxu0
    %v834 = vadd.f32 0.0, %v833
    %v835 = vpop.f32.mrf.mxu0
    %836 = vdwg.mxu0
    %v838 = vsel %vm440, %v829, 0
    %v841 = vsel %vm440, %v834, 0
    %843 = vmatprep.subr.mxu0 0.0
    %844 = vmatpush1.msra.mxu0 0.0
    %845 = vmatprep.subr.mxu0 0.0
    %846 = vmatpush1.msra.mxu0 0.0
    %847 = vmatprep.subr.mxu0 0.0
    %848 = vmatpush1.msra.mxu0 0.0
    %849 = vmatprep.subr.mxu0 0.0
    %850 = vmatpush1.msra.mxu0 0.0
    %851 = vmatprep.subr.mxu0 0.0
    %852 = vmatpush1.msra.mxu0 0.0
    %853 = vmatprep.subr.mxu0 0.0
    %854 = vmatpush1.msra.mxu0 0.0
    %855 = vmatprep.subr.mxu0 0.0
    %856 = vmatpush1.msra.mxu0 0.0
    %857 = vmatprep.subr.mxu0 0.0
    %858 = vmatpush1.msra.mxu0 0.0
    %859 = vmatprep.subr.mxu0 0.0
    %860 = vmatpush1.msra.mxu0 0.0
    %861 = vmatprep.subr.mxu0 0.0
    %862 = vmatpush1.msra.mxu0 0.0
    %863 = vmatprep.subr.mxu0 0.0
    %864 = vmatpush1.msra.mxu0 0.0
    %865 = vmatprep.subr.mxu0 0.0
    %866 = vmatpush1.msra.mxu0 0.0
    %867 = vmatprep.subr.mxu0 0.0
    %868 = vmatpush1.msra.mxu0 0.0
    %869 = vmatprep.subr.mxu0 0.0
    %870 = vmatpush1.msra.mxu0 0.0
    %871 = vmatprep.subr.mxu0 0.0
    %872 = vmatpush1.msra.mxu0 0.0
    %873 = vmatprep.subr.mxu0 0.0
    %874 = vmatpush1.msra.mxu0 %v305
    %875 = vmatprep.subr.mxu0 0.0
    %876 = vmatpush2.msra.mxu0 0.0
    %877 = vmatprep.subr.mxu0 0.0
    %878 = vmatpush2.msra.mxu0 0.0
    %879 = vmatprep.subr.mxu0 0.0
    %880 = vmatpush2.msra.mxu0 0.0
    %881 = vmatprep.subr.mxu0 0.0
    %882 = vmatpush2.msra.mxu0 0.0
    %883 = vmatprep.subr.mxu0 0.0
    %884 = vmatpush2.msra.mxu0 0.0
    %885 = vmatprep.subr.mxu0 0.0
    %886 = vmatpush2.msra.mxu0 0.0
    %887 = vmatprep.subr.mxu0 0.0
    %888 = vmatpush2.msra.mxu0 0.0
    %889 = vmatprep.subr.mxu0 0.0
    %890 = vmatpush2.msra.mxu0 0.0
    %891 = vmatprep.subr.mxu0 0.0
    %892 = vmatpush2.msra.mxu0 0.0
    %893 = vmatprep.subr.mxu0 0.0
    %894 = vmatpush2.msra.mxu0 0.0
    %895 = vmatprep.subr.mxu0 0.0
    %896 = vmatpush2.msra.mxu0 0.0
    %897 = vmatprep.subr.mxu0 0.0
    %898 = vmatpush2.msra.mxu0 0.0
    %899 = vmatprep.subr.mxu0 0.0
    %900 = vmatpush2.msra.mxu0 0.0
    %901 = vmatprep.subr.mxu0 0.0
    %902 = vmatpush2.msra.mxu0 0.0
    %903 = vmatprep.subr.mxu0 0.0
    %904 = vmatpush2.msra.mxu0 0.0
    %905 = vmatprep.subr.mxu0 0.0
    %906 = vmatpush2.msra.mxu0 0.0
    %907 = vmatprep.mubr.f32.mxu0 0.0
    %908 = vmatmul.mubr.f32.gmra.mxu0 %v838
    %v909 = vpop.f32.mrf.mxu0
    %v910 = vadd.f32 0.0, %v909
    %v911 = vpop.f32.mrf.mxu0
    %912 = vmatprep.mubr.f32.mxu0 0.0
    %913 = vmatmul.mubr.f32.gmra.mxu0 %v841
    %v914 = vpop.f32.mrf.mxu0
    %v915 = vadd.f32 0.0, %v914
    %v916 = vpop.f32.mrf.mxu0
    %917 = vdwg.mxu0
    %v919 = vsel %vm440, %v627, 0
    %v922 = vsel %vm440, %v632, 0
    %924 = vmatprep.subr.mxu0 0.0
    %925 = vmatpush1.msra.mxu0 0.0
    %926 = vmatprep.subr.mxu0 0.0
    %927 = vmatpush1.msra.mxu0 0.0
    %928 = vmatprep.subr.mxu0 0.0
    %929 = vmatpush1.msra.mxu0 0.0
    %930 = vmatprep.subr.mxu0 0.0
    %931 = vmatpush1.msra.mxu0 0.0
    %932 = vmatprep.subr.mxu0 0.0
    %933 = vmatpush1.msra.mxu0 0.0
    %934 = vmatprep.subr.mxu0 0.0
    %935 = vmatpush1.msra.mxu0 0.0
    %936 = vmatprep.subr.mxu0 0.0
    %937 = vmatpush1.msra.mxu0 0.0
    %938 = vmatprep.subr.mxu0 0.0
    %939 = vmatpush1.msra.mxu0 0.0
    %940 = vmatprep.subr.mxu0 0.0
    %941 = vmatpush1.msra.mxu0 0.0
    %942 = vmatprep.subr.mxu0 0.0
    %943 = vmatpush1.msra.mxu0 0.0
    %944 = vmatprep.subr.mxu0 0.0
    %945 = vmatpush1.msra.mxu0 0.0
    %946 = vmatprep.subr.mxu0 0.0
    %947 = vmatpush1.msra.mxu0 0.0
    %948 = vmatprep.subr.mxu0 0.0
    %949 = vmatpush1.msra.mxu0 0.0
    %950 = vmatprep.subr.mxu0 0.0
    %951 = vmatpush1.msra.mxu0 0.0
    %952 = vmatprep.subr.mxu0 0.0
    %953 = vmatpush1.msra.mxu0 0.0
    %954 = vmatprep.subr.mxu0 0.0
    %955 = vmatpush1.msra.mxu0 %v304
    %956 = vmatprep.subr.mxu0 0.0
    %957 = vmatpush2.msra.mxu0 0.0
    %958 = vmatprep.subr.mxu0 0.0
    %959 = vmatpush2.msra.mxu0 0.0
    %960 = vmatprep.subr.mxu0 0.0
    %961 = vmatpush2.msra.mxu0 0.0
    %962 = vmatprep.subr.mxu0 0.0
    %963 = vmatpush2.msra.mxu0 0.0
    %964 = vmatprep.subr.mxu0 0.0
    %965 = vmatpush2.msra.mxu0 0.0
    %966 = vmatprep.subr.mxu0 0.0
    %967 = vmatpush2.msra.mxu0 0.0
    %968 = vmatprep.subr.mxu0 0.0
    %969 = vmatpush2.msra.mxu0 0.0
    %970 = vmatprep.subr.mxu0 0.0
    %971 = vmatpush2.msra.mxu0 0.0
    %972 = vmatprep.subr.mxu0 0.0
    %973 = vmatpush2.msra.mxu0 0.0
    %974 = vmatprep.subr.mxu0 0.0
    %975 = vmatpush2.msra.mxu0 0.0
    %976 = vmatprep.subr.mxu0 0.0
    %977 = vmatpush2.msra.mxu0 0.0
    %978 = vmatprep.subr.mxu0 0.0
    %979 = vmatpush2.msra.mxu0 0.0
    %980 = vmatprep.subr.mxu0 0.0
    %981 = vmatpush2.msra.mxu0 0.0
    %982 = vmatprep.subr.mxu0 0.0
    %983 = vmatpush2.msra.mxu0 0.0
    %984 = vmatprep.subr.mxu0 0.0
    %985 = vmatpush2.msra.mxu0 0.0
    %986 = vmatprep.subr.mxu0 0.0
    %987 = vmatpush2.msra.mxu0 0.0
    %988 = vmatprep.mubr.f32.mxu0 0.0
    %989 = vmatmul.mubr.f32.gmra.mxu0 %v919
    %v990 = vpop.f32.mrf.mxu0
    %v991 = vadd.f32 %v910, %v990
    %v992 = vpop.f32.mrf.mxu0
    %993 = vmatprep.mubr.f32.mxu0 0.0
    %994 = vmatmul.mubr.f32.gmra.mxu0 %v922
    %v995 = vpop.f32.mrf.mxu0
    %v996 = vadd.f32 %v915, %v995
    %v997 = vpop.f32.mrf.mxu0
    %998 = vdwg.mxu0
    %999 = vrot.lane.b32.xlu0 %v415, 112
    %v1000 = vpop.permute.xlu0 %999
    %1001 = vrot.lane.b32.xlu0 %v420, 112
    %v1002 = vpop.permute.xlu0 %1001
    %1003 = vrot.lane.b32.xlu0 %v415, 80
    %v1004 = vpop.permute.xlu0 %1003
    %1005 = vrot.lane.b32.xlu0 %v420, 80
    %v1006 = vpop.permute.xlu0 %1005
    %v1007 = vsel %vm440, %v1000, 0
    %v1009 = vsel %vm440, %v1002, 0
    %v1011 = vsel %vm440, %v1004, 0
    %v1013 = vsel %vm440, %v1006, 0
    %1015 = vmatprep.subr.mxu0 0.0
    %1016 = vmatpush1.xpose.msra.mxu0 0.0
    %1017 = vmatprep.subr.mxu0 0.0
    %1018 = vmatpush1.xpose.msra.mxu0 0.0
    %1019 = vmatprep.subr.mxu0 0.0
    %1020 = vmatpush1.xpose.msra.mxu0 0.0
    %1021 = vmatprep.subr.mxu0 0.0
    %1022 = vmatpush1.xpose.msra.mxu0 0.0
    %1023 = vmatprep.subr.mxu0 0.0
    %1024 = vmatpush1.xpose.msra.mxu0 0.0
    %1025 = vmatprep.subr.mxu0 0.0
    %1026 = vmatpush1.xpose.msra.mxu0 0.0
    %1027 = vmatprep.subr.mxu0 0.0
    %1028 = vmatpush1.xpose.msra.mxu0 0.0
    %1029 = vmatprep.subr.mxu0 0.0
    %1030 = vmatpush1.xpose.msra.mxu0 0.0
    %1031 = vmatprep.subr.mxu0 0.0
    %1032 = vmatpush1.xpose.msra.mxu0 0.0
    %1033 = vmatprep.subr.mxu0 0.0
    %1034 = vmatpush1.xpose.msra.mxu0 0.0
    %1035 = vmatprep.subr.mxu0 0.0
    %1036 = vmatpush1.xpose.msra.mxu0 0.0
    %1037 = vmatprep.subr.mxu0 0.0
    %1038 = vmatpush1.xpose.msra.mxu0 0.0
    %1039 = vmatprep.subr.mxu0 0.0
    %1040 = vmatpush1.xpose.msra.mxu0 0.0
    %1041 = vmatprep.subr.mxu0 0.0
    %1042 = vmatpush1.xpose.msra.mxu0 0.0
    %1043 = vmatprep.subr.mxu0 0.0
    %1044 = vmatpush1.xpose.msra.mxu0 %v1013
    %1045 = vmatprep.subr.mxu0 0.0
    %1046 = vmatpush1.xpose.msra.mxu0 %v1011
    %1047 = vmatprep.subr.mxu0 0.0
    %1048 = vmatpush2.xpose.msra.mxu0 0.0
    %1049 = vmatprep.subr.mxu0 0.0
    %1050 = vmatpush2.xpose.msra.mxu0 0.0
    %1051 = vmatprep.subr.mxu0 0.0
    %1052 = vmatpush2.xpose.msra.mxu0 0.0
    %1053 = vmatprep.subr.mxu0 0.0
    %1054 = vmatpush2.xpose.msra.mxu0 0.0
    %1055 = vmatprep.subr.mxu0 0.0
    %1056 = vmatpush2.xpose.msra.mxu0 0.0
    %1057 = vmatprep.subr.mxu0 0.0
    %1058 = vmatpush2.xpose.msra.mxu0 0.0
    %1059 = vmatprep.subr.mxu0 0.0
    %1060 = vmatpush2.xpose.msra.mxu0 0.0
    %1061 = vmatprep.subr.mxu0 0.0
    %1062 = vmatpush2.xpose.msra.mxu0 0.0
    %1063 = vmatprep.subr.mxu0 0.0
    %1064 = vmatpush2.xpose.msra.mxu0 0.0
    %1065 = vmatprep.subr.mxu0 0.0
    %1066 = vmatpush2.xpose.msra.mxu0 0.0
    %1067 = vmatprep.subr.mxu0 0.0
    %1068 = vmatpush2.xpose.msra.mxu0 0.0
    %1069 = vmatprep.subr.mxu0 0.0
    %1070 = vmatpush2.xpose.msra.mxu0 0.0
    %1071 = vmatprep.subr.mxu0 0.0
    %1072 = vmatpush2.xpose.msra.mxu0 0.0
    %1073 = vmatprep.subr.mxu0 0.0
    %1074 = vmatpush2.xpose.msra.mxu0 0.0
    %1075 = vmatprep.subr.mxu0 0.0
    %1076 = vmatpush2.xpose.msra.mxu0 0.0
    %1077 = vmatprep.subr.mxu0 0.0
    %1078 = vmatpush2.xpose.msra.mxu0 0.0
    %1079 = vmatprep.mubr.f32.mxu0 0.0
    %1080 = vmatmul.mubr.f32.gmra.mxu0 %v1007
    %v1081 = vpop.f32.mrf.mxu0
    %v1082 = vadd.f32 0.0, %v1081
    %v1083 = vpop.f32.mrf.mxu0
    %1084 = vmatprep.mubr.f32.mxu0 0.0
    %1085 = vmatmul.mubr.f32.gmra.mxu0 %v1009
    %v1086 = vpop.f32.mrf.mxu0
    %v1087 = vadd.f32 0.0, %v1086
    %v1088 = vpop.f32.mrf.mxu0
    %1089 = vdwg.mxu0
    %v1090 = vmul.f32 %v1082, %v432
    %v1091 = vmul.f32 %v1087, %v433
    %v1092 = vsel %vm88, %v1090, -inf
    %1093 = vmax.xlane.f32.xlu0 %v1092
    %v1094 = vpop.xlane.xlu0 %1093
    %v1095 = vsel %vm88, %v1091, -inf
    %1096 = vmax.xlane.f32.xlu0 %v1095
    %v1097 = vpop.xlane.xlu0 %1096
    %v1098 = vsub.f32 %v1090, %v1094
    %v1099 = vsub.f32 %v1091, %v1097
    %v1100 = vmul.f32 %v1098, 1.442695
    %v1101 = vpow.pop %v1100
    %v1102 = vmul.f32 %v1099, 1.442695
    %v1103 = vpow.pop %v1102
    %v1104 = vsel %vm88, %v1101, 0.0
    %1105 = vadd.xlane.f32.xlu0 %v1104
    %v1106 = vpop.xlane.xlu0 %1105
    %v1107 = vsel %vm88, %v1103, 0.0
    %1108 = vadd.xlane.f32.xlu0 %v1107
    %v1109 = vpop.xlane.xlu0 %1108
    %v1110 = vrcp.pop %v1106
    %v1111 = vmul.f32 %v1101, %v1110
    %v1112 = vrcp.pop %v1109
    %v1113 = vmul.f32 %v1103, %v1112
    %1114 = vrot.lane.b32.xlu0 %v415, 48
    %v1115 = vpop.permute.xlu0 %1114
    %1116 = vrot.lane.b32.xlu0 %v420, 48
    %v1117 = vpop.permute.xlu0 %1116
    %v1121 = vsel %vm88, %v1111, 0
    %v1124 = vsel %vm88, %v1113, 0
    %1126 = vmatprep.subr.mxu0 0.0
    %1127 = vmatpush1.msra.mxu0 0.0
    %1128 = vmatprep.subr.mxu0 0.0
    %1129 = vmatpush1.msra.mxu0 0.0
    %1130 = vmatprep.subr.mxu0 0.0
    %1131 = vmatpush1.msra.mxu0 0.0
    %1132 = vmatprep.subr.mxu0 0.0
    %1133 = vmatpush1.msra.mxu0 0.0
    %1134 = vmatprep.subr.mxu0 0.0
    %1135 = vmatpush1.msra.mxu0 0.0
    %1136 = vmatprep.subr.mxu0 0.0
    %1137 = vmatpush1.msra.mxu0 0.0
    %1138 = vmatprep.subr.mxu0 0.0
    %1139 = vmatpush1.msra.mxu0 0.0
    %1140 = vmatprep.subr.mxu0 0.0
    %1141 = vmatpush1.msra.mxu0 0.0
    %1142 = vmatprep.subr.mxu0 0.0
    %1143 = vmatpush1.msra.mxu0 0.0
    %1144 = vmatprep.subr.mxu0 0.0
    %1145 = vmatpush1.msra.mxu0 0.0
    %1146 = vmatprep.subr.mxu0 0.0
    %1147 = vmatpush1.msra.mxu0 0.0
    %1148 = vmatprep.subr.mxu0 0.0
    %1149 = vmatpush1.msra.mxu0 0.0
    %1150 = vmatprep.subr.mxu0 0.0
    %1151 = vmatpush1.msra.mxu0 0.0
    %1152 = vmatprep.subr.mxu0 0.0
    %1153 = vmatpush1.msra.mxu0 0.0
    %1154 = vmatprep.subr.mxu0 0.0
    %1155 = vmatpush1.msra.mxu0 %v1117
    %1156 = vmatprep.subr.mxu0 0.0
    %1157 = vmatpush1.msra.mxu0 %v1115
    %1158 = vmatprep.subr.mxu0 0.0
    %1159 = vmatpush2.msra.mxu0 0.0
    %1160 = vmatprep.subr.mxu0 0.0
    %1161 = vmatpush2.msra.mxu0 0.0
    %1162 = vmatprep.subr.mxu0 0.0
    %1163 = vmatpush2.msra.mxu0 0.0
    %1164 = vmatprep.subr.mxu0 0.0
    %1165 = vmatpush2.msra.mxu0 0.0
    %1166 = vmatprep.subr.mxu0 0.0
    %1167 = vmatpush2.msra.mxu0 0.0
    %1168 = vmatprep.subr.mxu0 0.0
    %1169 = vmatpush2.msra.mxu0 0.0
    %1170 = vmatprep.subr.mxu0 0.0
    %1171 = vmatpush2.msra.mxu0 0.0
    %1172 = vmatprep.subr.mxu0 0.0
    %1173 = vmatpush2.msra.mxu0 0.0
    %1174 = vmatprep.subr.mxu0 0.0
    %1175 = vmatpush2.msra.mxu0 0.0
    %1176 = vmatprep.subr.mxu0 0.0
    %1177 = vmatpush2.msra.mxu0 0.0
    %1178 = vmatprep.subr.mxu0 0.0
    %1179 = vmatpush2.msra.mxu0 0.0
    %1180 = vmatprep.subr.mxu0 0.0
    %1181 = vmatpush2.msra.mxu0 0.0
    %1182 = vmatprep.subr.mxu0 0.0
    %1183 = vmatpush2.msra.mxu0 0.0
    %1184 = vmatprep.subr.mxu0 0.0
    %1185 = vmatpush2.msra.mxu0 0.0
    %1186 = vmatprep.subr.mxu0 0.0
    %1187 = vmatpush2.msra.mxu0 0.0
    %1188 = vmatprep.subr.mxu0 0.0
    %1189 = vmatpush2.msra.mxu0 0.0
    %1190 = vmatprep.mubr.f32.mxu0 0.0
    %1191 = vmatmul.mubr.f32.gmra.mxu0 %v1121
    %v1192 = vpop.f32.mrf.mxu0
    %v1193 = vadd.f32 0.0, %v1192
    %v1194 = vpop.f32.mrf.mxu0
    %1195 = vmatprep.mubr.f32.mxu0 0.0
    %1196 = vmatmul.mubr.f32.gmra.mxu0 %v1124
    %v1197 = vpop.f32.mrf.mxu0
    %v1198 = vadd.f32 0.0, %v1197
    %v1199 = vpop.f32.mrf.mxu0
    %1200 = vdwg.mxu0
    %v1202 = vsel %vm440, %v1193, 0
    %v1205 = vsel %vm440, %v1198, 0
    %1207 = vmatprep.subr.mxu0 0.0
    %1208 = vmatpush1.msra.mxu0 0.0
    %1209 = vmatprep.subr.mxu0 0.0
    %1210 = vmatpush1.msra.mxu0 0.0
    %1211 = vmatprep.subr.mxu0 0.0
    %1212 = vmatpush1.msra.mxu0 0.0
    %1213 = vmatprep.subr.mxu0 0.0
    %1214 = vmatpush1.msra.mxu0 0.0
    %1215 = vmatprep.subr.mxu0 0.0
    %1216 = vmatpush1.msra.mxu0 0.0
    %1217 = vmatprep.subr.mxu0 0.0
    %1218 = vmatpush1.msra.mxu0 0.0
    %1219 = vmatprep.subr.mxu0 0.0
    %1220 = vmatpush1.msra.mxu0 0.0
    %1221 = vmatprep.subr.mxu0 0.0
    %1222 = vmatpush1.msra.mxu0 0.0
    %1223 = vmatprep.subr.mxu0 0.0
    %1224 = vmatpush1.msra.mxu0 0.0
    %1225 = vmatprep.subr.mxu0 0.0
    %1226 = vmatpush1.msra.mxu0 0.0
    %1227 = vmatprep.subr.mxu0 0.0
    %1228 = vmatpush1.msra.mxu0 0.0
    %1229 = vmatprep.subr.mxu0 0.0
    %1230 = vmatpush1.msra.mxu0 0.0
    %1231 = vmatprep.subr.mxu0 0.0
    %1232 = vmatpush1.msra.mxu0 0.0
    %1233 = vmatprep.subr.mxu0 0.0
    %1234 = vmatpush1.msra.mxu0 0.0
    %1235 = vmatprep.subr.mxu0 0.0
    %1236 = vmatpush1.msra.mxu0 0.0
    %1237 = vmatprep.subr.mxu0 0.0
    %1238 = vmatpush1.msra.mxu0 %v306
    %1239 = vmatprep.subr.mxu0 0.0
    %1240 = vmatpush2.msra.mxu0 0.0
    %1241 = vmatprep.subr.mxu0 0.0
    %1242 = vmatpush2.msra.mxu0 0.0
    %1243 = vmatprep.subr.mxu0 0.0
    %1244 = vmatpush2.msra.mxu0 0.0
    %1245 = vmatprep.subr.mxu0 0.0
    %1246 = vmatpush2.msra.mxu0 0.0
    %1247 = vmatprep.subr.mxu0 0.0
    %1248 = vmatpush2.msra.mxu0 0.0
    %1249 = vmatprep.subr.mxu0 0.0
    %1250 = vmatpush2.msra.mxu0 0.0
    %1251 = vmatprep.subr.mxu0 0.0
    %1252 = vmatpush2.msra.mxu0 0.0
    %1253 = vmatprep.subr.mxu0 0.0
    %1254 = vmatpush2.msra.mxu0 0.0
    %1255 = vmatprep.subr.mxu0 0.0
    %1256 = vmatpush2.msra.mxu0 0.0
    %1257 = vmatprep.subr.mxu0 0.0
    %1258 = vmatpush2.msra.mxu0 0.0
    %1259 = vmatprep.subr.mxu0 0.0
    %1260 = vmatpush2.msra.mxu0 0.0
    %1261 = vmatprep.subr.mxu0 0.0
    %1262 = vmatpush2.msra.mxu0 0.0
    %1263 = vmatprep.subr.mxu0 0.0
    %1264 = vmatpush2.msra.mxu0 0.0
    %1265 = vmatprep.subr.mxu0 0.0
    %1266 = vmatpush2.msra.mxu0 0.0
    %1267 = vmatprep.subr.mxu0 0.0
    %1268 = vmatpush2.msra.mxu0 0.0
    %1269 = vmatprep.subr.mxu0 0.0
    %1270 = vmatpush2.msra.mxu0 0.0
    %1271 = vmatprep.mubr.f32.mxu0 0.0
    %1272 = vmatmul.mubr.f32.gmra.mxu0 %v1202
    %v1273 = vpop.f32.mrf.mxu0
    %v1274 = vadd.f32 0.0, %v1273
    %v1275 = vpop.f32.mrf.mxu0
    %1276 = vmatprep.mubr.f32.mxu0 0.0
    %1277 = vmatmul.mubr.f32.gmra.mxu0 %v1205
    %v1278 = vpop.f32.mrf.mxu0
    %v1279 = vadd.f32 0.0, %v1278
    %v1280 = vpop.f32.mrf.mxu0
    %1281 = vdwg.mxu0
    %v1282 = vadd.f32 %v991, %v1274
    %v1283 = vadd.f32 %v996, %v1279
    %1284 = vrot.lane.b32.xlu0 %v415, 104
    %v1285 = vpop.permute.xlu0 %1284
    %1286 = vrot.lane.b32.xlu0 %v420, 104
    %v1287 = vpop.permute.xlu0 %1286
    %1288 = vrot.lane.b32.xlu0 %v415, 72
    %v1289 = vpop.permute.xlu0 %1288
    %1290 = vrot.lane.b32.xlu0 %v420, 72
    %v1291 = vpop.permute.xlu0 %1290
    %v1292 = vsel %vm440, %v1285, 0
    %v1294 = vsel %vm440, %v1287, 0
    %v1296 = vsel %vm440, %v1289, 0
    %v1298 = vsel %vm440, %v1291, 0
    %1300 = vmatprep.subr.mxu0 0.0
    %1301 = vmatpush1.xpose.msra.mxu0 0.0
    %1302 = vmatprep.subr.mxu0 0.0
    %1303 = vmatpush1.xpose.msra.mxu0 0.0
    %1304 = vmatprep.subr.mxu0 0.0
    %1305 = vmatpush1.xpose.msra.mxu0 0.0
    %1306 = vmatprep.subr.mxu0 0.0
    %1307 = vmatpush1.xpose.msra.mxu0 0.0
    %1308 = vmatprep.subr.mxu0 0.0
    %1309 = vmatpush1.xpose.msra.mxu0 0.0
    %1310 = vmatprep.subr.mxu0 0.0
    %1311 = vmatpush1.xpose.msra.mxu0 0.0
    %1312 = vmatprep.subr.mxu0 0.0
    %1313 = vmatpush1.xpose.msra.mxu0 0.0
    %1314 = vmatprep.subr.mxu0 0.0
    %1315 = vmatpush1.xpose.msra.mxu0 0.0
    %1316 = vmatprep.subr.mxu0 0.0
    %1317 = vmatpush1.xpose.msra.mxu0 0.0
    %1318 = vmatprep.subr.mxu0 0.0
    %1319 = vmatpush1.xpose.msra.mxu0 0.0
    %1320 = vmatprep.subr.mxu0 0.0
    %1321 = vmatpush1.xpose.msra.mxu0 0.0
    %1322 = vmatprep.subr.mxu0 0.0
    %1323 = vmatpush1.xpose.msra.mxu0 0.0
    %1324 = vmatprep.subr.mxu0 0.0
    %1325 = vmatpush1.xpose.msra.mxu0 0.0
    %1326 = vmatprep.subr.mxu0 0.0
    %1327 = vmatpush1.xpose.msra.mxu0 0.0
    %1328 = vmatprep.subr.mxu0 0.0
    %1329 = vmatpush1.xpose.msra.mxu0 %v1298
    %1330 = vmatprep.subr.mxu0 0.0
    %1331 = vmatpush1.xpose.msra.mxu0 %v1296
    %1332 = vmatprep.subr.mxu0 0.0
    %1333 = vmatpush2.xpose.msra.mxu0 0.0
    %1334 = vmatprep.subr.mxu0 0.0
    %1335 = vmatpush2.xpose.msra.mxu0 0.0
    %1336 = vmatprep.subr.mxu0 0.0
    %1337 = vmatpush2.xpose.msra.mxu0 0.0
    %1338 = vmatprep.subr.mxu0 0.0
    %1339 = vmatpush2.xpose.msra.mxu0 0.0
    %1340 = vmatprep.subr.mxu0 0.0
    %1341 = vmatpush2.xpose.msra.mxu0 0.0
    %1342 = vmatprep.subr.mxu0 0.0
    %1343 = vmatpush2.xpose.msra.mxu0 0.0
    %1344 = vmatprep.subr.mxu0 0.0
    %1345 = vmatpush2.xpose.msra.mxu0 0.0
    %1346 = vmatprep.subr.mxu0 0.0
    %1347 = vmatpush2.xpose.msra.mxu0 0.0
    %1348 = vmatprep.subr.mxu0 0.0
    %1349 = vmatpush2.xpose.msra.mxu0 0.0
    %1350 = vmatprep.subr.mxu0 0.0
    %1351 = vmatpush2.xpose.msra.mxu0 0.0
    %1352 = vmatprep.subr.mxu0 0.0
    %1353 = vmatpush2.xpose.msra.mxu0 0.0
    %1354 = vmatprep.subr.mxu0 0.0
    %1355 = vmatpush2.xpose.msra.mxu0 0.0
    %1356 = vmatprep.subr.mxu0 0.0
    %1357 = vmatpush2.xpose.msra.mxu0 0.0
    %1358 = vmatprep.subr.mxu0 0.0
    %1359 = vmatpush2.xpose.msra.mxu0 0.0
    %1360 = vmatprep.subr.mxu0 0.0
    %1361 = vmatpush2.xpose.msra.mxu0 0.0
    %1362 = vmatprep.subr.mxu0 0.0
    %1363 = vmatpush2.xpose.msra.mxu0 0.0
    %1364 = vmatprep.mubr.f32.mxu0 0.0
    %1365 = vmatmul.mubr.f32.gmra.mxu0 %v1292
    %v1366 = vpop.f32.mrf.mxu0
    %v1367 = vadd.f32 0.0, %v1366
    %v1368 = vpop.f32.mrf.mxu0
    %1369 = vmatprep.mubr.f32.mxu0 0.0
    %1370 = vmatmul.mubr.f32.gmra.mxu0 %v1294
    %v1371 = vpop.f32.mrf.mxu0
    %v1372 = vadd.f32 0.0, %v1371
    %v1373 = vpop.f32.mrf.mxu0
    %1374 = vdwg.mxu0
    %v1375 = vmul.f32 %v1367, %v432
    %v1376 = vmul.f32 %v1372, %v433
    %v1377 = vsel %vm88, %v1375, -inf
    %1378 = vmax.xlane.f32.xlu0 %v1377
    %v1379 = vpop.xlane.xlu0 %1378
    %v1380 = vsel %vm88, %v1376, -inf
    %1381 = vmax.xlane.f32.xlu0 %v1380
    %v1382 = vpop.xlane.xlu0 %1381
    %v1383 = vsub.f32 %v1375, %v1379
    %v1384 = vsub.f32 %v1376, %v1382
    %v1385 = vmul.f32 %v1383, 1.442695
    %v1386 = vpow.pop %v1385
    %v1387 = vmul.f32 %v1384, 1.442695
    %v1388 = vpow.pop %v1387
    %v1389 = vsel %vm88, %v1386, 0.0
    %1390 = vadd.xlane.f32.xlu0 %v1389
    %v1391 = vpop.xlane.xlu0 %1390
    %v1392 = vsel %vm88, %v1388, 0.0
    %1393 = vadd.xlane.f32.xlu0 %v1392
    %v1394 = vpop.xlane.xlu0 %1393
    %v1395 = vrcp.pop %v1391
    %v1396 = vmul.f32 %v1386, %v1395
    %v1397 = vrcp.pop %v1394
    %v1398 = vmul.f32 %v1388, %v1397
    %1399 = vrot.lane.b32.xlu0 %v415, 40
    %v1400 = vpop.permute.xlu0 %1399
    %1401 = vrot.lane.b32.xlu0 %v420, 40
    %v1402 = vpop.permute.xlu0 %1401
    %v1406 = vsel %vm88, %v1396, 0
    %v1409 = vsel %vm88, %v1398, 0
    %1411 = vmatprep.subr.mxu0 0.0
    %1412 = vmatpush1.msra.mxu0 0.0
    %1413 = vmatprep.subr.mxu0 0.0
    %1414 = vmatpush1.msra.mxu0 0.0
    %1415 = vmatprep.subr.mxu0 0.0
    %1416 = vmatpush1.msra.mxu0 0.0
    %1417 = vmatprep.subr.mxu0 0.0
    %1418 = vmatpush1.msra.mxu0 0.0
    %1419 = vmatprep.subr.mxu0 0.0
    %1420 = vmatpush1.msra.mxu0 0.0
    %1421 = vmatprep.subr.mxu0 0.0
    %1422 = vmatpush1.msra.mxu0 0.0
    %1423 = vmatprep.subr.mxu0 0.0
    %1424 = vmatpush1.msra.mxu0 0.0
    %1425 = vmatprep.subr.mxu0 0.0
    %1426 = vmatpush1.msra.mxu0 0.0
    %1427 = vmatprep.subr.mxu0 0.0
    %1428 = vmatpush1.msra.mxu0 0.0
    %1429 = vmatprep.subr.mxu0 0.0
    %1430 = vmatpush1.msra.mxu0 0.0
    %1431 = vmatprep.subr.mxu0 0.0
    %1432 = vmatpush1.msra.mxu0 0.0
    %1433 = vmatprep.subr.mxu0 0.0
    %1434 = vmatpush1.msra.mxu0 0.0
    %1435 = vmatprep.subr.mxu0 0.0
    %1436 = vmatpush1.msra.mxu0 0.0
    %1437 = vmatprep.subr.mxu0 0.0
    %1438 = vmatpush1.msra.mxu0 0.0
    %1439 = vmatprep.subr.mxu0 0.0
    %1440 = vmatpush1.msra.mxu0 %v1402
    %1441 = vmatprep.subr.mxu0 0.0
    %1442 = vmatpush1.msra.mxu0 %v1400
    %1443 = vmatprep.subr.mxu0 0.0
    %1444 = vmatpush2.msra.mxu0 0.0
    %1445 = vmatprep.subr.mxu0 0.0
    %1446 = vmatpush2.msra.mxu0 0.0
    %1447 = vmatprep.subr.mxu0 0.0
    %1448 = vmatpush2.msra.mxu0 0.0
    %1449 = vmatprep.subr.mxu0 0.0
    %1450 = vmatpush2.msra.mxu0 0.0
    %1451 = vmatprep.subr.mxu0 0.0
    %1452 = vmatpush2.msra.mxu0 0.0
    %1453 = vmatprep.subr.mxu0 0.0
    %1454 = vmatpush2.msra.mxu0 0.0
    %1455 = vmatprep.subr.mxu0 0.0
    %1456 = vmatpush2.msra.mxu0 0.0
    %1457 = vmatprep.subr.mxu0 0.0
    %1458 = vmatpush2.msra.mxu0 0.0
    %1459 = vmatprep.subr.mxu0 0.0
    %1460 = vmatpush2.msra.mxu0 0.0
    %1461 = vmatprep.subr.mxu0 0.0
    %1462 = vmatpush2.msra.mxu0 0.0
    %1463 = vmatprep.subr.mxu0 0.0
    %1464 = vmatpush2.msra.mxu0 0.0
    %1465 = vmatprep.subr.mxu0 0.0
    %1466 = vmatpush2.msra.mxu0 0.0
    %1467 = vmatprep.subr.mxu0 0.0
    %1468 = vmatpush2.msra.mxu0 0.0
    %1469 = vmatprep.subr.mxu0 0.0
    %1470 = vmatpush2.msra.mxu0 0.0
    %1471 = vmatprep.subr.mxu0 0.0
    %1472 = vmatpush2.msra.mxu0 0.0
    %1473 = vmatprep.subr.mxu0 0.0
    %1474 = vmatpush2.msra.mxu0 0.0
    %1475 = vmatprep.mubr.f32.mxu0 0.0
    %1476 = vmatmul.mubr.f32.gmra.mxu0 %v1406
    %v1477 = vpop.f32.mrf.mxu0
    %v1478 = vadd.f32 0.0, %v1477
    %v1479 = vpop.f32.mrf.mxu0
    %1480 = vmatprep.mubr.f32.mxu0 0.0
    %1481 = vmatmul.mubr.f32.gmra.mxu0 %v1409
    %v1482 = vpop.f32.mrf.mxu0
    %v1483 = vadd.f32 0.0, %v1482
    %v1484 = vpop.f32.mrf.mxu0
    %1485 = vdwg.mxu0
    %v1487 = vsel %vm440, %v1478, 0
    %v1490 = vsel %vm440, %v1483, 0
    %1492 = vmatprep.subr.mxu0 0.0
    %1493 = vmatpush1.msra.mxu0 0.0
    %1494 = vmatprep.subr.mxu0 0.0
    %1495 = vmatpush1.msra.mxu0 0.0
    %1496 = vmatprep.subr.mxu0 0.0
    %1497 = vmatpush1.msra.mxu0 0.0
    %1498 = vmatprep.subr.mxu0 0.0
    %1499 = vmatpush1.msra.mxu0 0.0
    %1500 = vmatprep.subr.mxu0 0.0
    %1501 = vmatpush1.msra.mxu0 0.0
    %1502 = vmatprep.subr.mxu0 0.0
    %1503 = vmatpush1.msra.mxu0 0.0
    %1504 = vmatprep.subr.mxu0 0.0
    %1505 = vmatpush1.msra.mxu0 0.0
    %1506 = vmatprep.subr.mxu0 0.0
    %1507 = vmatpush1.msra.mxu0 0.0
    %1508 = vmatprep.subr.mxu0 0.0
    %1509 = vmatpush1.msra.mxu0 0.0
    %1510 = vmatprep.subr.mxu0 0.0
    %1511 = vmatpush1.msra.mxu0 0.0
    %1512 = vmatprep.subr.mxu0 0.0
    %1513 = vmatpush1.msra.mxu0 0.0
    %1514 = vmatprep.subr.mxu0 0.0
    %1515 = vmatpush1.msra.mxu0 0.0
    %1516 = vmatprep.subr.mxu0 0.0
    %1517 = vmatpush1.msra.mxu0 0.0
    %1518 = vmatprep.subr.mxu0 0.0
    %1519 = vmatpush1.msra.mxu0 0.0
    %1520 = vmatprep.subr.mxu0 0.0
    %1521 = vmatpush1.msra.mxu0 0.0
    %1522 = vmatprep.subr.mxu0 0.0
    %1523 = vmatpush1.msra.mxu0 %v307
    %1524 = vmatprep.subr.mxu0 0.0
    %1525 = vmatpush2.msra.mxu0 0.0
    %1526 = vmatprep.subr.mxu0 0.0
    %1527 = vmatpush2.msra.mxu0 0.0
    %1528 = vmatprep.subr.mxu0 0.0
    %1529 = vmatpush2.msra.mxu0 0.0
    %1530 = vmatprep.subr.mxu0 0.0
    %1531 = vmatpush2.msra.mxu0 0.0
    %1532 = vmatprep.subr.mxu0 0.0
    %1533 = vmatpush2.msra.mxu0 0.0
    %1534 = vmatprep.subr.mxu0 0.0
    %1535 = vmatpush2.msra.mxu0 0.0
    %1536 = vmatprep.subr.mxu0 0.0
    %1537 = vmatpush2.msra.mxu0 0.0
    %1538 = vmatprep.subr.mxu0 0.0
    %1539 = vmatpush2.msra.mxu0 0.0
    %1540 = vmatprep.subr.mxu0 0.0
    %1541 = vmatpush2.msra.mxu0 0.0
    %1542 = vmatprep.subr.mxu0 0.0
    %1543 = vmatpush2.msra.mxu0 0.0
    %1544 = vmatprep.subr.mxu0 0.0
    %1545 = vmatpush2.msra.mxu0 0.0
    %1546 = vmatprep.subr.mxu0 0.0
    %1547 = vmatpush2.msra.mxu0 0.0
    %1548 = vmatprep.subr.mxu0 0.0
    %1549 = vmatpush2.msra.mxu0 0.0
    %1550 = vmatprep.subr.mxu0 0.0
    %1551 = vmatpush2.msra.mxu0 0.0
    %1552 = vmatprep.subr.mxu0 0.0
    %1553 = vmatpush2.msra.mxu0 0.0
    %1554 = vmatprep.subr.mxu0 0.0
    %1555 = vmatpush2.msra.mxu0 0.0
    %1556 = vmatprep.mubr.f32.mxu0 0.0
    %1557 = vmatmul.mubr.f32.gmra.mxu0 %v1487
    %v1558 = vpop.f32.mrf.mxu0
    %v1559 = vadd.f32 0.0, %v1558
    %v1560 = vpop.f32.mrf.mxu0
    %1561 = vmatprep.mubr.f32.mxu0 0.0
    %1562 = vmatmul.mubr.f32.gmra.mxu0 %v1490
    %v1563 = vpop.f32.mrf.mxu0
    %v1564 = vadd.f32 0.0, %v1563
    %v1565 = vpop.f32.mrf.mxu0
    %1566 = vdwg.mxu0
    %v1567 = vadd.f32 %v1282, %v1559
    %v1568 = vadd.f32 %v1283, %v1564
    %v1570 = vlaneseq
    %v1571 = vshrl.u32 %v1570, 7
    %v1572 = vsub.s32 0, %v1571
    %v1573 = vrot.slane %v308, %v1572
    %v1575 = vadd.f32 %v1567, %v1573
    %v1576 = vadd.f32 %v1568, %v1573
    %v1577 = vadd.f32 %v1575, %v281
    %v1578 = vadd.f32 %v1576, %v286
    %v1579 = vld [vmem:[%s1] sm:$0xf]
    %v1580 = vld [vmem:[%s11] sm:$0xff]
    %v1581 = vld [vmem:[%s11 + $0x8] sm:$0xff]
    %v1582 = vld [vmem:[%s12] sm:$0x1]
    %v1584 = vlaneseq
    %v1585 = vshrl.u32 %v1584, 7
    %v1586 = vsub.s32 0, %v1585
    %v1587 = vrot.slane %v1582, %v1586
    %v1590 = vsel %vm88, %v1579, 0
    %1592 = vmatprep.subr.mxu0 0.0
    %1593 = vmatpush1.msra.mxu0 0.0
    %1594 = vmatprep.subr.mxu0 0.0
    %1595 = vmatpush1.msra.mxu0 0.0
    %1596 = vmatprep.subr.mxu0 0.0
    %1597 = vmatpush1.msra.mxu0 0.0
    %1598 = vmatprep.subr.mxu0 0.0
    %1599 = vmatpush1.msra.mxu0 0.0
    %1600 = vmatprep.subr.mxu0 0.0
    %1601 = vmatpush1.msra.mxu0 0.0
    %1602 = vmatprep.subr.mxu0 0.0
    %1603 = vmatpush1.msra.mxu0 0.0
    %1604 = vmatprep.subr.mxu0 0.0
    %1605 = vmatpush1.msra.mxu0 0.0
    %1606 = vmatprep.subr.mxu0 0.0
    %1607 = vmatpush1.msra.mxu0 0.0
    %1608 = vmatprep.subr.mxu0 0.0
    %1609 = vmatpush1.msra.mxu0 0.0
    %1610 = vmatprep.subr.mxu0 0.0
    %1611 = vmatpush1.msra.mxu0 0.0
    %1612 = vmatprep.subr.mxu0 0.0
    %1613 = vmatpush1.msra.mxu0 0.0
    %1614 = vmatprep.subr.mxu0 0.0
    %1615 = vmatpush1.msra.mxu0 0.0
    %1616 = vmatprep.subr.mxu0 0.0
    %1617 = vmatpush1.msra.mxu0 0.0
    %1618 = vmatprep.subr.mxu0 0.0
    %1619 = vmatpush1.msra.mxu0 0.0
    %1620 = vmatprep.subr.mxu0 0.0
    %1621 = vmatpush1.msra.mxu0 %v1581
    %1622 = vmatprep.subr.mxu0 0.0
    %1623 = vmatpush1.msra.mxu0 %v1580
    %1624 = vmatprep.subr.mxu0 0.0
    %1625 = vmatpush2.msra.mxu0 0.0
    %1626 = vmatprep.subr.mxu0 0.0
    %1627 = vmatpush2.msra.mxu0 0.0
    %1628 = vmatprep.subr.mxu0 0.0
    %1629 = vmatpush2.msra.mxu0 0.0
    %1630 = vmatprep.subr.mxu0 0.0
    %1631 = vmatpush2.msra.mxu0 0.0
    %1632 = vmatprep.subr.mxu0 0.0
    %1633 = vmatpush2.msra.mxu0 0.0
    %1634 = vmatprep.subr.mxu0 0.0
    %1635 = vmatpush2.msra.mxu0 0.0
    %1636 = vmatprep.subr.mxu0 0.0
    %1637 = vmatpush2.msra.mxu0 0.0
    %1638 = vmatprep.subr.mxu0 0.0
    %1639 = vmatpush2.msra.mxu0 0.0
    %1640 = vmatprep.subr.mxu0 0.0
    %1641 = vmatpush2.msra.mxu0 0.0
    %1642 = vmatprep.subr.mxu0 0.0
    %1643 = vmatpush2.msra.mxu0 0.0
    %1644 = vmatprep.subr.mxu0 0.0
    %1645 = vmatpush2.msra.mxu0 0.0
    %1646 = vmatprep.subr.mxu0 0.0
    %1647 = vmatpush2.msra.mxu0 0.0
    %1648 = vmatprep.subr.mxu0 0.0
    %1649 = vmatpush2.msra.mxu0 0.0
    %1650 = vmatprep.subr.mxu0 0.0
    %1651 = vmatpush2.msra.mxu0 0.0
    %1652 = vmatprep.subr.mxu0 0.0
    %1653 = vmatpush2.msra.mxu0 0.0
    %1654 = vmatprep.subr.mxu0 0.0
    %1655 = vmatpush2.msra.mxu0 0.0
    %1656 = vmatprep.mubr.f32.mxu0 0.0
    %1657 = vmatmul.mubr.f32.gmra.mxu0 %v1590
    %v1658 = vpop.f32.mrf.mxu0
    %v1659 = vadd.f32 %v1587, %v1658
    %v1660 = vpop.f32.mrf.mxu0
    %1661 = vdwg.mxu0
    %v1662 = vmax.f32 %v1659, 0.0
    %v1663 = vld [vmem:[%s2] sm:$0xf]
    %v1664 = vmul.f32 %v1662, %v1663
    %v1665 = vld [vmem:[%s13] sm:$0xff]
    %v1666 = vld [vmem:[%s13 + $0x8] sm:$0xff]
    %v1667 = vld [vmem:[%s13 + $0x10] sm:$0xff]
    %v1668 = vld [vmem:[%s13 + $0x18] sm:$0xff]
    %v1669 = vld [vmem:[%s13 + $0x20] sm:$0xff]
    %v1670 = vld [vmem:[%s13 + $0x28] sm:$0xff]
    %v1671 = vld [vmem:[%s13 + $0x30] sm:$0xff]
    %v1672 = vld [vmem:[%s13 + $0x38] sm:$0xff]
    %v1673 = vld [vmem:[%s13 + $0x40] sm:$0xff]
    %v1674 = vld [vmem:[%s13 + $0x48] sm:$0xff]
    %v1675 = vld [vmem:[%s13 + $0x50] sm:$0xff]
    %v1676 = vld [vmem:[%s13 + $0x58] sm:$0xff]
    %v1677 = vld [vmem:[%s13 + $0x60] sm:$0xff]
    %v1678 = vld [vmem:[%s13 + $0x68] sm:$0xff]
    %v1679 = vld [vmem:[%s13 + $0x70] sm:$0xff]
    %v1680 = vld [vmem:[%s13 + $0x78] sm:$0xff]
    %v1681 = vld [vmem:[%s14] sm:$0xf]
    %1682 = vmatprep.subr.mxu0 0.0
    %1683 = vmatpush1.msra.mxu0 %v1680
    %1684 = vmatprep.subr.mxu0 0.0
    %1685 = vmatpush1.msra.mxu0 %v1679
    %1686 = vmatprep.subr.mxu0 0.0
    %1687 = vmatpush1.msra.mxu0 %v1678
    %1688 = vmatprep.subr.mxu0 0.0
    %1689 = vmatpush1.msra.mxu0 %v1677
    %1690 = vmatprep.subr.mxu0 0.0
    %1691 = vmatpush1.msra.mxu0 %v1676
    %1692 = vmatprep.subr.mxu0 0.0
    %1693 = vmatpush1.msra.mxu0 %v1675
    %1694 = vmatprep.subr.mxu0 0.0
    %1695 = vmatpush1.msra.mxu0 %v1674
    %1696 = vmatprep.subr.mxu0 0.0
    %1697 = vmatpush1.msra.mxu0 %v1673
    %1698 = vmatprep.subr.mxu0 0.0
    %1699 = vmatpush1.msra.mxu0 %v1672
    %1700 = vmatprep.subr.mxu0 0.0
    %1701 = vmatpush1.msra.mxu0 %v1671
    %1702 = vmatprep.subr.mxu0 0.0
    %1703 = vmatpush1.msra.mxu0 %v1670
    %1704 = vmatprep.subr.mxu0 0.0
    %1705 = vmatpush1.msra.mxu0 %v1669
    %1706 = vmatprep.subr.mxu0 0.0
    %1707 = vmatpush1.msra.mxu0 %v1668
    %1708 = vmatprep.subr.mxu0 0.0
    %1709 = vmatpush1.msra.mxu0 %v1667
    %1710 = vmatprep.subr.mxu0 0.0
    %1711 = vmatpush1.msra.mxu0 %v1666
    %1712 = vmatprep.subr.mxu0 0.0
    %1713 = vmatpush1.msra.mxu0 %v1665
    %1714 = vmatprep.subr.mxu0 0.0
    %1715 = vmatpush2.msra.mxu0 0.0
    %1716 = vmatprep.subr.mxu0 0.0
    %1717 = vmatpush2.msra.mxu0 0.0
    %1718 = vmatprep.subr.mxu0 0.0
    %1719 = vmatpush2.msra.mxu0 0.0
    %1720 = vmatprep.subr.mxu0 0.0
    %1721 = vmatpush2.msra.mxu0 0.0
    %1722 = vmatprep.subr.mxu0 0.0
    %1723 = vmatpush2.msra.mxu0 0.0
    %1724 = vmatprep.subr.mxu0 0.0
    %1725 = vmatpush2.msra.mxu0 0.0
    %1726 = vmatprep.subr.mxu0 0.0
    %1727 = vmatpush2.msra.mxu0 0.0
    %1728 = vmatprep.subr.mxu0 0.0
    %1729 = vmatpush2.msra.mxu0 0.0
    %1730 = vmatprep.subr.mxu0 0.0
    %1731 = vmatpush2.msra.mxu0 0.0
    %1732 = vmatprep.subr.mxu0 0.0
    %1733 = vmatpush2.msra.mxu0 0.0
    %1734 = vmatprep.subr.mxu0 0.0
    %1735 = vmatpush2.msra.mxu0 0.0
    %1736 = vmatprep.subr.mxu0 0.0
    %1737 = vmatpush2.msra.mxu0 0.0
    %1738 = vmatprep.subr.mxu0 0.0
    %1739 = vmatpush2.msra.mxu0 0.0
    %1740 = vmatprep.subr.mxu0 0.0
    %1741 = vmatpush2.msra.mxu0 0.0
    %1742 = vmatprep.subr.mxu0 0.0
    %1743 = vmatpush2.msra.mxu0 0.0
    %1744 = vmatprep.subr.mxu0 0.0
    %1745 = vmatpush2.msra.mxu0 0.0
    %1746 = vmatprep.mubr.f32.mxu0 0.0
    %1747 = vmatmul.mubr.f32.gmra.mxu0 %v1664
    %v1748 = vpop.f32.mrf.mxu0
    %v1749 = vadd.f32 %v1681, %v1748
    %v1750 = vpop.f32.mrf.mxu0
    %1751 = vdwg.mxu0
    %v1752 = vld [vmem:[%s15] sm:$0xff]
    %v1753 = vld [vmem:[%s15 + $0x8] sm:$0xff]
    %v1754 = vld [vmem:[%s15 + $0x10] sm:$0xff]
    %v1755 = vld [vmem:[%s15 + $0x18] sm:$0xff]
    %v1756 = vld [vmem:[%s16] sm:$0x1]
    %v1757 = vld [vmem:[%s17] sm:$0xff]
    %v1758 = vld [vmem:[%s17 + $0x8] sm:$0xff]
    %v1759 = vld [vmem:[%s17 + $0x10] sm:$0xff]
    %v1760 = vld [vmem:[%s17 + $0x18] sm:$0xff]
    %v1761 = vld [vmem:[%s18] sm:$0x1]
    %vm1762 = vcmask 257024
    %v1763 = vsel %vm1762, %v1749, 0.0
    %1764 = vadd.xlane.f32.xlu0 %v1763
    %v1765 = vpop.xlane.xlu0 %1764
    %v1766 = vmul.f32 %v1765, %v315
    %v1767 = vsub.f32 %v1749, %v1766
    %v1768 = vmul.f32 %v1767, %v1767
    %v1769 = vsel %vm1762, %v1768, 0.0
    %1770 = vadd.xlane.f32.xlu0 %v1769
    %v1771 = vpop.xlane.xlu0 %1770
    %v1772 = vmul.f32 %v1771, %v315
    %v1773 = vadd.f32 %v1772, 1e-05
    %v1774 = vrsqrt.pop %v1773
    %v1775 = vmul.f32 %v1767, %v1774
    %v1777 = vlaneseq
    %v1778 = vshrl.u32 %v1777, 7
    %v1779 = vsub.s32 0, %v1778
    %v1780 = vrot.slane %v1756, %v1779
    %v1783 = vsel %vm201, %v1775, 0
    %1785 = vmatprep.subr.mxu0 0.0
    %1786 = vmatpush1.msra.mxu0 0.0
    %1787 = vmatprep.subr.mxu0 0.0
    %1788 = vmatpush1.msra.mxu0 0.0
    %1789 = vmatprep.subr.mxu0 0.0
    %1790 = vmatpush1.msra.mxu0 0.0
    %1791 = vmatprep.subr.mxu0 0.0
    %1792 = vmatpush1.msra.mxu0 0.0
    %1793 = vmatprep.subr.mxu0 0.0
    %1794 = vmatpush1.msra.mxu0 0.0
    %1795 = vmatprep.subr.mxu0 0.0
    %1796 = vmatpush1.msra.mxu0 0.0
    %1797 = vmatprep.subr.mxu0 0.0
    %1798 = vmatpush1.msra.mxu0 0.0
    %1799 = vmatprep.subr.mxu0 0.0
    %1800 = vmatpush1.msra.mxu0 0.0
    %1801 = vmatprep.subr.mxu0 0.0
    %1802 = vmatpush1.msra.mxu0 0.0
    %1803 = vmatprep.subr.mxu0 0.0
    %1804 = vmatpush1.msra.mxu0 0.0
    %1805 = vmatprep.subr.mxu0 0.0
    %1806 = vmatpush1.msra.mxu0 0.0
    %1807 = vmatprep.subr.mxu0 0.0
    %1808 = vmatpush1.msra.mxu0 0.0
    %1809 = vmatprep.subr.mxu0 0.0
    %1810 = vmatpush1.msra.mxu0 %v1755
    %1811 = vmatprep.subr.mxu0 0.0
    %1812 = vmatpush1.msra.mxu0 %v1754
    %1813 = vmatprep.subr.mxu0 0.0
    %1814 = vmatpush1.msra.mxu0 %v1753
    %1815 = vmatprep.subr.mxu0 0.0
    %1816 = vmatpush1.msra.mxu0 %v1752
    %1817 = vmatprep.subr.mxu0 0.0
    %1818 = vmatpush2.msra.mxu0 0.0
    %1819 = vmatprep.subr.mxu0 0.0
    %1820 = vmatpush2.msra.mxu0 0.0
    %1821 = vmatprep.subr.mxu0 0.0
    %1822 = vmatpush2.msra.mxu0 0.0
    %1823 = vmatprep.subr.mxu0 0.0
    %1824 = vmatpush2.msra.mxu0 0.0
    %1825 = vmatprep.subr.mxu0 0.0
    %1826 = vmatpush2.msra.mxu0 0.0
    %1827 = vmatprep.subr.mxu0 0.0
    %1828 = vmatpush2.msra.mxu0 0.0
    %1829 = vmatprep.subr.mxu0 0.0
    %1830 = vmatpush2.msra.mxu0 0.0
    %1831 = vmatprep.subr.mxu0 0.0
    %1832 = vmatpush2.msra.mxu0 0.0
    %1833 = vmatprep.subr.mxu0 0.0
    %1834 = vmatpush2.msra.mxu0 0.0
    %1835 = vmatprep.subr.mxu0 0.0
    %1836 = vmatpush2.msra.mxu0 0.0
    %1837 = vmatprep.subr.mxu0 0.0
    %1838 = vmatpush2.msra.mxu0 0.0
    %1839 = vmatprep.subr.mxu0 0.0
    %1840 = vmatpush2.msra.mxu0 0.0
    %1841 = vmatprep.subr.mxu0 0.0
    %1842 = vmatpush2.msra.mxu0 0.0
    %1843 = vmatprep.subr.mxu0 0.0
    %1844 = vmatpush2.msra.mxu0 0.0
    %1845 = vmatprep.subr.mxu0 0.0
    %1846 = vmatpush2.msra.mxu0 0.0
    %1847 = vmatprep.subr.mxu0 0.0
    %1848 = vmatpush2.msra.mxu0 0.0
    %1849 = vmatprep.mubr.f32.mxu0 0.0
    %1850 = vmatmul.mubr.f32.gmra.mxu0 %v1783
    %v1851 = vpop.f32.mrf.mxu0
    %v1852 = vadd.f32 %v1780, %v1851
    %v1853 = vpop.f32.mrf.mxu0
    %1854 = vdwg.mxu0
    %1856 = vrot.lane.b32.xlu0 %v1852, 96
    %v1857 = vpop.permute.xlu0 %1856
    %v1858 = vsel %vm440, %v1852, 0
    %v1860 = vsel %vm440, %v1857, 0
    %1862 = vmatprep.subr.mxu0 0.0
    %1863 = vmatpush1.xpose.msra.mxu0 0.0
    %1864 = vmatprep.subr.mxu0 0.0
    %1865 = vmatpush1.xpose.msra.mxu0 0.0
    %1866 = vmatprep.subr.mxu0 0.0
    %1867 = vmatpush1.xpose.msra.mxu0 0.0
    %1868 = vmatprep.subr.mxu0 0.0
    %1869 = vmatpush1.xpose.msra.mxu0 0.0
    %1870 = vmatprep.subr.mxu0 0.0
    %1871 = vmatpush1.xpose.msra.mxu0 0.0
    %1872 = vmatprep.subr.mxu0 0.0
    %1873 = vmatpush1.xpose.msra.mxu0 0.0
    %1874 = vmatprep.subr.mxu0 0.0
    %1875 = vmatpush1.xpose.msra.mxu0 0.0
    %1876 = vmatprep.subr.mxu0 0.0
    %1877 = vmatpush1.xpose.msra.mxu0 0.0
    %1878 = vmatprep.subr.mxu0 0.0
    %1879 = vmatpush1.xpose.msra.mxu0 0.0
    %1880 = vmatprep.subr.mxu0 0.0
    %1881 = vmatpush1.xpose.msra.mxu0 0.0
    %1882 = vmatprep.subr.mxu0 0.0
    %1883 = vmatpush1.xpose.msra.mxu0 0.0
    %1884 = vmatprep.subr.mxu0 0.0
    %1885 = vmatpush1.xpose.msra.mxu0 0.0
    %1886 = vmatprep.subr.mxu0 0.0
    %1887 = vmatpush1.xpose.msra.mxu0 0.0
    %1888 = vmatprep.subr.mxu0 0.0
    %1889 = vmatpush1.xpose.msra.mxu0 0.0
    %1890 = vmatprep.subr.mxu0 0.0
    %1891 = vmatpush1.xpose.msra.mxu0 0.0
    %1892 = vmatprep.subr.mxu0 0.0
    %1893 = vmatpush1.xpose.msra.mxu0 %v1860
    %1894 = vmatprep.subr.mxu0 0.0
    %1895 = vmatpush2.xpose.msra.mxu0 0.0
    %1896 = vmatprep.subr.mxu0 0.0
    %1897 = vmatpush2.xpose.msra.mxu0 0.0
    %1898 = vmatprep.subr.mxu0 0.0
    %1899 = vmatpush2.xpose.msra.mxu0 0.0
    %1900 = vmatprep.subr.mxu0 0.0
    %1901 = vmatpush2.xpose.msra.mxu0 0.0
    %1902 = vmatprep.subr.mxu0 0.0
    %1903 = vmatpush2.xpose.msra.mxu0 0.0
    %1904 = vmatprep.subr.mxu0 0.0
    %1905 = vmatpush2.xpose.msra.mxu0 0.0
    %1906 = vmatprep.subr.mxu0 0.0
    %1907 = vmatpush2.xpose.msra.mxu0 0.0
    %1908 = vmatprep.subr.mxu0 0.0
    %1909 = vmatpush2.xpose.msra.mxu0 0.0
    %1910 = vmatprep.subr.mxu0 0.0
    %1911 = vmatpush2.xpose.msra.mxu0 0.0
    %1912 = vmatprep.subr.mxu0 0.0
    %1913 = vmatpush2.xpose.msra.mxu0 0.0
    %1914 = vmatprep.subr.mxu0 0.0
    %1915 = vmatpush2.xpose.msra.mxu0 0.0
    %1916 = vmatprep.subr.mxu0 0.0
    %1917 = vmatpush2.xpose.msra.mxu0 0.0
    %1918 = vmatprep.subr.mxu0 0.0
    %1919 = vmatpush2.xpose.msra.mxu0 0.0
    %1920 = vmatprep.subr.mxu0 0.0
    %1921 = vmatpush2.xpose.msra.mxu0 0.0
    %1922 = vmatprep.subr.mxu0 0.0
    %1923 = vmatpush2.xpose.msra.mxu0 0.0
    %1924 = vmatprep.subr.mxu0 0.0
    %1925 = vmatpush2.xpose.msra.mxu0 0.0
    %1926 = vmatprep.mubr.f32.mxu0 0.0
    %1927 = vmatmul.mubr.f32.gmra.mxu0 %v1858
    %v1928 = vpop.f32.mrf.mxu0
    %v1929 = vadd.f32 0.0, %v1928
    %v1930 = vpop.f32.mrf.mxu0
    %1931 = vdwg.mxu0
    %v1932 = vmul.f32 %v1929, %v432
    %vm1933 = vcmask 27648
    %v1934 = vsel %vm1933, %v1932, -inf
    %1935 = vmax.xlane.f32.xlu0 %v1934
    %v1936 = vpop.xlane.xlu0 %1935
    %v1937 = vsub.f32 %v1932, %v1936
    %v1938 = vmul.f32 %v1937, 1.442695
    %v1939 = vpow.pop %v1938
    %v1940 = vsel %vm1933, %v1939, 0.0
    %1941 = vadd.xlane.f32.xlu0 %v1940
    %v1942 = vpop.xlane.xlu0 %1941
    %v1943 = vrcp.pop %v1942
    %v1944 = vmul.f32 %v1939, %v1943
    %1945 = vrot.lane.b32.xlu0 %v1852, 64
    %v1946 = vpop.permute.xlu0 %1945
    %vm1947 = vcmask 31744
    %v1949 = vsel %vm1947, %v1944, 0
    %vm1951 = vcmask 1043456
    %v1952 = vsel %vm1951, %v1946, 0
    %1954 = vmatprep.subr.mxu0 0.0
    %1955 = vmatpush1.msra.mxu0 0.0
    %1956 = vmatprep.subr.mxu0 0.0
    %1957 = vmatpush1.msra.mxu0 0.0
    %1958 = vmatprep.subr.mxu0 0.0
    %1959 = vmatpush1.msra.mxu0 0.0
    %1960 = vmatprep.subr.mxu0 0.0
    %1961 = vmatpush1.msra.mxu0 0.0
    %1962 = vmatprep.subr.mxu0 0.0
    %1963 = vmatpush1.msra.mxu0 0.0
    %1964 = vmatprep.subr.mxu0 0.0
    %1965 = vmatpush1.msra.mxu0 0.0
    %1966 = vmatprep.subr.mxu0 0.0
    %1967 = vmatpush1.msra.mxu0 0.0
    %1968 = vmatprep.subr.mxu0 0.0
    %1969 = vmatpush1.msra.mxu0 0.0
    %1970 = vmatprep.subr.mxu0 0.0
    %1971 = vmatpush1.msra.mxu0 0.0
    %1972 = vmatprep.subr.mxu0 0.0
    %1973 = vmatpush1.msra.mxu0 0.0
    %1974 = vmatprep.subr.mxu0 0.0
    %1975 = vmatpush1.msra.mxu0 0.0
    %1976 = vmatprep.subr.mxu0 0.0
    %1977 = vmatpush1.msra.mxu0 0.0
    %1978 = vmatprep.subr.mxu0 0.0
    %1979 = vmatpush1.msra.mxu0 0.0
    %1980 = vmatprep.subr.mxu0 0.0
    %1981 = vmatpush1.msra.mxu0 0.0
    %1982 = vmatprep.subr.mxu0 0.0
    %1983 = vmatpush1.msra.mxu0 0.0
    %1984 = vmatprep.subr.mxu0 0.0
    %1985 = vmatpush1.msra.mxu0 %v1952
    %1986 = vmatprep.subr.mxu0 0.0
    %1987 = vmatpush2.msra.mxu0 0.0
    %1988 = vmatprep.subr.mxu0 0.0
    %1989 = vmatpush2.msra.mxu0 0.0
    %1990 = vmatprep.subr.mxu0 0.0
    %1991 = vmatpush2.msra.mxu0 0.0
    %1992 = vmatprep.subr.mxu0 0.0
    %1993 = vmatpush2.msra.mxu0 0.0
    %1994 = vmatprep.subr.mxu0 0.0
    %1995 = vmatpush2.msra.mxu0 0.0
    %1996 = vmatprep.subr.mxu0 0.0
    %1997 = vmatpush2.msra.mxu0 0.0
    %1998 = vmatprep.subr.mxu0 0.0
    %1999 = vmatpush2.msra.mxu0 0.0
    %2000 = vmatprep.subr.mxu0 0.0
    %2001 = vmatpush2.msra.mxu0 0.0
    %2002 = vmatprep.subr.mxu0 0.0
    %2003 = vmatpush2.msra.mxu0 0.0
    %2004 = vmatprep.subr.mxu0 0.0
    %2005 = vmatpush2.msra.mxu0 0.0
    %2006 = vmatprep.subr.mxu0 0.0
    %2007 = vmatpush2.msra.mxu0 0.0
    %2008 = vmatprep.subr.mxu0 0.0
    %2009 = vmatpush2.msra.mxu0 0.0
    %2010 = vmatprep.subr.mxu0 0.0
    %2011 = vmatpush2.msra.mxu0 0.0
    %2012 = vmatprep.subr.mxu0 0.0
    %2013 = vmatpush2.msra.mxu0 0.0
    %2014 = vmatprep.subr.mxu0 0.0
    %2015 = vmatpush2.msra.mxu0 0.0
    %2016 = vmatprep.subr.mxu0 0.0
    %2017 = vmatpush2.msra.mxu0 0.0
    %2018 = vmatprep.mubr.f32.mxu0 0.0
    %2019 = vmatmul.mubr.f32.gmra.mxu0 %v1949
    %v2020 = vpop.f32.mrf.mxu0
    %v2021 = vadd.f32 0.0, %v2020
    %v2022 = vpop.f32.mrf.mxu0
    %2023 = vdwg.mxu0
    %2024 = vrot.lane.b32.xlu0 %v1852, 120
    %v2025 = vpop.permute.xlu0 %2024
    %2026 = vrot.lane.b32.xlu0 %v1852, 88
    %v2027 = vpop.permute.xlu0 %2026
    %v2028 = vsel %vm440, %v2025, 0
    %v2030 = vsel %vm440, %v2027, 0
    %2032 = vmatprep.subr.mxu0 0.0
    %2033 = vmatpush1.xpose.msra.mxu0 0.0
    %2034 = vmatprep.subr.mxu0 0.0
    %2035 = vmatpush1.xpose.msra.mxu0 0.0
    %2036 = vmatprep.subr.mxu0 0.0
    %2037 = vmatpush1.xpose.msra.mxu0 0.0
    %2038 = vmatprep.subr.mxu0 0.0
    %2039 = vmatpush1.xpose.msra.mxu0 0.0
    %2040 = vmatprep.subr.mxu0 0.0
    %2041 = vmatpush1.xpose.msra.mxu0 0.0
    %2042 = vmatprep.subr.mxu0 0.0
    %2043 = vmatpush1.xpose.msra.mxu0 0.0
    %2044 = vmatprep.subr.mxu0 0.0
    %2045 = vmatpush1.xpose.msra.mxu0 0.0
    %2046 = vmatprep.subr.mxu0 0.0
    %2047 = vmatpush1.xpose.msra.mxu0 0.0
    %2048 = vmatprep.subr.mxu0 0.0
    %2049 = vmatpush1.xpose.msra.mxu0 0.0
    %2050 = vmatprep.subr.mxu0 0.0
    %2051 = vmatpush1.xpose.msra.mxu0 0.0
    %2052 = vmatprep.subr.mxu0 0.0
    %2053 = vmatpush1.xpose.msra.mxu0 0.0
    %2054 = vmatprep.subr.mxu0 0.0
    %2055 = vmatpush1.xpose.msra.mxu0 0.0
    %2056 = vmatprep.subr.mxu0 0.0
    %2057 = vmatpush1.xpose.msra.mxu0 0.0
    %2058 = vmatprep.subr.mxu0 0.0
    %2059 = vmatpush1.xpose.msra.mxu0 0.0
    %2060 = vmatprep.subr.mxu0 0.0
    %2061 = vmatpush1.xpose.msra.mxu0 0.0
    %2062 = vmatprep.subr.mxu0 0.0
    %2063 = vmatpush1.xpose.msra.mxu0 %v2030
    %2064 = vmatprep.subr.mxu0 0.0
    %2065 = vmatpush2.xpose.msra.mxu0 0.0
    %2066 = vmatprep.subr.mxu0 0.0
    %2067 = vmatpush2.xpose.msra.mxu0 0.0
    %2068 = vmatprep.subr.mxu0 0.0
    %2069 = vmatpush2.xpose.msra.mxu0 0.0
    %2070 = vmatprep.subr.mxu0 0.0
    %2071 = vmatpush2.xpose.msra.mxu0 0.0
    %2072 = vmatprep.subr.mxu0 0.0
    %2073 = vmatpush2.xpose.msra.mxu0 0.0
    %2074 = vmatprep.subr.mxu0 0.0
    %2075 = vmatpush2.xpose.msra.mxu0 0.0
    %2076 = vmatprep.subr.mxu0 0.0
    %2077 = vmatpush2.xpose.msra.mxu0 0.0
    %2078 = vmatprep.subr.mxu0 0.0
    %2079 = vmatpush2.xpose.msra.mxu0 0.0
    %2080 = vmatprep.subr.mxu0 0.0
    %2081 = vmatpush2.xpose.msra.mxu0 0.0
    %2082 = vmatprep.subr.mxu0 0.0
    %2083 = vmatpush2.xpose.msra.mxu0 0.0
    %2084 = vmatprep.subr.mxu0 0.0
    %2085 = vmatpush2.xpose.msra.mxu0 0.0
    %2086 = vmatprep.subr.mxu0 0.0
    %2087 = vmatpush2.xpose.msra.mxu0 0.0
    %2088 = vmatprep.subr.mxu0 0.0
    %2089 = vmatpush2.xpose.msra.mxu0 0.0
    %2090 = vmatprep.subr.mxu0 0.0
    %2091 = vmatpush2.xpose.msra.mxu0 0.0
    %2092 = vmatprep.subr.mxu0 0.0
    %2093 = vmatpush2.xpose.msra.mxu0 0.0
    %2094 = vmatprep.subr.mxu0 0.0
    %2095 = vmatpush2.xpose.msra.mxu0 0.0
    %2096 = vmatprep.mubr.f32.mxu0 0.0
    %2097 = vmatmul.mubr.f32.gmra.mxu0 %v2028
    %v2098 = vpop.f32.mrf.mxu0
    %v2099 = vadd.f32 0.0, %v2098
    %v2100 = vpop.f32.mrf.mxu0
    %2101 = vdwg.mxu0
    %v2102 = vmul.f32 %v2099, %v432
    %v2103 = vsel %vm1933, %v2102, -inf
    %2104 = vmax.xlane.f32.xlu0 %v2103
    %v2105 = vpop.xlane.xlu0 %2104
    %v2106 = vsub.f32 %v2102, %v2105
    %v2107 = vmul.f32 %v2106, 1.442695
    %v2108 = vpow.pop %v2107
    %v2109 = vsel %vm1933, %v2108, 0.0
    %2110 = vadd.xlane.f32.xlu0 %v2109
    %v2111 = vpop.xlane.xlu0 %2110
    %v2112 = vrcp.pop %v2111
    %v2113 = vmul.f32 %v2108, %v2112
    %2114 = vrot.lane.b32.xlu0 %v1852, 56
    %v2115 = vpop.permute.xlu0 %2114
    %v2117 = vsel %vm1947, %v2113, 0
    %v2119 = vsel %vm1951, %v2115, 0
    %2121 = vmatprep.subr.mxu0 0.0
    %2122 = vmatpush1.msra.mxu0 0.0
    %2123 = vmatprep.subr.mxu0 0.0
    %2124 = vmatpush1.msra.mxu0 0.0
    %2125 = vmatprep.subr.mxu0 0.0
    %2126 = vmatpush1.msra.mxu0 0.0
    %2127 = vmatprep.subr.mxu0 0.0
    %2128 = vmatpush1.msra.mxu0 0.0
    %2129 = vmatprep.subr.mxu0 0.0
    %2130 = vmatpush1.msra.mxu0 0.0
    %2131 = vmatprep.subr.mxu0 0.0
    %2132 = vmatpush1.msra.mxu0 0.0
    %2133 = vmatprep.subr.mxu0 0.0
    %2134 = vmatpush1.msra.mxu0 0.0
    %2135 = vmatprep.subr.mxu0 0.0
    %2136 = vmatpush1.msra.mxu0 0.0
    %2137 = vmatprep.subr.mxu0 0.0
    %2138 = vmatpush1.msra.mxu0 0.0
    %2139 = vmatprep.subr.mxu0 0.0
    %2140 = vmatpush1.msra.mxu0 0.0
    %2141 = vmatprep.subr.mxu0 0.0
    %2142 = vmatpush1.msra.mxu0 0.0
    %2143 = vmatprep.subr.mxu0 0.0
    %2144 = vmatpush1.msra.mxu0 0.0
    %2145 = vmatprep.subr.mxu0 0.0
    %2146 = vmatpush1.msra.mxu0 0.0
    %2147 = vmatprep.subr.mxu0 0.0
    %2148 = vmatpush1.msra.mxu0 0.0
    %2149 = vmatprep.subr.mxu0 0.0
    %2150 = vmatpush1.msra.mxu0 0.0
    %2151 = vmatprep.subr.mxu0 0.0
    %2152 = vmatpush1.msra.mxu0 %v2119
    %2153 = vmatprep.subr.mxu0 0.0
    %2154 = vmatpush2.msra.mxu0 0.0
    %2155 = vmatprep.subr.mxu0 0.0
    %2156 = vmatpush2.msra.mxu0 0.0
    %2157 = vmatprep.subr.mxu0 0.0
    %2158 = vmatpush2.msra.mxu0 0.0
    %2159 = vmatprep.subr.mxu0 0.0
    %2160 = vmatpush2.msra.mxu0 0.0
    %2161 = vmatprep.subr.mxu0 0.0
    %2162 = vmatpush2.msra.mxu0 0.0
    %2163 = vmatprep.subr.mxu0 0.0
    %2164 = vmatpush2.msra.mxu0 0.0
    %2165 = vmatprep.subr.mxu0 0.0
    %2166 = vmatpush2.msra.mxu0 0.0
    %2167 = vmatprep.subr.mxu0 0.0
    %2168 = vmatpush2.msra.mxu0 0.0
    %2169 = vmatprep.subr.mxu0 0.0
    %2170 = vmatpush2.msra.mxu0 0.0
    %2171 = vmatprep.subr.mxu0 0.0
    %2172 = vmatpush2.msra.mxu0 0.0
    %2173 = vmatprep.subr.mxu0 0.0
    %2174 = vmatpush2.msra.mxu0 0.0
    %2175 = vmatprep.subr.mxu0 0.0
    %2176 = vmatpush2.msra.mxu0 0.0
    %2177 = vmatprep.subr.mxu0 0.0
    %2178 = vmatpush2.msra.mxu0 0.0
    %2179 = vmatprep.subr.mxu0 0.0
    %2180 = vmatpush2.msra.mxu0 0.0
    %2181 = vmatprep.subr.mxu0 0.0
    %2182 = vmatpush2.msra.mxu0 0.0
    %2183 = vmatprep.subr.mxu0 0.0
    %2184 = vmatpush2.msra.mxu0 0.0
    %2185 = vmatprep.mubr.f32.mxu0 0.0
    %2186 = vmatmul.mubr.f32.gmra.mxu0 %v2117
    %v2187 = vpop.f32.mrf.mxu0
    %v2188 = vadd.f32 0.0, %v2187
    %v2189 = vpop.f32.mrf.mxu0
    %2190 = vdwg.mxu0
    %v2192 = vsel %vm440, %v2188, 0
    %2194 = vmatprep.subr.mxu0 0.0
    %2195 = vmatpush1.msra.mxu0 0.0
    %2196 = vmatprep.subr.mxu0 0.0
    %2197 = vmatpush1.msra.mxu0 0.0
    %2198 = vmatprep.subr.mxu0 0.0
    %2199 = vmatpush1.msra.mxu0 0.0
    %2200 = vmatprep.subr.mxu0 0.0
    %2201 = vmatpush1.msra.mxu0 0.0
    %2202 = vmatprep.subr.mxu0 0.0
    %2203 = vmatpush1.msra.mxu0 0.0
    %2204 = vmatprep.subr.mxu0 0.0
    %2205 = vmatpush1.msra.mxu0 0.0
    %2206 = vmatprep.subr.mxu0 0.0
    %2207 = vmatpush1.msra.mxu0 0.0
    %2208 = vmatprep.subr.mxu0 0.0
    %2209 = vmatpush1.msra.mxu0 0.0
    %2210 = vmatprep.subr.mxu0 0.0
    %2211 = vmatpush1.msra.mxu0 0.0
    %2212 = vmatprep.subr.mxu0 0.0
    %2213 = vmatpush1.msra.mxu0 0.0
    %2214 = vmatprep.subr.mxu0 0.0
    %2215 = vmatpush1.msra.mxu0 0.0
    %2216 = vmatprep.subr.mxu0 0.0
    %2217 = vmatpush1.msra.mxu0 0.0
    %2218 = vmatprep.subr.mxu0 0.0
    %2219 = vmatpush1.msra.mxu0 0.0
    %2220 = vmatprep.subr.mxu0 0.0
    %2221 = vmatpush1.msra.mxu0 0.0
    %2222 = vmatprep.subr.mxu0 0.0
    %2223 = vmatpush1.msra.mxu0 0.0
    %2224 = vmatprep.subr.mxu0 0.0
    %2225 = vmatpush1.msra.mxu0 %v1758
    %2226 = vmatprep.subr.mxu0 0.0
    %2227 = vmatpush2.msra.mxu0 0.0
    %2228 = vmatprep.subr.mxu0 0.0
    %2229 = vmatpush2.msra.mxu0 0.0
    %2230 = vmatprep.subr.mxu0 0.0
    %2231 = vmatpush2.msra.mxu0 0.0
    %2232 = vmatprep.subr.mxu0 0.0
    %2233 = vmatpush2.msra.mxu0 0.0
    %2234 = vmatprep.subr.mxu0 0.0
    %2235 = vmatpush2.msra.mxu0 0.0
    %2236 = vmatprep.subr.mxu0 0.0
    %2237 = vmatpush2.msra.mxu0 0.0
    %2238 = vmatprep.subr.mxu0 0.0
    %2239 = vmatpush2.msra.mxu0 0.0
    %2240 = vmatprep.subr.mxu0 0.0
    %2241 = vmatpush2.msra.mxu0 0.0
    %2242 = vmatprep.subr.mxu0 0.0
    %2243 = vmatpush2.msra.mxu0 0.0
    %2244 = vmatprep.subr.mxu0 0.0
    %2245 = vmatpush2.msra.mxu0 0.0
    %2246 = vmatprep.subr.mxu0 0.0
    %2247 = vmatpush2.msra.mxu0 0.0
    %2248 = vmatprep.subr.mxu0 0.0
    %2249 = vmatpush2.msra.mxu0 0.0
    %2250 = vmatprep.subr.mxu0 0.0
    %2251 = vmatpush2.msra.mxu0 0.0
    %2252 = vmatprep.subr.mxu0 0.0
    %2253 = vmatpush2.msra.mxu0 0.0
    %2254 = vmatprep.subr.mxu0 0.0
    %2255 = vmatpush2.msra.mxu0 0.0
    %2256 = vmatprep.subr.mxu0 0.0
    %2257 = vmatpush2.msra.mxu0 0.0
    %2258 = vmatprep.mubr.f32.mxu0 0.0
    %2259 = vmatmul.mubr.f32.gmra.mxu0 %v2192
    %v2260 = vpop.f32.mrf.mxu0
    %v2261 = vadd.f32 0.0, %v2260
    %v2262 = vpop.f32.mrf.mxu0
    %2263 = vdwg.mxu0
    %v2265 = vsel %vm440, %v2021, 0
    %2267 = vmatprep.subr.mxu0 0.0
    %2268 = vmatpush1.msra.mxu0 0.0
    %2269 = vmatprep.subr.mxu0 0.0
    %2270 = vmatpush1.msra.mxu0 0.0
    %2271 = vmatprep.subr.mxu0 0.0
    %2272 = vmatpush1.msra.mxu0 0.0
    %2273 = vmatprep.subr.mxu0 0.0
    %2274 = vmatpush1.msra.mxu0 0.0
    %2275 = vmatprep.subr.mxu0 0.0
    %2276 = vmatpush1.msra.mxu0 0.0
    %2277 = vmatprep.subr.mxu0 0.0
    %2278 = vmatpush1.msra.mxu0 0.0
    %2279 = vmatprep.subr.mxu0 0.0
    %2280 = vmatpush1.msra.mxu0 0.0
    %2281 = vmatprep.subr.mxu0 0.0
    %2282 = vmatpush1.msra.mxu0 0.0
    %2283 = vmatprep.subr.mxu0 0.0
    %2284 = vmatpush1.msra.mxu0 0.0
    %2285 = vmatprep.subr.mxu0 0.0
    %2286 = vmatpush1.msra.mxu0 0.0
    %2287 = vmatprep.subr.mxu0 0.0
    %2288 = vmatpush1.msra.mxu0 0.0
    %2289 = vmatprep.subr.mxu0 0.0
    %2290 = vmatpush1.msra.mxu0 0.0
    %2291 = vmatprep.subr.mxu0 0.0
    %2292 = vmatpush1.msra.mxu0 0.0
    %2293 = vmatprep.subr.mxu0 0.0
    %2294 = vmatpush1.msra.mxu0 0.0
    %2295 = vmatprep.subr.mxu0 0.0
    %2296 = vmatpush1.msra.mxu0 0.0
    %2297 = vmatprep.subr.mxu0 0.0
    %2298 = vmatpush1.msra.mxu0 %v1757
    %2299 = vmatprep.subr.mxu0 0.0
    %2300 = vmatpush2.msra.mxu0 0.0
    %2301 = vmatprep.subr.mxu0 0.0
    %2302 = vmatpush2.msra.mxu0 0.0
    %2303 = vmatprep.subr.mxu0 0.0
    %2304 = vmatpush2.msra.mxu0 0.0
    %2305 = vmatprep.subr.mxu0 0.0
    %2306 = vmatpush2.msra.mxu0 0.0
    %2307 = vmatprep.subr.mxu0 0.0
    %2308 = vmatpush2.msra.mxu0 0.0
    %2309 = vmatprep.subr.mxu0 0.0
    %2310 = vmatpush2.msra.mxu0 0.0
    %2311 = vmatprep.subr.mxu0 0.0
    %2312 = vmatpush2.msra.mxu0 0.0
    %2313 = vmatprep.subr.mxu0 0.0
    %2314 = vmatpush2.msra.mxu0 0.0
    %2315 = vmatprep.subr.mxu0 0.0
    %2316 = vmatpush2.msra.mxu0 0.0
    %2317 = vmatprep.subr.mxu0 0.0
    %2318 = vmatpush2.msra.mxu0 0.0
    %2319 = vmatprep.subr.mxu0 0.0
    %2320 = vmatpush2.msra.mxu0 0.0
    %2321 = vmatprep.subr.mxu0 0.0
    %2322 = vmatpush2.msra.mxu0 0.0
    %2323 = vmatprep.subr.mxu0 0.0
    %2324 = vmatpush2.msra.mxu0 0.0
    %2325 = vmatprep.subr.mxu0 0.0
    %2326 = vmatpush2.msra.mxu0 0.0
    %2327 = vmatprep.subr.mxu0 0.0
    %2328 = vmatpush2.msra.mxu0 0.0
    %2329 = vmatprep.subr.mxu0 0.0
    %2330 = vmatpush2.msra.mxu0 0.0
    %2331 = vmatprep.mubr.f32.mxu0 0.0
    %2332 = vmatmul.mubr.f32.gmra.mxu0 %v2265
    %v2333 = vpop.f32.mrf.mxu0
    %v2334 = vadd.f32 %v2261, %v2333
    %v2335 = vpop.f32.mrf.mxu0
    %2336 = vdwg.mxu0
    %2337 = vrot.lane.b32.xlu0 %v1852, 112
    %v2338 = vpop.permute.xlu0 %2337
    %2339 = vrot.lane.b32.xlu0 %v1852, 80
    %v2340 = vpop.permute.xlu0 %2339
    %v2341 = vsel %vm440, %v2338, 0
    %v2343 = vsel %vm440, %v2340, 0
    %2345 = vmatprep.subr.mxu0 0.0
    %2346 = vmatpush1.xpose.msra.mxu0 0.0
    %2347 = vmatprep.subr.mxu0 0.0
    %2348 = vmatpush1.xpose.msra.mxu0 0.0
    %2349 = vmatprep.subr.mxu0 0.0
    %2350 = vmatpush1.xpose.msra.mxu0 0.0
    %2351 = vmatprep.subr.mxu0 0.0
    %2352 = vmatpush1.xpose.msra.mxu0 0.0
    %2353 = vmatprep.subr.mxu0 0.0
    %2354 = vmatpush1.xpose.msra.mxu0 0.0
    %2355 = vmatprep.subr.mxu0 0.0
    %2356 = vmatpush1.xpose.msra.mxu0 0.0
    %2357 = vmatprep.subr.mxu0 0.0
    %2358 = vmatpush1.xpose.msra.mxu0 0.0
    %2359 = vmatprep.subr.mxu0 0.0
    %2360 = vmatpush1.xpose.msra.mxu0 0.0
    %2361 = vmatprep.subr.mxu0 0.0
    %2362 = vmatpush1.xpose.msra.mxu0 0.0
    %2363 = vmatprep.subr.mxu0 0.0
    %2364 = vmatpush1.xpose.msra.mxu0 0.0
    %2365 = vmatprep.subr.mxu0 0.0
    %2366 = vmatpush1.xpose.msra.mxu0 0.0
    %2367 = vmatprep.subr.mxu0 0.0
    %2368 = vmatpush1.xpose.msra.mxu0 0.0
    %2369 = vmatprep.subr.mxu0 0.0
    %2370 = vmatpush1.xpose.msra.mxu0 0.0
    %2371 = vmatprep.subr.mxu0 0.0
    %2372 = vmatpush1.xpose.msra.mxu0 0.0
    %2373 = vmatprep.subr.mxu0 0.0
    %2374 = vmatpush1.xpose.msra.mxu0 0.0
    %2375 = vmatprep.subr.mxu0 0.0
    %2376 = vmatpush1.xpose.msra.mxu0 %v2343
    %2377 = vmatprep.subr.mxu0 0.0
    %2378 = vmatpush2.xpose.msra.mxu0 0.0
    %2379 = vmatprep.subr.mxu0 0.0
    %2380 = vmatpush2.xpose.msra.mxu0 0.0
    %2381 = vmatprep.subr.mxu0 0.0
    %2382 = vmatpush2.xpose.msra.mxu0 0.0
    %2383 = vmatprep.subr.mxu0 0.0
    %2384 = vmatpush2.xpose.msra.mxu0 0.0
    %2385 = vmatprep.subr.mxu0 0.0
    %2386 = vmatpush2.xpose.msra.mxu0 0.0
    %2387 = vmatprep.subr.mxu0 0.0
    %2388 = vmatpush2.xpose.msra.mxu0 0.0
    %2389 = vmatprep.subr.mxu0 0.0
    %2390 = vmatpush2.xpose.msra.mxu0 0.0
    %2391 = vmatprep.subr.mxu0 0.0
    %2392 = vmatpush2.xpose.msra.mxu0 0.0
    %2393 = vmatprep.subr.mxu0 0.0
    %2394 = vmatpush2.xpose.msra.mxu0 0.0
    %2395 = vmatprep.subr.mxu0 0.0
    %2396 = vmatpush2.xpose.msra.mxu0 0.0
    %2397 = vmatprep.subr.mxu0 0.0
    %2398 = vmatpush2.xpose.msra.mxu0 0.0
    %2399 = vmatprep.subr.mxu0 0.0
    %2400 = vmatpush2.xpose.msra.mxu0 0.0
    %2401 = vmatprep.subr.mxu0 0.0
    %2402 = vmatpush2.xpose.msra.mxu0 0.0
    %2403 = vmatprep.subr.mxu0 0.0
    %2404 = vmatpush2.xpose.msra.mxu0 0.0
    %2405 = vmatprep.subr.mxu0 0.0
    %2406 = vmatpush2.xpose.msra.mxu0 0.0
    %2407 = vmatprep.subr.mxu0 0.0
    %2408 = vmatpush2.xpose.msra.mxu0 0.0
    %2409 = vmatprep.mubr.f32.mxu0 0.0
    %2410 = vmatmul.mubr.f32.gmra.mxu0 %v2341
    %v2411 = vpop.f32.mrf.mxu0
    %v2412 = vadd.f32 0.0, %v2411
    %v2413 = vpop.f32.mrf.mxu0
    %2414 = vdwg.mxu0
    %v2415 = vmul.f32 %v2412, %v432
    %v2416 = vsel %vm1933, %v2415, -inf
    %2417 = vmax.xlane.f32.xlu0 %v2416
    %v2418 = vpop.xlane.xlu0 %2417
    %v2419 = vsub.f32 %v2415, %v2418
    %v2420 = vmul.f32 %v2419, 1.442695
    %v2421 = vpow.pop %v2420
    %v2422 = vsel %vm1933, %v2421, 0.0
    %2423 = vadd.xlane.f32.xlu0 %v2422
    %v2424 = vpop.xlane.xlu0 %2423
    %v2425 = vrcp.pop %v2424
    %v2426 = vmul.f32 %v2421, %v2425
    %2427 = vrot.lane.b32.xlu0 %v1852, 48
    %v2428 = vpop.permute.xlu0 %2427
    %v2430 = vsel %vm1947, %v2426, 0
    %v2432 = vsel %vm1951, %v2428, 0
    %2434 = vmatprep.subr.mxu0 0.0
    %2435 = vmatpush1.msra.mxu0 0.0
    %2436 = vmatprep.subr.mxu0 0.0
    %2437 = vmatpush1.msra.mxu0 0.0
    %2438 = vmatprep.subr.mxu0 0.0
    %2439 = vmatpush1.msra.mxu0 0.0
    %2440 = vmatprep.subr.mxu0 0.0
    %2441 = vmatpush1.msra.mxu0 0.0
    %2442 = vmatprep.subr.mxu0 0.0
    %2443 = vmatpush1.msra.mxu0 0.0
    %2444 = vmatprep.subr.mxu0 0.0
    %2445 = vmatpush1.msra.mxu0 0.0
    %2446 = vmatprep.subr.mxu0 0.0
    %2447 = vmatpush1.msra.mxu0 0.0
    %2448 = vmatprep.subr.mxu0 0.0
    %2449 = vmatpush1.msra.mxu0 0.0
    %2450 = vmatprep.subr.mxu0 0.0
    %2451 = vmatpush1.msra.mxu0 0.0
    %2452 = vmatprep.subr.mxu0 0.0
    %2453 = vmatpush1.msra.mxu0 0.0
    %2454 = vmatprep.subr.mxu0 0.0
    %2455 = vmatpush1.msra.mxu0 0.0
    %2456 = vmatprep.subr.mxu0 0.0
    %2457 = vmatpush1.msra.mxu0 0.0
    %2458 = vmatprep.subr.mxu0 0.0
    %2459 = vmatpush1.msra.mxu0 0.0
    %2460 = vmatprep.subr.mxu0 0.0
    %2461 = vmatpush1.msra.mxu0 0.0
    %2462 = vmatprep.subr.mxu0 0.0
    %2463 = vmatpush1.msra.mxu0 0.0
    %2464 = vmatprep.subr.mxu0 0.0
    %2465 = vmatpush1.msra.mxu0 %v2432
    %2466 = vmatprep.subr.mxu0 0.0
    %2467 = vmatpush2.msra.mxu0 0.0
    %2468 = vmatprep.subr.mxu0 0.0
    %2469 = vmatpush2.msra.mxu0 0.0
    %2470 = vmatprep.subr.mxu0 0.0
    %2471 = vmatpush2.msra.mxu0 0.0
    %2472 = vmatprep.subr.mxu0 0.0
    %2473 = vmatpush2.msra.mxu0 0.0
    %2474 = vmatprep.subr.mxu0 0.0
    %2475 = vmatpush2.msra.mxu0 0.0
    %2476 = vmatprep.subr.mxu0 0.0
    %2477 = vmatpush2.msra.mxu0 0.0
    %2478 = vmatprep.subr.mxu0 0.0
    %2479 = vmatpush2.msra.mxu0 0.0
    %2480 = vmatprep.subr.mxu0 0.0
    %2481 = vmatpush2.msra.mxu0 0.0
    %2482 = vmatprep.subr.mxu0 0.0
    %2483 = vmatpush2.msra.mxu0 0.0
    %2484 = vmatprep.subr.mxu0 0.0
    %2485 = vmatpush2.msra.mxu0 0.0
    %2486 = vmatprep.subr.mxu0 0.0
    %2487 = vmatpush2.msra.mxu0 0.0
    %2488 = vmatprep.subr.mxu0 0.0
    %2489 = vmatpush2.msra.mxu0 0.0
    %2490 = vmatprep.subr.mxu0 0.0
    %2491 = vmatpush2.msra.mxu0 0.0
    %2492 = vmatprep.subr.mxu0 0.0
    %2493 = vmatpush2.msra.mxu0 0.0
    %2494 = vmatprep.subr.mxu0 0.0
    %2495 = vmatpush2.msra.mxu0 0.0
    %2496 = vmatprep.subr.mxu0 0.0
    %2497 = vmatpush2.msra.mxu0 0.0
    %2498 = vmatprep.mubr.f32.mxu0 0.0
    %2499 = vmatmul.mubr.f32.gmra.mxu0 %v2430
    %v2500 = vpop.f32.mrf.mxu0
    %v2501 = vadd.f32 0.0, %v2500
    %v2502 = vpop.f32.mrf.mxu0
    %2503 = vdwg.mxu0
    %v2505 = vsel %vm440, %v2501, 0
    %2507 = vmatprep.subr.mxu0 0.0
    %2508 = vmatpush1.msra.mxu0 0.0
    %2509 = vmatprep.subr.mxu0 0.0
    %2510 = vmatpush1.msra.mxu0 0.0
    %2511 = vmatprep.subr.mxu0 0.0
    %2512 = vmatpush1.msra.mxu0 0.0
    %2513 = vmatprep.subr.mxu0 0.0
    %2514 = vmatpush1.msra.mxu0 0.0
    %2515 = vmatprep.subr.mxu0 0.0
    %2516 = vmatpush1.msra.mxu0 0.0
    %2517 = vmatprep.subr.mxu0 0.0
    %2518 = vmatpush1.msra.mxu0 0.0
    %2519 = vmatprep.subr.mxu0 0.0
    %2520 = vmatpush1.msra.mxu0 0.0
    %2521 = vmatprep.subr.mxu0 0.0
    %2522 = vmatpush1.msra.mxu0 0.0
    %2523 = vmatprep.subr.mxu0 0.0
    %2524 = vmatpush1.msra.mxu0 0.0
    %2525 = vmatprep.subr.mxu0 0.0
    %2526 = vmatpush1.msra.mxu0 0.0
    %2527 = vmatprep.subr.mxu0 0.0
    %2528 = vmatpush1.msra.mxu0 0.0
    %2529 = vmatprep.subr.mxu0 0.0
    %2530 = vmatpush1.msra.mxu0 0.0
    %2531 = vmatprep.subr.mxu0 0.0
    %2532 = vmatpush1.msra.mxu0 0.0
    %2533 = vmatprep.subr.mxu0 0.0
    %2534 = vmatpush1.msra.mxu0 0.0
    %2535 = vmatprep.subr.mxu0 0.0
    %2536 = vmatpush1.msra.mxu0 0.0
    %2537 = vmatprep.subr.mxu0 0.0
    %2538 = vmatpush1.msra.mxu0 %v1759
    %2539 = vmatprep.subr.mxu0 0.0
    %2540 = vmatpush2.msra.mxu0 0.0
    %2541 = vmatprep.subr.mxu0 0.0
    %2542 = vmatpush2.msra.mxu0 0.0
    %2543 = vmatprep.subr.mxu0 0.0
    %2544 = vmatpush2.msra.mxu0 0.0
    %2545 = vmatprep.subr.mxu0 0.0
    %2546 = vmatpush2.msra.mxu0 0.0
    %2547 = vmatprep.subr.mxu0 0.0
    %2548 = vmatpush2.msra.mxu0 0.0
    %2549 = vmatprep.subr.mxu0 0.0
    %2550 = vmatpush2.msra.mxu0 0.0
    %2551 = vmatprep.subr.mxu0 0.0
    %2552 = vmatpush2.msra.mxu0 0.0
    %2553 = vmatprep.subr.mxu0 0.0
    %2554 = vmatpush2.msra.mxu0 0.0
    %2555 = vmatprep.subr.mxu0 0.0
    %2556 = vmatpush2.msra.mxu0 0.0
    %2557 = vmatprep.subr.mxu0 0.0
    %2558 = vmatpush2.msra.mxu0 0.0
    %2559 = vmatprep.subr.mxu0 0.0
    %2560 = vmatpush2.msra.mxu0 0.0
    %2561 = vmatprep.subr.mxu0 0.0
    %2562 = vmatpush2.msra.mxu0 0.0
    %2563 = vmatprep.subr.mxu0 0.0
    %2564 = vmatpush2.msra.mxu0 0.0
    %2565 = vmatprep.subr.mxu0 0.0
    %2566 = vmatpush2.msra.mxu0 0.0
    %2567 = vmatprep.subr.mxu0 0.0
    %2568 = vmatpush2.msra.mxu0 0.0
    %2569 = vmatprep.subr.mxu0 0.0
    %2570 = vmatpush2.msra.mxu0 0.0
    %2571 = vmatprep.mubr.f32.mxu0 0.0
    %2572 = vmatmul.mubr.f32.gmra.mxu0 %v2505
    %v2573 = vpop.f32.mrf.mxu0
    %v2574 = vadd.f32 0.0, %v2573
    %v2575 = vpop.f32.mrf.mxu0
    %2576 = vdwg.mxu0
    %v2577 = vadd.f32 %v2334, %v2574
    %2578 = vrot.lane.b32.xlu0 %v1852, 104
    %v2579 = vpop.permute.xlu0 %2578
    %2580 = vrot.lane.b32.xlu0 %v1852, 72
    %v2581 = vpop.permute.xlu0 %2580
    %v2582 = vsel %vm440, %v2579, 0
    %v2584 = vsel %vm440, %v2581, 0
    %2586 = vmatprep.subr.mxu0 0.0
    %2587 = vmatpush1.xpose.msra.mxu0 0.0
    %2588 = vmatprep.subr.mxu0 0.0
    %2589 = vmatpush1.xpose.msra.mxu0 0.0
    %2590 = vmatprep.subr.mxu0 0.0
    %2591 = vmatpush1.xpose.msra.mxu0 0.0
    %2592 = vmatprep.subr.mxu0 0.0
    %2593 = vmatpush1.xpose.msra.mxu0 0.0
    %2594 = vmatprep.subr.mxu0 0.0
    %2595 = vmatpush1.xpose.msra.mxu0 0.0
    %2596 = vmatprep.subr.mxu0 0.0
    %2597 = vmatpush1.xpose.msra.mxu0 0.0
    %2598 = vmatprep.subr.mxu0 0.0
    %2599 = vmatpush1.xpose.msra.mxu0 0.0
    %2600 = vmatprep.subr.mxu0 0.0
    %2601 = vmatpush1.xpose.msra.mxu0 0.0
    %2602 = vmatprep.subr.mxu0 0.0
    %2603 = vmatpush1.xpose.msra.mxu0 0.0
    %2604 = vmatprep.subr.mxu0 0.0
    %2605 = vmatpush1.xpose.msra.mxu0 0.0
    %2606 = vmatprep.subr.mxu0 0.0
    %2607 = vmatpush1.xpose.msra.mxu0 0.0
    %2608 = vmatprep.subr.mxu0 0.0
    %2609 = vmatpush1.xpose.msra.mxu0 0.0
    %2610 = vmatprep.subr.mxu0 0.0
    %2611 = vmatpush1.xpose.msra.mxu0 0.0
    %2612 = vmatprep.subr.mxu0 0.0
    %2613 = vmatpush1.xpose.msra.mxu0 0.0
    %2614 = vmatprep.subr.mxu0 0.0
    %2615 = vmatpush1.xpose.msra.mxu0 0.0
    %2616 = vmatprep.subr.mxu0 0.0
    %2617 = vmatpush1.xpose.msra.mxu0 %v2584
    %2618 = vmatprep.subr.mxu0 0.0
    %2619 = vmatpush2.xpose.msra.mxu0 0.0
    %2620 = vmatprep.subr.mxu0 0.0
    %2621 = vmatpush2.xpose.msra.mxu0 0.0
    %2622 = vmatprep.subr.mxu0 0.0
    %2623 = vmatpush2.xpose.msra.mxu0 0.0
    %2624 = vmatprep.subr.mxu0 0.0
    %2625 = vmatpush2.xpose.msra.mxu0 0.0
    %2626 = vmatprep.subr.mxu0 0.0
    %2627 = vmatpush2.xpose.msra.mxu0 0.0
    %2628 = vmatprep.subr.mxu0 0.0
    %2629 = vmatpush2.xpose.msra.mxu0 0.0
    %2630 = vmatprep.subr.mxu0 0.0
    %2631 = vmatpush2.xpose.msra.mxu0 0.0
    %2632 = vmatprep.subr.mxu0 0.0
    %2633 = vmatpush2.xpose.msra.mxu0 0.0
    %2634 = vmatprep.subr.mxu0 0.0
    %2635 = vmatpush2.xpose.msra.mxu0 0.0
    %2636 = vmatprep.subr.mxu0 0.0
    %2637 = vmatpush2.xpose.msra.mxu0 0.0
    %2638 = vmatprep.subr.mxu0 0.0
    %2639 = vmatpush2.xpose.msra.mxu0 0.0
    %2640 = vmatprep.subr.mxu0 0.0
    %2641 = vmatpush2.xpose.msra.mxu0 0.0
    %2642 = vmatprep.subr.mxu0 0.0
    %2643 = vmatpush2.xpose.msra.mxu0 0.0
    %2644 = vmatprep.subr.mxu0 0.0
    %2645 = vmatpush2.xpose.msra.mxu0 0.0
    %2646 = vmatprep.subr.mxu0 0.0
    %2647 = vmatpush2.xpose.msra.mxu0 0.0
    %2648 = vmatprep.subr.mxu0 0.0
    %2649 = vmatpush2.xpose.msra.mxu0 0.0
    %2650 = vmatprep.mubr.f32.mxu0 0.0
    %2651 = vmatmul.mubr.f32.gmra.mxu0 %v2582
    %v2652 = vpop.f32.mrf.mxu0
    %v2653 = vadd.f32 0.0, %v2652
    %v2654 = vpop.f32.mrf.mxu0
    %2655 = vdwg.mxu0
    %v2656 = vmul.f32 %v2653, %v432
    %v2657 = vsel %vm1933, %v2656, -inf
    %2658 = vmax.xlane.f32.xlu0 %v2657
    %v2659 = vpop.xlane.xlu0 %2658
    %v2660 = vsub.f32 %v2656, %v2659
    %v2661 = vmul.f32 %v2660, 1.442695
    %v2662 = vpow.pop %v2661
    %v2663 = vsel %vm1933, %v2662, 0.0
    %2664 = vadd.xlane.f32.xlu0 %v2663
    %v2665 = vpop.xlane.xlu0 %2664
    %v2666 = vrcp.pop %v2665
    %v2667 = vmul.f32 %v2662, %v2666
    %2668 = vrot.lane.b32.xlu0 %v1852, 40
    %v2669 = vpop.permute.xlu0 %2668
    %v2671 = vsel %vm1947, %v2667, 0
    %v2673 = vsel %vm1951, %v2669, 0
    %2675 = vmatprep.subr.mxu0 0.0
    %2676 = vmatpush1.msra.mxu0 0.0
    %2677 = vmatprep.subr.mxu0 0.0
    %2678 = vmatpush1.msra.mxu0 0.0
    %2679 = vmatprep.subr.mxu0 0.0
    %2680 = vmatpush1.msra.mxu0 0.0
    %2681 = vmatprep.subr.mxu0 0.0
    %2682 = vmatpush1.msra.mxu0 0.0
    %2683 = vmatprep.subr.mxu0 0.0
    %2684 = vmatpush1.msra.mxu0 0.0
    %2685 = vmatprep.subr.mxu0 0.0
    %2686 = vmatpush1.msra.mxu0 0.0
    %2687 = vmatprep.subr.mxu0 0.0
    %2688 = vmatpush1.msra.mxu0 0.0
    %2689 = vmatprep.subr.mxu0 0.0
    %2690 = vmatpush1.msra.mxu0 0.0
    %2691 = vmatprep.subr.mxu0 0.0
    %2692 = vmatpush1.msra.mxu0 0.0
    %2693 = vmatprep.subr.mxu0 0.0
    %2694 = vmatpush1.msra.mxu0 0.0
    %2695 = vmatprep.subr.mxu0 0.0
    %2696 = vmatpush1.msra.mxu0 0.0
    %2697 = vmatprep.subr.mxu0 0.0
    %2698 = vmatpush1.msra.mxu0 0.0
    %2699 = vmatprep.subr.mxu0 0.0
    %2700 = vmatpush1.msra.mxu0 0.0
    %2701 = vmatprep.subr.mxu0 0.0
    %2702 = vmatpush1.msra.mxu0 0.0
    %2703 = vmatprep.subr.mxu0 0.0
    %2704 = vmatpush1.msra.mxu0 0.0
    %2705 = vmatprep.subr.mxu0 0.0
    %2706 = vmatpush1.msra.mxu0 %v2673
    %2707 = vmatprep.subr.mxu0 0.0
    %2708 = vmatpush2.msra.mxu0 0.0
    %2709 = vmatprep.subr.mxu0 0.0
    %2710 = vmatpush2.msra.mxu0 0.0
    %2711 = vmatprep.subr.mxu0 0.0
    %2712 = vmatpush2.msra.mxu0 0.0
    %2713 = vmatprep.subr.mxu0 0.0
    %2714 = vmatpush2.msra.mxu0 0.0
    %2715 = vmatprep.subr.mxu0 0.0
    %2716 = vmatpush2.msra.mxu0 0.0
    %2717 = vmatprep.subr.mxu0 0.0
    %2718 = vmatpush2.msra.mxu0 0.0
    %2719 = vmatprep.subr.mxu0 0.0
    %2720 = vmatpush2.msra.mxu0 0.0
    %2721 = vmatprep.subr.mxu0 0.0
    %2722 = vmatpush2.msra.mxu0 0.0
    %2723 = vmatprep.subr.mxu0 0.0
    %2724 = vmatpush2.msra.mxu0 0.0
    %2725 = vmatprep.subr.mxu0 0.0
    %2726 = vmatpush2.msra.mxu0 0.0
    %2727 = vmatprep.subr.mxu0 0.0
    %2728 = vmatpush2.msra.mxu0 0.0
    %2729 = vmatprep.subr.mxu0 0.0
    %2730 = vmatpush2.msra.mxu0 0.0
    %2731 = vmatprep.subr.mxu0 0.0
    %2732 = vmatpush2.msra.mxu0 0.0
    %2733 = vmatprep.subr.mxu0 0.0
    %2734 = vmatpush2.msra.mxu0 0.0
    %2735 = vmatprep.subr.mxu0 0.0
    %2736 = vmatpush2.msra.mxu0 0.0
    %2737 = vmatprep.subr.mxu0 0.0
    %2738 = vmatpush2.msra.mxu0 0.0
    %2739 = vmatprep.mubr.f32.mxu0 0.0
    %2740 = vmatmul.mubr.f32.gmra.mxu0 %v2671
    %v2741 = vpop.f32.mrf.mxu0
    %v2742 = vadd.f32 0.0, %v2741
    %v2743 = vpop.f32.mrf.mxu0
    %2744 = vdwg.mxu0
    %v2746 = vsel %vm440, %v2742, 0
    %2748 = vmatprep.subr.mxu0 0.0
    %2749 = vmatpush1.msra.mxu0 0.0
    %2750 = vmatprep.subr.mxu0 0.0
    %2751 = vmatpush1.msra.mxu0 0.0
    %2752 = vmatprep.subr.mxu0 0.0
    %2753 = vmatpush1.msra.mxu0 0.0
    %2754 = vmatprep.subr.mxu0 0.0
    %2755 = vmatpush1.msra.mxu0 0.0
    %2756 = vmatprep.subr.mxu0 0.0
    %2757 = vmatpush1.msra.mxu0 0.0
    %2758 = vmatprep.subr.mxu0 0.0
    %2759 = vmatpush1.msra.mxu0 0.0
    %2760 = vmatprep.subr.mxu0 0.0
    %2761 = vmatpush1.msra.mxu0 0.0
    %2762 = vmatprep.subr.mxu0 0.0
    %2763 = vmatpush1.msra.mxu0 0.0
    %2764 = vmatprep.subr.mxu0 0.0
    %2765 = vmatpush1.msra.mxu0 0.0
    %2766 = vmatprep.subr.mxu0 0.0
    %2767 = vmatpush1.msra.mxu0 0.0
    %2768 = vmatprep.subr.mxu0 0.0
    %2769 = vmatpush1.msra.mxu0 0.0
    %2770 = vmatprep.subr.mxu0 0.0
    %2771 = vmatpush1.msra.mxu0 0.0
    %2772 = vmatprep.subr.mxu0 0.0
    %2773 = vmatpush1.msra.mxu0 0.0
    %2774 = vmatprep.subr.mxu0 0.0
    %2775 = vmatpush1.msra.mxu0 0.0
    %2776 = vmatprep.subr.mxu0 0.0
    %2777 = vmatpush1.msra.mxu0 0.0
    %2778 = vmatprep.subr.mxu0 0.0
    %2779 = vmatpush1.msra.mxu0 %v1760
    %2780 = vmatprep.subr.mxu0 0.0
    %2781 = vmatpush2.msra.mxu0 0.0
    %2782 = vmatprep.subr.mxu0 0.0
    %2783 = vmatpush2.msra.mxu0 0.0
    %2784 = vmatprep.subr.mxu0 0.0
    %2785 = vmatpush2.msra.mxu0 0.0
    %2786 = vmatprep.subr.mxu0 0.0
    %2787 = vmatpush2.msra.mxu0 0.0
    %2788 = vmatprep.subr.mxu0 0.0
    %2789 = vmatpush2.msra.mxu0 0.0
    %2790 = vmatprep.subr.mxu0 0.0
    %2791 = vmatpush2.msra.mxu0 0.0
    %2792 = vmatprep.subr.mxu0 0.0
    %2793 = vmatpush2.msra.mxu0 0.0
    %2794 = vmatprep.subr.mxu0 0.0
    %2795 = vmatpush2.msra.mxu0 0.0
    %2796 = vmatprep.subr.mxu0 0.0
    %2797 = vmatpush2.msra.mxu0 0.0
    %2798 = vmatprep.subr.mxu0 0.0
    %2799 = vmatpush2.msra.mxu0 0.0
    %2800 = vmatprep.subr.mxu0 0.0
    %2801 = vmatpush2.msra.mxu0 0.0
    %2802 = vmatprep.subr.mxu0 0.0
    %2803 = vmatpush2.msra.mxu0 0.0
    %2804 = vmatprep.subr.mxu0 0.0
    %2805 = vmatpush2.msra.mxu0 0.0
    %2806 = vmatprep.subr.mxu0 0.0
    %2807 = vmatpush2.msra.mxu0 0.0
    %2808 = vmatprep.subr.mxu0 0.0
    %2809 = vmatpush2.msra.mxu0 0.0
    %2810 = vmatprep.subr.mxu0 0.0
    %2811 = vmatpush2.msra.mxu0 0.0
    %2812 = vmatprep.mubr.f32.mxu0 0.0
    %2813 = vmatmul.mubr.f32.gmra.mxu0 %v2746
    %v2814 = vpop.f32.mrf.mxu0
    %v2815 = vadd.f32 0.0, %v2814
    %v2816 = vpop.f32.mrf.mxu0
    %2817 = vdwg.mxu0
    %v2818 = vadd.f32 %v2577, %v2815
    %v2820 = vlaneseq
    %v2821 = vshrl.u32 %v2820, 7
    %v2822 = vsub.s32 0, %v2821
    %v2823 = vrot.slane %v1761, %v2822
    %v2825 = vadd.f32 %v2818, %v2823
    %v2826 = vadd.f32 %v2825, %v1749
    %v2827 = vld [vmem:[%s20] sm:$0x1]
    %v2828 = vld [vmem:[%s19] sm:$0xff]
    %v2829 = vld [vmem:[%s19 + $0x8] sm:$0xff]
    %v2830 = vld [vmem:[%s19 + $0x10] sm:$0xff]
    %v2831 = vld [vmem:[%s19 + $0x18] sm:$0xff]
    %v2833 = vsel %vm201, %v1577, 0
    %2835 = vmatprep.subr.mxu0 0.0
    %2836 = vmatpush1.msra.mxu0 0.0
    %2837 = vmatprep.subr.mxu0 0.0
    %2838 = vmatpush1.msra.mxu0 0.0
    %2839 = vmatprep.subr.mxu0 0.0
    %2840 = vmatpush1.msra.mxu0 0.0
    %2841 = vmatprep.subr.mxu0 0.0
    %2842 = vmatpush1.msra.mxu0 0.0
    %2843 = vmatprep.subr.mxu0 0.0
    %2844 = vmatpush1.msra.mxu0 0.0
    %2845 = vmatprep.subr.mxu0 0.0
    %2846 = vmatpush1.msra.mxu0 0.0
    %2847 = vmatprep.subr.mxu0 0.0
    %2848 = vmatpush1.msra.mxu0 0.0
    %2849 = vmatprep.subr.mxu0 0.0
    %2850 = vmatpush1.msra.mxu0 0.0
    %2851 = vmatprep.subr.mxu0 0.0
    %2852 = vmatpush1.msra.mxu0 0.0
    %2853 = vmatprep.subr.mxu0 0.0
    %2854 = vmatpush1.msra.mxu0 0.0
    %2855 = vmatprep.subr.mxu0 0.0
    %2856 = vmatpush1.msra.mxu0 0.0
    %2857 = vmatprep.subr.mxu0 0.0
    %2858 = vmatpush1.msra.mxu0 0.0
    %2859 = vmatprep.subr.mxu0 0.0
    %2860 = vmatpush1.msra.mxu0 %v2831
    %2861 = vmatprep.subr.mxu0 0.0
    %2862 = vmatpush1.msra.mxu0 %v2830
    %2863 = vmatprep.subr.mxu0 0.0
    %2864 = vmatpush1.msra.mxu0 %v2829
    %2865 = vmatprep.subr.mxu0 0.0
    %2866 = vmatpush1.msra.mxu0 %v2828
    %2867 = vmatprep.subr.mxu0 0.0
    %2868 = vmatpush2.msra.mxu0 0.0
    %2869 = vmatprep.subr.mxu0 0.0
    %2870 = vmatpush2.msra.mxu0 0.0
    %2871 = vmatprep.subr.mxu0 0.0
    %2872 = vmatpush2.msra.mxu0 0.0
    %2873 = vmatprep.subr.mxu0 0.0
    %2874 = vmatpush2.msra.mxu0 0.0
    %2875 = vmatprep.subr.mxu0 0.0
    %2876 = vmatpush2.msra.mxu0 0.0
    %2877 = vmatprep.subr.mxu0 0.0
    %2878 = vmatpush2.msra.mxu0 0.0
    %2879 = vmatprep.subr.mxu0 0.0
    %2880 = vmatpush2.msra.mxu0 0.0
    %2881 = vmatprep.subr.mxu0 0.0
    %2882 = vmatpush2.msra.mxu0 0.0
    %2883 = vmatprep.subr.mxu0 0.0
    %2884 = vmatpush2.msra.mxu0 0.0
    %2885 = vmatprep.subr.mxu0 0.0
    %2886 = vmatpush2.msra.mxu0 0.0
    %2887 = vmatprep.subr.mxu0 0.0
    %2888 = vmatpush2.msra.mxu0 0.0
    %2889 = vmatprep.subr.mxu0 0.0
    %2890 = vmatpush2.msra.mxu0 0.0
    %2891 = vmatprep.subr.mxu0 0.0
    %2892 = vmatpush2.msra.mxu0 0.0
    %2893 = vmatprep.subr.mxu0 0.0
    %2894 = vmatpush2.msra.mxu0 0.0
    %2895 = vmatprep.subr.mxu0 0.0
    %2896 = vmatpush2.msra.mxu0 0.0
    %2897 = vmatprep.subr.mxu0 0.0
    %2898 = vmatpush2.msra.mxu0 0.0
    %2899 = vmatprep.mubr.f32.mxu0 0.0
    %2900 = vmatmul.mubr.f32.gmra.mxu0 %v2833
    %v2901 = vpop.f32.mrf.mxu0
    %v2902 = vadd.f32 0.0, %v2901
    %v2903 = vpop.f32.mrf.mxu0
    %2904 = vdwg.mxu0
    %v2905 = vadd.f32 %v2827, %v2902
    %v2906 = vld [vmem:[%s19 + $0x20] sm:$0xff]
    %v2907 = vld [vmem:[%s19 + $0x28] sm:$0xff]
    %v2908 = vld [vmem:[%s19 + $0x30] sm:$0xff]
    %v2909 = vld [vmem:[%s19 + $0x38] sm:$0xff]
    %v2910 = vrot.slane %v1577, 1
    %v2911 = vsel %vm201, %v2910, 0
    %2913 = vmatprep.subr.mxu0 0.0
    %2914 = vmatpush1.msra.mxu0 0.0
    %2915 = vmatprep.subr.mxu0 0.0
    %2916 = vmatpush1.msra.mxu0 0.0
    %2917 = vmatprep.subr.mxu0 0.0
    %2918 = vmatpush1.msra.mxu0 0.0
    %2919 = vmatprep.subr.mxu0 0.0
    %2920 = vmatpush1.msra.mxu0 0.0
    %2921 = vmatprep.subr.mxu0 0.0
    %2922 = vmatpush1.msra.mxu0 0.0
    %2923 = vmatprep.subr.mxu0 0.0
    %2924 = vmatpush1.msra.mxu0 0.0
    %2925 = vmatprep.subr.mxu0 0.0
    %2926 = vmatpush1.msra.mxu0 0.0
    %2927 = vmatprep.subr.mxu0 0.0
    %2928 = vmatpush1.msra.mxu0 0.0
    %2929 = vmatprep.subr.mxu0 0.0
    %2930 = vmatpush1.msra.mxu0 0.0
    %2931 = vmatprep.subr.mxu0 0.0
    %2932 = vmatpush1.msra.mxu0 0.0
    %2933 = vmatprep.subr.mxu0 0.0
    %2934 = vmatpush1.msra.mxu0 0.0
    %2935 = vmatprep.subr.mxu0 0.0
    %2936 = vmatpush1.msra.mxu0 0.0
    %2937 = vmatprep.subr.mxu0 0.0
    %2938 = vmatpush1.msra.mxu0 %v2909
    %2939 = vmatprep.subr.mxu0 0.0
    %2940 = vmatpush1.msra.mxu0 %v2908
    %2941 = vmatprep.subr.mxu0 0.0
    %2942 = vmatpush1.msra.mxu0 %v2907
    %2943 = vmatprep.subr.mxu0 0.0
    %2944 = vmatpush1.msra.mxu0 %v2906
    %2945 = vmatprep.subr.mxu0 0.0
    %2946 = vmatpush2.msra.mxu0 0.0
    %2947 = vmatprep.subr.mxu0 0.0
    %2948 = vmatpush2.msra.mxu0 0.0
    %2949 = vmatprep.subr.mxu0 0.0
    %2950 = vmatpush2.msra.mxu0 0.0
    %2951 = vmatprep.subr.mxu0 0.0
    %2952 = vmatpush2.msra.mxu0 0.0
    %2953 = vmatprep.subr.mxu0 0.0
    %2954 = vmatpush2.msra.mxu0 0.0
    %2955 = vmatprep.subr.mxu0 0.0
    %2956 = vmatpush2.msra.mxu0 0.0
    %2957 = vmatprep.subr.mxu0 0.0
    %2958 = vmatpush2.msra.mxu0 0.0
    %2959 = vmatprep.subr.mxu0 0.0
    %2960 = vmatpush2.msra.mxu0 0.0
    %2961 = vmatprep.subr.mxu0 0.0
    %2962 = vmatpush2.msra.mxu0 0.0
    %2963 = vmatprep.subr.mxu0 0.0
    %2964 = vmatpush2.msra.mxu0 0.0
    %2965 = vmatprep.subr.mxu0 0.0
    %2966 = vmatpush2.msra.mxu0 0.0
    %2967 = vmatprep.subr.mxu0 0.0
    %2968 = vmatpush2.msra.mxu0 0.0
    %2969 = vmatprep.subr.mxu0 0.0
    %2970 = vmatpush2.msra.mxu0 0.0
    %2971 = vmatprep.subr.mxu0 0.0
    %2972 = vmatpush2.msra.mxu0 0.0
    %2973 = vmatprep.subr.mxu0 0.0
    %2974 = vmatpush2.msra.mxu0 0.0
    %2975 = vmatprep.subr.mxu0 0.0
    %2976 = vmatpush2.msra.mxu0 0.0
    %2977 = vmatprep.mubr.f32.mxu0 0.0
    %2978 = vmatmul.mubr.f32.gmra.mxu0 %v2911
    %v2979 = vpop.f32.mrf.mxu0
    %v2980 = vadd.f32 0.0, %v2979
    %v2981 = vpop.f32.mrf.mxu0
    %2982 = vdwg.mxu0
    %v2983 = vadd.f32 %v2905, %v2980
    %v2984 = vld [vmem:[%s19 + $0x40] sm:$0xff]
    %v2985 = vld [vmem:[%s19 + $0x48] sm:$0xff]
    %v2986 = vld [vmem:[%s19 + $0x50] sm:$0xff]
    %v2987 = vld [vmem:[%s19 + $0x58] sm:$0xff]
    %v2988 = vrot.slane %v1577, 2
    %v2989 = vsel %vm201, %v2988, 0
    %2991 = vmatprep.subr.mxu0 0.0
    %2992 = vmatpush1.msra.mxu0 0.0
    %2993 = vmatprep.subr.mxu0 0.0
    %2994 = vmatpush1.msra.mxu0 0.0
    %2995 = vmatprep.subr.mxu0 0.0
    %2996 = vmatpush1.msra.mxu0 0.0
    %2997 = vmatprep.subr.mxu0 0.0
    %2998 = vmatpush1.msra.mxu0 0.0
    %2999 = vmatprep.subr.mxu0 0.0
    %3000 = vmatpush1.msra.mxu0 0.0
    %3001 = vmatprep.subr.mxu0 0.0
    %3002 = vmatpush1.msra.mxu0 0.0
    %3003 = vmatprep.subr.mxu0 0.0
    %3004 = vmatpush1.msra.mxu0 0.0
    %3005 = vmatprep.subr.mxu0 0.0
    %3006 = vmatpush1.msra.mxu0 0.0
    %3007 = vmatprep.subr.mxu0 0.0
    %3008 = vmatpush1.msra.mxu0 0.0
    %3009 = vmatprep.subr.mxu0 0.0
    %3010 = vmatpush1.msra.mxu0 0.0
    %3011 = vmatprep.subr.mxu0 0.0
    %3012 = vmatpush1.msra.mxu0 0.0
    %3013 = vmatprep.subr.mxu0 0.0
    %3014 = vmatpush1.msra.mxu0 0.0
    %3015 = vmatprep.subr.mxu0 0.0
    %3016 = vmatpush1.msra.mxu0 %v2987
    %3017 = vmatprep.subr.mxu0 0.0
    %3018 = vmatpush1.msra.mxu0 %v2986
    %3019 = vmatprep.subr.mxu0 0.0
    %3020 = vmatpush1.msra.mxu0 %v2985
    %3021 = vmatprep.subr.mxu0 0.0
    %3022 = vmatpush1.msra.mxu0 %v2984
    %3023 = vmatprep.subr.mxu0 0.0
    %3024 = vmatpush2.msra.mxu0 0.0
    %3025 = vmatprep.subr.mxu0 0.0
    %3026 = vmatpush2.msra.mxu0 0.0
    %3027 = vmatprep.subr.mxu0 0.0
    %3028 = vmatpush2.msra.mxu0 0.0
    %3029 = vmatprep.subr.mxu0 0.0
    %3030 = vmatpush2.msra.mxu0 0.0
    %3031 = vmatprep.subr.mxu0 0.0
    %3032 = vmatpush2.msra.mxu0 0.0
    %3033 = vmatprep.subr.mxu0 0.0
    %3034 = vmatpush2.msra.mxu0 0.0
    %3035 = vmatprep.subr.mxu0 0.0
    %3036 = vmatpush2.msra.mxu0 0.0
    %3037 = vmatprep.subr.mxu0 0.0
    %3038 = vmatpush2.msra.mxu0 0.0
    %3039 = vmatprep.subr.mxu0 0.0
    %3040 = vmatpush2.msra.mxu0 0.0
    %3041 = vmatprep.subr.mxu0 0.0
    %3042 = vmatpush2.msra.mxu0 0.0
    %3043 = vmatprep.subr.mxu0 0.0
    %3044 = vmatpush2.msra.mxu0 0.0
    %3045 = vmatprep.subr.mxu0 0.0
    %3046 = vmatpush2.msra.mxu0 0.0
    %3047 = vmatprep.subr.mxu0 0.0
    %3048 = vmatpush2.msra.mxu0 0.0
    %3049 = vmatprep.subr.mxu0 0.0
    %3050 = vmatpush2.msra.mxu0 0.0
    %3051 = vmatprep.subr.mxu0 0.0
    %3052 = vmatpush2.msra.mxu0 0.0
    %3053 = vmatprep.subr.mxu0 0.0
    %3054 = vmatpush2.msra.mxu0 0.0
    %3055 = vmatprep.mubr.f32.mxu0 0.0
    %3056 = vmatmul.mubr.f32.gmra.mxu0 %v2989
    %v3057 = vpop.f32.mrf.mxu0
    %v3058 = vadd.f32 0.0, %v3057
    %v3059 = vpop.f32.mrf.mxu0
    %3060 = vdwg.mxu0
    %v3061 = vadd.f32 %v2983, %v3058
    %v3062 = vld [vmem:[%s19 + $0x60] sm:$0xff]
    %v3063 = vld [vmem:[%s19 + $0x68] sm:$0xff]
    %v3064 = vld [vmem:[%s19 + $0x70] sm:$0xff]
    %v3065 = vld [vmem:[%s19 + $0x78] sm:$0xff]
    %v3066 = vrot.slane %v1577, 3
    %v3067 = vsel %vm201, %v3066, 0
    %3069 = vmatprep.subr.mxu0 0.0
    %3070 = vmatpush1.msra.mxu0 0.0
    %3071 = vmatprep.subr.mxu0 0.0
    %3072 = vmatpush1.msra.mxu0 0.0
    %3073 = vmatprep.subr.mxu0 0.0
    %3074 = vmatpush1.msra.mxu0 0.0
    %3075 = vmatprep.subr.mxu0 0.0
    %3076 = vmatpush1.msra.mxu0 0.0
    %3077 = vmatprep.subr.mxu0 0.0
    %3078 = vmatpush1.msra.mxu0 0.0
    %3079 = vmatprep.subr.mxu0 0.0
    %3080 = vmatpush1.msra.mxu0 0.0
    %3081 = vmatprep.subr.mxu0 0.0
    %3082 = vmatpush1.msra.mxu0 0.0
    %3083 = vmatprep.subr.mxu0 0.0
    %3084 = vmatpush1.msra.mxu0 0.0
    %3085 = vmatprep.subr.mxu0 0.0
    %3086 = vmatpush1.msra.mxu0 0.0
    %3087 = vmatprep.subr.mxu0 0.0
    %3088 = vmatpush1.msra.mxu0 0.0
    %3089 = vmatprep.subr.mxu0 0.0
    %3090 = vmatpush1.msra.mxu0 0.0
    %3091 = vmatprep.subr.mxu0 0.0
    %3092 = vmatpush1.msra.mxu0 0.0
    %3093 = vmatprep.subr.mxu0 0.0
    %3094 = vmatpush1.msra.mxu0 %v3065
    %3095 = vmatprep.subr.mxu0 0.0
    %3096 = vmatpush1.msra.mxu0 %v3064
    %3097 = vmatprep.subr.mxu0 0.0
    %3098 = vmatpush1.msra.mxu0 %v3063
    %3099 = vmatprep.subr.mxu0 0.0
    %3100 = vmatpush1.msra.mxu0 %v3062
    %3101 = vmatprep.subr.mxu0 0.0
    %3102 = vmatpush2.msra.mxu0 0.0
    %3103 = vmatprep.subr.mxu0 0.0
    %3104 = vmatpush2.msra.mxu0 0.0
    %3105 = vmatprep.subr.mxu0 0.0
    %3106 = vmatpush2.msra.mxu0 0.0
    %3107 = vmatprep.subr.mxu0 0.0
    %3108 = vmatpush2.msra.mxu0 0.0
    %3109 = vmatprep.subr.mxu0 0.0
    %3110 = vmatpush2.msra.mxu0 0.0
    %3111 = vmatprep.subr.mxu0 0.0
    %3112 = vmatpush2.msra.mxu0 0.0
    %3113 = vmatprep.subr.mxu0 0.0
    %3114 = vmatpush2.msra.mxu0 0.0
    %3115 = vmatprep.subr.mxu0 0.0
    %3116 = vmatpush2.msra.mxu0 0.0
    %3117 = vmatprep.subr.mxu0 0.0
    %3118 = vmatpush2.msra.mxu0 0.0
    %3119 = vmatprep.subr.mxu0 0.0
    %3120 = vmatpush2.msra.mxu0 0.0
    %3121 = vmatprep.subr.mxu0 0.0
    %3122 = vmatpush2.msra.mxu0 0.0
    %3123 = vmatprep.subr.mxu0 0.0
    %3124 = vmatpush2.msra.mxu0 0.0
    %3125 = vmatprep.subr.mxu0 0.0
    %3126 = vmatpush2.msra.mxu0 0.0
    %3127 = vmatprep.subr.mxu0 0.0
    %3128 = vmatpush2.msra.mxu0 0.0
    %3129 = vmatprep.subr.mxu0 0.0
    %3130 = vmatpush2.msra.mxu0 0.0
    %3131 = vmatprep.subr.mxu0 0.0
    %3132 = vmatpush2.msra.mxu0 0.0
    %3133 = vmatprep.mubr.f32.mxu0 0.0
    %3134 = vmatmul.mubr.f32.gmra.mxu0 %v3067
    %v3135 = vpop.f32.mrf.mxu0
    %v3136 = vadd.f32 0.0, %v3135
    %v3137 = vpop.f32.mrf.mxu0
    %3138 = vdwg.mxu0
    %v3139 = vadd.f32 %v3061, %v3136
    %v3140 = vld [vmem:[%s19 + $0x80] sm:$0xff]
    %v3141 = vld [vmem:[%s19 + $0x88] sm:$0xff]
    %v3142 = vld [vmem:[%s19 + $0x90] sm:$0xff]
    %v3143 = vld [vmem:[%s19 + $0x98] sm:$0xff]
    %v3144 = vrot.slane %v1577, 4
    %v3145 = vsel %vm201, %v3144, 0
    %3147 = vmatprep.subr.mxu0 0.0
    %3148 = vmatpush1.msra.mxu0 0.0
    %3149 = vmatprep.subr.mxu0 0.0
    %3150 = vmatpush1.msra.mxu0 0.0
    %3151 = vmatprep.subr.mxu0 0.0
    %3152 = vmatpush1.msra.mxu0 0.0
    %3153 = vmatprep.subr.mxu0 0.0
    %3154 = vmatpush1.msra.mxu0 0.0
    %3155 = vmatprep.subr.mxu0 0.0
    %3156 = vmatpush1.msra.mxu0 0.0
    %3157 = vmatprep.subr.mxu0 0.0
    %3158 = vmatpush1.msra.mxu0 0.0
    %3159 = vmatprep.subr.mxu0 0.0
    %3160 = vmatpush1.msra.mxu0 0.0
    %3161 = vmatprep.subr.mxu0 0.0
    %3162 = vmatpush1.msra.mxu0 0.0
    %3163 = vmatprep.subr.mxu0 0.0
    %3164 = vmatpush1.msra.mxu0 0.0
    %3165 = vmatprep.subr.mxu0 0.0
    %3166 = vmatpush1.msra.mxu0 0.0
    %3167 = vmatprep.subr.mxu0 0.0
    %3168 = vmatpush1.msra.mxu0 0.0
    %3169 = vmatprep.subr.mxu0 0.0
    %3170 = vmatpush1.msra.mxu0 0.0
    %3171 = vmatprep.subr.mxu0 0.0
    %3172 = vmatpush1.msra.mxu0 %v3143
    %3173 = vmatprep.subr.mxu0 0.0
    %3174 = vmatpush1.msra.mxu0 %v3142
    %3175 = vmatprep.subr.mxu0 0.0
    %3176 = vmatpush1.msra.mxu0 %v3141
    %3177 = vmatprep.subr.mxu0 0.0
    %3178 = vmatpush1.msra.mxu0 %v3140
    %3179 = vmatprep.subr.mxu0 0.0
    %3180 = vmatpush2.msra.mxu0 0.0
    %3181 = vmatprep.subr.mxu0 0.0
    %3182 = vmatpush2.msra.mxu0 0.0
    %3183 = vmatprep.subr.mxu0 0.0
    %3184 = vmatpush2.msra.mxu0 0.0
    %3185 = vmatprep.subr.mxu0 0.0
    %3186 = vmatpush2.msra.mxu0 0.0
    %3187 = vmatprep.subr.mxu0 0.0
    %3188 = vmatpush2.msra.mxu0 0.0
    %3189 = vmatprep.subr.mxu0 0.0
    %3190 = vmatpush2.msra.mxu0 0.0
    %3191 = vmatprep.subr.mxu0 0.0
    %3192 = vmatpush2.msra.mxu0 0.0
    %3193 = vmatprep.subr.mxu0 0.0
    %3194 = vmatpush2.msra.mxu0 0.0
    %3195 = vmatprep.subr.mxu0 0.0
    %3196 = vmatpush2.msra.mxu0 0.0
    %3197 = vmatprep.subr.mxu0 0.0
    %3198 = vmatpush2.msra.mxu0 0.0
    %3199 = vmatprep.subr.mxu0 0.0
    %3200 = vmatpush2.msra.mxu0 0.0
    %3201 = vmatprep.subr.mxu0 0.0
    %3202 = vmatpush2.msra.mxu0 0.0
    %3203 = vmatprep.subr.mxu0 0.0
    %3204 = vmatpush2.msra.mxu0 0.0
    %3205 = vmatprep.subr.mxu0 0.0
    %3206 = vmatpush2.msra.mxu0 0.0
    %3207 = vmatprep.subr.mxu0 0.0
    %3208 = vmatpush2.msra.mxu0 0.0
    %3209 = vmatprep.subr.mxu0 0.0
    %3210 = vmatpush2.msra.mxu0 0.0
    %3211 = vmatprep.mubr.f32.mxu0 0.0
    %3212 = vmatmul.mubr.f32.gmra.mxu0 %v3145
    %v3213 = vpop.f32.mrf.mxu0
    %v3214 = vadd.f32 0.0, %v3213
    %v3215 = vpop.f32.mrf.mxu0
    %3216 = vdwg.mxu0
    %v3217 = vadd.f32 %v3139, %v3214
    %v3218 = vld [vmem:[%s19 + $0xa0] sm:$0xff]
    %v3219 = vld [vmem:[%s19 + $0xa8] sm:$0xff]
    %v3220 = vld [vmem:[%s19 + $0xb0] sm:$0xff]
    %v3221 = vld [vmem:[%s19 + $0xb8] sm:$0xff]
    %v3222 = vrot.slane %v1577, 5
    %v3223 = vsel %vm201, %v3222, 0
    %3225 = vmatprep.subr.mxu0 0.0
    %3226 = vmatpush1.msra.mxu0 0.0
    %3227 = vmatprep.subr.mxu0 0.0
    %3228 = vmatpush1.msra.mxu0 0.0
    %3229 = vmatprep.subr.mxu0 0.0
    %3230 = vmatpush1.msra.mxu0 0.0
    %3231 = vmatprep.subr.mxu0 0.0
    %3232 = vmatpush1.msra.mxu0 0.0
    %3233 = vmatprep.subr.mxu0 0.0
    %3234 = vmatpush1.msra.mxu0 0.0
    %3235 = vmatprep.subr.mxu0 0.0
    %3236 = vmatpush1.msra.mxu0 0.0
    %3237 = vmatprep.subr.mxu0 0.0
    %3238 = vmatpush1.msra.mxu0 0.0
    %3239 = vmatprep.subr.mxu0 0.0
    %3240 = vmatpush1.msra.mxu0 0.0
    %3241 = vmatprep.subr.mxu0 0.0
    %3242 = vmatpush1.msra.mxu0 0.0
    %3243 = vmatprep.subr.mxu0 0.0
    %3244 = vmatpush1.msra.mxu0 0.0
    %3245 = vmatprep.subr.mxu0 0.0
    %3246 = vmatpush1.msra.mxu0 0.0
    %3247 = vmatprep.subr.mxu0 0.0
    %3248 = vmatpush1.msra.mxu0 0.0
    %3249 = vmatprep.subr.mxu0 0.0
    %3250 = vmatpush1.msra.mxu0 %v3221
    %3251 = vmatprep.subr.mxu0 0.0
    %3252 = vmatpush1.msra.mxu0 %v3220
    %3253 = vmatprep.subr.mxu0 0.0
    %3254 = vmatpush1.msra.mxu0 %v3219
    %3255 = vmatprep.subr.mxu0 0.0
    %3256 = vmatpush1.msra.mxu0 %v3218
    %3257 = vmatprep.subr.mxu0 0.0
    %3258 = vmatpush2.msra.mxu0 0.0
    %3259 = vmatprep.subr.mxu0 0.0
    %3260 = vmatpush2.msra.mxu0 0.0
    %3261 = vmatprep.subr.mxu0 0.0
    %3262 = vmatpush2.msra.mxu0 0.0
    %3263 = vmatprep.subr.mxu0 0.0
    %3264 = vmatpush2.msra.mxu0 0.0
    %3265 = vmatprep.subr.mxu0 0.0
    %3266 = vmatpush2.msra.mxu0 0.0
    %3267 = vmatprep.subr.mxu0 0.0
    %3268 = vmatpush2.msra.mxu0 0.0
    %3269 = vmatprep.subr.mxu0 0.0
    %3270 = vmatpush2.msra.mxu0 0.0
    %3271 = vmatprep.subr.mxu0 0.0
    %3272 = vmatpush2.msra.mxu0 0.0
    %3273 = vmatprep.subr.mxu0 0.0
    %3274 = vmatpush2.msra.mxu0 0.0
    %3275 = vmatprep.subr.mxu0 0.0
    %3276 = vmatpush2.msra.mxu0 0.0
    %3277 = vmatprep.subr.mxu0 0.0
    %3278 = vmatpush2.msra.mxu0 0.0
    %3279 = vmatprep.subr.mxu0 0.0
    %3280 = vmatpush2.msra.mxu0 0.0
    %3281 = vmatprep.subr.mxu0 0.0
    %3282 = vmatpush2.msra.mxu0 0.0
    %3283 = vmatprep.subr.mxu0 0.0
    %3284 = vmatpush2.msra.mxu0 0.0
    %3285 = vmatprep.subr.mxu0 0.0
    %3286 = vmatpush2.msra.mxu0 0.0
    %3287 = vmatprep.subr.mxu0 0.0
    %3288 = vmatpush2.msra.mxu0 0.0
    %3289 = vmatprep.mubr.f32.mxu0 0.0
    %3290 = vmatmul.mubr.f32.gmra.mxu0 %v3223
    %v3291 = vpop.f32.mrf.mxu0
    %v3292 = vadd.f32 0.0, %v3291
    %v3293 = vpop.f32.mrf.mxu0
    %3294 = vdwg.mxu0
    %v3295 = vadd.f32 %v3217, %v3292
    %v3296 = vld [vmem:[%s19 + $0xc0] sm:$0xff]
    %v3297 = vld [vmem:[%s19 + $0xc8] sm:$0xff]
    %v3298 = vld [vmem:[%s19 + $0xd0] sm:$0xff]
    %v3299 = vld [vmem:[%s19 + $0xd8] sm:$0xff]
    %v3300 = vrot.slane %v1577, 6
    %v3301 = vsel %vm201, %v3300, 0
    %3303 = vmatprep.subr.mxu0 0.0
    %3304 = vmatpush1.msra.mxu0 0.0
    %3305 = vmatprep.subr.mxu0 0.0
    %3306 = vmatpush1.msra.mxu0 0.0
    %3307 = vmatprep.subr.mxu0 0.0
    %3308 = vmatpush1.msra.mxu0 0.0
    %3309 = vmatprep.subr.mxu0 0.0
    %3310 = vmatpush1.msra.mxu0 0.0
    %3311 = vmatprep.subr.mxu0 0.0
    %3312 = vmatpush1.msra.mxu0 0.0
    %3313 = vmatprep.subr.mxu0 0.0
    %3314 = vmatpush1.msra.mxu0 0.0
    %3315 = vmatprep.subr.mxu0 0.0
    %3316 = vmatpush1.msra.mxu0 0.0
    %3317 = vmatprep.subr.mxu0 0.0
    %3318 = vmatpush1.msra.mxu0 0.0
    %3319 = vmatprep.subr.mxu0 0.0
    %3320 = vmatpush1.msra.mxu0 0.0
    %3321 = vmatprep.subr.mxu0 0.0
    %3322 = vmatpush1.msra.mxu0 0.0
    %3323 = vmatprep.subr.mxu0 0.0
    %3324 = vmatpush1.msra.mxu0 0.0
    %3325 = vmatprep.subr.mxu0 0.0
    %3326 = vmatpush1.msra.mxu0 0.0
    %3327 = vmatprep.subr.mxu0 0.0
    %3328 = vmatpush1.msra.mxu0 %v3299
    %3329 = vmatprep.subr.mxu0 0.0
    %3330 = vmatpush1.msra.mxu0 %v3298
    %3331 = vmatprep.subr.mxu0 0.0
    %3332 = vmatpush1.msra.mxu0 %v3297
    %3333 = vmatprep.subr.mxu0 0.0
    %3334 = vmatpush1.msra.mxu0 %v3296
    %3335 = vmatprep.subr.mxu0 0.0
    %3336 = vmatpush2.msra.mxu0 0.0
    %3337 = vmatprep.subr.mxu0 0.0
    %3338 = vmatpush2.msra.mxu0 0.0
    %3339 = vmatprep.subr.mxu0 0.0
    %3340 = vmatpush2.msra.mxu0 0.0
    %3341 = vmatprep.subr.mxu0 0.0
    %3342 = vmatpush2.msra.mxu0 0.0
    %3343 = vmatprep.subr.mxu0 0.0
    %3344 = vmatpush2.msra.mxu0 0.0
    %3345 = vmatprep.subr.mxu0 0.0
    %3346 = vmatpush2.msra.mxu0 0.0
    %3347 = vmatprep.subr.mxu0 0.0
    %3348 = vmatpush2.msra.mxu0 0.0
    %3349 = vmatprep.subr.mxu0 0.0
    %3350 = vmatpush2.msra.mxu0 0.0
    %3351 = vmatprep.subr.mxu0 0.0
    %3352 = vmatpush2.msra.mxu0 0.0
    %3353 = vmatprep.subr.mxu0 0.0
    %3354 = vmatpush2.msra.mxu0 0.0
    %3355 = vmatprep.subr.mxu0 0.0
    %3356 = vmatpush2.msra.mxu0 0.0
    %3357 = vmatprep.subr.mxu0 0.0
    %3358 = vmatpush2.msra.mxu0 0.0
    %3359 = vmatprep.subr.mxu0 0.0
    %3360 = vmatpush2.msra.mxu0 0.0
    %3361 = vmatprep.subr.mxu0 0.0
    %3362 = vmatpush2.msra.mxu0 0.0
    %3363 = vmatprep.subr.mxu0 0.0
    %3364 = vmatpush2.msra.mxu0 0.0
    %3365 = vmatprep.subr.mxu0 0.0
    %3366 = vmatpush2.msra.mxu0 0.0
    %3367 = vmatprep.mubr.f32.mxu0 0.0
    %3368 = vmatmul.mubr.f32.gmra.mxu0 %v3301
    %v3369 = vpop.f32.mrf.mxu0
    %v3370 = vadd.f32 0.0, %v3369
    %v3371 = vpop.f32.mrf.mxu0
    %3372 = vdwg.mxu0
    %v3373 = vadd.f32 %v3295, %v3370
    %v3374 = vld [vmem:[%s19 + $0xe0] sm:$0xff]
    %v3375 = vld [vmem:[%s19 + $0xe8] sm:$0xff]
    %v3376 = vld [vmem:[%s19 + $0xf0] sm:$0xff]
    %v3377 = vld [vmem:[%s19 + $0xf8] sm:$0xff]
    %v3378 = vrot.slane %v1577, 7
    %v3379 = vsel %vm201, %v3378, 0
    %3381 = vmatprep.subr.mxu0 0.0
    %3382 = vmatpush1.msra.mxu0 0.0
    %3383 = vmatprep.subr.mxu0 0.0
    %3384 = vmatpush1.msra.mxu0 0.0
    %3385 = vmatprep.subr.mxu0 0.0
    %3386 = vmatpush1.msra.mxu0 0.0
    %3387 = vmatprep.subr.mxu0 0.0
    %3388 = vmatpush1.msra.mxu0 0.0
    %3389 = vmatprep.subr.mxu0 0.0
    %3390 = vmatpush1.msra.mxu0 0.0
    %3391 = vmatprep.subr.mxu0 0.0
    %3392 = vmatpush1.msra.mxu0 0.0
    %3393 = vmatprep.subr.mxu0 0.0
    %3394 = vmatpush1.msra.mxu0 0.0
    %3395 = vmatprep.subr.mxu0 0.0
    %3396 = vmatpush1.msra.mxu0 0.0
    %3397 = vmatprep.subr.mxu0 0.0
    %3398 = vmatpush1.msra.mxu0 0.0
    %3399 = vmatprep.subr.mxu0 0.0
    %3400 = vmatpush1.msra.mxu0 0.0
    %3401 = vmatprep.subr.mxu0 0.0
    %3402 = vmatpush1.msra.mxu0 0.0
    %3403 = vmatprep.subr.mxu0 0.0
    %3404 = vmatpush1.msra.mxu0 0.0
    %3405 = vmatprep.subr.mxu0 0.0
    %3406 = vmatpush1.msra.mxu0 %v3377
    %3407 = vmatprep.subr.mxu0 0.0
    %3408 = vmatpush1.msra.mxu0 %v3376
    %3409 = vmatprep.subr.mxu0 0.0
    %3410 = vmatpush1.msra.mxu0 %v3375
    %3411 = vmatprep.subr.mxu0 0.0
    %3412 = vmatpush1.msra.mxu0 %v3374
    %3413 = vmatprep.subr.mxu0 0.0
    %3414 = vmatpush2.msra.mxu0 0.0
    %3415 = vmatprep.subr.mxu0 0.0
    %3416 = vmatpush2.msra.mxu0 0.0
    %3417 = vmatprep.subr.mxu0 0.0
    %3418 = vmatpush2.msra.mxu0 0.0
    %3419 = vmatprep.subr.mxu0 0.0
    %3420 = vmatpush2.msra.mxu0 0.0
    %3421 = vmatprep.subr.mxu0 0.0
    %3422 = vmatpush2.msra.mxu0 0.0
    %3423 = vmatprep.subr.mxu0 0.0
    %3424 = vmatpush2.msra.mxu0 0.0
    %3425 = vmatprep.subr.mxu0 0.0
    %3426 = vmatpush2.msra.mxu0 0.0
    %3427 = vmatprep.subr.mxu0 0.0
    %3428 = vmatpush2.msra.mxu0 0.0
    %3429 = vmatprep.subr.mxu0 0.0
    %3430 = vmatpush2.msra.mxu0 0.0
    %3431 = vmatprep.subr.mxu0 0.0
    %3432 = vmatpush2.msra.mxu0 0.0
    %3433 = vmatprep.subr.mxu0 0.0
    %3434 = vmatpush2.msra.mxu0 0.0
    %3435 = vmatprep.subr.mxu0 0.0
    %3436 = vmatpush2.msra.mxu0 0.0
    %3437 = vmatprep.subr.mxu0 0.0
    %3438 = vmatpush2.msra.mxu0 0.0
    %3439 = vmatprep.subr.mxu0 0.0
    %3440 = vmatpush2.msra.mxu0 0.0
    %3441 = vmatprep.subr.mxu0 0.0
    %3442 = vmatpush2.msra.mxu0 0.0
    %3443 = vmatprep.subr.mxu0 0.0
    %3444 = vmatpush2.msra.mxu0 0.0
    %3445 = vmatprep.mubr.f32.mxu0 0.0
    %3446 = vmatmul.mubr.f32.gmra.mxu0 %v3379
    %v3447 = vpop.f32.mrf.mxu0
    %v3448 = vadd.f32 0.0, %v3447
    %v3449 = vpop.f32.mrf.mxu0
    %3450 = vdwg.mxu0
    %v3451 = vadd.f32 %v3373, %v3448
    %v3452 = vld [vmem:[%s19 + $0x100] sm:$0xff]
    %v3453 = vld [vmem:[%s19 + $0x108] sm:$0xff]
    %v3454 = vld [vmem:[%s19 + $0x110] sm:$0xff]
    %v3455 = vld [vmem:[%s19 + $0x118] sm:$0xff]
    %v3457 = vsel %vm201, %v1578, 0
    %3459 = vmatprep.subr.mxu0 0.0
    %3460 = vmatpush1.msra.mxu0 0.0
    %3461 = vmatprep.subr.mxu0 0.0
    %3462 = vmatpush1.msra.mxu0 0.0
    %3463 = vmatprep.subr.mxu0 0.0
    %3464 = vmatpush1.msra.mxu0 0.0
    %3465 = vmatprep.subr.mxu0 0.0
    %3466 = vmatpush1.msra.mxu0 0.0
    %3467 = vmatprep.subr.mxu0 0.0
    %3468 = vmatpush1.msra.mxu0 0.0
    %3469 = vmatprep.subr.mxu0 0.0
    %3470 = vmatpush1.msra.mxu0 0.0
    %3471 = vmatprep.subr.mxu0 0.0
    %3472 = vmatpush1.msra.mxu0 0.0
    %3473 = vmatprep.subr.mxu0 0.0
    %3474 = vmatpush1.msra.mxu0 0.0
    %3475 = vmatprep.subr.mxu0 0.0
    %3476 = vmatpush1.msra.mxu0 0.0
    %3477 = vmatprep.subr.mxu0 0.0
    %3478 = vmatpush1.msra.mxu0 0.0
    %3479 = vmatprep.subr.mxu0 0.0
    %3480 = vmatpush1.msra.mxu0 0.0
    %3481 = vmatprep.subr.mxu0 0.0
    %3482 = vmatpush1.msra.mxu0 0.0
    %3483 = vmatprep.subr.mxu0 0.0
    %3484 = vmatpush1.msra.mxu0 %v3455
    %3485 = vmatprep.subr.mxu0 0.0
    %3486 = vmatpush1.msra.mxu0 %v3454
    %3487 = vmatprep.subr.mxu0 0.0
    %3488 = vmatpush1.msra.mxu0 %v3453
    %3489 = vmatprep.subr.mxu0 0.0
    %3490 = vmatpush1.msra.mxu0 %v3452
    %3491 = vmatprep.subr.mxu0 0.0
    %3492 = vmatpush2.msra.mxu0 0.0
    %3493 = vmatprep.subr.mxu0 0.0
    %3494 = vmatpush2.msra.mxu0 0.0
    %3495 = vmatprep.subr.mxu0 0.0
    %3496 = vmatpush2.msra.mxu0 0.0
    %3497 = vmatprep.subr.mxu0 0.0
    %3498 = vmatpush2.msra.mxu0 0.0
    %3499 = vmatprep.subr.mxu0 0.0
    %3500 = vmatpush2.msra.mxu0 0.0
    %3501 = vmatprep.subr.mxu0 0.0
    %3502 = vmatpush2.msra.mxu0 0.0
    %3503 = vmatprep.subr.mxu0 0.0
    %3504 = vmatpush2.msra.mxu0 0.0
    %3505 = vmatprep.subr.mxu0 0.0
    %3506 = vmatpush2.msra.mxu0 0.0
    %3507 = vmatprep.subr.mxu0 0.0
    %3508 = vmatpush2.msra.mxu0 0.0
    %3509 = vmatprep.subr.mxu0 0.0
    %3510 = vmatpush2.msra.mxu0 0.0
    %3511 = vmatprep.subr.mxu0 0.0
    %3512 = vmatpush2.msra.mxu0 0.0
    %3513 = vmatprep.subr.mxu0 0.0
    %3514 = vmatpush2.msra.mxu0 0.0
    %3515 = vmatprep.subr.mxu0 0.0
    %3516 = vmatpush2.msra.mxu0 0.0
    %3517 = vmatprep.subr.mxu0 0.0
    %3518 = vmatpush2.msra.mxu0 0.0
    %3519 = vmatprep.subr.mxu0 0.0
    %3520 = vmatpush2.msra.mxu0 0.0
    %3521 = vmatprep.subr.mxu0 0.0
    %3522 = vmatpush2.msra.mxu0 0.0
    %3523 = vmatprep.mubr.f32.mxu0 0.0
    %3524 = vmatmul.mubr.f32.gmra.mxu0 %v3457
    %v3525 = vpop.f32.mrf.mxu0
    %v3526 = vadd.f32 0.0, %v3525
    %v3527 = vpop.f32.mrf.mxu0
    %3528 = vdwg.mxu0
    %v3529 = vadd.f32 %v3451, %v3526
    %v3530 = vld [vmem:[%s19 + $0x120] sm:$0xff]
    %v3531 = vld [vmem:[%s19 + $0x128] sm:$0xff]
    %v3532 = vld [vmem:[%s19 + $0x130] sm:$0xff]
    %v3533 = vld [vmem:[%s19 + $0x138] sm:$0xff]
    %v3534 = vrot.slane %v1578, 1
    %v3535 = vsel %vm201, %v3534, 0
    %3537 = vmatprep.subr.mxu0 0.0
    %3538 = vmatpush1.msra.mxu0 0.0
    %3539 = vmatprep.subr.mxu0 0.0
    %3540 = vmatpush1.msra.mxu0 0.0
    %3541 = vmatprep.subr.mxu0 0.0
    %3542 = vmatpush1.msra.mxu0 0.0
    %3543 = vmatprep.subr.mxu0 0.0
    %3544 = vmatpush1.msra.mxu0 0.0
    %3545 = vmatprep.subr.mxu0 0.0
    %3546 = vmatpush1.msra.mxu0 0.0
    %3547 = vmatprep.subr.mxu0 0.0
    %3548 = vmatpush1.msra.mxu0 0.0
    %3549 = vmatprep.subr.mxu0 0.0
    %3550 = vmatpush1.msra.mxu0 0.0
    %3551 = vmatprep.subr.mxu0 0.0
    %3552 = vmatpush1.msra.mxu0 0.0
    %3553 = vmatprep.subr.mxu0 0.0
    %3554 = vmatpush1.msra.mxu0 0.0
    %3555 = vmatprep.subr.mxu0 0.0
    %3556 = vmatpush1.msra.mxu0 0.0
    %3557 = vmatprep.subr.mxu0 0.0
    %3558 = vmatpush1.msra.mxu0 0.0
    %3559 = vmatprep.subr.mxu0 0.0
    %3560 = vmatpush1.msra.mxu0 0.0
    %3561 = vmatprep.subr.mxu0 0.0
    %3562 = vmatpush1.msra.mxu0 %v3533
    %3563 = vmatprep.subr.mxu0 0.0
    %3564 = vmatpush1.msra.mxu0 %v3532
    %3565 = vmatprep.subr.mxu0 0.0
    %3566 = vmatpush1.msra.mxu0 %v3531
    %3567 = vmatprep.subr.mxu0 0.0
    %3568 = vmatpush1.msra.mxu0 %v3530
    %3569 = vmatprep.subr.mxu0 0.0
    %3570 = vmatpush2.msra.mxu0 0.0
    %3571 = vmatprep.subr.mxu0 0.0
    %3572 = vmatpush2.msra.mxu0 0.0
    %3573 = vmatprep.subr.mxu0 0.0
    %3574 = vmatpush2.msra.mxu0 0.0
    %3575 = vmatprep.subr.mxu0 0.0
    %3576 = vmatpush2.msra.mxu0 0.0
    %3577 = vmatprep.subr.mxu0 0.0
    %3578 = vmatpush2.msra.mxu0 0.0
    %3579 = vmatprep.subr.mxu0 0.0
    %3580 = vmatpush2.msra.mxu0 0.0
    %3581 = vmatprep.subr.mxu0 0.0
    %3582 = vmatpush2.msra.mxu0 0.0
    %3583 = vmatprep.subr.mxu0 0.0
    %3584 = vmatpush2.msra.mxu0 0.0
    %3585 = vmatprep.subr.mxu0 0.0
    %3586 = vmatpush2.msra.mxu0 0.0
    %3587 = vmatprep.subr.mxu0 0.0
    %3588 = vmatpush2.msra.mxu0 0.0
    %3589 = vmatprep.subr.mxu0 0.0
    %3590 = vmatpush2.msra.mxu0 0.0
    %3591 = vmatprep.subr.mxu0 0.0
    %3592 = vmatpush2.msra.mxu0 0.0
    %3593 = vmatprep.subr.mxu0 0.0
    %3594 = vmatpush2.msra.mxu0 0.0
    %3595 = vmatprep.subr.mxu0 0.0
    %3596 = vmatpush2.msra.mxu0 0.0
    %3597 = vmatprep.subr.mxu0 0.0
    %3598 = vmatpush2.msra.mxu0 0.0
    %3599 = vmatprep.subr.mxu0 0.0
    %3600 = vmatpush2.msra.mxu0 0.0
    %3601 = vmatprep.mubr.f32.mxu0 0.0
    %3602 = vmatmul.mubr.f32.gmra.mxu0 %v3535
    %v3603 = vpop.f32.mrf.mxu0
    %v3604 = vadd.f32 0.0, %v3603
    %v3605 = vpop.f32.mrf.mxu0
    %3606 = vdwg.mxu0
    %v3607 = vadd.f32 %v3529, %v3604
    %v3608 = vld [vmem:[%s19 + $0x140] sm:$0xff]
    %v3609 = vld [vmem:[%s19 + $0x148] sm:$0xff]
    %v3610 = vld [vmem:[%s19 + $0x150] sm:$0xff]
    %v3611 = vld [vmem:[%s19 + $0x158] sm:$0xff]
    %v3612 = vrot.slane %v1578, 2
    %v3613 = vsel %vm201, %v3612, 0
    %3615 = vmatprep.subr.mxu0 0.0
    %3616 = vmatpush1.msra.mxu0 0.0
    %3617 = vmatprep.subr.mxu0 0.0
    %3618 = vmatpush1.msra.mxu0 0.0
    %3619 = vmatprep.subr.mxu0 0.0
    %3620 = vmatpush1.msra.mxu0 0.0
    %3621 = vmatprep.subr.mxu0 0.0
    %3622 = vmatpush1.msra.mxu0 0.0
    %3623 = vmatprep.subr.mxu0 0.0
    %3624 = vmatpush1.msra.mxu0 0.0
    %3625 = vmatprep.subr.mxu0 0.0
    %3626 = vmatpush1.msra.mxu0 0.0
    %3627 = vmatprep.subr.mxu0 0.0
    %3628 = vmatpush1.msra.mxu0 0.0
    %3629 = vmatprep.subr.mxu0 0.0
    %3630 = vmatpush1.msra.mxu0 0.0
    %3631 = vmatprep.subr.mxu0 0.0
    %3632 = vmatpush1.msra.mxu0 0.0
    %3633 = vmatprep.subr.mxu0 0.0
    %3634 = vmatpush1.msra.mxu0 0.0
    %3635 = vmatprep.subr.mxu0 0.0
    %3636 = vmatpush1.msra.mxu0 0.0
    %3637 = vmatprep.subr.mxu0 0.0
    %3638 = vmatpush1.msra.mxu0 0.0
    %3639 = vmatprep.subr.mxu0 0.0
    %3640 = vmatpush1.msra.mxu0 %v3611
    %3641 = vmatprep.subr.mxu0 0.0
    %3642 = vmatpush1.msra.mxu0 %v3610
    %3643 = vmatprep.subr.mxu0 0.0
    %3644 = vmatpush1.msra.mxu0 %v3609
    %3645 = vmatprep.subr.mxu0 0.0
    %3646 = vmatpush1.msra.mxu0 %v3608
    %3647 = vmatprep.subr.mxu0 0.0
    %3648 = vmatpush2.msra.mxu0 0.0
    %3649 = vmatprep.subr.mxu0 0.0
    %3650 = vmatpush2.msra.mxu0 0.0
    %3651 = vmatprep.subr.mxu0 0.0
    %3652 = vmatpush2.msra.mxu0 0.0
    %3653 = vmatprep.subr.mxu0 0.0
    %3654 = vmatpush2.msra.mxu0 0.0
    %3655 = vmatprep.subr.mxu0 0.0
    %3656 = vmatpush2.msra.mxu0 0.0
    %3657 = vmatprep.subr.mxu0 0.0
    %3658 = vmatpush2.msra.mxu0 0.0
    %3659 = vmatprep.subr.mxu0 0.0
    %3660 = vmatpush2.msra.mxu0 0.0
    %3661 = vmatprep.subr.mxu0 0.0
    %3662 = vmatpush2.msra.mxu0 0.0
    %3663 = vmatprep.subr.mxu0 0.0
    %3664 = vmatpush2.msra.mxu0 0.0
    %3665 = vmatprep.subr.mxu0 0.0
    %3666 = vmatpush2.msra.mxu0 0.0
    %3667 = vmatprep.subr.mxu0 0.0
    %3668 = vmatpush2.msra.mxu0 0.0
    %3669 = vmatprep.subr.mxu0 0.0
    %3670 = vmatpush2.msra.mxu0 0.0
    %3671 = vmatprep.subr.mxu0 0.0
    %3672 = vmatpush2.msra.mxu0 0.0
    %3673 = vmatprep.subr.mxu0 0.0
    %3674 = vmatpush2.msra.mxu0 0.0
    %3675 = vmatprep.subr.mxu0 0.0
    %3676 = vmatpush2.msra.mxu0 0.0
    %3677 = vmatprep.subr.mxu0 0.0
    %3678 = vmatpush2.msra.mxu0 0.0
    %3679 = vmatprep.mubr.f32.mxu0 0.0
    %3680 = vmatmul.mubr.f32.gmra.mxu0 %v3613
    %v3681 = vpop.f32.mrf.mxu0
    %v3682 = vadd.f32 0.0, %v3681
    %v3683 = vpop.f32.mrf.mxu0
    %3684 = vdwg.mxu0
    %v3685 = vadd.f32 %v3607, %v3682
    %v3686 = vld [vmem:[%s19 + $0x160] sm:$0xff]
    %v3687 = vld [vmem:[%s19 + $0x168] sm:$0xff]
    %v3688 = vld [vmem:[%s19 + $0x170] sm:$0xff]
    %v3689 = vld [vmem:[%s19 + $0x178] sm:$0xff]
    %v3690 = vrot.slane %v1578, 3
    %v3691 = vsel %vm201, %v3690, 0
    %3693 = vmatprep.subr.mxu0 0.0
    %3694 = vmatpush1.msra.mxu0 0.0
    %3695 = vmatprep.subr.mxu0 0.0
    %3696 = vmatpush1.msra.mxu0 0.0
    %3697 = vmatprep.subr.mxu0 0.0
    %3698 = vmatpush1.msra.mxu0 0.0
    %3699 = vmatprep.subr.mxu0 0.0
    %3700 = vmatpush1.msra.mxu0 0.0
    %3701 = vmatprep.subr.mxu0 0.0
    %3702 = vmatpush1.msra.mxu0 0.0
    %3703 = vmatprep.subr.mxu0 0.0
    %3704 = vmatpush1.msra.mxu0 0.0
    %3705 = vmatprep.subr.mxu0 0.0
    %3706 = vmatpush1.msra.mxu0 0.0
    %3707 = vmatprep.subr.mxu0 0.0
    %3708 = vmatpush1.msra.mxu0 0.0
    %3709 = vmatprep.subr.mxu0 0.0
    %3710 = vmatpush1.msra.mxu0 0.0
    %3711 = vmatprep.subr.mxu0 0.0
    %3712 = vmatpush1.msra.mxu0 0.0
    %3713 = vmatprep.subr.mxu0 0.0
    %3714 = vmatpush1.msra.mxu0 0.0
    %3715 = vmatprep.subr.mxu0 0.0
    %3716 = vmatpush1.msra.mxu0 0.0
    %3717 = vmatprep.subr.mxu0 0.0
    %3718 = vmatpush1.msra.mxu0 %v3689
    %3719 = vmatprep.subr.mxu0 0.0
    %3720 = vmatpush1.msra.mxu0 %v3688
    %3721 = vmatprep.subr.mxu0 0.0
    %3722 = vmatpush1.msra.mxu0 %v3687
    %3723 = vmatprep.subr.mxu0 0.0
    %3724 = vmatpush1.msra.mxu0 %v3686
    %3725 = vmatprep.subr.mxu0 0.0
    %3726 = vmatpush2.msra.mxu0 0.0
    %3727 = vmatprep.subr.mxu0 0.0
    %3728 = vmatpush2.msra.mxu0 0.0
    %3729 = vmatprep.subr.mxu0 0.0
    %3730 = vmatpush2.msra.mxu0 0.0
    %3731 = vmatprep.subr.mxu0 0.0
    %3732 = vmatpush2.msra.mxu0 0.0
    %3733 = vmatprep.subr.mxu0 0.0
    %3734 = vmatpush2.msra.mxu0 0.0
    %3735 = vmatprep.subr.mxu0 0.0
    %3736 = vmatpush2.msra.mxu0 0.0
    %3737 = vmatprep.subr.mxu0 0.0
    %3738 = vmatpush2.msra.mxu0 0.0
    %3739 = vmatprep.subr.mxu0 0.0
    %3740 = vmatpush2.msra.mxu0 0.0
    %3741 = vmatprep.subr.mxu0 0.0
    %3742 = vmatpush2.msra.mxu0 0.0
    %3743 = vmatprep.subr.mxu0 0.0
    %3744 = vmatpush2.msra.mxu0 0.0
    %3745 = vmatprep.subr.mxu0 0.0
    %3746 = vmatpush2.msra.mxu0 0.0
    %3747 = vmatprep.subr.mxu0 0.0
    %3748 = vmatpush2.msra.mxu0 0.0
    %3749 = vmatprep.subr.mxu0 0.0
    %3750 = vmatpush2.msra.mxu0 0.0
    %3751 = vmatprep.subr.mxu0 0.0
    %3752 = vmatpush2.msra.mxu0 0.0
    %3753 = vmatprep.subr.mxu0 0.0
    %3754 = vmatpush2.msra.mxu0 0.0
    %3755 = vmatprep.subr.mxu0 0.0
    %3756 = vmatpush2.msra.mxu0 0.0
    %3757 = vmatprep.mubr.f32.mxu0 0.0
    %3758 = vmatmul.mubr.f32.gmra.mxu0 %v3691
    %v3759 = vpop.f32.mrf.mxu0
    %v3760 = vadd.f32 0.0, %v3759
    %v3761 = vpop.f32.mrf.mxu0
    %3762 = vdwg.mxu0
    %v3763 = vadd.f32 %v3685, %v3760
    %v3764 = vld [vmem:[%s19 + $0x180] sm:$0xff]
    %v3765 = vld [vmem:[%s19 + $0x188] sm:$0xff]
    %v3766 = vld [vmem:[%s19 + $0x190] sm:$0xff]
    %v3767 = vld [vmem:[%s19 + $0x198] sm:$0xff]
    %v3768 = vrot.slane %v1578, 4
    %v3769 = vsel %vm201, %v3768, 0
    %3771 = vmatprep.subr.mxu0 0.0
    %3772 = vmatpush1.msra.mxu0 0.0
    %3773 = vmatprep.subr.mxu0 0.0
    %3774 = vmatpush1.msra.mxu0 0.0
    %3775 = vmatprep.subr.mxu0 0.0
    %3776 = vmatpush1.msra.mxu0 0.0
    %3777 = vmatprep.subr.mxu0 0.0
    %3778 = vmatpush1.msra.mxu0 0.0
    %3779 = vmatprep.subr.mxu0 0.0
    %3780 = vmatpush1.msra.mxu0 0.0
    %3781 = vmatprep.subr.mxu0 0.0
    %3782 = vmatpush1.msra.mxu0 0.0
    %3783 = vmatprep.subr.mxu0 0.0
    %3784 = vmatpush1.msra.mxu0 0.0
    %3785 = vmatprep.subr.mxu0 0.0
    %3786 = vmatpush1.msra.mxu0 0.0
    %3787 = vmatprep.subr.mxu0 0.0
    %3788 = vmatpush1.msra.mxu0 0.0
    %3789 = vmatprep.subr.mxu0 0.0
    %3790 = vmatpush1.msra.mxu0 0.0
    %3791 = vmatprep.subr.mxu0 0.0
    %3792 = vmatpush1.msra.mxu0 0.0
    %3793 = vmatprep.subr.mxu0 0.0
    %3794 = vmatpush1.msra.mxu0 0.0
    %3795 = vmatprep.subr.mxu0 0.0
    %3796 = vmatpush1.msra.mxu0 %v3767
    %3797 = vmatprep.subr.mxu0 0.0
    %3798 = vmatpush1.msra.mxu0 %v3766
    %3799 = vmatprep.subr.mxu0 0.0
    %3800 = vmatpush1.msra.mxu0 %v3765
    %3801 = vmatprep.subr.mxu0 0.0
    %3802 = vmatpush1.msra.mxu0 %v3764
    %3803 = vmatprep.subr.mxu0 0.0
    %3804 = vmatpush2.msra.mxu0 0.0
    %3805 = vmatprep.subr.mxu0 0.0
    %3806 = vmatpush2.msra.mxu0 0.0
    %3807 = vmatprep.subr.mxu0 0.0
    %3808 = vmatpush2.msra.mxu0 0.0
    %3809 = vmatprep.subr.mxu0 0.0
    %3810 = vmatpush2.msra.mxu0 0.0
    %3811 = vmatprep.subr.mxu0 0.0
    %3812 = vmatpush2.msra.mxu0 0.0
    %3813 = vmatprep.subr.mxu0 0.0
    %3814 = vmatpush2.msra.mxu0 0.0
    %3815 = vmatprep.subr.mxu0 0.0
    %3816 = vmatpush2.msra.mxu0 0.0
    %3817 = vmatprep.subr.mxu0 0.0
    %3818 = vmatpush2.msra.mxu0 0.0
    %3819 = vmatprep.subr.mxu0 0.0
    %3820 = vmatpush2.msra.mxu0 0.0
    %3821 = vmatprep.subr.mxu0 0.0
    %3822 = vmatpush2.msra.mxu0 0.0
    %3823 = vmatprep.subr.mxu0 0.0
    %3824 = vmatpush2.msra.mxu0 0.0
    %3825 = vmatprep.subr.mxu0 0.0
    %3826 = vmatpush2.msra.mxu0 0.0
    %3827 = vmatprep.subr.mxu0 0.0
    %3828 = vmatpush2.msra.mxu0 0.0
    %3829 = vmatprep.subr.mxu0 0.0
    %3830 = vmatpush2.msra.mxu0 0.0
    %3831 = vmatprep.subr.mxu0 0.0
    %3832 = vmatpush2.msra.mxu0 0.0
    %3833 = vmatprep.subr.mxu0 0.0
    %3834 = vmatpush2.msra.mxu0 0.0
    %3835 = vmatprep.mubr.f32.mxu0 0.0
    %3836 = vmatmul.mubr.f32.gmra.mxu0 %v3769
    %v3837 = vpop.f32.mrf.mxu0
    %v3838 = vadd.f32 0.0, %v3837
    %v3839 = vpop.f32.mrf.mxu0
    %3840 = vdwg.mxu0
    %v3841 = vadd.f32 %v3763, %v3838
    %v3842 = vld [vmem:[%s19 + $0x1a0] sm:$0xff]
    %v3843 = vld [vmem:[%s19 + $0x1a8] sm:$0xff]
    %v3844 = vld [vmem:[%s19 + $0x1b0] sm:$0xff]
    %v3845 = vld [vmem:[%s19 + $0x1b8] sm:$0xff]
    %v3846 = vrot.slane %v1578, 5
    %v3847 = vsel %vm201, %v3846, 0
    %3849 = vmatprep.subr.mxu0 0.0
    %3850 = vmatpush1.msra.mxu0 0.0
    %3851 = vmatprep.subr.mxu0 0.0
    %3852 = vmatpush1.msra.mxu0 0.0
    %3853 = vmatprep.subr.mxu0 0.0
    %3854 = vmatpush1.msra.mxu0 0.0
    %3855 = vmatprep.subr.mxu0 0.0
    %3856 = vmatpush1.msra.mxu0 0.0
    %3857 = vmatprep.subr.mxu0 0.0
    %3858 = vmatpush1.msra.mxu0 0.0
    %3859 = vmatprep.subr.mxu0 0.0
    %3860 = vmatpush1.msra.mxu0 0.0
    %3861 = vmatprep.subr.mxu0 0.0
    %3862 = vmatpush1.msra.mxu0 0.0
    %3863 = vmatprep.subr.mxu0 0.0
    %3864 = vmatpush1.msra.mxu0 0.0
    %3865 = vmatprep.subr.mxu0 0.0
    %3866 = vmatpush1.msra.mxu0 0.0
    %3867 = vmatprep.subr.mxu0 0.0
    %3868 = vmatpush1.msra.mxu0 0.0
    %3869 = vmatprep.subr.mxu0 0.0
    %3870 = vmatpush1.msra.mxu0 0.0
    %3871 = vmatprep.subr.mxu0 0.0
    %3872 = vmatpush1.msra.mxu0 0.0
    %3873 = vmatprep.subr.mxu0 0.0
    %3874 = vmatpush1.msra.mxu0 %v3845
    %3875 = vmatprep.subr.mxu0 0.0
    %3876 = vmatpush1.msra.mxu0 %v3844
    %3877 = vmatprep.subr.mxu0 0.0
    %3878 = vmatpush1.msra.mxu0 %v3843
    %3879 = vmatprep.subr.mxu0 0.0
    %3880 = vmatpush1.msra.mxu0 %v3842
    %3881 = vmatprep.subr.mxu0 0.0
    %3882 = vmatpush2.msra.mxu0 0.0
    %3883 = vmatprep.subr.mxu0 0.0
    %3884 = vmatpush2.msra.mxu0 0.0
    %3885 = vmatprep.subr.mxu0 0.0
    %3886 = vmatpush2.msra.mxu0 0.0
    %3887 = vmatprep.subr.mxu0 0.0
    %3888 = vmatpush2.msra.mxu0 0.0
    %3889 = vmatprep.subr.mxu0 0.0
    %3890 = vmatpush2.msra.mxu0 0.0
    %3891 = vmatprep.subr.mxu0 0.0
    %3892 = vmatpush2.msra.mxu0 0.0
    %3893 = vmatprep.subr.mxu0 0.0
    %3894 = vmatpush2.msra.mxu0 0.0
    %3895 = vmatprep.subr.mxu0 0.0
    %3896 = vmatpush2.msra.mxu0 0.0
    %3897 = vmatprep.subr.mxu0 0.0
    %3898 = vmatpush2.msra.mxu0 0.0
    %3899 = vmatprep.subr.mxu0 0.0
    %3900 = vmatpush2.msra.mxu0 0.0
    %3901 = vmatprep.subr.mxu0 0.0
    %3902 = vmatpush2.msra.mxu0 0.0
    %3903 = vmatprep.subr.mxu0 0.0
    %3904 = vmatpush2.msra.mxu0 0.0
    %3905 = vmatprep.subr.mxu0 0.0
    %3906 = vmatpush2.msra.mxu0 0.0
    %3907 = vmatprep.subr.mxu0 0.0
    %3908 = vmatpush2.msra.mxu0 0.0
    %3909 = vmatprep.subr.mxu0 0.0
    %3910 = vmatpush2.msra.mxu0 0.0
    %3911 = vmatprep.subr.mxu0 0.0
    %3912 = vmatpush2.msra.mxu0 0.0
    %3913 = vmatprep.mubr.f32.mxu0 0.0
    %3914 = vmatmul.mubr.f32.gmra.mxu0 %v3847
    %v3915 = vpop.f32.mrf.mxu0
    %v3916 = vadd.f32 0.0, %v3915
    %v3917 = vpop.f32.mrf.mxu0
    %3918 = vdwg.mxu0
    %v3919 = vadd.f32 %v3841, %v3916
    %v3920 = vld [vmem:[%s19 + $0x1c0] sm:$0xff]
    %v3921 = vld [vmem:[%s19 + $0x1c8] sm:$0xff]
    %v3922 = vld [vmem:[%s19 + $0x1d0] sm:$0xff]
    %v3923 = vld [vmem:[%s19 + $0x1d8] sm:$0xff]
    %v3924 = vrot.slane %v1578, 6
    %v3925 = vsel %vm201, %v3924, 0
    %3927 = vmatprep.subr.mxu0 0.0
    %3928 = vmatpush1.msra.mxu0 0.0
    %3929 = vmatprep.subr.mxu0 0.0
    %3930 = vmatpush1.msra.mxu0 0.0
    %3931 = vmatprep.subr.mxu0 0.0
    %3932 = vmatpush1.msra.mxu0 0.0
    %3933 = vmatprep.subr.mxu0 0.0
    %3934 = vmatpush1.msra.mxu0 0.0
    %3935 = vmatprep.subr.mxu0 0.0
    %3936 = vmatpush1.msra.mxu0 0.0
    %3937 = vmatprep.subr.mxu0 0.0
    %3938 = vmatpush1.msra.mxu0 0.0
    %3939 = vmatprep.subr.mxu0 0.0
    %3940 = vmatpush1.msra.mxu0 0.0
    %3941 = vmatprep.subr.mxu0 0.0
    %3942 = vmatpush1.msra.mxu0 0.0
    %3943 = vmatprep.subr.mxu0 0.0
    %3944 = vmatpush1.msra.mxu0 0.0
    %3945 = vmatprep.subr.mxu0 0.0
    %3946 = vmatpush1.msra.mxu0 0.0
    %3947 = vmatprep.subr.mxu0 0.0
    %3948 = vmatpush1.msra.mxu0 0.0
    %3949 = vmatprep.subr.mxu0 0.0
    %3950 = vmatpush1.msra.mxu0 0.0
    %3951 = vmatprep.subr.mxu0 0.0
    %3952 = vmatpush1.msra.mxu0 %v3923
    %3953 = vmatprep.subr.mxu0 0.0
    %3954 = vmatpush1.msra.mxu0 %v3922
    %3955 = vmatprep.subr.mxu0 0.0
    %3956 = vmatpush1.msra.mxu0 %v3921
    %3957 = vmatprep.subr.mxu0 0.0
    %3958 = vmatpush1.msra.mxu0 %v3920
    %3959 = vmatprep.subr.mxu0 0.0
    %3960 = vmatpush2.msra.mxu0 0.0
    %3961 = vmatprep.subr.mxu0 0.0
    %3962 = vmatpush2.msra.mxu0 0.0
    %3963 = vmatprep.subr.mxu0 0.0
    %3964 = vmatpush2.msra.mxu0 0.0
    %3965 = vmatprep.subr.mxu0 0.0
    %3966 = vmatpush2.msra.mxu0 0.0
    %3967 = vmatprep.subr.mxu0 0.0
    %3968 = vmatpush2.msra.mxu0 0.0
    %3969 = vmatprep.subr.mxu0 0.0
    %3970 = vmatpush2.msra.mxu0 0.0
    %3971 = vmatprep.subr.mxu0 0.0
    %3972 = vmatpush2.msra.mxu0 0.0
    %3973 = vmatprep.subr.mxu0 0.0
    %3974 = vmatpush2.msra.mxu0 0.0
    %3975 = vmatprep.subr.mxu0 0.0
    %3976 = vmatpush2.msra.mxu0 0.0
    %3977 = vmatprep.subr.mxu0 0.0
    %3978 = vmatpush2.msra.mxu0 0.0
    %3979 = vmatprep.subr.mxu0 0.0
    %3980 = vmatpush2.msra.mxu0 0.0
    %3981 = vmatprep.subr.mxu0 0.0
    %3982 = vmatpush2.msra.mxu0 0.0
    %3983 = vmatprep.subr.mxu0 0.0
    %3984 = vmatpush2.msra.mxu0 0.0
    %3985 = vmatprep.subr.mxu0 0.0
    %3986 = vmatpush2.msra.mxu0 0.0
    %3987 = vmatprep.subr.mxu0 0.0
    %3988 = vmatpush2.msra.mxu0 0.0
    %3989 = vmatprep.subr.mxu0 0.0
    %3990 = vmatpush2.msra.mxu0 0.0
    %3991 = vmatprep.mubr.f32.mxu0 0.0
    %3992 = vmatmul.mubr.f32.gmra.mxu0 %v3925
    %v3993 = vpop.f32.mrf.mxu0
    %v3994 = vadd.f32 0.0, %v3993
    %v3995 = vpop.f32.mrf.mxu0
    %3996 = vdwg.mxu0
    %v3997 = vadd.f32 %v3919, %v3994
    %v3998 = vld [vmem:[%s19 + $0x1e0] sm:$0xff]
    %v3999 = vld [vmem:[%s19 + $0x1e8] sm:$0xff]
    %v4000 = vld [vmem:[%s19 + $0x1f0] sm:$0xff]
    %v4001 = vld [vmem:[%s19 + $0x1f8] sm:$0xff]
    %v4002 = vrot.slane %v1578, 7
    %v4003 = vsel %vm201, %v4002, 0
    %4005 = vmatprep.subr.mxu0 0.0
    %4006 = vmatpush1.msra.mxu0 0.0
    %4007 = vmatprep.subr.mxu0 0.0
    %4008 = vmatpush1.msra.mxu0 0.0
    %4009 = vmatprep.subr.mxu0 0.0
    %4010 = vmatpush1.msra.mxu0 0.0
    %4011 = vmatprep.subr.mxu0 0.0
    %4012 = vmatpush1.msra.mxu0 0.0
    %4013 = vmatprep.subr.mxu0 0.0
    %4014 = vmatpush1.msra.mxu0 0.0
    %4015 = vmatprep.subr.mxu0 0.0
    %4016 = vmatpush1.msra.mxu0 0.0
    %4017 = vmatprep.subr.mxu0 0.0
    %4018 = vmatpush1.msra.mxu0 0.0
    %4019 = vmatprep.subr.mxu0 0.0
    %4020 = vmatpush1.msra.mxu0 0.0
    %4021 = vmatprep.subr.mxu0 0.0
    %4022 = vmatpush1.msra.mxu0 0.0
    %4023 = vmatprep.subr.mxu0 0.0
    %4024 = vmatpush1.msra.mxu0 0.0
    %4025 = vmatprep.subr.mxu0 0.0
    %4026 = vmatpush1.msra.mxu0 0.0
    %4027 = vmatprep.subr.mxu0 0.0
    %4028 = vmatpush1.msra.mxu0 0.0
    %4029 = vmatprep.subr.mxu0 0.0
    %4030 = vmatpush1.msra.mxu0 %v4001
    %4031 = vmatprep.subr.mxu0 0.0
    %4032 = vmatpush1.msra.mxu0 %v4000
    %4033 = vmatprep.subr.mxu0 0.0
    %4034 = vmatpush1.msra.mxu0 %v3999
    %4035 = vmatprep.subr.mxu0 0.0
    %4036 = vmatpush1.msra.mxu0 %v3998
    %4037 = vmatprep.subr.mxu0 0.0
    %4038 = vmatpush2.msra.mxu0 0.0
    %4039 = vmatprep.subr.mxu0 0.0
    %4040 = vmatpush2.msra.mxu0 0.0
    %4041 = vmatprep.subr.mxu0 0.0
    %4042 = vmatpush2.msra.mxu0 0.0
    %4043 = vmatprep.subr.mxu0 0.0
    %4044 = vmatpush2.msra.mxu0 0.0
    %4045 = vmatprep.subr.mxu0 0.0
    %4046 = vmatpush2.msra.mxu0 0.0
    %4047 = vmatprep.subr.mxu0 0.0
    %4048 = vmatpush2.msra.mxu0 0.0
    %4049 = vmatprep.subr.mxu0 0.0
    %4050 = vmatpush2.msra.mxu0 0.0
    %4051 = vmatprep.subr.mxu0 0.0
    %4052 = vmatpush2.msra.mxu0 0.0
    %4053 = vmatprep.subr.mxu0 0.0
    %4054 = vmatpush2.msra.mxu0 0.0
    %4055 = vmatprep.subr.mxu0 0.0
    %4056 = vmatpush2.msra.mxu0 0.0
    %4057 = vmatprep.subr.mxu0 0.0
    %4058 = vmatpush2.msra.mxu0 0.0
    %4059 = vmatprep.subr.mxu0 0.0
    %4060 = vmatpush2.msra.mxu0 0.0
    %4061 = vmatprep.subr.mxu0 0.0
    %4062 = vmatpush2.msra.mxu0 0.0
    %4063 = vmatprep.subr.mxu0 0.0
    %4064 = vmatpush2.msra.mxu0 0.0
    %4065 = vmatprep.subr.mxu0 0.0
    %4066 = vmatpush2.msra.mxu0 0.0
    %4067 = vmatprep.subr.mxu0 0.0
    %4068 = vmatpush2.msra.mxu0 0.0
    %4069 = vmatprep.mubr.f32.mxu0 0.0
    %4070 = vmatmul.mubr.f32.gmra.mxu0 %v4003
    %v4071 = vpop.f32.mrf.mxu0
    %v4072 = vadd.f32 0.0, %v4071
    %v4073 = vpop.f32.mrf.mxu0
    %4074 = vdwg.mxu0
    %v4075 = vadd.f32 %v3997, %v4072
    %v4076 = vld [vmem:[%s19 + $0x200] sm:$0xff]
    %v4077 = vld [vmem:[%s19 + $0x208] sm:$0xff]
    %v4078 = vld [vmem:[%s19 + $0x210] sm:$0xff]
    %v4079 = vld [vmem:[%s19 + $0x218] sm:$0xff]
    %v4081 = vsel %vm201, %v2826, 0
    %4083 = vmatprep.subr.mxu0 0.0
    %4084 = vmatpush1.msra.mxu0 0.0
    %4085 = vmatprep.subr.mxu0 0.0
    %4086 = vmatpush1.msra.mxu0 0.0
    %4087 = vmatprep.subr.mxu0 0.0
    %4088 = vmatpush1.msra.mxu0 0.0
    %4089 = vmatprep.subr.mxu0 0.0
    %4090 = vmatpush1.msra.mxu0 0.0
    %4091 = vmatprep.subr.mxu0 0.0
    %4092 = vmatpush1.msra.mxu0 0.0
    %4093 = vmatprep.subr.mxu0 0.0
    %4094 = vmatpush1.msra.mxu0 0.0
    %4095 = vmatprep.subr.mxu0 0.0
    %4096 = vmatpush1.msra.mxu0 0.0
    %4097 = vmatprep.subr.mxu0 0.0
    %4098 = vmatpush1.msra.mxu0 0.0
    %4099 = vmatprep.subr.mxu0 0.0
    %4100 = vmatpush1.msra.mxu0 0.0
    %4101 = vmatprep.subr.mxu0 0.0
    %4102 = vmatpush1.msra.mxu0 0.0
    %4103 = vmatprep.subr.mxu0 0.0
    %4104 = vmatpush1.msra.mxu0 0.0
    %4105 = vmatprep.subr.mxu0 0.0
    %4106 = vmatpush1.msra.mxu0 0.0
    %4107 = vmatprep.subr.mxu0 0.0
    %4108 = vmatpush1.msra.mxu0 %v4079
    %4109 = vmatprep.subr.mxu0 0.0
    %4110 = vmatpush1.msra.mxu0 %v4078
    %4111 = vmatprep.subr.mxu0 0.0
    %4112 = vmatpush1.msra.mxu0 %v4077
    %4113 = vmatprep.subr.mxu0 0.0
    %4114 = vmatpush1.msra.mxu0 %v4076
    %4115 = vmatprep.subr.mxu0 0.0
    %4116 = vmatpush2.msra.mxu0 0.0
    %4117 = vmatprep.subr.mxu0 0.0
    %4118 = vmatpush2.msra.mxu0 0.0
    %4119 = vmatprep.subr.mxu0 0.0
    %4120 = vmatpush2.msra.mxu0 0.0
    %4121 = vmatprep.subr.mxu0 0.0
    %4122 = vmatpush2.msra.mxu0 0.0
    %4123 = vmatprep.subr.mxu0 0.0
    %4124 = vmatpush2.msra.mxu0 0.0
    %4125 = vmatprep.subr.mxu0 0.0
    %4126 = vmatpush2.msra.mxu0 0.0
    %4127 = vmatprep.subr.mxu0 0.0
    %4128 = vmatpush2.msra.mxu0 0.0
    %4129 = vmatprep.subr.mxu0 0.0
    %4130 = vmatpush2.msra.mxu0 0.0
    %4131 = vmatprep.subr.mxu0 0.0
    %4132 = vmatpush2.msra.mxu0 0.0
    %4133 = vmatprep.subr.mxu0 0.0
    %4134 = vmatpush2.msra.mxu0 0.0
    %4135 = vmatprep.subr.mxu0 0.0
    %4136 = vmatpush2.msra.mxu0 0.0
    %4137 = vmatprep.subr.mxu0 0.0
    %4138 = vmatpush2.msra.mxu0 0.0
    %4139 = vmatprep.subr.mxu0 0.0
    %4140 = vmatpush2.msra.mxu0 0.0
    %4141 = vmatprep.subr.mxu0 0.0
    %4142 = vmatpush2.msra.mxu0 0.0
    %4143 = vmatprep.subr.mxu0 0.0
    %4144 = vmatpush2.msra.mxu0 0.0
    %4145 = vmatprep.subr.mxu0 0.0
    %4146 = vmatpush2.msra.mxu0 0.0
    %4147 = vmatprep.mubr.f32.mxu0 0.0
    %4148 = vmatmul.mubr.f32.gmra.mxu0 %v4081
    %v4149 = vpop.f32.mrf.mxu0
    %v4150 = vadd.f32 0.0, %v4149
    %v4151 = vpop.f32.mrf.mxu0
    %4152 = vdwg.mxu0
    %v4153 = vadd.f32 %v4075, %v4150
    %v4154 = vld [vmem:[%s19 + $0x220] sm:$0xff]
    %v4155 = vld [vmem:[%s19 + $0x228] sm:$0xff]
    %v4156 = vld [vmem:[%s19 + $0x230] sm:$0xff]
    %v4157 = vld [vmem:[%s19 + $0x238] sm:$0xff]
    %v4158 = vrot.slane %v2826, 1
    %v4159 = vsel %vm201, %v4158, 0
    %4161 = vmatprep.subr.mxu0 0.0
    %4162 = vmatpush1.msra.mxu0 0.0
    %4163 = vmatprep.subr.mxu0 0.0
    %4164 = vmatpush1.msra.mxu0 0.0
    %4165 = vmatprep.subr.mxu0 0.0
    %4166 = vmatpush1.msra.mxu0 0.0
    %4167 = vmatprep.subr.mxu0 0.0
    %4168 = vmatpush1.msra.mxu0 0.0
    %4169 = vmatprep.subr.mxu0 0.0
    %4170 = vmatpush1.msra.mxu0 0.0
    %4171 = vmatprep.subr.mxu0 0.0
    %4172 = vmatpush1.msra.mxu0 0.0
    %4173 = vmatprep.subr.mxu0 0.0
    %4174 = vmatpush1.msra.mxu0 0.0
    %4175 = vmatprep.subr.mxu0 0.0
    %4176 = vmatpush1.msra.mxu0 0.0
    %4177 = vmatprep.subr.mxu0 0.0
    %4178 = vmatpush1.msra.mxu0 0.0
    %4179 = vmatprep.subr.mxu0 0.0
    %4180 = vmatpush1.msra.mxu0 0.0
    %4181 = vmatprep.subr.mxu0 0.0
    %4182 = vmatpush1.msra.mxu0 0.0
    %4183 = vmatprep.subr.mxu0 0.0
    %4184 = vmatpush1.msra.mxu0 0.0
    %4185 = vmatprep.subr.mxu0 0.0
    %4186 = vmatpush1.msra.mxu0 %v4157
    %4187 = vmatprep.subr.mxu0 0.0
    %4188 = vmatpush1.msra.mxu0 %v4156
    %4189 = vmatprep.subr.mxu0 0.0
    %4190 = vmatpush1.msra.mxu0 %v4155
    %4191 = vmatprep.subr.mxu0 0.0
    %4192 = vmatpush1.msra.mxu0 %v4154
    %4193 = vmatprep.subr.mxu0 0.0
    %4194 = vmatpush2.msra.mxu0 0.0
    %4195 = vmatprep.subr.mxu0 0.0
    %4196 = vmatpush2.msra.mxu0 0.0
    %4197 = vmatprep.subr.mxu0 0.0
    %4198 = vmatpush2.msra.mxu0 0.0
    %4199 = vmatprep.subr.mxu0 0.0
    %4200 = vmatpush2.msra.mxu0 0.0
    %4201 = vmatprep.subr.mxu0 0.0
    %4202 = vmatpush2.msra.mxu0 0.0
    %4203 = vmatprep.subr.mxu0 0.0
    %4204 = vmatpush2.msra.mxu0 0.0
    %4205 = vmatprep.subr.mxu0 0.0
    %4206 = vmatpush2.msra.mxu0 0.0
    %4207 = vmatprep.subr.mxu0 0.0
    %4208 = vmatpush2.msra.mxu0 0.0
    %4209 = vmatprep.subr.mxu0 0.0
    %4210 = vmatpush2.msra.mxu0 0.0
    %4211 = vmatprep.subr.mxu0 0.0
    %4212 = vmatpush2.msra.mxu0 0.0
    %4213 = vmatprep.subr.mxu0 0.0
    %4214 = vmatpush2.msra.mxu0 0.0
    %4215 = vmatprep.subr.mxu0 0.0
    %4216 = vmatpush2.msra.mxu0 0.0
    %4217 = vmatprep.subr.mxu0 0.0
    %4218 = vmatpush2.msra.mxu0 0.0
    %4219 = vmatprep.subr.mxu0 0.0
    %4220 = vmatpush2.msra.mxu0 0.0
    %4221 = vmatprep.subr.mxu0 0.0
    %4222 = vmatpush2.msra.mxu0 0.0
    %4223 = vmatprep.subr.mxu0 0.0
    %4224 = vmatpush2.msra.mxu0 0.0
    %4225 = vmatprep.mubr.f32.mxu0 0.0
    %4226 = vmatmul.mubr.f32.gmra.mxu0 %v4159
    %v4227 = vpop.f32.mrf.mxu0
    %v4228 = vadd.f32 0.0, %v4227
    %v4229 = vpop.f32.mrf.mxu0
    %4230 = vdwg.mxu0
    %v4231 = vadd.f32 %v4153, %v4228
    %v4232 = vld [vmem:[%s19 + $0x240] sm:$0xff]
    %v4233 = vld [vmem:[%s19 + $0x248] sm:$0xff]
    %v4234 = vld [vmem:[%s19 + $0x250] sm:$0xff]
    %v4235 = vld [vmem:[%s19 + $0x258] sm:$0xff]
    %v4236 = vrot.slane %v2826, 2
    %v4237 = vsel %vm201, %v4236, 0
    %4239 = vmatprep.subr.mxu0 0.0
    %4240 = vmatpush1.msra.mxu0 0.0
    %4241 = vmatprep.subr.mxu0 0.0
    %4242 = vmatpush1.msra.mxu0 0.0
    %4243 = vmatprep.subr.mxu0 0.0
    %4244 = vmatpush1.msra.mxu0 0.0
    %4245 = vmatprep.subr.mxu0 0.0
    %4246 = vmatpush1.msra.mxu0 0.0
    %4247 = vmatprep.subr.mxu0 0.0
    %4248 = vmatpush1.msra.mxu0 0.0
    %4249 = vmatprep.subr.mxu0 0.0
    %4250 = vmatpush1.msra.mxu0 0.0
    %4251 = vmatprep.subr.mxu0 0.0
    %4252 = vmatpush1.msra.mxu0 0.0
    %4253 = vmatprep.subr.mxu0 0.0
    %4254 = vmatpush1.msra.mxu0 0.0
    %4255 = vmatprep.subr.mxu0 0.0
    %4256 = vmatpush1.msra.mxu0 0.0
    %4257 = vmatprep.subr.mxu0 0.0
    %4258 = vmatpush1.msra.mxu0 0.0
    %4259 = vmatprep.subr.mxu0 0.0
    %4260 = vmatpush1.msra.mxu0 0.0
    %4261 = vmatprep.subr.mxu0 0.0
    %4262 = vmatpush1.msra.mxu0 0.0
    %4263 = vmatprep.subr.mxu0 0.0
    %4264 = vmatpush1.msra.mxu0 %v4235
    %4265 = vmatprep.subr.mxu0 0.0
    %4266 = vmatpush1.msra.mxu0 %v4234
    %4267 = vmatprep.subr.mxu0 0.0
    %4268 = vmatpush1.msra.mxu0 %v4233
    %4269 = vmatprep.subr.mxu0 0.0
    %4270 = vmatpush1.msra.mxu0 %v4232
    %4271 = vmatprep.subr.mxu0 0.0
    %4272 = vmatpush2.msra.mxu0 0.0
    %4273 = vmatprep.subr.mxu0 0.0
    %4274 = vmatpush2.msra.mxu0 0.0
    %4275 = vmatprep.subr.mxu0 0.0
    %4276 = vmatpush2.msra.mxu0 0.0
    %4277 = vmatprep.subr.mxu0 0.0
    %4278 = vmatpush2.msra.mxu0 0.0
    %4279 = vmatprep.subr.mxu0 0.0
    %4280 = vmatpush2.msra.mxu0 0.0
    %4281 = vmatprep.subr.mxu0 0.0
    %4282 = vmatpush2.msra.mxu0 0.0
    %4283 = vmatprep.subr.mxu0 0.0
    %4284 = vmatpush2.msra.mxu0 0.0
    %4285 = vmatprep.subr.mxu0 0.0
    %4286 = vmatpush2.msra.mxu0 0.0
    %4287 = vmatprep.subr.mxu0 0.0
    %4288 = vmatpush2.msra.mxu0 0.0
    %4289 = vmatprep.subr.mxu0 0.0
    %4290 = vmatpush2.msra.mxu0 0.0
    %4291 = vmatprep.subr.mxu0 0.0
    %4292 = vmatpush2.msra.mxu0 0.0
    %4293 = vmatprep.subr.mxu0 0.0
    %4294 = vmatpush2.msra.mxu0 0.0
    %4295 = vmatprep.subr.mxu0 0.0
    %4296 = vmatpush2.msra.mxu0 0.0
    %4297 = vmatprep.subr.mxu0 0.0
    %4298 = vmatpush2.msra.mxu0 0.0
    %4299 = vmatprep.subr.mxu0 0.0
    %4300 = vmatpush2.msra.mxu0 0.0
    %4301 = vmatprep.subr.mxu0 0.0
    %4302 = vmatpush2.msra.mxu0 0.0
    %4303 = vmatprep.mubr.f32.mxu0 0.0
    %4304 = vmatmul.mubr.f32.gmra.mxu0 %v4237
    %v4305 = vpop.f32.mrf.mxu0
    %v4306 = vadd.f32 0.0, %v4305
    %v4307 = vpop.f32.mrf.mxu0
    %4308 = vdwg.mxu0
    %v4309 = vadd.f32 %v4231, %v4306
    %v4310 = vld [vmem:[%s19 + $0x260] sm:$0xff]
    %v4311 = vld [vmem:[%s19 + $0x268] sm:$0xff]
    %v4312 = vld [vmem:[%s19 + $0x270] sm:$0xff]
    %v4313 = vld [vmem:[%s19 + $0x278] sm:$0xff]
    %v4314 = vrot.slane %v2826, 3
    %v4315 = vsel %vm201, %v4314, 0
    %4317 = vmatprep.subr.mxu0 0.0
    %4318 = vmatpush1.msra.mxu0 0.0
    %4319 = vmatprep.subr.mxu0 0.0
    %4320 = vmatpush1.msra.mxu0 0.0
    %4321 = vmatprep.subr.mxu0 0.0
    %4322 = vmatpush1.msra.mxu0 0.0
    %4323 = vmatprep.subr.mxu0 0.0
    %4324 = vmatpush1.msra.mxu0 0.0
    %4325 = vmatprep.subr.mxu0 0.0
    %4326 = vmatpush1.msra.mxu0 0.0
    %4327 = vmatprep.subr.mxu0 0.0
    %4328 = vmatpush1.msra.mxu0 0.0
    %4329 = vmatprep.subr.mxu0 0.0
    %4330 = vmatpush1.msra.mxu0 0.0
    %4331 = vmatprep.subr.mxu0 0.0
    %4332 = vmatpush1.msra.mxu0 0.0
    %4333 = vmatprep.subr.mxu0 0.0
    %4334 = vmatpush1.msra.mxu0 0.0
    %4335 = vmatprep.subr.mxu0 0.0
    %4336 = vmatpush1.msra.mxu0 0.0
    %4337 = vmatprep.subr.mxu0 0.0
    %4338 = vmatpush1.msra.mxu0 0.0
    %4339 = vmatprep.subr.mxu0 0.0
    %4340 = vmatpush1.msra.mxu0 0.0
    %4341 = vmatprep.subr.mxu0 0.0
    %4342 = vmatpush1.msra.mxu0 %v4313
    %4343 = vmatprep.subr.mxu0 0.0
    %4344 = vmatpush1.msra.mxu0 %v4312
    %4345 = vmatprep.subr.mxu0 0.0
    %4346 = vmatpush1.msra.mxu0 %v4311
    %4347 = vmatprep.subr.mxu0 0.0
    %4348 = vmatpush1.msra.mxu0 %v4310
    %4349 = vmatprep.subr.mxu0 0.0
    %4350 = vmatpush2.msra.mxu0 0.0
    %4351 = vmatprep.subr.mxu0 0.0
    %4352 = vmatpush2.msra.mxu0 0.0
    %4353 = vmatprep.subr.mxu0 0.0
    %4354 = vmatpush2.msra.mxu0 0.0
    %4355 = vmatprep.subr.mxu0 0.0
    %4356 = vmatpush2.msra.mxu0 0.0
    %4357 = vmatprep.subr.mxu0 0.0
    %4358 = vmatpush2.msra.mxu0 0.0
    %4359 = vmatprep.subr.mxu0 0.0
    %4360 = vmatpush2.msra.mxu0 0.0
    %4361 = vmatprep.subr.mxu0 0.0
    %4362 = vmatpush2.msra.mxu0 0.0
    %4363 = vmatprep.subr.mxu0 0.0
    %4364 = vmatpush2.msra.mxu0 0.0
    %4365 = vmatprep.subr.mxu0 0.0
    %4366 = vmatpush2.msra.mxu0 0.0
    %4367 = vmatprep.subr.mxu0 0.0
    %4368 = vmatpush2.msra.mxu0 0.0
    %4369 = vmatprep.subr.mxu0 0.0
    %4370 = vmatpush2.msra.mxu0 0.0
    %4371 = vmatprep.subr.mxu0 0.0
    %4372 = vmatpush2.msra.mxu0 0.0
    %4373 = vmatprep.subr.mxu0 0.0
    %4374 = vmatpush2.msra.mxu0 0.0
    %4375 = vmatprep.subr.mxu0 0.0
    %4376 = vmatpush2.msra.mxu0 0.0
    %4377 = vmatprep.subr.mxu0 0.0
    %4378 = vmatpush2.msra.mxu0 0.0
    %4379 = vmatprep.subr.mxu0 0.0
    %4380 = vmatpush2.msra.mxu0 0.0
    %4381 = vmatprep.mubr.f32.mxu0 0.0
    %4382 = vmatmul.mubr.f32.gmra.mxu0 %v4315
    %v4383 = vpop.f32.mrf.mxu0
    %v4384 = vadd.f32 0.0, %v4383
    %v4385 = vpop.f32.mrf.mxu0
    %4386 = vdwg.mxu0
    %v4387 = vadd.f32 %v4309, %v4384
    %v4388 = vmax.f32 %v4387, 0.0
    %v4389 = vld [vmem:[%s21] sm:$0xff]
    %v4390 = vld [vmem:[%s21 + $0x8] sm:$0xff]
    %v4391 = vld [vmem:[%s21 + $0x10] sm:$0xff]
    %v4392 = vld [vmem:[%s21 + $0x18] sm:$0xff]
    %v4393 = vld [vmem:[%s22] sm:$0x1]
    %v4395 = vsel %vm201, %v4388, 0
    %4397 = vmatprep.subr.mxu0 0.0
    %4398 = vmatpush1.msra.mxu0 0.0
    %4399 = vmatprep.subr.mxu0 0.0
    %4400 = vmatpush1.msra.mxu0 0.0
    %4401 = vmatprep.subr.mxu0 0.0
    %4402 = vmatpush1.msra.mxu0 0.0
    %4403 = vmatprep.subr.mxu0 0.0
    %4404 = vmatpush1.msra.mxu0 0.0
    %4405 = vmatprep.subr.mxu0 0.0
    %4406 = vmatpush1.msra.mxu0 0.0
    %4407 = vmatprep.subr.mxu0 0.0
    %4408 = vmatpush1.msra.mxu0 0.0
    %4409 = vmatprep.subr.mxu0 0.0
    %4410 = vmatpush1.msra.mxu0 0.0
    %4411 = vmatprep.subr.mxu0 0.0
    %4412 = vmatpush1.msra.mxu0 0.0
    %4413 = vmatprep.subr.mxu0 0.0
    %4414 = vmatpush1.msra.mxu0 0.0
    %4415 = vmatprep.subr.mxu0 0.0
    %4416 = vmatpush1.msra.mxu0 0.0
    %4417 = vmatprep.subr.mxu0 0.0
    %4418 = vmatpush1.msra.mxu0 0.0
    %4419 = vmatprep.subr.mxu0 0.0
    %4420 = vmatpush1.msra.mxu0 0.0
    %4421 = vmatprep.subr.mxu0 0.0
    %4422 = vmatpush1.msra.mxu0 %v4392
    %4423 = vmatprep.subr.mxu0 0.0
    %4424 = vmatpush1.msra.mxu0 %v4391
    %4425 = vmatprep.subr.mxu0 0.0
    %4426 = vmatpush1.msra.mxu0 %v4390
    %4427 = vmatprep.subr.mxu0 0.0
    %4428 = vmatpush1.msra.mxu0 %v4389
    %4429 = vmatprep.subr.mxu0 0.0
    %4430 = vmatpush2.msra.mxu0 0.0
    %4431 = vmatprep.subr.mxu0 0.0
    %4432 = vmatpush2.msra.mxu0 0.0
    %4433 = vmatprep.subr.mxu0 0.0
    %4434 = vmatpush2.msra.mxu0 0.0
    %4435 = vmatprep.subr.mxu0 0.0
    %4436 = vmatpush2.msra.mxu0 0.0
    %4437 = vmatprep.subr.mxu0 0.0
    %4438 = vmatpush2.msra.mxu0 0.0
    %4439 = vmatprep.subr.mxu0 0.0
    %4440 = vmatpush2.msra.mxu0 0.0
    %4441 = vmatprep.subr.mxu0 0.0
    %4442 = vmatpush2.msra.mxu0 0.0
    %4443 = vmatprep.subr.mxu0 0.0
    %4444 = vmatpush2.msra.mxu0 0.0
    %4445 = vmatprep.subr.mxu0 0.0
    %4446 = vmatpush2.msra.mxu0 0.0
    %4447 = vmatprep.subr.mxu0 0.0
    %4448 = vmatpush2.msra.mxu0 0.0
    %4449 = vmatprep.subr.mxu0 0.0
    %4450 = vmatpush2.msra.mxu0 0.0
    %4451 = vmatprep.subr.mxu0 0.0
    %4452 = vmatpush2.msra.mxu0 0.0
    %4453 = vmatprep.subr.mxu0 0.0
    %4454 = vmatpush2.msra.mxu0 0.0
    %4455 = vmatprep.subr.mxu0 0.0
    %4456 = vmatpush2.msra.mxu0 0.0
    %4457 = vmatprep.subr.mxu0 0.0
    %4458 = vmatpush2.msra.mxu0 0.0
    %4459 = vmatprep.subr.mxu0 0.0
    %4460 = vmatpush2.msra.mxu0 0.0
    %4461 = vmatprep.mubr.f32.mxu0 0.0
    %4462 = vmatmul.mubr.f32.gmra.mxu0 %v4395
    %v4463 = vpop.f32.mrf.mxu0
    %v4464 = vadd.f32 %v4393, %v4463
    %v4465 = vpop.f32.mrf.mxu0
    %4466 = vdwg.mxu0
    %vm4467 = vcmask 8192
    %4468 = vst.msk [vmem:[#allocation2] sm:$0x1] %vm4467, %v4464
    %v4469 = vld [vmem:[%s7] sm:$0xff]
    %v4470 = vld [vmem:[%s7 + $0x8] sm:$0xff]
    %v4471 = vld [vmem:[%s7 + $0x10] sm:$0xff]
    %v4472 = vld [vmem:[%s7 + $0x18] sm:$0xff]
    %v4473 = vld [vmem:[%s8] sm:$0x1]
    %v4474 = vld [vmem:[%s9] sm:$0xff]
    %v4475 = vld [vmem:[%s9 + $0x8] sm:$0xff]
    %v4476 = vld [vmem:[%s9 + $0x10] sm:$0xff]
    %v4477 = vld [vmem:[%s9 + $0x18] sm:$0xff]
    %v4478 = vld [vmem:[%s10] sm:$0x1]
    %v4479 = vsel %vm201, %v291, 0.0
    %4480 = vadd.xlane.f32.xlu0 %v4479
    %v4481 = vpop.xlane.xlu0 %4480
    %v4482 = vsel %vm201, %v296, 0.0
    %4483 = vadd.xlane.f32.xlu0 %v4482
    %v4484 = vpop.xlane.xlu0 %4483
    %v4485 = vmul.f32 %v4481, %v315
    %v4486 = vmul.f32 %v4484, %v315
    %v4487 = vsub.f32 %v291, %v4485
    %v4488 = vsub.f32 %v296, %v4486
    %v4489 = vmul.f32 %v4487, %v4487
    %v4490 = vmul.f32 %v4488, %v4488
    %v4491 = vsel %vm201, %v4489, 0.0
    %4492 = vadd.xlane.f32.xlu0 %v4491
    %v4493 = vpop.xlane.xlu0 %4492
    %v4494 = vsel %vm201, %v4490, 0.0
    %4495 = vadd.xlane.f32.xlu0 %v4494
    %v4496 = vpop.xlane.xlu0 %4495
    %v4497 = vmul.f32 %v4493, %v315
    %v4498 = vmul.f32 %v4496, %v315
    %v4499 = vadd.f32 %v4497, 1e-05
    %v4500 = vadd.f32 %v4498, 1e-05
    %v4501 = vrsqrt.pop %v4499
    %v4502 = vrsqrt.pop %v4500
    %v4503 = vmul.f32 %v4487, %v4501
    %v4504 = vmul.f32 %v4488, %v4502
    %v4506 = vlaneseq
    %v4507 = vshrl.u32 %v4506, 7
    %v4508 = vsub.s32 0, %v4507
    %v4509 = vrot.slane %v4473, %v4508
    %v4512 = vsel %vm201, %v4503, 0
    %v4515 = vsel %vm201, %v4504, 0
    %4517 = vmatprep.subr.mxu0 0.0
    %4518 = vmatpush1.msra.mxu0 0.0
    %4519 = vmatprep.subr.mxu0 0.0
    %4520 = vmatpush1.msra.mxu0 0.0
    %4521 = vmatprep.subr.mxu0 0.0
    %4522 = vmatpush1.msra.mxu0 0.0
    %4523 = vmatprep.subr.mxu0 0.0
    %4524 = vmatpush1.msra.mxu0 0.0
    %4525 = vmatprep.subr.mxu0 0.0
    %4526 = vmatpush1.msra.mxu0 0.0
    %4527 = vmatprep.subr.mxu0 0.0
    %4528 = vmatpush1.msra.mxu0 0.0
    %4529 = vmatprep.subr.mxu0 0.0
    %4530 = vmatpush1.msra.mxu0 0.0
    %4531 = vmatprep.subr.mxu0 0.0
    %4532 = vmatpush1.msra.mxu0 0.0
    %4533 = vmatprep.subr.mxu0 0.0
    %4534 = vmatpush1.msra.mxu0 0.0
    %4535 = vmatprep.subr.mxu0 0.0
    %4536 = vmatpush1.msra.mxu0 0.0
    %4537 = vmatprep.subr.mxu0 0.0
    %4538 = vmatpush1.msra.mxu0 0.0
    %4539 = vmatprep.subr.mxu0 0.0
    %4540 = vmatpush1.msra.mxu0 0.0
    %4541 = vmatprep.subr.mxu0 0.0
    %4542 = vmatpush1.msra.mxu0 %v4472
    %4543 = vmatprep.subr.mxu0 0.0
    %4544 = vmatpush1.msra.mxu0 %v4471
    %4545 = vmatprep.subr.mxu0 0.0
    %4546 = vmatpush1.msra.mxu0 %v4470
    %4547 = vmatprep.subr.mxu0 0.0
    %4548 = vmatpush1.msra.mxu0 %v4469
    %4549 = vmatprep.subr.mxu0 0.0
    %4550 = vmatpush2.msra.mxu0 0.0
    %4551 = vmatprep.subr.mxu0 0.0
    %4552 = vmatpush2.msra.mxu0 0.0
    %4553 = vmatprep.subr.mxu0 0.0
    %4554 = vmatpush2.msra.mxu0 0.0
    %4555 = vmatprep.subr.mxu0 0.0
    %4556 = vmatpush2.msra.mxu0 0.0
    %4557 = vmatprep.subr.mxu0 0.0
    %4558 = vmatpush2.msra.mxu0 0.0
    %4559 = vmatprep.subr.mxu0 0.0
    %4560 = vmatpush2.msra.mxu0 0.0
    %4561 = vmatprep.subr.mxu0 0.0
    %4562 = vmatpush2.msra.mxu0 0.0
    %4563 = vmatprep.subr.mxu0 0.0
    %4564 = vmatpush2.msra.mxu0 0.0
    %4565 = vmatprep.subr.mxu0 0.0
    %4566 = vmatpush2.msra.mxu0 0.0
    %4567 = vmatprep.subr.mxu0 0.0
    %4568 = vmatpush2.msra.mxu0 0.0
    %4569 = vmatprep.subr.mxu0 0.0
    %4570 = vmatpush2.msra.mxu0 0.0
    %4571 = vmatprep.subr.mxu0 0.0
    %4572 = vmatpush2.msra.mxu0 0.0
    %4573 = vmatprep.subr.mxu0 0.0
    %4574 = vmatpush2.msra.mxu0 0.0
    %4575 = vmatprep.subr.mxu0 0.0
    %4576 = vmatpush2.msra.mxu0 0.0
    %4577 = vmatprep.subr.mxu0 0.0
    %4578 = vmatpush2.msra.mxu0 0.0
    %4579 = vmatprep.subr.mxu0 0.0
    %4580 = vmatpush2.msra.mxu0 0.0
    %4581 = vmatprep.mubr.f32.mxu0 0.0
    %4582 = vmatmul.mubr.f32.gmra.mxu0 %v4512
    %v4583 = vpop.f32.mrf.mxu0
    %v4584 = vadd.f32 %v4509, %v4583
    %v4585 = vpop.f32.mrf.mxu0
    %4586 = vmatprep.mubr.f32.mxu0 0.0
    %4587 = vmatmul.mubr.f32.gmra.mxu0 %v4515
    %v4588 = vpop.f32.mrf.mxu0
    %v4589 = vadd.f32 %v4509, %v4588
    %v4590 = vpop.f32.mrf.mxu0
    %4591 = vdwg.mxu0
    %4594 = vrot.lane.b32.xlu0 %v4584, 96
    %v4595 = vpop.permute.xlu0 %4594
    %4596 = vrot.lane.b32.xlu0 %v4589, 96
    %v4597 = vpop.permute.xlu0 %4596
    %v4598 = vsel %vm440, %v4584, 0
    %v4600 = vsel %vm440, %v4589, 0
    %v4602 = vsel %vm440, %v4595, 0
    %v4604 = vsel %vm440, %v4597, 0
    %4606 = vmatprep.subr.mxu0 0.0
    %4607 = vmatpush1.xpose.msra.mxu0 0.0
    %4608 = vmatprep.subr.mxu0 0.0
    %4609 = vmatpush1.xpose.msra.mxu0 0.0
    %4610 = vmatprep.subr.mxu0 0.0
    %4611 = vmatpush1.xpose.msra.mxu0 0.0
    %4612 = vmatprep.subr.mxu0 0.0
    %4613 = vmatpush1.xpose.msra.mxu0 0.0
    %4614 = vmatprep.subr.mxu0 0.0
    %4615 = vmatpush1.xpose.msra.mxu0 0.0
    %4616 = vmatprep.subr.mxu0 0.0
    %4617 = vmatpush1.xpose.msra.mxu0 0.0
    %4618 = vmatprep.subr.mxu0 0.0
    %4619 = vmatpush1.xpose.msra.mxu0 0.0
    %4620 = vmatprep.subr.mxu0 0.0
    %4621 = vmatpush1.xpose.msra.mxu0 0.0
    %4622 = vmatprep.subr.mxu0 0.0
    %4623 = vmatpush1.xpose.msra.mxu0 0.0
    %4624 = vmatprep.subr.mxu0 0.0
    %4625 = vmatpush1.xpose.msra.mxu0 0.0
    %4626 = vmatprep.subr.mxu0 0.0
    %4627 = vmatpush1.xpose.msra.mxu0 0.0
    %4628 = vmatprep.subr.mxu0 0.0
    %4629 = vmatpush1.xpose.msra.mxu0 0.0
    %4630 = vmatprep.subr.mxu0 0.0
    %4631 = vmatpush1.xpose.msra.mxu0 0.0
    %4632 = vmatprep.subr.mxu0 0.0
    %4633 = vmatpush1.xpose.msra.mxu0 0.0
    %4634 = vmatprep.subr.mxu0 0.0
    %4635 = vmatpush1.xpose.msra.mxu0 %v4604
    %4636 = vmatprep.subr.mxu0 0.0
    %4637 = vmatpush1.xpose.msra.mxu0 %v4602
    %4638 = vmatprep.subr.mxu0 0.0
    %4639 = vmatpush2.xpose.msra.mxu0 0.0
    %4640 = vmatprep.subr.mxu0 0.0
    %4641 = vmatpush2.xpose.msra.mxu0 0.0
    %4642 = vmatprep.subr.mxu0 0.0
    %4643 = vmatpush2.xpose.msra.mxu0 0.0
    %4644 = vmatprep.subr.mxu0 0.0
    %4645 = vmatpush2.xpose.msra.mxu0 0.0
    %4646 = vmatprep.subr.mxu0 0.0
    %4647 = vmatpush2.xpose.msra.mxu0 0.0
    %4648 = vmatprep.subr.mxu0 0.0
    %4649 = vmatpush2.xpose.msra.mxu0 0.0
    %4650 = vmatprep.subr.mxu0 0.0
    %4651 = vmatpush2.xpose.msra.mxu0 0.0
    %4652 = vmatprep.subr.mxu0 0.0
    %4653 = vmatpush2.xpose.msra.mxu0 0.0
    %4654 = vmatprep.subr.mxu0 0.0
    %4655 = vmatpush2.xpose.msra.mxu0 0.0
    %4656 = vmatprep.subr.mxu0 0.0
    %4657 = vmatpush2.xpose.msra.mxu0 0.0
    %4658 = vmatprep.subr.mxu0 0.0
    %4659 = vmatpush2.xpose.msra.mxu0 0.0
    %4660 = vmatprep.subr.mxu0 0.0
    %4661 = vmatpush2.xpose.msra.mxu0 0.0
    %4662 = vmatprep.subr.mxu0 0.0
    %4663 = vmatpush2.xpose.msra.mxu0 0.0
    %4664 = vmatprep.subr.mxu0 0.0
    %4665 = vmatpush2.xpose.msra.mxu0 0.0
    %4666 = vmatprep.subr.mxu0 0.0
    %4667 = vmatpush2.xpose.msra.mxu0 0.0
    %4668 = vmatprep.subr.mxu0 0.0
    %4669 = vmatpush2.xpose.msra.mxu0 0.0
    %4670 = vmatprep.mubr.f32.mxu0 0.0
    %4671 = vmatmul.mubr.f32.gmra.mxu0 %v4598
    %v4672 = vpop.f32.mrf.mxu0
    %v4673 = vadd.f32 0.0, %v4672
    %v4674 = vpop.f32.mrf.mxu0
    %4675 = vmatprep.mubr.f32.mxu0 0.0
    %4676 = vmatmul.mubr.f32.gmra.mxu0 %v4600
    %v4677 = vpop.f32.mrf.mxu0
    %v4678 = vadd.f32 0.0, %v4677
    %v4679 = vpop.f32.mrf.mxu0
    %4680 = vdwg.mxu0
    %v4681 = vmul.f32 %v4673, %v432
    %v4682 = vmul.f32 %v4678, %v433
    %v4683 = vsel %vm88, %v4681, -inf
    %4684 = vmax.xlane.f32.xlu0 %v4683
    %v4685 = vpop.xlane.xlu0 %4684
    %v4686 = vsel %vm88, %v4682, -inf
    %4687 = vmax.xlane.f32.xlu0 %v4686
    %v4688 = vpop.xlane.xlu0 %4687
    %v4689 = vsub.f32 %v4681, %v4685
    %v4690 = vsub.f32 %v4682, %v4688
    %v4691 = vmul.f32 %v4689, 1.442695
    %v4692 = vpow.pop %v4691
    %v4693 = vmul.f32 %v4690, 1.442695
    %v4694 = vpow.pop %v4693
    %v4695 = vsel %vm88, %v4692, 0.0
    %4696 = vadd.xlane.f32.xlu0 %v4695
    %v4697 = vpop.xlane.xlu0 %4696
    %v4698 = vsel %vm88, %v4694, 0.0
    %4699 = vadd.xlane.f32.xlu0 %v4698
    %v4700 = vpop.xlane.xlu0 %4699
    %v4701 = vrcp.pop %v4697
    %v4702 = vmul.f32 %v4692, %v4701
    %v4703 = vrcp.pop %v4700
    %v4704 = vmul.f32 %v4694, %v4703
    %4705 = vrot.lane.b32.xlu0 %v4584, 64
    %v4706 = vpop.permute.xlu0 %4705
    %4707 = vrot.lane.b32.xlu0 %v4589, 64
    %v4708 = vpop.permute.xlu0 %4707
    %v4712 = vsel %vm88, %v4702, 0
    %v4715 = vsel %vm88, %v4704, 0
    %4717 = vmatprep.subr.mxu0 0.0
    %4718 = vmatpush1.msra.mxu0 0.0
    %4719 = vmatprep.subr.mxu0 0.0
    %4720 = vmatpush1.msra.mxu0 0.0
    %4721 = vmatprep.subr.mxu0 0.0
    %4722 = vmatpush1.msra.mxu0 0.0
    %4723 = vmatprep.subr.mxu0 0.0
    %4724 = vmatpush1.msra.mxu0 0.0
    %4725 = vmatprep.subr.mxu0 0.0
    %4726 = vmatpush1.msra.mxu0 0.0
    %4727 = vmatprep.subr.mxu0 0.0
    %4728 = vmatpush1.msra.mxu0 0.0
    %4729 = vmatprep.subr.mxu0 0.0
    %4730 = vmatpush1.msra.mxu0 0.0
    %4731 = vmatprep.subr.mxu0 0.0
    %4732 = vmatpush1.msra.mxu0 0.0
    %4733 = vmatprep.subr.mxu0 0.0
    %4734 = vmatpush1.msra.mxu0 0.0
    %4735 = vmatprep.subr.mxu0 0.0
    %4736 = vmatpush1.msra.mxu0 0.0
    %4737 = vmatprep.subr.mxu0 0.0
    %4738 = vmatpush1.msra.mxu0 0.0
    %4739 = vmatprep.subr.mxu0 0.0
    %4740 = vmatpush1.msra.mxu0 0.0
    %4741 = vmatprep.subr.mxu0 0.0
    %4742 = vmatpush1.msra.mxu0 0.0
    %4743 = vmatprep.subr.mxu0 0.0
    %4744 = vmatpush1.msra.mxu0 0.0
    %4745 = vmatprep.subr.mxu0 0.0
    %4746 = vmatpush1.msra.mxu0 %v4708
    %4747 = vmatprep.subr.mxu0 0.0
    %4748 = vmatpush1.msra.mxu0 %v4706
    %4749 = vmatprep.subr.mxu0 0.0
    %4750 = vmatpush2.msra.mxu0 0.0
    %4751 = vmatprep.subr.mxu0 0.0
    %4752 = vmatpush2.msra.mxu0 0.0
    %4753 = vmatprep.subr.mxu0 0.0
    %4754 = vmatpush2.msra.mxu0 0.0
    %4755 = vmatprep.subr.mxu0 0.0
    %4756 = vmatpush2.msra.mxu0 0.0
    %4757 = vmatprep.subr.mxu0 0.0
    %4758 = vmatpush2.msra.mxu0 0.0
    %4759 = vmatprep.subr.mxu0 0.0
    %4760 = vmatpush2.msra.mxu0 0.0
    %4761 = vmatprep.subr.mxu0 0.0
    %4762 = vmatpush2.msra.mxu0 0.0
    %4763 = vmatprep.subr.mxu0 0.0
    %4764 = vmatpush2.msra.mxu0 0.0
    %4765 = vmatprep.subr.mxu0 0.0
    %4766 = vmatpush2.msra.mxu0 0.0
    %4767 = vmatprep.subr.mxu0 0.0
    %4768 = vmatpush2.msra.mxu0 0.0
    %4769 = vmatprep.subr.mxu0 0.0
    %4770 = vmatpush2.msra.mxu0 0.0
    %4771 = vmatprep.subr.mxu0 0.0
    %4772 = vmatpush2.msra.mxu0 0.0
    %4773 = vmatprep.subr.mxu0 0.0
    %4774 = vmatpush2.msra.mxu0 0.0
    %4775 = vmatprep.subr.mxu0 0.0
    %4776 = vmatpush2.msra.mxu0 0.0
    %4777 = vmatprep.subr.mxu0 0.0
    %4778 = vmatpush2.msra.mxu0 0.0
    %4779 = vmatprep.subr.mxu0 0.0
    %4780 = vmatpush2.msra.mxu0 0.0
    %4781 = vmatprep.mubr.f32.mxu0 0.0
    %4782 = vmatmul.mubr.f32.gmra.mxu0 %v4712
    %v4783 = vpop.f32.mrf.mxu0
    %v4784 = vadd.f32 0.0, %v4783
    %v4785 = vpop.f32.mrf.mxu0
    %4786 = vmatprep.mubr.f32.mxu0 0.0
    %4787 = vmatmul.mubr.f32.gmra.mxu0 %v4715
    %v4788 = vpop.f32.mrf.mxu0
    %v4789 = vadd.f32 0.0, %v4788
    %v4790 = vpop.f32.mrf.mxu0
    %4791 = vdwg.mxu0
    %4792 = vrot.lane.b32.xlu0 %v4584, 120
    %v4793 = vpop.permute.xlu0 %4792
    %4794 = vrot.lane.b32.xlu0 %v4589, 120
    %v4795 = vpop.permute.xlu0 %4794
    %4796 = vrot.lane.b32.xlu0 %v4584, 88
    %v4797 = vpop.permute.xlu0 %4796
    %4798 = vrot.lane.b32.xlu0 %v4589, 88
    %v4799 = vpop.permute.xlu0 %4798
    %v4800 = vsel %vm440, %v4793, 0
    %v4802 = vsel %vm440, %v4795, 0
    %v4804 = vsel %vm440, %v4797, 0
    %v4806 = vsel %vm440, %v4799, 0
    %4808 = vmatprep.subr.mxu0 0.0
    %4809 = vmatpush1.xpose.msra.mxu0 0.0
    %4810 = vmatprep.subr.mxu0 0.0
    %4811 = vmatpush1.xpose.msra.mxu0 0.0
    %4812 = vmatprep.subr.mxu0 0.0
    %4813 = vmatpush1.xpose.msra.mxu0 0.0
    %4814 = vmatprep.subr.mxu0 0.0
    %4815 = vmatpush1.xpose.msra.mxu0 0.0
    %4816 = vmatprep.subr.mxu0 0.0
    %4817 = vmatpush1.xpose.msra.mxu0 0.0
    %4818 = vmatprep.subr.mxu0 0.0
    %4819 = vmatpush1.xpose.msra.mxu0 0.0
    %4820 = vmatprep.subr.mxu0 0.0
    %4821 = vmatpush1.xpose.msra.mxu0 0.0
    %4822 = vmatprep.subr.mxu0 0.0
    %4823 = vmatpush1.xpose.msra.mxu0 0.0
    %4824 = vmatprep.subr.mxu0 0.0
    %4825 = vmatpush1.xpose.msra.mxu0 0.0
    %4826 = vmatprep.subr.mxu0 0.0
    %4827 = vmatpush1.xpose.msra.mxu0 0.0
    %4828 = vmatprep.subr.mxu0 0.0
    %4829 = vmatpush1.xpose.msra.mxu0 0.0
    %4830 = vmatprep.subr.mxu0 0.0
    %4831 = vmatpush1.xpose.msra.mxu0 0.0
    %4832 = vmatprep.subr.mxu0 0.0
    %4833 = vmatpush1.xpose.msra.mxu0 0.0
    %4834 = vmatprep.subr.mxu0 0.0
    %4835 = vmatpush1.xpose.msra.mxu0 0.0
    %4836 = vmatprep.subr.mxu0 0.0
    %4837 = vmatpush1.xpose.msra.mxu0 %v4806
    %4838 = vmatprep.subr.mxu0 0.0
    %4839 = vmatpush1.xpose.msra.mxu0 %v4804
    %4840 = vmatprep.subr.mxu0 0.0
    %4841 = vmatpush2.xpose.msra.mxu0 0.0
    %4842 = vmatprep.subr.mxu0 0.0
    %4843 = vmatpush2.xpose.msra.mxu0 0.0
    %4844 = vmatprep.subr.mxu0 0.0
    %4845 = vmatpush2.xpose.msra.mxu0 0.0
    %4846 = vmatprep.subr.mxu0 0.0
    %4847 = vmatpush2.xpose.msra.mxu0 0.0
    %4848 = vmatprep.subr.mxu0 0.0
    %4849 = vmatpush2.xpose.msra.mxu0 0.0
    %4850 = vmatprep.subr.mxu0 0.0
    %4851 = vmatpush2.xpose.msra.mxu0 0.0
    %4852 = vmatprep.subr.mxu0 0.0
    %4853 = vmatpush2.xpose.msra.mxu0 0.0
    %4854 = vmatprep.subr.mxu0 0.0
    %4855 = vmatpush2.xpose.msra.mxu0 0.0
    %4856 = vmatprep.subr.mxu0 0.0
    %4857 = vmatpush2.xpose.msra.mxu0 0.0
    %4858 = vmatprep.subr.mxu0 0.0
    %4859 = vmatpush2.xpose.msra.mxu0 0.0
    %4860 = vmatprep.subr.mxu0 0.0
    %4861 = vmatpush2.xpose.msra.mxu0 0.0
    %4862 = vmatprep.subr.mxu0 0.0
    %4863 = vmatpush2.xpose.msra.mxu0 0.0
    %4864 = vmatprep.subr.mxu0 0.0
    %4865 = vmatpush2.xpose.msra.mxu0 0.0
    %4866 = vmatprep.subr.mxu0 0.0
    %4867 = vmatpush2.xpose.msra.mxu0 0.0
    %4868 = vmatprep.subr.mxu0 0.0
    %4869 = vmatpush2.xpose.msra.mxu0 0.0
    %4870 = vmatprep.subr.mxu0 0.0
    %4871 = vmatpush2.xpose.msra.mxu0 0.0
    %4872 = vmatprep.mubr.f32.mxu0 0.0
    %4873 = vmatmul.mubr.f32.gmra.mxu0 %v4800
    %v4874 = vpop.f32.mrf.mxu0
    %v4875 = vadd.f32 0.0, %v4874
    %v4876 = vpop.f32.mrf.mxu0
    %4877 = vmatprep.mubr.f32.mxu0 0.0
    %4878 = vmatmul.mubr.f32.gmra.mxu0 %v4802
    %v4879 = vpop.f32.mrf.mxu0
    %v4880 = vadd.f32 0.0, %v4879
    %v4881 = vpop.f32.mrf.mxu0
    %4882 = vdwg.mxu0
    %v4883 = vmul.f32 %v4875, %v432
    %v4884 = vmul.f32 %v4880, %v433
    %v4885 = vsel %vm88, %v4883, -inf
    %4886 = vmax.xlane.f32.xlu0 %v4885
    %v4887 = vpop.xlane.xlu0 %4886
    %v4888 = vsel %vm88, %v4884, -inf
    %4889 = vmax.xlane.f32.xlu0 %v4888
    %v4890 = vpop.xlane.xlu0 %4889
    %v4891 = vsub.f32 %v4883, %v4887
    %v4892 = vsub.f32 %v4884, %v4890
    %v4893 = vmul.f32 %v4891, 1.442695
    %v4894 = vpow.pop %v4893
    %v4895 = vmul.f32 %v4892, 1.442695
    %v4896 = vpow.pop %v4895
    %v4897 = vsel %vm88, %v4894, 0.0
    %4898 = vadd.xlane.f32.xlu0 %v4897
    %v4899 = vpop.xlane.xlu0 %4898
    %v4900 = vsel %vm88, %v4896, 0.0
    %4901 = vadd.xlane.f32.xlu0 %v4900
    %v4902 = vpop.xlane.xlu0 %4901
    %v4903 = vrcp.pop %v4899
    %v4904 = vmul.f32 %v4894, %v4903
    %v4905 = vrcp.pop %v4902
    %v4906 = vmul.f32 %v4896, %v4905
    %4907 = vrot.lane.b32.xlu0 %v4584, 56
    %v4908 = vpop.permute.xlu0 %4907
    %4909 = vrot.lane.b32.xlu0 %v4589, 56
    %v4910 = vpop.permute.xlu0 %4909
    %v4914 = vsel %vm88, %v4904, 0
    %v4917 = vsel %vm88, %v4906, 0
    %4919 = vmatprep.subr.mxu0 0.0
    %4920 = vmatpush1.msra.mxu0 0.0
    %4921 = vmatprep.subr.mxu0 0.0
    %4922 = vmatpush1.msra.mxu0 0.0
    %4923 = vmatprep.subr.mxu0 0.0
    %4924 = vmatpush1.msra.mxu0 0.0
    %4925 = vmatprep.subr.mxu0 0.0
    %4926 = vmatpush1.msra.mxu0 0.0
    %4927 = vmatprep.subr.mxu0 0.0
    %4928 = vmatpush1.msra.mxu0 0.0
    %4929 = vmatprep.subr.mxu0 0.0
    %4930 = vmatpush1.msra.mxu0 0.0
    %4931 = vmatprep.subr.mxu0 0.0
    %4932 = vmatpush1.msra.mxu0 0.0
    %4933 = vmatprep.subr.mxu0 0.0
    %4934 = vmatpush1.msra.mxu0 0.0
    %4935 = vmatprep.subr.mxu0 0.0
    %4936 = vmatpush1.msra.mxu0 0.0
    %4937 = vmatprep.subr.mxu0 0.0
    %4938 = vmatpush1.msra.mxu0 0.0
    %4939 = vmatprep.subr.mxu0 0.0
    %4940 = vmatpush1.msra.mxu0 0.0
    %4941 = vmatprep.subr.mxu0 0.0
    %4942 = vmatpush1.msra.mxu0 0.0
    %4943 = vmatprep.subr.mxu0 0.0
    %4944 = vmatpush1.msra.mxu0 0.0
    %4945 = vmatprep.subr.mxu0 0.0
    %4946 = vmatpush1.msra.mxu0 0.0
    %4947 = vmatprep.subr.mxu0 0.0
    %4948 = vmatpush1.msra.mxu0 %v4910
    %4949 = vmatprep.subr.mxu0 0.0
    %4950 = vmatpush1.msra.mxu0 %v4908
    %4951 = vmatprep.subr.mxu0 0.0
    %4952 = vmatpush2.msra.mxu0 0.0
    %4953 = vmatprep.subr.mxu0 0.0
    %4954 = vmatpush2.msra.mxu0 0.0
    %4955 = vmatprep.subr.mxu0 0.0
    %4956 = vmatpush2.msra.mxu0 0.0
    %4957 = vmatprep.subr.mxu0 0.0
    %4958 = vmatpush2.msra.mxu0 0.0
    %4959 = vmatprep.subr.mxu0 0.0
    %4960 = vmatpush2.msra.mxu0 0.0
    %4961 = vmatprep.subr.mxu0 0.0
    %4962 = vmatpush2.msra.mxu0 0.0
    %4963 = vmatprep.subr.mxu0 0.0
    %4964 = vmatpush2.msra.mxu0 0.0
    %4965 = vmatprep.subr.mxu0 0.0
    %4966 = vmatpush2.msra.mxu0 0.0
    %4967 = vmatprep.subr.mxu0 0.0
    %4968 = vmatpush2.msra.mxu0 0.0
    %4969 = vmatprep.subr.mxu0 0.0
    %4970 = vmatpush2.msra.mxu0 0.0
    %4971 = vmatprep.subr.mxu0 0.0
    %4972 = vmatpush2.msra.mxu0 0.0
    %4973 = vmatprep.subr.mxu0 0.0
    %4974 = vmatpush2.msra.mxu0 0.0
    %4975 = vmatprep.subr.mxu0 0.0
    %4976 = vmatpush2.msra.mxu0 0.0
    %4977 = vmatprep.subr.mxu0 0.0
    %4978 = vmatpush2.msra.mxu0 0.0
    %4979 = vmatprep.subr.mxu0 0.0
    %4980 = vmatpush2.msra.mxu0 0.0
    %4981 = vmatprep.subr.mxu0 0.0
    %4982 = vmatpush2.msra.mxu0 0.0
    %4983 = vmatprep.mubr.f32.mxu0 0.0
    %4984 = vmatmul.mubr.f32.gmra.mxu0 %v4914
    %v4985 = vpop.f32.mrf.mxu0
    %v4986 = vadd.f32 0.0, %v4985
    %v4987 = vpop.f32.mrf.mxu0
    %4988 = vmatprep.mubr.f32.mxu0 0.0
    %4989 = vmatmul.mubr.f32.gmra.mxu0 %v4917
    %v4990 = vpop.f32.mrf.mxu0
    %v4991 = vadd.f32 0.0, %v4990
    %v4992 = vpop.f32.mrf.mxu0
    %4993 = vdwg.mxu0
    %v4995 = vsel %vm440, %v4986, 0
    %v4998 = vsel %vm440, %v4991, 0
    %5000 = vmatprep.subr.mxu0 0.0
    %5001 = vmatpush1.msra.mxu0 0.0
    %5002 = vmatprep.subr.mxu0 0.0
    %5003 = vmatpush1.msra.mxu0 0.0
    %5004 = vmatprep.subr.mxu0 0.0
    %5005 = vmatpush1.msra.mxu0 0.0
    %5006 = vmatprep.subr.mxu0 0.0
    %5007 = vmatpush1.msra.mxu0 0.0
    %5008 = vmatprep.subr.mxu0 0.0
    %5009 = vmatpush1.msra.mxu0 0.0
    %5010 = vmatprep.subr.mxu0 0.0
    %5011 = vmatpush1.msra.mxu0 0.0
    %5012 = vmatprep.subr.mxu0 0.0
    %5013 = vmatpush1.msra.mxu0 0.0
    %5014 = vmatprep.subr.mxu0 0.0
    %5015 = vmatpush1.msra.mxu0 0.0
    %5016 = vmatprep.subr.mxu0 0.0
    %5017 = vmatpush1.msra.mxu0 0.0
    %5018 = vmatprep.subr.mxu0 0.0
    %5019 = vmatpush1.msra.mxu0 0.0
    %5020 = vmatprep.subr.mxu0 0.0
    %5021 = vmatpush1.msra.mxu0 0.0
    %5022 = vmatprep.subr.mxu0 0.0
    %5023 = vmatpush1.msra.mxu0 0.0
    %5024 = vmatprep.subr.mxu0 0.0
    %5025 = vmatpush1.msra.mxu0 0.0
    %5026 = vmatprep.subr.mxu0 0.0
    %5027 = vmatpush1.msra.mxu0 0.0
    %5028 = vmatprep.subr.mxu0 0.0
    %5029 = vmatpush1.msra.mxu0 0.0
    %5030 = vmatprep.subr.mxu0 0.0
    %5031 = vmatpush1.msra.mxu0 %v4475
    %5032 = vmatprep.subr.mxu0 0.0
    %5033 = vmatpush2.msra.mxu0 0.0
    %5034 = vmatprep.subr.mxu0 0.0
    %5035 = vmatpush2.msra.mxu0 0.0
    %5036 = vmatprep.subr.mxu0 0.0
    %5037 = vmatpush2.msra.mxu0 0.0
    %5038 = vmatprep.subr.mxu0 0.0
    %5039 = vmatpush2.msra.mxu0 0.0
    %5040 = vmatprep.subr.mxu0 0.0
    %5041 = vmatpush2.msra.mxu0 0.0
    %5042 = vmatprep.subr.mxu0 0.0
    %5043 = vmatpush2.msra.mxu0 0.0
    %5044 = vmatprep.subr.mxu0 0.0
    %5045 = vmatpush2.msra.mxu0 0.0
    %5046 = vmatprep.subr.mxu0 0.0
    %5047 = vmatpush2.msra.mxu0 0.0
    %5048 = vmatprep.subr.mxu0 0.0
    %5049 = vmatpush2.msra.mxu0 0.0
    %5050 = vmatprep.subr.mxu0 0.0
    %5051 = vmatpush2.msra.mxu0 0.0
    %5052 = vmatprep.subr.mxu0 0.0
    %5053 = vmatpush2.msra.mxu0 0.0
    %5054 = vmatprep.subr.mxu0 0.0
    %5055 = vmatpush2.msra.mxu0 0.0
    %5056 = vmatprep.subr.mxu0 0.0
    %5057 = vmatpush2.msra.mxu0 0.0
    %5058 = vmatprep.subr.mxu0 0.0
    %5059 = vmatpush2.msra.mxu0 0.0
    %5060 = vmatprep.subr.mxu0 0.0
    %5061 = vmatpush2.msra.mxu0 0.0
    %5062 = vmatprep.subr.mxu0 0.0
    %5063 = vmatpush2.msra.mxu0 0.0
    %5064 = vmatprep.mubr.f32.mxu0 0.0
    %5065 = vmatmul.mubr.f32.gmra.mxu0 %v4995
    %v5066 = vpop.f32.mrf.mxu0
    %v5067 = vadd.f32 0.0, %v5066
    %v5068 = vpop.f32.mrf.mxu0
    %5069 = vmatprep.mubr.f32.mxu0 0.0
    %5070 = vmatmul.mubr.f32.gmra.mxu0 %v4998
    %v5071 = vpop.f32.mrf.mxu0
    %v5072 = vadd.f32 0.0, %v5071
    %v5073 = vpop.f32.mrf.mxu0
    %5074 = vdwg.mxu0
    %v5076 = vsel %vm440, %v4784, 0
    %v5079 = vsel %vm440, %v4789, 0
    %5081 = vmatprep.subr.mxu0 0.0
    %5082 = vmatpush1.msra.mxu0 0.0
    %5083 = vmatprep.subr.mxu0 0.0
    %5084 = vmatpush1.msra.mxu0 0.0
    %5085 = vmatprep.subr.mxu0 0.0
    %5086 = vmatpush1.msra.mxu0 0.0
    %5087 = vmatprep.subr.mxu0 0.0
    %5088 = vmatpush1.msra.mxu0 0.0
    %5089 = vmatprep.subr.mxu0 0.0
    %5090 = vmatpush1.msra.mxu0 0.0
    %5091 = vmatprep.subr.mxu0 0.0
    %5092 = vmatpush1.msra.mxu0 0.0
    %5093 = vmatprep.subr.mxu0 0.0
    %5094 = vmatpush1.msra.mxu0 0.0
    %5095 = vmatprep.subr.mxu0 0.0
    %5096 = vmatpush1.msra.mxu0 0.0
    %5097 = vmatprep.subr.mxu0 0.0
    %5098 = vmatpush1.msra.mxu0 0.0
    %5099 = vmatprep.subr.mxu0 0.0
    %5100 = vmatpush1.msra.mxu0 0.0
    %5101 = vmatprep.subr.mxu0 0.0
    %5102 = vmatpush1.msra.mxu0 0.0
    %5103 = vmatprep.subr.mxu0 0.0
    %5104 = vmatpush1.msra.mxu0 0.0
    %5105 = vmatprep.subr.mxu0 0.0
    %5106 = vmatpush1.msra.mxu0 0.0
    %5107 = vmatprep.subr.mxu0 0.0
    %5108 = vmatpush1.msra.mxu0 0.0
    %5109 = vmatprep.subr.mxu0 0.0
    %5110 = vmatpush1.msra.mxu0 0.0
    %5111 = vmatprep.subr.mxu0 0.0
    %5112 = vmatpush1.msra.mxu0 %v4474
    %5113 = vmatprep.subr.mxu0 0.0
    %5114 = vmatpush2.msra.mxu0 0.0
    %5115 = vmatprep.subr.mxu0 0.0
    %5116 = vmatpush2.msra.mxu0 0.0
    %5117 = vmatprep.subr.mxu0 0.0
    %5118 = vmatpush2.msra.mxu0 0.0
    %5119 = vmatprep.subr.mxu0 0.0
    %5120 = vmatpush2.msra.mxu0 0.0
    %5121 = vmatprep.subr.mxu0 0.0
    %5122 = vmatpush2.msra.mxu0 0.0
    %5123 = vmatprep.subr.mxu0 0.0
    %5124 = vmatpush2.msra.mxu0 0.0
    %5125 = vmatprep.subr.mxu0 0.0
    %5126 = vmatpush2.msra.mxu0 0.0
    %5127 = vmatprep.subr.mxu0 0.0
    %5128 = vmatpush2.msra.mxu0 0.0
    %5129 = vmatprep.subr.mxu0 0.0
    %5130 = vmatpush2.msra.mxu0 0.0
    %5131 = vmatprep.subr.mxu0 0.0
    %5132 = vmatpush2.msra.mxu0 0.0
    %5133 = vmatprep.subr.mxu0 0.0
    %5134 = vmatpush2.msra.mxu0 0.0
    %5135 = vmatprep.subr.mxu0 0.0
    %5136 = vmatpush2.msra.mxu0 0.0
    %5137 = vmatprep.subr.mxu0 0.0
    %5138 = vmatpush2.msra.mxu0 0.0
    %5139 = vmatprep.subr.mxu0 0.0
    %5140 = vmatpush2.msra.mxu0 0.0
    %5141 = vmatprep.subr.mxu0 0.0
    %5142 = vmatpush2.msra.mxu0 0.0
    %5143 = vmatprep.subr.mxu0 0.0
    %5144 = vmatpush2.msra.mxu0 0.0
    %5145 = vmatprep.mubr.f32.mxu0 0.0
    %5146 = vmatmul.mubr.f32.gmra.mxu0 %v5076
    %v5147 = vpop.f32.mrf.mxu0
    %v5148 = vadd.f32 %v5067, %v5147
    %v5149 = vpop.f32.mrf.mxu0
    %5150 = vmatprep.mubr.f32.mxu0 0.0
    %5151 = vmatmul.mubr.f32.gmra.mxu0 %v5079
    %v5152 = vpop.f32.mrf.mxu0
    %v5153 = vadd.f32 %v5072, %v5152
    %v5154 = vpop.f32.mrf.mxu0
    %5155 = vdwg.mxu0
    %5156 = vrot.lane.b32.xlu0 %v4584, 112
    %v5157 = vpop.permute.xlu0 %5156
    %5158 = vrot.lane.b32.xlu0 %v4589, 112
    %v5159 = vpop.permute.xlu0 %5158
    %5160 = vrot.lane.b32.xlu0 %v4584, 80
    %v5161 = vpop.permute.xlu0 %5160
    %5162 = vrot.lane.b32.xlu0 %v4589, 80
    %v5163 = vpop.permute.xlu0 %5162
    %v5164 = vsel %vm440, %v5157, 0
    %v5166 = vsel %vm440, %v5159, 0
    %v5168 = vsel %vm440, %v5161, 0
    %v5170 = vsel %vm440, %v5163, 0
    %5172 = vmatprep.subr.mxu0 0.0
    %5173 = vmatpush1.xpose.msra.mxu0 0.0
    %5174 = vmatprep.subr.mxu0 0.0
    %5175 = vmatpush1.xpose.msra.mxu0 0.0
    %5176 = vmatprep.subr.mxu0 0.0
    %5177 = vmatpush1.xpose.msra.mxu0 0.0
    %5178 = vmatprep.subr.mxu0 0.0
    %5179 = vmatpush1.xpose.msra.mxu0 0.0
    %5180 = vmatprep.subr.mxu0 0.0
    %5181 = vmatpush1.xpose.msra.mxu0 0.0
    %5182 = vmatprep.subr.mxu0 0.0
    %5183 = vmatpush1.xpose.msra.mxu0 0.0
    %5184 = vmatprep.subr.mxu0 0.0
    %5185 = vmatpush1.xpose.msra.mxu0 0.0
    %5186 = vmatprep.subr.mxu0 0.0
    %5187 = vmatpush1.xpose.msra.mxu0 0.0
    %5188 = vmatprep.subr.mxu0 0.0
    %5189 = vmatpush1.xpose.msra.mxu0 0.0
    %5190 = vmatprep.subr.mxu0 0.0
    %5191 = vmatpush1.xpose.msra.mxu0 0.0
    %5192 = vmatprep.subr.mxu0 0.0
    %5193 = vmatpush1.xpose.msra.mxu0 0.0
    %5194 = vmatprep.subr.mxu0 0.0
    %5195 = vmatpush1.xpose.msra.mxu0 0.0
    %5196 = vmatprep.subr.mxu0 0.0
    %5197 = vmatpush1.xpose.msra.mxu0 0.0
    %5198 = vmatprep.subr.mxu0 0.0
    %5199 = vmatpush1.xpose.msra.mxu0 0.0
    %5200 = vmatprep.subr.mxu0 0.0
    %5201 = vmatpush1.xpose.msra.mxu0 %v5170
    %5202 = vmatprep.subr.mxu0 0.0
    %5203 = vmatpush1.xpose.msra.mxu0 %v5168
    %5204 = vmatprep.subr.mxu0 0.0
    %5205 = vmatpush2.xpose.msra.mxu0 0.0
    %5206 = vmatprep.subr.mxu0 0.0
    %5207 = vmatpush2.xpose.msra.mxu0 0.0
    %5208 = vmatprep.subr.mxu0 0.0
    %5209 = vmatpush2.xpose.msra.mxu0 0.0
    %5210 = vmatprep.subr.mxu0 0.0
    %5211 = vmatpush2.xpose.msra.mxu0 0.0
    %5212 = vmatprep.subr.mxu0 0.0
    %5213 = vmatpush2.xpose.msra.mxu0 0.0
    %5214 = vmatprep.subr.mxu0 0.0
    %5215 = vmatpush2.xpose.msra.mxu0 0.0
    %5216 = vmatprep.subr.mxu0 0.0
    %5217 = vmatpush2.xpose.msra.mxu0 0.0
    %5218 = vmatprep.subr.mxu0 0.0
    %5219 = vmatpush2.xpose.msra.mxu0 0.0
    %5220 = vmatprep.subr.mxu0 0.0
    %5221 = vmatpush2.xpose.msra.mxu0 0.0
    %5222 = vmatprep.subr.mxu0 0.0
    %5223 = vmatpush2.xpose.msra.mxu0 0.0
    %5224 = vmatprep.subr.mxu0 0.0
    %5225 = vmatpush2.xpose.msra.mxu0 0.0
    %5226 = vmatprep.subr.mxu0 0.0
    %5227 = vmatpush2.xpose.msra.mxu0 0.0
    %5228 = vmatprep.subr.mxu0 0.0
    %5229 = vmatpush2.xpose.msra.mxu0 0.0
    %5230 = vmatprep.subr.mxu0 0.0
    %5231 = vmatpush2.xpose.msra.mxu0 0.0
    %5232 = vmatprep.subr.mxu0 0.0
    %5233 = vmatpush2.xpose.msra.mxu0 0.0
    %5234 = vmatprep.subr.mxu0 0.0
    %5235 = vmatpush2.xpose.msra.mxu0 0.0
    %5236 = vmatprep.mubr.f32.mxu0 0.0
    %5237 = vmatmul.mubr.f32.gmra.mxu0 %v5164
    %v5238 = vpop.f32.mrf.mxu0
    %v5239 = vadd.f32 0.0, %v5238
    %v5240 = vpop.f32.mrf.mxu0
    %5241 = vmatprep.mubr.f32.mxu0 0.0
    %5242 = vmatmul.mubr.f32.gmra.mxu0 %v5166
    %v5243 = vpop.f32.mrf.mxu0
    %v5244 = vadd.f32 0.0, %v5243
    %v5245 = vpop.f32.mrf.mxu0
    %5246 = vdwg.mxu0
    %v5247 = vmul.f32 %v5239, %v432
    %v5248 = vmul.f32 %v5244, %v433
    %v5249 = vsel %vm88, %v5247, -inf
    %5250 = vmax.xlane.f32.xlu0 %v5249
    %v5251 = vpop.xlane.xlu0 %5250
    %v5252 = vsel %vm88, %v5248, -inf
    %5253 = vmax.xlane.f32.xlu0 %v5252
    %v5254 = vpop.xlane.xlu0 %5253
    %v5255 = vsub.f32 %v5247, %v5251
    %v5256 = vsub.f32 %v5248, %v5254
    %v5257 = vmul.f32 %v5255, 1.442695
    %v5258 = vpow.pop %v5257
    %v5259 = vmul.f32 %v5256, 1.442695
    %v5260 = vpow.pop %v5259
    %v5261 = vsel %vm88, %v5258, 0.0
    %5262 = vadd.xlane.f32.xlu0 %v5261
    %v5263 = vpop.xlane.xlu0 %5262
    %v5264 = vsel %vm88, %v5260, 0.0
    %5265 = vadd.xlane.f32.xlu0 %v5264
    %v5266 = vpop.xlane.xlu0 %5265
    %v5267 = vrcp.pop %v5263
    %v5268 = vmul.f32 %v5258, %v5267
    %v5269 = vrcp.pop %v5266
    %v5270 = vmul.f32 %v5260, %v5269
    %5271 = vrot.lane.b32.xlu0 %v4584, 48
    %v5272 = vpop.permute.xlu0 %5271
    %5273 = vrot.lane.b32.xlu0 %v4589, 48
    %v5274 = vpop.permute.xlu0 %5273
    %v5278 = vsel %vm88, %v5268, 0
    %v5281 = vsel %vm88, %v5270, 0
    %5283 = vmatprep.subr.mxu0 0.0
    %5284 = vmatpush1.msra.mxu0 0.0
    %5285 = vmatprep.subr.mxu0 0.0
    %5286 = vmatpush1.msra.mxu0 0.0
    %5287 = vmatprep.subr.mxu0 0.0
    %5288 = vmatpush1.msra.mxu0 0.0
    %5289 = vmatprep.subr.mxu0 0.0
    %5290 = vmatpush1.msra.mxu0 0.0
    %5291 = vmatprep.subr.mxu0 0.0
    %5292 = vmatpush1.msra.mxu0 0.0
    %5293 = vmatprep.subr.mxu0 0.0
    %5294 = vmatpush1.msra.mxu0 0.0
    %5295 = vmatprep.subr.mxu0 0.0
    %5296 = vmatpush1.msra.mxu0 0.0
    %5297 = vmatprep.subr.mxu0 0.0
    %5298 = vmatpush1.msra.mxu0 0.0
    %5299 = vmatprep.subr.mxu0 0.0
    %5300 = vmatpush1.msra.mxu0 0.0
    %5301 = vmatprep.subr.mxu0 0.0
    %5302 = vmatpush1.msra.mxu0 0.0
    %5303 = vmatprep.subr.mxu0 0.0
    %5304 = vmatpush1.msra.mxu0 0.0
    %5305 = vmatprep.subr.mxu0 0.0
    %5306 = vmatpush1.msra.mxu0 0.0
    %5307 = vmatprep.subr.mxu0 0.0
    %5308 = vmatpush1.msra.mxu0 0.0
    %5309 = vmatprep.subr.mxu0 0.0
    %5310 = vmatpush1.msra.mxu0 0.0
    %5311 = vmatprep.subr.mxu0 0.0
    %5312 = vmatpush1.msra.mxu0 %v5274
    %5313 = vmatprep.subr.mxu0 0.0
    %5314 = vmatpush1.msra.mxu0 %v5272
    %5315 = vmatprep.subr.mxu0 0.0
    %5316 = vmatpush2.msra.mxu0 0.0
    %5317 = vmatprep.subr.mxu0 0.0
    %5318 = vmatpush2.msra.mxu0 0.0
    %5319 = vmatprep.subr.mxu0 0.0
    %5320 = vmatpush2.msra.mxu0 0.0
    %5321 = vmatprep.subr.mxu0 0.0
    %5322 = vmatpush2.msra.mxu0 0.0
    %5323 = vmatprep.subr.mxu0 0.0
    %5324 = vmatpush2.msra.mxu0 0.0
    %5325 = vmatprep.subr.mxu0 0.0
    %5326 = vmatpush2.msra.mxu0 0.0
    %5327 = vmatprep.subr.mxu0 0.0
    %5328 = vmatpush2.msra.mxu0 0.0
    %5329 = vmatprep.subr.mxu0 0.0
    %5330 = vmatpush2.msra.mxu0 0.0
    %5331 = vmatprep.subr.mxu0 0.0
    %5332 = vmatpush2.msra.mxu0 0.0
    %5333 = vmatprep.subr.mxu0 0.0
    %5334 = vmatpush2.msra.mxu0 0.0
    %5335 = vmatprep.subr.mxu0 0.0
    %5336 = vmatpush2.msra.mxu0 0.0
    %5337 = vmatprep.subr.mxu0 0.0
    %5338 = vmatpush2.msra.mxu0 0.0
    %5339 = vmatprep.subr.mxu0 0.0
    %5340 = vmatpush2.msra.mxu0 0.0
    %5341 = vmatprep.subr.mxu0 0.0
    %5342 = vmatpush2.msra.mxu0 0.0
    %5343 = vmatprep.subr.mxu0 0.0
    %5344 = vmatpush2.msra.mxu0 0.0
    %5345 = vmatprep.subr.mxu0 0.0
    %5346 = vmatpush2.msra.mxu0 0.0
    %5347 = vmatprep.mubr.f32.mxu0 0.0
    %5348 = vmatmul.mubr.f32.gmra.mxu0 %v5278
    %v5349 = vpop.f32.mrf.mxu0
    %v5350 = vadd.f32 0.0, %v5349
    %v5351 = vpop.f32.mrf.mxu0
    %5352 = vmatprep.mubr.f32.mxu0 0.0
    %5353 = vmatmul.mubr.f32.gmra.mxu0 %v5281
    %v5354 = vpop.f32.mrf.mxu0
    %v5355 = vadd.f32 0.0, %v5354
    %v5356 = vpop.f32.mrf.mxu0
    %5357 = vdwg.mxu0
    %v5359 = vsel %vm440, %v5350, 0
    %v5362 = vsel %vm440, %v5355, 0
    %5364 = vmatprep.subr.mxu0 0.0
    %5365 = vmatpush1.msra.mxu0 0.0
    %5366 = vmatprep.subr.mxu0 0.0
    %5367 = vmatpush1.msra.mxu0 0.0
    %5368 = vmatprep.subr.mxu0 0.0
    %5369 = vmatpush1.msra.mxu0 0.0
    %5370 = vmatprep.subr.mxu0 0.0
    %5371 = vmatpush1.msra.mxu0 0.0
    %5372 = vmatprep.subr.mxu0 0.0
    %5373 = vmatpush1.msra.mxu0 0.0
    %5374 = vmatprep.subr.mxu0 0.0
    %5375 = vmatpush1.msra.mxu0 0.0
    %5376 = vmatprep.subr.mxu0 0.0
    %5377 = vmatpush1.msra.mxu0 0.0
    %5378 = vmatprep.subr.mxu0 0.0
    %5379 = vmatpush1.msra.mxu0 0.0
    %5380 = vmatprep.subr.mxu0 0.0
    %5381 = vmatpush1.msra.mxu0 0.0
    %5382 = vmatprep.subr.mxu0 0.0
    %5383 = vmatpush1.msra.mxu0 0.0
    %5384 = vmatprep.subr.mxu0 0.0
    %5385 = vmatpush1.msra.mxu0 0.0
    %5386 = vmatprep.subr.mxu0 0.0
    %5387 = vmatpush1.msra.mxu0 0.0
    %5388 = vmatprep.subr.mxu0 0.0
    %5389 = vmatpush1.msra.mxu0 0.0
    %5390 = vmatprep.subr.mxu0 0.0
    %5391 = vmatpush1.msra.mxu0 0.0
    %5392 = vmatprep.subr.mxu0 0.0
    %5393 = vmatpush1.msra.mxu0 0.0
    %5394 = vmatprep.subr.mxu0 0.0
    %5395 = vmatpush1.msra.mxu0 %v4476
    %5396 = vmatprep.subr.mxu0 0.0
    %5397 = vmatpush2.msra.mxu0 0.0
    %5398 = vmatprep.subr.mxu0 0.0
    %5399 = vmatpush2.msra.mxu0 0.0
    %5400 = vmatprep.subr.mxu0 0.0
    %5401 = vmatpush2.msra.mxu0 0.0
    %5402 = vmatprep.subr.mxu0 0.0
    %5403 = vmatpush2.msra.mxu0 0.0
    %5404 = vmatprep.subr.mxu0 0.0
    %5405 = vmatpush2.msra.mxu0 0.0
    %5406 = vmatprep.subr.mxu0 0.0
    %5407 = vmatpush2.msra.mxu0 0.0
    %5408 = vmatprep.subr.mxu0 0.0
    %5409 = vmatpush2.msra.mxu0 0.0
    %5410 = vmatprep.subr.mxu0 0.0
    %5411 = vmatpush2.msra.mxu0 0.0
    %5412 = vmatprep.subr.mxu0 0.0
    %5413 = vmatpush2.msra.mxu0 0.0
    %5414 = vmatprep.subr.mxu0 0.0
    %5415 = vmatpush2.msra.mxu0 0.0
    %5416 = vmatprep.subr.mxu0 0.0
    %5417 = vmatpush2.msra.mxu0 0.0
    %5418 = vmatprep.subr.mxu0 0.0
    %5419 = vmatpush2.msra.mxu0 0.0
    %5420 = vmatprep.subr.mxu0 0.0
    %5421 = vmatpush2.msra.mxu0 0.0
    %5422 = vmatprep.subr.mxu0 0.0
    %5423 = vmatpush2.msra.mxu0 0.0
    %5424 = vmatprep.subr.mxu0 0.0
    %5425 = vmatpush2.msra.mxu0 0.0
    %5426 = vmatprep.subr.mxu0 0.0
    %5427 = vmatpush2.msra.mxu0 0.0
    %5428 = vmatprep.mubr.f32.mxu0 0.0
    %5429 = vmatmul.mubr.f32.gmra.mxu0 %v5359
    %v5430 = vpop.f32.mrf.mxu0
    %v5431 = vadd.f32 0.0, %v5430
    %v5432 = vpop.f32.mrf.mxu0
    %5433 = vmatprep.mubr.f32.mxu0 0.0
    %5434 = vmatmul.mubr.f32.gmra.mxu0 %v5362
    %v5435 = vpop.f32.mrf.mxu0
    %v5436 = vadd.f32 0.0, %v5435
    %v5437 = vpop.f32.mrf.mxu0
    %5438 = vdwg.mxu0
    %v5439 = vadd.f32 %v5148, %v5431
    %v5440 = vadd.f32 %v5153, %v5436
    %5441 = vrot.lane.b32.xlu0 %v4584, 104
    %v5442 = vpop.permute.xlu0 %5441
    %5443 = vrot.lane.b32.xlu0 %v4589, 104
    %v5444 = vpop.permute.xlu0 %5443
    %5445 = vrot.lane.b32.xlu0 %v4584, 72
    %v5446 = vpop.permute.xlu0 %5445
    %5447 = vrot.lane.b32.xlu0 %v4589, 72
    %v5448 = vpop.permute.xlu0 %5447
    %v5449 = vsel %vm440, %v5442, 0
    %v5451 = vsel %vm440, %v5444, 0
    %v5453 = vsel %vm440, %v5446, 0
    %v5455 = vsel %vm440, %v5448, 0
    %5457 = vmatprep.subr.mxu0 0.0
    %5458 = vmatpush1.xpose.msra.mxu0 0.0
    %5459 = vmatprep.subr.mxu0 0.0
    %5460 = vmatpush1.xpose.msra.mxu0 0.0
    %5461 = vmatprep.subr.mxu0 0.0
    %5462 = vmatpush1.xpose.msra.mxu0 0.0
    %5463 = vmatprep.subr.mxu0 0.0
    %5464 = vmatpush1.xpose.msra.mxu0 0.0
    %5465 = vmatprep.subr.mxu0 0.0
    %5466 = vmatpush1.xpose.msra.mxu0 0.0
    %5467 = vmatprep.subr.mxu0 0.0
    %5468 = vmatpush1.xpose.msra.mxu0 0.0
    %5469 = vmatprep.subr.mxu0 0.0
    %5470 = vmatpush1.xpose.msra.mxu0 0.0
    %5471 = vmatprep.subr.mxu0 0.0
    %5472 = vmatpush1.xpose.msra.mxu0 0.0
    %5473 = vmatprep.subr.mxu0 0.0
    %5474 = vmatpush1.xpose.msra.mxu0 0.0
    %5475 = vmatprep.subr.mxu0 0.0
    %5476 = vmatpush1.xpose.msra.mxu0 0.0
    %5477 = vmatprep.subr.mxu0 0.0
    %5478 = vmatpush1.xpose.msra.mxu0 0.0
    %5479 = vmatprep.subr.mxu0 0.0
    %5480 = vmatpush1.xpose.msra.mxu0 0.0
    %5481 = vmatprep.subr.mxu0 0.0
    %5482 = vmatpush1.xpose.msra.mxu0 0.0
    %5483 = vmatprep.subr.mxu0 0.0
    %5484 = vmatpush1.xpose.msra.mxu0 0.0
    %5485 = vmatprep.subr.mxu0 0.0
    %5486 = vmatpush1.xpose.msra.mxu0 %v5455
    %5487 = vmatprep.subr.mxu0 0.0
    %5488 = vmatpush1.xpose.msra.mxu0 %v5453
    %5489 = vmatprep.subr.mxu0 0.0
    %5490 = vmatpush2.xpose.msra.mxu0 0.0
    %5491 = vmatprep.subr.mxu0 0.0
    %5492 = vmatpush2.xpose.msra.mxu0 0.0
    %5493 = vmatprep.subr.mxu0 0.0
    %5494 = vmatpush2.xpose.msra.mxu0 0.0
    %5495 = vmatprep.subr.mxu0 0.0
    %5496 = vmatpush2.xpose.msra.mxu0 0.0
    %5497 = vmatprep.subr.mxu0 0.0
    %5498 = vmatpush2.xpose.msra.mxu0 0.0
    %5499 = vmatprep.subr.mxu0 0.0
    %5500 = vmatpush2.xpose.msra.mxu0 0.0
    %5501 = vmatprep.subr.mxu0 0.0
    %5502 = vmatpush2.xpose.msra.mxu0 0.0
    %5503 = vmatprep.subr.mxu0 0.0
    %5504 = vmatpush2.xpose.msra.mxu0 0.0
    %5505 = vmatprep.subr.mxu0 0.0
    %5506 = vmatpush2.xpose.msra.mxu0 0.0
    %5507 = vmatprep.subr.mxu0 0.0
    %5508 = vmatpush2.xpose.msra.mxu0 0.0
    %5509 = vmatprep.subr.mxu0 0.0
    %5510 = vmatpush2.xpose.msra.mxu0 0.0
    %5511 = vmatprep.subr.mxu0 0.0
    %5512 = vmatpush2.xpose.msra.mxu0 0.0
    %5513 = vmatprep.subr.mxu0 0.0
    %5514 = vmatpush2.xpose.msra.mxu0 0.0
    %5515 = vmatprep.subr.mxu0 0.0
    %5516 = vmatpush2.xpose.msra.mxu0 0.0
    %5517 = vmatprep.subr.mxu0 0.0
    %5518 = vmatpush2.xpose.msra.mxu0 0.0
    %5519 = vmatprep.subr.mxu0 0.0
    %5520 = vmatpush2.xpose.msra.mxu0 0.0
    %5521 = vmatprep.mubr.f32.mxu0 0.0
    %5522 = vmatmul.mubr.f32.gmra.mxu0 %v5449
    %v5523 = vpop.f32.mrf.mxu0
    %v5524 = vadd.f32 0.0, %v5523
    %v5525 = vpop.f32.mrf.mxu0
    %5526 = vmatprep.mubr.f32.mxu0 0.0
    %5527 = vmatmul.mubr.f32.gmra.mxu0 %v5451
    %v5528 = vpop.f32.mrf.mxu0
    %v5529 = vadd.f32 0.0, %v5528
    %v5530 = vpop.f32.mrf.mxu0
    %5531 = vdwg.mxu0
    %v5532 = vmul.f32 %v5524, %v432
    %v5533 = vmul.f32 %v5529, %v433
    %v5534 = vsel %vm88, %v5532, -inf
    %5535 = vmax.xlane.f32.xlu0 %v5534
    %v5536 = vpop.xlane.xlu0 %5535
    %v5537 = vsel %vm88, %v5533, -inf
    %5538 = vmax.xlane.f32.xlu0 %v5537
    %v5539 = vpop.xlane.xlu0 %5538
    %v5540 = vsub.f32 %v5532, %v5536
    %v5541 = vsub.f32 %v5533, %v5539
    %v5542 = vmul.f32 %v5540, 1.442695
    %v5543 = vpow.pop %v5542
    %v5544 = vmul.f32 %v5541, 1.442695
    %v5545 = vpow.pop %v5544
    %v5546 = vsel %vm88, %v5543, 0.0
    %5547 = vadd.xlane.f32.xlu0 %v5546
    %v5548 = vpop.xlane.xlu0 %5547
    %v5549 = vsel %vm88, %v5545, 0.0
    %5550 = vadd.xlane.f32.xlu0 %v5549
    %v5551 = vpop.xlane.xlu0 %5550
    %v5552 = vrcp.pop %v5548
    %v5553 = vmul.f32 %v5543, %v5552
    %v5554 = vrcp.pop %v5551
    %v5555 = vmul.f32 %v5545, %v5554
    %5556 = vrot.lane.b32.xlu0 %v4584, 40
    %v5557 = vpop.permute.xlu0 %5556
    %5558 = vrot.lane.b32.xlu0 %v4589, 40
    %v5559 = vpop.permute.xlu0 %5558
    %v5563 = vsel %vm88, %v5553, 0
    %v5566 = vsel %vm88, %v5555, 0
    %5568 = vmatprep.subr.mxu0 0.0
    %5569 = vmatpush1.msra.mxu0 0.0
    %5570 = vmatprep.subr.mxu0 0.0
    %5571 = vmatpush1.msra.mxu0 0.0
    %5572 = vmatprep.subr.mxu0 0.0
    %5573 = vmatpush1.msra.mxu0 0.0
    %5574 = vmatprep.subr.mxu0 0.0
    %5575 = vmatpush1.msra.mxu0 0.0
    %5576 = vmatprep.subr.mxu0 0.0
    %5577 = vmatpush1.msra.mxu0 0.0
    %5578 = vmatprep.subr.mxu0 0.0
    %5579 = vmatpush1.msra.mxu0 0.0
    %5580 = vmatprep.subr.mxu0 0.0
    %5581 = vmatpush1.msra.mxu0 0.0
    %5582 = vmatprep.subr.mxu0 0.0
    %5583 = vmatpush1.msra.mxu0 0.0
    %5584 = vmatprep.subr.mxu0 0.0
    %5585 = vmatpush1.msra.mxu0 0.0
    %5586 = vmatprep.subr.mxu0 0.0
    %5587 = vmatpush1.msra.mxu0 0.0
    %5588 = vmatprep.subr.mxu0 0.0
    %5589 = vmatpush1.msra.mxu0 0.0
    %5590 = vmatprep.subr.mxu0 0.0
    %5591 = vmatpush1.msra.mxu0 0.0
    %5592 = vmatprep.subr.mxu0 0.0
    %5593 = vmatpush1.msra.mxu0 0.0
    %5594 = vmatprep.subr.mxu0 0.0
    %5595 = vmatpush1.msra.mxu0 0.0
    %5596 = vmatprep.subr.mxu0 0.0
    %5597 = vmatpush1.msra.mxu0 %v5559
    %5598 = vmatprep.subr.mxu0 0.0
    %5599 = vmatpush1.msra.mxu0 %v5557
    %5600 = vmatprep.subr.mxu0 0.0
    %5601 = vmatpush2.msra.mxu0 0.0
    %5602 = vmatprep.subr.mxu0 0.0
    %5603 = vmatpush2.msra.mxu0 0.0
    %5604 = vmatprep.subr.mxu0 0.0
    %5605 = vmatpush2.msra.mxu0 0.0
    %5606 = vmatprep.subr.mxu0 0.0
    %5607 = vmatpush2.msra.mxu0 0.0
    %5608 = vmatprep.subr.mxu0 0.0
    %5609 = vmatpush2.msra.mxu0 0.0
    %5610 = vmatprep.subr.mxu0 0.0
    %5611 = vmatpush2.msra.mxu0 0.0
    %5612 = vmatprep.subr.mxu0 0.0
    %5613 = vmatpush2.msra.mxu0 0.0
    %5614 = vmatprep.subr.mxu0 0.0
    %5615 = vmatpush2.msra.mxu0 0.0
    %5616 = vmatprep.subr.mxu0 0.0
    %5617 = vmatpush2.msra.mxu0 0.0
    %5618 = vmatprep.subr.mxu0 0.0
    %5619 = vmatpush2.msra.mxu0 0.0
    %5620 = vmatprep.subr.mxu0 0.0
    %5621 = vmatpush2.msra.mxu0 0.0
    %5622 = vmatprep.subr.mxu0 0.0
    %5623 = vmatpush2.msra.mxu0 0.0
    %5624 = vmatprep.subr.mxu0 0.0
    %5625 = vmatpush2.msra.mxu0 0.0
    %5626 = vmatprep.subr.mxu0 0.0
    %5627 = vmatpush2.msra.mxu0 0.0
    %5628 = vmatprep.subr.mxu0 0.0
    %5629 = vmatpush2.msra.mxu0 0.0
    %5630 = vmatprep.subr.mxu0 0.0
    %5631 = vmatpush2.msra.mxu0 0.0
    %5632 = vmatprep.mubr.f32.mxu0 0.0
    %5633 = vmatmul.mubr.f32.gmra.mxu0 %v5563
    %v5634 = vpop.f32.mrf.mxu0
    %v5635 = vadd.f32 0.0, %v5634
    %v5636 = vpop.f32.mrf.mxu0
    %5637 = vmatprep.mubr.f32.mxu0 0.0
    %5638 = vmatmul.mubr.f32.gmra.mxu0 %v5566
    %v5639 = vpop.f32.mrf.mxu0
    %v5640 = vadd.f32 0.0, %v5639
    %v5641 = vpop.f32.mrf.mxu0
    %5642 = vdwg.mxu0
    %v5644 = vsel %vm440, %v5635, 0
    %v5647 = vsel %vm440, %v5640, 0
    %5649 = vmatprep.subr.mxu0 0.0
    %5650 = vmatpush1.msra.mxu0 0.0
    %5651 = vmatprep.subr.mxu0 0.0
    %5652 = vmatpush1.msra.mxu0 0.0
    %5653 = vmatprep.subr.mxu0 0.0
    %5654 = vmatpush1.msra.mxu0 0.0
    %5655 = vmatprep.subr.mxu0 0.0
    %5656 = vmatpush1.msra.mxu0 0.0
    %5657 = vmatprep.subr.mxu0 0.0
    %5658 = vmatpush1.msra.mxu0 0.0
    %5659 = vmatprep.subr.mxu0 0.0
    %5660 = vmatpush1.msra.mxu0 0.0
    %5661 = vmatprep.subr.mxu0 0.0
    %5662 = vmatpush1.msra.mxu0 0.0
    %5663 = vmatprep.subr.mxu0 0.0
    %5664 = vmatpush1.msra.mxu0 0.0
    %5665 = vmatprep.subr.mxu0 0.0
    %5666 = vmatpush1.msra.mxu0 0.0
    %5667 = vmatprep.subr.mxu0 0.0
    %5668 = vmatpush1.msra.mxu0 0.0
    %5669 = vmatprep.subr.mxu0 0.0
    %5670 = vmatpush1.msra.mxu0 0.0
    %5671 = vmatprep.subr.mxu0 0.0
    %5672 = vmatpush1.msra.mxu0 0.0
    %5673 = vmatprep.subr.mxu0 0.0
    %5674 = vmatpush1.msra.mxu0 0.0
    %5675 = vmatprep.subr.mxu0 0.0
    %5676 = vmatpush1.msra.mxu0 0.0
    %5677 = vmatprep.subr.mxu0 0.0
    %5678 = vmatpush1.msra.mxu0 0.0
    %5679 = vmatprep.subr.mxu0 0.0
    %5680 = vmatpush1.msra.mxu0 %v4477
    %5681 = vmatprep.subr.mxu0 0.0
    %5682 = vmatpush2.msra.mxu0 0.0
    %5683 = vmatprep.subr.mxu0 0.0
    %5684 = vmatpush2.msra.mxu0 0.0
    %5685 = vmatprep.subr.mxu0 0.0
    %5686 = vmatpush2.msra.mxu0 0.0
    %5687 = vmatprep.subr.mxu0 0.0
    %5688 = vmatpush2.msra.mxu0 0.0
    %5689 = vmatprep.subr.mxu0 0.0
    %5690 = vmatpush2.msra.mxu0 0.0
    %5691 = vmatprep.subr.mxu0 0.0
    %5692 = vmatpush2.msra.mxu0 0.0
    %5693 = vmatprep.subr.mxu0 0.0
    %5694 = vmatpush2.msra.mxu0 0.0
    %5695 = vmatprep.subr.mxu0 0.0
    %5696 = vmatpush2.msra.mxu0 0.0
    %5697 = vmatprep.subr.mxu0 0.0
    %5698 = vmatpush2.msra.mxu0 0.0
    %5699 = vmatprep.subr.mxu0 0.0
    %5700 = vmatpush2.msra.mxu0 0.0
    %5701 = vmatprep.subr.mxu0 0.0
    %5702 = vmatpush2.msra.mxu0 0.0
    %5703 = vmatprep.subr.mxu0 0.0
    %5704 = vmatpush2.msra.mxu0 0.0
    %5705 = vmatprep.subr.mxu0 0.0
    %5706 = vmatpush2.msra.mxu0 0.0
    %5707 = vmatprep.subr.mxu0 0.0
    %5708 = vmatpush2.msra.mxu0 0.0
    %5709 = vmatprep.subr.mxu0 0.0
    %5710 = vmatpush2.msra.mxu0 0.0
    %5711 = vmatprep.subr.mxu0 0.0
    %5712 = vmatpush2.msra.mxu0 0.0
    %5713 = vmatprep.mubr.f32.mxu0 0.0
    %5714 = vmatmul.mubr.f32.gmra.mxu0 %v5644
    %v5715 = vpop.f32.mrf.mxu0
    %v5716 = vadd.f32 0.0, %v5715
    %v5717 = vpop.f32.mrf.mxu0
    %5718 = vmatprep.mubr.f32.mxu0 0.0
    %5719 = vmatmul.mubr.f32.gmra.mxu0 %v5647
    %v5720 = vpop.f32.mrf.mxu0
    %v5721 = vadd.f32 0.0, %v5720
    %v5722 = vpop.f32.mrf.mxu0
    %5723 = vdwg.mxu0
    %v5724 = vadd.f32 %v5439, %v5716
    %v5725 = vadd.f32 %v5440, %v5721
    %v5727 = vlaneseq
    %v5728 = vshrl.u32 %v5727, 7
    %v5729 = vsub.s32 0, %v5728
    %v5730 = vrot.slane %v4478, %v5729
    %v5732 = vadd.f32 %v5724, %v5730
    %v5733 = vadd.f32 %v5725, %v5730
    %v5734 = vadd.f32 %v5732, %v291
    %v5735 = vadd.f32 %v5733, %v296
    %s5736 = scalar_lea.vmem %s1, 4
    %v5737 = vld [vmem:[%s5736] sm:$0xf]
    %v5738 = vld [vmem:[%s11] sm:$0xff]
    %v5739 = vld [vmem:[%s11 + $0x8] sm:$0xff]
    %v5740 = vld [vmem:[%s12] sm:$0x1]
    %v5742 = vlaneseq
    %v5743 = vshrl.u32 %v5742, 7
    %v5744 = vsub.s32 0, %v5743
    %v5745 = vrot.slane %v5740, %v5744
    %v5748 = vsel %vm88, %v5737, 0
    %5750 = vmatprep.subr.mxu0 0.0
    %5751 = vmatpush1.msra.mxu0 0.0
    %5752 = vmatprep.subr.mxu0 0.0
    %5753 = vmatpush1.msra.mxu0 0.0
    %5754 = vmatprep.subr.mxu0 0.0
    %5755 = vmatpush1.msra.mxu0 0.0
    %5756 = vmatprep.subr.mxu0 0.0
    %5757 = vmatpush1.msra.mxu0 0.0
    %5758 = vmatprep.subr.mxu0 0.0
    %5759 = vmatpush1.msra.mxu0 0.0
    %5760 = vmatprep.subr.mxu0 0.0
    %5761 = vmatpush1.msra.mxu0 0.0
    %5762 = vmatprep.subr.mxu0 0.0
    %5763 = vmatpush1.msra.mxu0 0.0
    %5764 = vmatprep.subr.mxu0 0.0
    %5765 = vmatpush1.msra.mxu0 0.0
    %5766 = vmatprep.subr.mxu0 0.0
    %5767 = vmatpush1.msra.mxu0 0.0
    %5768 = vmatprep.subr.mxu0 0.0
    %5769 = vmatpush1.msra.mxu0 0.0
    %5770 = vmatprep.subr.mxu0 0.0
    %5771 = vmatpush1.msra.mxu0 0.0
    %5772 = vmatprep.subr.mxu0 0.0
    %5773 = vmatpush1.msra.mxu0 0.0
    %5774 = vmatprep.subr.mxu0 0.0
    %5775 = vmatpush1.msra.mxu0 0.0
    %5776 = vmatprep.subr.mxu0 0.0
    %5777 = vmatpush1.msra.mxu0 0.0
    %5778 = vmatprep.subr.mxu0 0.0
    %5779 = vmatpush1.msra.mxu0 %v5739
    %5780 = vmatprep.subr.mxu0 0.0
    %5781 = vmatpush1.msra.mxu0 %v5738
    %5782 = vmatprep.subr.mxu0 0.0
    %5783 = vmatpush2.msra.mxu0 0.0
    %5784 = vmatprep.subr.mxu0 0.0
    %5785 = vmatpush2.msra.mxu0 0.0
    %5786 = vmatprep.subr.mxu0 0.0
    %5787 = vmatpush2.msra.mxu0 0.0
    %5788 = vmatprep.subr.mxu0 0.0
    %5789 = vmatpush2.msra.mxu0 0.0
    %5790 = vmatprep.subr.mxu0 0.0
    %5791 = vmatpush2.msra.mxu0 0.0
    %5792 = vmatprep.subr.mxu0 0.0
    %5793 = vmatpush2.msra.mxu0 0.0
    %5794 = vmatprep.subr.mxu0 0.0
    %5795 = vmatpush2.msra.mxu0 0.0
    %5796 = vmatprep.subr.mxu0 0.0
    %5797 = vmatpush2.msra.mxu0 0.0
    %5798 = vmatprep.subr.mxu0 0.0
    %5799 = vmatpush2.msra.mxu0 0.0
    %5800 = vmatprep.subr.mxu0 0.0
    %5801 = vmatpush2.msra.mxu0 0.0
    %5802 = vmatprep.subr.mxu0 0.0
    %5803 = vmatpush2.msra.mxu0 0.0
    %5804 = vmatprep.subr.mxu0 0.0
    %5805 = vmatpush2.msra.mxu0 0.0
    %5806 = vmatprep.subr.mxu0 0.0
    %5807 = vmatpush2.msra.mxu0 0.0
    %5808 = vmatprep.subr.mxu0 0.0
    %5809 = vmatpush2.msra.mxu0 0.0
    %5810 = vmatprep.subr.mxu0 0.0
    %5811 = vmatpush2.msra.mxu0 0.0
    %5812 = vmatprep.subr.mxu0 0.0
    %5813 = vmatpush2.msra.mxu0 0.0
    %5814 = vmatprep.mubr.f32.mxu0 0.0
    %5815 = vmatmul.mubr.f32.gmra.mxu0 %v5748
    %v5816 = vpop.f32.mrf.mxu0
    %v5817 = vadd.f32 %v5745, %v5816
    %v5818 = vpop.f32.mrf.mxu0
    %5819 = vdwg.mxu0
    %v5820 = vmax.f32 %v5817, 0.0
    %v5821 = vld [vmem:[%s2] sm:$0xf]
    %v5822 = vmul.f32 %v5820, %v5821
    %v5823 = vld [vmem:[%s13] sm:$0xff]
    %v5824 = vld [vmem:[%s13 + $0x8] sm:$0xff]
    %v5825 = vld [vmem:[%s13 + $0x10] sm:$0xff]
    %v5826 = vld [vmem:[%s13 + $0x18] sm:$0xff]
    %v5827 = vld [vmem:[%s13 + $0x20] sm:$0xff]
    %v5828 = vld [vmem:[%s13 + $0x28] sm:$0xff]
    %v5829 = vld [vmem:[%s13 + $0x30] sm:$0xff]
    %v5830 = vld [vmem:[%s13 + $0x38] sm:$0xff]
    %v5831 = vld [vmem:[%s13 + $0x40] sm:$0xff]
    %v5832 = vld [vmem:[%s13 + $0x48] sm:$0xff]
    %v5833 = vld [vmem:[%s13 + $0x50] sm:$0xff]
    %v5834 = vld [vmem:[%s13 + $0x58] sm:$0xff]
    %v5835 = vld [vmem:[%s13 + $0x60] sm:$0xff]
    %v5836 = vld [vmem:[%s13 + $0x68] sm:$0xff]
    %v5837 = vld [vmem:[%s13 + $0x70] sm:$0xff]
    %v5838 = vld [vmem:[%s13 + $0x78] sm:$0xff]
    %v5839 = vld [vmem:[%s14] sm:$0xf]
    %5840 = vmatprep.subr.mxu0 0.0
    %5841 = vmatpush1.msra.mxu0 %v5838
    %5842 = vmatprep.subr.mxu0 0.0
    %5843 = vmatpush1.msra.mxu0 %v5837
    %5844 = vmatprep.subr.mxu0 0.0
    %5845 = vmatpush1.msra.mxu0 %v5836
    %5846 = vmatprep.subr.mxu0 0.0
    %5847 = vmatpush1.msra.mxu0 %v5835
    %5848 = vmatprep.subr.mxu0 0.0
    %5849 = vmatpush1.msra.mxu0 %v5834
    %5850 = vmatprep.subr.mxu0 0.0
    %5851 = vmatpush1.msra.mxu0 %v5833
    %5852 = vmatprep.subr.mxu0 0.0
    %5853 = vmatpush1.msra.mxu0 %v5832
    %5854 = vmatprep.subr.mxu0 0.0
    %5855 = vmatpush1.msra.mxu0 %v5831
    %5856 = vmatprep.subr.mxu0 0.0
    %5857 = vmatpush1.msra.mxu0 %v5830
    %5858 = vmatprep.subr.mxu0 0.0
    %5859 = vmatpush1.msra.mxu0 %v5829
    %5860 = vmatprep.subr.mxu0 0.0
    %5861 = vmatpush1.msra.mxu0 %v5828
    %5862 = vmatprep.subr.mxu0 0.0
    %5863 = vmatpush1.msra.mxu0 %v5827
    %5864 = vmatprep.subr.mxu0 0.0
    %5865 = vmatpush1.msra.mxu0 %v5826
    %5866 = vmatprep.subr.mxu0 0.0
    %5867 = vmatpush1.msra.mxu0 %v5825
    %5868 = vmatprep.subr.mxu0 0.0
    %5869 = vmatpush1.msra.mxu0 %v5824
    %5870 = vmatprep.subr.mxu0 0.0
    %5871 = vmatpush1.msra.mxu0 %v5823
    %5872 = vmatprep.subr.mxu0 0.0
    %5873 = vmatpush2.msra.mxu0 0.0
    %5874 = vmatprep.subr.mxu0 0.0
    %5875 = vmatpush2.msra.mxu0 0.0
    %5876 = vmatprep.subr.mxu0 0.0
    %5877 = vmatpush2.msra.mxu0 0.0
    %5878 = vmatprep.subr.mxu0 0.0
    %5879 = vmatpush2.msra.mxu0 0.0
    %5880 = vmatprep.subr.mxu0 0.0
    %5881 = vmatpush2.msra.mxu0 0.0
    %5882 = vmatprep.subr.mxu0 0.0
    %5883 = vmatpush2.msra.mxu0 0.0
    %5884 = vmatprep.subr.mxu0 0.0
    %5885 = vmatpush2.msra.mxu0 0.0
    %5886 = vmatprep.subr.mxu0 0.0
    %5887 = vmatpush2.msra.mxu0 0.0
    %5888 = vmatprep.subr.mxu0 0.0
    %5889 = vmatpush2.msra.mxu0 0.0
    %5890 = vmatprep.subr.mxu0 0.0
    %5891 = vmatpush2.msra.mxu0 0.0
    %5892 = vmatprep.subr.mxu0 0.0
    %5893 = vmatpush2.msra.mxu0 0.0
    %5894 = vmatprep.subr.mxu0 0.0
    %5895 = vmatpush2.msra.mxu0 0.0
    %5896 = vmatprep.subr.mxu0 0.0
    %5897 = vmatpush2.msra.mxu0 0.0
    %5898 = vmatprep.subr.mxu0 0.0
    %5899 = vmatpush2.msra.mxu0 0.0
    %5900 = vmatprep.subr.mxu0 0.0
    %5901 = vmatpush2.msra.mxu0 0.0
    %5902 = vmatprep.subr.mxu0 0.0
    %5903 = vmatpush2.msra.mxu0 0.0
    %5904 = vmatprep.mubr.f32.mxu0 0.0
    %5905 = vmatmul.mubr.f32.gmra.mxu0 %v5822
    %v5906 = vpop.f32.mrf.mxu0
    %v5907 = vadd.f32 %v5839, %v5906
    %v5908 = vpop.f32.mrf.mxu0
    %5909 = vdwg.mxu0
    %v5910 = vld [vmem:[%s15] sm:$0xff]
    %v5911 = vld [vmem:[%s15 + $0x8] sm:$0xff]
    %v5912 = vld [vmem:[%s15 + $0x10] sm:$0xff]
    %v5913 = vld [vmem:[%s15 + $0x18] sm:$0xff]
    %v5914 = vld [vmem:[%s16] sm:$0x1]
    %v5915 = vld [vmem:[%s17] sm:$0xff]
    %v5916 = vld [vmem:[%s17 + $0x8] sm:$0xff]
    %v5917 = vld [vmem:[%s17 + $0x10] sm:$0xff]
    %v5918 = vld [vmem:[%s17 + $0x18] sm:$0xff]
    %v5919 = vld [vmem:[%s18] sm:$0x1]
    %v5920 = vsel %vm1762, %v5907, 0.0
    %5921 = vadd.xlane.f32.xlu0 %v5920
    %v5922 = vpop.xlane.xlu0 %5921
    %v5923 = vmul.f32 %v5922, %v315
    %v5924 = vsub.f32 %v5907, %v5923
    %v5925 = vmul.f32 %v5924, %v5924
    %v5926 = vsel %vm1762, %v5925, 0.0
    %5927 = vadd.xlane.f32.xlu0 %v5926
    %v5928 = vpop.xlane.xlu0 %5927
    %v5929 = vmul.f32 %v5928, %v315
    %v5930 = vadd.f32 %v5929, 1e-05
    %v5931 = vrsqrt.pop %v5930
    %v5932 = vmul.f32 %v5924, %v5931
    %v5934 = vlaneseq
    %v5935 = vshrl.u32 %v5934, 7
    %v5936 = vsub.s32 0, %v5935
    %v5937 = vrot.slane %v5914, %v5936
    %v5940 = vsel %vm201, %v5932, 0
    %5942 = vmatprep.subr.mxu0 0.0
    %5943 = vmatpush1.msra.mxu0 0.0
    %5944 = vmatprep.subr.mxu0 0.0
    %5945 = vmatpush1.msra.mxu0 0.0
    %5946 = vmatprep.subr.mxu0 0.0
    %5947 = vmatpush1.msra.mxu0 0.0
    %5948 = vmatprep.subr.mxu0 0.0
    %5949 = vmatpush1.msra.mxu0 0.0
    %5950 = vmatprep.subr.mxu0 0.0
    %5951 = vmatpush1.msra.mxu0 0.0
    %5952 = vmatprep.subr.mxu0 0.0
    %5953 = vmatpush1.msra.mxu0 0.0
    %5954 = vmatprep.subr.mxu0 0.0
    %5955 = vmatpush1.msra.mxu0 0.0
    %5956 = vmatprep.subr.mxu0 0.0
    %5957 = vmatpush1.msra.mxu0 0.0
    %5958 = vmatprep.subr.mxu0 0.0
    %5959 = vmatpush1.msra.mxu0 0.0
    %5960 = vmatprep.subr.mxu0 0.0
    %5961 = vmatpush1.msra.mxu0 0.0
    %5962 = vmatprep.subr.mxu0 0.0
    %5963 = vmatpush1.msra.mxu0 0.0
    %5964 = vmatprep.subr.mxu0 0.0
    %5965 = vmatpush1.msra.mxu0 0.0
    %5966 = vmatprep.subr.mxu0 0.0
    %5967 = vmatpush1.msra.mxu0 %v5913
    %5968 = vmatprep.subr.mxu0 0.0
    %5969 = vmatpush1.msra.mxu0 %v5912
    %5970 = vmatprep.subr.mxu0 0.0
    %5971 = vmatpush1.msra.mxu0 %v5911
    %5972 = vmatprep.subr.mxu0 0.0
    %5973 = vmatpush1.msra.mxu0 %v5910
    %5974 = vmatprep.subr.mxu0 0.0
    %5975 = vmatpush2.msra.mxu0 0.0
    %5976 = vmatprep.subr.mxu0 0.0
    %5977 = vmatpush2.msra.mxu0 0.0
    %5978 = vmatprep.subr.mxu0 0.0
    %5979 = vmatpush2.msra.mxu0 0.0
    %5980 = vmatprep.subr.mxu0 0.0
    %5981 = vmatpush2.msra.mxu0 0.0
    %5982 = vmatprep.subr.mxu0 0.0
    %5983 = vmatpush2.msra.mxu0 0.0
    %5984 = vmatprep.subr.mxu0 0.0
    %5985 = vmatpush2.msra.mxu0 0.0
    %5986 = vmatprep.subr.mxu0 0.0
    %5987 = vmatpush2.msra.mxu0 0.0
    %5988 = vmatprep.subr.mxu0 0.0
    %5989 = vmatpush2.msra.mxu0 0.0
    %5990 = vmatprep.subr.mxu0 0.0
    %5991 = vmatpush2.msra.mxu0 0.0
    %5992 = vmatprep.subr.mxu0 0.0
    %5993 = vmatpush2.msra.mxu0 0.0
    %5994 = vmatprep.subr.mxu0 0.0
    %5995 = vmatpush2.msra.mxu0 0.0
    %5996 = vmatprep.subr.mxu0 0.0
    %5997 = vmatpush2.msra.mxu0 0.0
    %5998 = vmatprep.subr.mxu0 0.0
    %5999 = vmatpush2.msra.mxu0 0.0
    %6000 = vmatprep.subr.mxu0 0.0
    %6001 = vmatpush2.msra.mxu0 0.0
    %6002 = vmatprep.subr.mxu0 0.0
    %6003 = vmatpush2.msra.mxu0 0.0
    %6004 = vmatprep.subr.mxu0 0.0
    %6005 = vmatpush2.msra.mxu0 0.0
    %6006 = vmatprep.mubr.f32.mxu0 0.0
    %6007 = vmatmul.mubr.f32.gmra.mxu0 %v5940
    %v6008 = vpop.f32.mrf.mxu0
    %v6009 = vadd.f32 %v5937, %v6008
    %v6010 = vpop.f32.mrf.mxu0
    %6011 = vdwg.mxu0
    %6013 = vrot.lane.b32.xlu0 %v6009, 96
    %v6014 = vpop.permute.xlu0 %6013
    %v6015 = vsel %vm440, %v6009, 0
    %v6017 = vsel %vm440, %v6014, 0
    %6019 = vmatprep.subr.mxu0 0.0
    %6020 = vmatpush1.xpose.msra.mxu0 0.0
    %6021 = vmatprep.subr.mxu0 0.0
    %6022 = vmatpush1.xpose.msra.mxu0 0.0
    %6023 = vmatprep.subr.mxu0 0.0
    %6024 = vmatpush1.xpose.msra.mxu0 0.0
    %6025 = vmatprep.subr.mxu0 0.0
    %6026 = vmatpush1.xpose.msra.mxu0 0.0
    %6027 = vmatprep.subr.mxu0 0.0
    %6028 = vmatpush1.xpose.msra.mxu0 0.0
    %6029 = vmatprep.subr.mxu0 0.0
    %6030 = vmatpush1.xpose.msra.mxu0 0.0
    %6031 = vmatprep.subr.mxu0 0.0
    %6032 = vmatpush1.xpose.msra.mxu0 0.0
    %6033 = vmatprep.subr.mxu0 0.0
    %6034 = vmatpush1.xpose.msra.mxu0 0.0
    %6035 = vmatprep.subr.mxu0 0.0
    %6036 = vmatpush1.xpose.msra.mxu0 0.0
    %6037 = vmatprep.subr.mxu0 0.0
    %6038 = vmatpush1.xpose.msra.mxu0 0.0
    %6039 = vmatprep.subr.mxu0 0.0
    %6040 = vmatpush1.xpose.msra.mxu0 0.0
    %6041 = vmatprep.subr.mxu0 0.0
    %6042 = vmatpush1.xpose.msra.mxu0 0.0
    %6043 = vmatprep.subr.mxu0 0.0
    %6044 = vmatpush1.xpose.msra.mxu0 0.0
    %6045 = vmatprep.subr.mxu0 0.0
    %6046 = vmatpush1.xpose.msra.mxu0 0.0
    %6047 = vmatprep.subr.mxu0 0.0
    %6048 = vmatpush1.xpose.msra.mxu0 0.0
    %6049 = vmatprep.subr.mxu0 0.0
    %6050 = vmatpush1.xpose.msra.mxu0 %v6017
    %6051 = vmatprep.subr.mxu0 0.0
    %6052 = vmatpush2.xpose.msra.mxu0 0.0
    %6053 = vmatprep.subr.mxu0 0.0
    %6054 = vmatpush2.xpose.msra.mxu0 0.0
    %6055 = vmatprep.subr.mxu0 0.0
    %6056 = vmatpush2.xpose.msra.mxu0 0.0
    %6057 = vmatprep.subr.mxu0 0.0
    %6058 = vmatpush2.xpose.msra.mxu0 0.0
    %6059 = vmatprep.subr.mxu0 0.0
    %6060 = vmatpush2.xpose.msra.mxu0 0.0
    %6061 = vmatprep.subr.mxu0 0.0
    %6062 = vmatpush2.xpose.msra.mxu0 0.0
    %6063 = vmatprep.subr.mxu0 0.0
    %6064 = vmatpush2.xpose.msra.mxu0 0.0
    %6065 = vmatprep.subr.mxu0 0.0
    %6066 = vmatpush2.xpose.msra.mxu0 0.0
    %6067 = vmatprep.subr.mxu0 0.0
    %6068 = vmatpush2.xpose.msra.mxu0 0.0
    %6069 = vmatprep.subr.mxu0 0.0
    %6070 = vmatpush2.xpose.msra.mxu0 0.0
    %6071 = vmatprep.subr.mxu0 0.0
    %6072 = vmatpush2.xpose.msra.mxu0 0.0
    %6073 = vmatprep.subr.mxu0 0.0
    %6074 = vmatpush2.xpose.msra.mxu0 0.0
    %6075 = vmatprep.subr.mxu0 0.0
    %6076 = vmatpush2.xpose.msra.mxu0 0.0
    %6077 = vmatprep.subr.mxu0 0.0
    %6078 = vmatpush2.xpose.msra.mxu0 0.0
    %6079 = vmatprep.subr.mxu0 0.0
    %6080 = vmatpush2.xpose.msra.mxu0 0.0
    %6081 = vmatprep.subr.mxu0 0.0
    %6082 = vmatpush2.xpose.msra.mxu0 0.0
    %6083 = vmatprep.mubr.f32.mxu0 0.0
    %6084 = vmatmul.mubr.f32.gmra.mxu0 %v6015
    %v6085 = vpop.f32.mrf.mxu0
    %v6086 = vadd.f32 0.0, %v6085
    %v6087 = vpop.f32.mrf.mxu0
    %6088 = vdwg.mxu0
    %v6089 = vmul.f32 %v6086, %v432
    %v6090 = vsel %vm1933, %v6089, -inf
    %6091 = vmax.xlane.f32.xlu0 %v6090
    %v6092 = vpop.xlane.xlu0 %6091
    %v6093 = vsub.f32 %v6089, %v6092
    %v6094 = vmul.f32 %v6093, 1.442695
    %v6095 = vpow.pop %v6094
    %v6096 = vsel %vm1933, %v6095, 0.0
    %6097 = vadd.xlane.f32.xlu0 %v6096
    %v6098 = vpop.xlane.xlu0 %6097
    %v6099 = vrcp.pop %v6098
    %v6100 = vmul.f32 %v6095, %v6099
    %6101 = vrot.lane.b32.xlu0 %v6009, 64
    %v6102 = vpop.permute.xlu0 %6101
    %v6104 = vsel %vm1947, %v6100, 0
    %v6106 = vsel %vm1951, %v6102, 0
    %6108 = vmatprep.subr.mxu0 0.0
    %6109 = vmatpush1.msra.mxu0 0.0
    %6110 = vmatprep.subr.mxu0 0.0
    %6111 = vmatpush1.msra.mxu0 0.0
    %6112 = vmatprep.subr.mxu0 0.0
    %6113 = vmatpush1.msra.mxu0 0.0
    %6114 = vmatprep.subr.mxu0 0.0
    %6115 = vmatpush1.msra.mxu0 0.0
    %6116 = vmatprep.subr.mxu0 0.0
    %6117 = vmatpush1.msra.mxu0 0.0
    %6118 = vmatprep.subr.mxu0 0.0
    %6119 = vmatpush1.msra.mxu0 0.0
    %6120 = vmatprep.subr.mxu0 0.0
    %6121 = vmatpush1.msra.mxu0 0.0
    %6122 = vmatprep.subr.mxu0 0.0
    %6123 = vmatpush1.msra.mxu0 0.0
    %6124 = vmatprep.subr.mxu0 0.0
    %6125 = vmatpush1.msra.mxu0 0.0
    %6126 = vmatprep.subr.mxu0 0.0
    %6127 = vmatpush1.msra.mxu0 0.0
    %6128 = vmatprep.subr.mxu0 0.0
    %6129 = vmatpush1.msra.mxu0 0.0
    %6130 = vmatprep.subr.mxu0 0.0
    %6131 = vmatpush1.msra.mxu0 0.0
    %6132 = vmatprep.subr.mxu0 0.0
    %6133 = vmatpush1.msra.mxu0 0.0
    %6134 = vmatprep.subr.mxu0 0.0
    %6135 = vmatpush1.msra.mxu0 0.0
    %6136 = vmatprep.subr.mxu0 0.0
    %6137 = vmatpush1.msra.mxu0 0.0
    %6138 = vmatprep.subr.mxu0 0.0
    %6139 = vmatpush1.msra.mxu0 %v6106
    %6140 = vmatprep.subr.mxu0 0.0
    %6141 = vmatpush2.msra.mxu0 0.0
    %6142 = vmatprep.subr.mxu0 0.0
    %6143 = vmatpush2.msra.mxu0 0.0
    %6144 = vmatprep.subr.mxu0 0.0
    %6145 = vmatpush2.msra.mxu0 0.0
    %6146 = vmatprep.subr.mxu0 0.0
    %6147 = vmatpush2.msra.mxu0 0.0
    %6148 = vmatprep.subr.mxu0 0.0
    %6149 = vmatpush2.msra.mxu0 0.0
    %6150 = vmatprep.subr.mxu0 0.0
    %6151 = vmatpush2.msra.mxu0 0.0
    %6152 = vmatprep.subr.mxu0 0.0
    %6153 = vmatpush2.msra.mxu0 0.0
    %6154 = vmatprep.subr.mxu0 0.0
    %6155 = vmatpush2.msra.mxu0 0.0
    %6156 = vmatprep.subr.mxu0 0.0
    %6157 = vmatpush2.msra.mxu0 0.0
    %6158 = vmatprep.subr.mxu0 0.0
    %6159 = vmatpush2.msra.mxu0 0.0
    %6160 = vmatprep.subr.mxu0 0.0
    %6161 = vmatpush2.msra.mxu0 0.0
    %6162 = vmatprep.subr.mxu0 0.0
    %6163 = vmatpush2.msra.mxu0 0.0
    %6164 = vmatprep.subr.mxu0 0.0
    %6165 = vmatpush2.msra.mxu0 0.0
    %6166 = vmatprep.subr.mxu0 0.0
    %6167 = vmatpush2.msra.mxu0 0.0
    %6168 = vmatprep.subr.mxu0 0.0
    %6169 = vmatpush2.msra.mxu0 0.0
    %6170 = vmatprep.subr.mxu0 0.0
    %6171 = vmatpush2.msra.mxu0 0.0
    %6172 = vmatprep.mubr.f32.mxu0 0.0
    %6173 = vmatmul.mubr.f32.gmra.mxu0 %v6104
    %v6174 = vpop.f32.mrf.mxu0
    %v6175 = vadd.f32 0.0, %v6174
    %v6176 = vpop.f32.mrf.mxu0
    %6177 = vdwg.mxu0
    %6178 = vrot.lane.b32.xlu0 %v6009, 120
    %v6179 = vpop.permute.xlu0 %6178
    %6180 = vrot.lane.b32.xlu0 %v6009, 88
    %v6181 = vpop.permute.xlu0 %6180
    %v6182 = vsel %vm440, %v6179, 0
    %v6184 = vsel %vm440, %v6181, 0
    %6186 = vmatprep.subr.mxu0 0.0
    %6187 = vmatpush1.xpose.msra.mxu0 0.0
    %6188 = vmatprep.subr.mxu0 0.0
    %6189 = vmatpush1.xpose.msra.mxu0 0.0
    %6190 = vmatprep.subr.mxu0 0.0
    %6191 = vmatpush1.xpose.msra.mxu0 0.0
    %6192 = vmatprep.subr.mxu0 0.0
    %6193 = vmatpush1.xpose.msra.mxu0 0.0
    %6194 = vmatprep.subr.mxu0 0.0
    %6195 = vmatpush1.xpose.msra.mxu0 0.0
    %6196 = vmatprep.subr.mxu0 0.0
    %6197 = vmatpush1.xpose.msra.mxu0 0.0
    %6198 = vmatprep.subr.mxu0 0.0
    %6199 = vmatpush1.xpose.msra.mxu0 0.0
    %6200 = vmatprep.subr.mxu0 0.0
    %6201 = vmatpush1.xpose.msra.mxu0 0.0
    %6202 = vmatprep.subr.mxu0 0.0
    %6203 = vmatpush1.xpose.msra.mxu0 0.0
    %6204 = vmatprep.subr.mxu0 0.0
    %6205 = vmatpush1.xpose.msra.mxu0 0.0
    %6206 = vmatprep.subr.mxu0 0.0
    %6207 = vmatpush1.xpose.msra.mxu0 0.0
    %6208 = vmatprep.subr.mxu0 0.0
    %6209 = vmatpush1.xpose.msra.mxu0 0.0
    %6210 = vmatprep.subr.mxu0 0.0
    %6211 = vmatpush1.xpose.msra.mxu0 0.0
    %6212 = vmatprep.subr.mxu0 0.0
    %6213 = vmatpush1.xpose.msra.mxu0 0.0
    %6214 = vmatprep.subr.mxu0 0.0
    %6215 = vmatpush1.xpose.msra.mxu0 0.0
    %6216 = vmatprep.subr.mxu0 0.0
    %6217 = vmatpush1.xpose.msra.mxu0 %v6184
    %6218 = vmatprep.subr.mxu0 0.0
    %6219 = vmatpush2.xpose.msra.mxu0 0.0
    %6220 = vmatprep.subr.mxu0 0.0
    %6221 = vmatpush2.xpose.msra.mxu0 0.0
    %6222 = vmatprep.subr.mxu0 0.0
    %6223 = vmatpush2.xpose.msra.mxu0 0.0
    %6224 = vmatprep.subr.mxu0 0.0
    %6225 = vmatpush2.xpose.msra.mxu0 0.0
    %6226 = vmatprep.subr.mxu0 0.0
    %6227 = vmatpush2.xpose.msra.mxu0 0.0
    %6228 = vmatprep.subr.mxu0 0.0
    %6229 = vmatpush2.xpose.msra.mxu0 0.0
    %6230 = vmatprep.subr.mxu0 0.0
    %6231 = vmatpush2.xpose.msra.mxu0 0.0
    %6232 = vmatprep.subr.mxu0 0.0
    %6233 = vmatpush2.xpose.msra.mxu0 0.0
    %6234 = vmatprep.subr.mxu0 0.0
    %6235 = vmatpush2.xpose.msra.mxu0 0.0
    %6236 = vmatprep.subr.mxu0 0.0
    %6237 = vmatpush2.xpose.msra.mxu0 0.0
    %6238 = vmatprep.subr.mxu0 0.0
    %6239 = vmatpush2.xpose.msra.mxu0 0.0
    %6240 = vmatprep.subr.mxu0 0.0
    %6241 = vmatpush2.xpose.msra.mxu0 0.0
    %6242 = vmatprep.subr.mxu0 0.0
    %6243 = vmatpush2.xpose.msra.mxu0 0.0
    %6244 = vmatprep.subr.mxu0 0.0
    %6245 = vmatpush2.xpose.msra.mxu0 0.0
    %6246 = vmatprep.subr.mxu0 0.0
    %6247 = vmatpush2.xpose.msra.mxu0 0.0
    %6248 = vmatprep.subr.mxu0 0.0
    %6249 = vmatpush2.xpose.msra.mxu0 0.0
    %6250 = vmatprep.mubr.f32.mxu0 0.0
    %6251 = vmatmul.mubr.f32.gmra.mxu0 %v6182
    %v6252 = vpop.f32.mrf.mxu0
    %v6253 = vadd.f32 0.0, %v6252
    %v6254 = vpop.f32.mrf.mxu0
    %6255 = vdwg.mxu0
    %v6256 = vmul.f32 %v6253, %v432
    %v6257 = vsel %vm1933, %v6256, -inf
    %6258 = vmax.xlane.f32.xlu0 %v6257
    %v6259 = vpop.xlane.xlu0 %6258
    %v6260 = vsub.f32 %v6256, %v6259
    %v6261 = vmul.f32 %v6260, 1.442695
    %v6262 = vpow.pop %v6261
    %v6263 = vsel %vm1933, %v6262, 0.0
    %6264 = vadd.xlane.f32.xlu0 %v6263
    %v6265 = vpop.xlane.xlu0 %6264
    %v6266 = vrcp.pop %v6265
    %v6267 = vmul.f32 %v6262, %v6266
    %6268 = vrot.lane.b32.xlu0 %v6009, 56
    %v6269 = vpop.permute.xlu0 %6268
    %v6271 = vsel %vm1947, %v6267, 0
    %v6273 = vsel %vm1951, %v6269, 0
    %6275 = vmatprep.subr.mxu0 0.0
    %6276 = vmatpush1.msra.mxu0 0.0
    %6277 = vmatprep.subr.mxu0 0.0
    %6278 = vmatpush1.msra.mxu0 0.0
    %6279 = vmatprep.subr.mxu0 0.0
    %6280 = vmatpush1.msra.mxu0 0.0
    %6281 = vmatprep.subr.mxu0 0.0
    %6282 = vmatpush1.msra.mxu0 0.0
    %6283 = vmatprep.subr.mxu0 0.0
    %6284 = vmatpush1.msra.mxu0 0.0
    %6285 = vmatprep.subr.mxu0 0.0
    %6286 = vmatpush1.msra.mxu0 0.0
    %6287 = vmatprep.subr.mxu0 0.0
    %6288 = vmatpush1.msra.mxu0 0.0
    %6289 = vmatprep.subr.mxu0 0.0
    %6290 = vmatpush1.msra.mxu0 0.0
    %6291 = vmatprep.subr.mxu0 0.0
    %6292 = vmatpush1.msra.mxu0 0.0
    %6293 = vmatprep.subr.mxu0 0.0
    %6294 = vmatpush1.msra.mxu0 0.0
    %6295 = vmatprep.subr.mxu0 0.0
    %6296 = vmatpush1.msra.mxu0 0.0
    %6297 = vmatprep.subr.mxu0 0.0
    %6298 = vmatpush1.msra.mxu0 0.0
    %6299 = vmatprep.subr.mxu0 0.0
    %6300 = vmatpush1.msra.mxu0 0.0
    %6301 = vmatprep.subr.mxu0 0.0
    %6302 = vmatpush1.msra.mxu0 0.0
    %6303 = vmatprep.subr.mxu0 0.0
    %6304 = vmatpush1.msra.mxu0 0.0
    %6305 = vmatprep.subr.mxu0 0.0
    %6306 = vmatpush1.msra.mxu0 %v6273
    %6307 = vmatprep.subr.mxu0 0.0
    %6308 = vmatpush2.msra.mxu0 0.0
    %6309 = vmatprep.subr.mxu0 0.0
    %6310 = vmatpush2.msra.mxu0 0.0
    %6311 = vmatprep.subr.mxu0 0.0
    %6312 = vmatpush2.msra.mxu0 0.0
    %6313 = vmatprep.subr.mxu0 0.0
    %6314 = vmatpush2.msra.mxu0 0.0
    %6315 = vmatprep.subr.mxu0 0.0
    %6316 = vmatpush2.msra.mxu0 0.0
    %6317 = vmatprep.subr.mxu0 0.0
    %6318 = vmatpush2.msra.mxu0 0.0
    %6319 = vmatprep.subr.mxu0 0.0
    %6320 = vmatpush2.msra.mxu0 0.0
    %6321 = vmatprep.subr.mxu0 0.0
    %6322 = vmatpush2.msra.mxu0 0.0
    %6323 = vmatprep.subr.mxu0 0.0
    %6324 = vmatpush2.msra.mxu0 0.0
    %6325 = vmatprep.subr.mxu0 0.0
    %6326 = vmatpush2.msra.mxu0 0.0
    %6327 = vmatprep.subr.mxu0 0.0
    %6328 = vmatpush2.msra.mxu0 0.0
    %6329 = vmatprep.subr.mxu0 0.0
    %6330 = vmatpush2.msra.mxu0 0.0
    %6331 = vmatprep.subr.mxu0 0.0
    %6332 = vmatpush2.msra.mxu0 0.0
    %6333 = vmatprep.subr.mxu0 0.0
    %6334 = vmatpush2.msra.mxu0 0.0
    %6335 = vmatprep.subr.mxu0 0.0
    %6336 = vmatpush2.msra.mxu0 0.0
    %6337 = vmatprep.subr.mxu0 0.0
    %6338 = vmatpush2.msra.mxu0 0.0
    %6339 = vmatprep.mubr.f32.mxu0 0.0
    %6340 = vmatmul.mubr.f32.gmra.mxu0 %v6271
    %v6341 = vpop.f32.mrf.mxu0
    %v6342 = vadd.f32 0.0, %v6341
    %v6343 = vpop.f32.mrf.mxu0
    %6344 = vdwg.mxu0
    %v6346 = vsel %vm440, %v6342, 0
    %6348 = vmatprep.subr.mxu0 0.0
    %6349 = vmatpush1.msra.mxu0 0.0
    %6350 = vmatprep.subr.mxu0 0.0
    %6351 = vmatpush1.msra.mxu0 0.0
    %6352 = vmatprep.subr.mxu0 0.0
    %6353 = vmatpush1.msra.mxu0 0.0
    %6354 = vmatprep.subr.mxu0 0.0
    %6355 = vmatpush1.msra.mxu0 0.0
    %6356 = vmatprep.subr.mxu0 0.0
    %6357 = vmatpush1.msra.mxu0 0.0
    %6358 = vmatprep.subr.mxu0 0.0
    %6359 = vmatpush1.msra.mxu0 0.0
    %6360 = vmatprep.subr.mxu0 0.0
    %6361 = vmatpush1.msra.mxu0 0.0
    %6362 = vmatprep.subr.mxu0 0.0
    %6363 = vmatpush1.msra.mxu0 0.0
    %6364 = vmatprep.subr.mxu0 0.0
    %6365 = vmatpush1.msra.mxu0 0.0
    %6366 = vmatprep.subr.mxu0 0.0
    %6367 = vmatpush1.msra.mxu0 0.0
    %6368 = vmatprep.subr.mxu0 0.0
    %6369 = vmatpush1.msra.mxu0 0.0
    %6370 = vmatprep.subr.mxu0 0.0
    %6371 = vmatpush1.msra.mxu0 0.0
    %6372 = vmatprep.subr.mxu0 0.0
    %6373 = vmatpush1.msra.mxu0 0.0
    %6374 = vmatprep.subr.mxu0 0.0
    %6375 = vmatpush1.msra.mxu0 0.0
    %6376 = vmatprep.subr.mxu0 0.0
    %6377 = vmatpush1.msra.mxu0 0.0
    %6378 = vmatprep.subr.mxu0 0.0
    %6379 = vmatpush1.msra.mxu0 %v5916
    %6380 = vmatprep.subr.mxu0 0.0
    %6381 = vmatpush2.msra.mxu0 0.0
    %6382 = vmatprep.subr.mxu0 0.0
    %6383 = vmatpush2.msra.mxu0 0.0
    %6384 = vmatprep.subr.mxu0 0.0
    %6385 = vmatpush2.msra.mxu0 0.0
    %6386 = vmatprep.subr.mxu0 0.0
    %6387 = vmatpush2.msra.mxu0 0.0
    %6388 = vmatprep.subr.mxu0 0.0
    %6389 = vmatpush2.msra.mxu0 0.0
    %6390 = vmatprep.subr.mxu0 0.0
    %6391 = vmatpush2.msra.mxu0 0.0
    %6392 = vmatprep.subr.mxu0 0.0
    %6393 = vmatpush2.msra.mxu0 0.0
    %6394 = vmatprep.subr.mxu0 0.0
    %6395 = vmatpush2.msra.mxu0 0.0
    %6396 = vmatprep.subr.mxu0 0.0
    %6397 = vmatpush2.msra.mxu0 0.0
    %6398 = vmatprep.subr.mxu0 0.0
    %6399 = vmatpush2.msra.mxu0 0.0
    %6400 = vmatprep.subr.mxu0 0.0
    %6401 = vmatpush2.msra.mxu0 0.0
    %6402 = vmatprep.subr.mxu0 0.0
    %6403 = vmatpush2.msra.mxu0 0.0
    %6404 = vmatprep.subr.mxu0 0.0
    %6405 = vmatpush2.msra.mxu0 0.0
    %6406 = vmatprep.subr.mxu0 0.0
    %6407 = vmatpush2.msra.mxu0 0.0
    %6408 = vmatprep.subr.mxu0 0.0
    %6409 = vmatpush2.msra.mxu0 0.0
    %6410 = vmatprep.subr.mxu0 0.0
    %6411 = vmatpush2.msra.mxu0 0.0
    %6412 = vmatprep.mubr.f32.mxu0 0.0
    %6413 = vmatmul.mubr.f32.gmra.mxu0 %v6346
    %v6414 = vpop.f32.mrf.mxu0
    %v6415 = vadd.f32 0.0, %v6414
    %v6416 = vpop.f32.mrf.mxu0
    %6417 = vdwg.mxu0
    %v6419 = vsel %vm440, %v6175, 0
    %6421 = vmatprep.subr.mxu0 0.0
    %6422 = vmatpush1.msra.mxu0 0.0
    %6423 = vmatprep.subr.mxu0 0.0
    %6424 = vmatpush1.msra.mxu0 0.0
    %6425 = vmatprep.subr.mxu0 0.0
    %6426 = vmatpush1.msra.mxu0 0.0
    %6427 = vmatprep.subr.mxu0 0.0
    %6428 = vmatpush1.msra.mxu0 0.0
    %6429 = vmatprep.subr.mxu0 0.0
    %6430 = vmatpush1.msra.mxu0 0.0
    %6431 = vmatprep.subr.mxu0 0.0
    %6432 = vmatpush1.msra.mxu0 0.0
    %6433 = vmatprep.subr.mxu0 0.0
    %6434 = vmatpush1.msra.mxu0 0.0
    %6435 = vmatprep.subr.mxu0 0.0
    %6436 = vmatpush1.msra.mxu0 0.0
    %6437 = vmatprep.subr.mxu0 0.0
    %6438 = vmatpush1.msra.mxu0 0.0
    %6439 = vmatprep.subr.mxu0 0.0
    %6440 = vmatpush1.msra.mxu0 0.0
    %6441 = vmatprep.subr.mxu0 0.0
    %6442 = vmatpush1.msra.mxu0 0.0
    %6443 = vmatprep.subr.mxu0 0.0
    %6444 = vmatpush1.msra.mxu0 0.0
    %6445 = vmatprep.subr.mxu0 0.0
    %6446 = vmatpush1.msra.mxu0 0.0
    %6447 = vmatprep.subr.mxu0 0.0
    %6448 = vmatpush1.msra.mxu0 0.0
    %6449 = vmatprep.subr.mxu0 0.0
    %6450 = vmatpush1.msra.mxu0 0.0
    %6451 = vmatprep.subr.mxu0 0.0
    %6452 = vmatpush1.msra.mxu0 %v5915
    %6453 = vmatprep.subr.mxu0 0.0
    %6454 = vmatpush2.msra.mxu0 0.0
    %6455 = vmatprep.subr.mxu0 0.0
    %6456 = vmatpush2.msra.mxu0 0.0
    %6457 = vmatprep.subr.mxu0 0.0
    %6458 = vmatpush2.msra.mxu0 0.0
    %6459 = vmatprep.subr.mxu0 0.0
    %6460 = vmatpush2.msra.mxu0 0.0
    %6461 = vmatprep.subr.mxu0 0.0
    %6462 = vmatpush2.msra.mxu0 0.0
    %6463 = vmatprep.subr.mxu0 0.0
    %6464 = vmatpush2.msra.mxu0 0.0
    %6465 = vmatprep.subr.mxu0 0.0
    %6466 = vmatpush2.msra.mxu0 0.0
    %6467 = vmatprep.subr.mxu0 0.0
    %6468 = vmatpush2.msra.mxu0 0.0
    %6469 = vmatprep.subr.mxu0 0.0
    %6470 = vmatpush2.msra.mxu0 0.0
    %6471 = vmatprep.subr.mxu0 0.0
    %6472 = vmatpush2.msra.mxu0 0.0
    %6473 = vmatprep.subr.mxu0 0.0
    %6474 = vmatpush2.msra.mxu0 0.0
    %6475 = vmatprep.subr.mxu0 0.0
    %6476 = vmatpush2.msra.mxu0 0.0
    %6477 = vmatprep.subr.mxu0 0.0
    %6478 = vmatpush2.msra.mxu0 0.0
    %6479 = vmatprep.subr.mxu0 0.0
    %6480 = vmatpush2.msra.mxu0 0.0
    %6481 = vmatprep.subr.mxu0 0.0
    %6482 = vmatpush2.msra.mxu0 0.0
    %6483 = vmatprep.subr.mxu0 0.0
    %6484 = vmatpush2.msra.mxu0 0.0
    %6485 = vmatprep.mubr.f32.mxu0 0.0
    %6486 = vmatmul.mubr.f32.gmra.mxu0 %v6419
    %v6487 = vpop.f32.mrf.mxu0
    %v6488 = vadd.f32 %v6415, %v6487
    %v6489 = vpop.f32.mrf.mxu0
    %6490 = vdwg.mxu0
    %6491 = vrot.lane.b32.xlu0 %v6009, 112
    %v6492 = vpop.permute.xlu0 %6491
    %6493 = vrot.lane.b32.xlu0 %v6009, 80
    %v6494 = vpop.permute.xlu0 %6493
    %v6495 = vsel %vm440, %v6492, 0
    %v6497 = vsel %vm440, %v6494, 0
    %6499 = vmatprep.subr.mxu0 0.0
    %6500 = vmatpush1.xpose.msra.mxu0 0.0
    %6501 = vmatprep.subr.mxu0 0.0
    %6502 = vmatpush1.xpose.msra.mxu0 0.0
    %6503 = vmatprep.subr.mxu0 0.0
    %6504 = vmatpush1.xpose.msra.mxu0 0.0
    %6505 = vmatprep.subr.mxu0 0.0
    %6506 = vmatpush1.xpose.msra.mxu0 0.0
    %6507 = vmatprep.subr.mxu0 0.0
    %6508 = vmatpush1.xpose.msra.mxu0 0.0
    %6509 = vmatprep.subr.mxu0 0.0
    %6510 = vmatpush1.xpose.msra.mxu0 0.0
    %6511 = vmatprep.subr.mxu0 0.0
    %6512 = vmatpush1.xpose.msra.mxu0 0.0
    %6513 = vmatprep.subr.mxu0 0.0
    %6514 = vmatpush1.xpose.msra.mxu0 0.0
    %6515 = vmatprep.subr.mxu0 0.0
    %6516 = vmatpush1.xpose.msra.mxu0 0.0
    %6517 = vmatprep.subr.mxu0 0.0
    %6518 = vmatpush1.xpose.msra.mxu0 0.0
    %6519 = vmatprep.subr.mxu0 0.0
    %6520 = vmatpush1.xpose.msra.mxu0 0.0
    %6521 = vmatprep.subr.mxu0 0.0
    %6522 = vmatpush1.xpose.msra.mxu0 0.0
    %6523 = vmatprep.subr.mxu0 0.0
    %6524 = vmatpush1.xpose.msra.mxu0 0.0
    %6525 = vmatprep.subr.mxu0 0.0
    %6526 = vmatpush1.xpose.msra.mxu0 0.0
    %6527 = vmatprep.subr.mxu0 0.0
    %6528 = vmatpush1.xpose.msra.mxu0 0.0
    %6529 = vmatprep.subr.mxu0 0.0
    %6530 = vmatpush1.xpose.msra.mxu0 %v6497
    %6531 = vmatprep.subr.mxu0 0.0
    %6532 = vmatpush2.xpose.msra.mxu0 0.0
    %6533 = vmatprep.subr.mxu0 0.0
    %6534 = vmatpush2.xpose.msra.mxu0 0.0
    %6535 = vmatprep.subr.mxu0 0.0
    %6536 = vmatpush2.xpose.msra.mxu0 0.0
    %6537 = vmatprep.subr.mxu0 0.0
    %6538 = vmatpush2.xpose.msra.mxu0 0.0
    %6539 = vmatprep.subr.mxu0 0.0
    %6540 = vmatpush2.xpose.msra.mxu0 0.0
    %6541 = vmatprep.subr.mxu0 0.0
    %6542 = vmatpush2.xpose.msra.mxu0 0.0
    %6543 = vmatprep.subr.mxu0 0.0
    %6544 = vmatpush2.xpose.msra.mxu0 0.0
    %6545 = vmatprep.subr.mxu0 0.0
    %6546 = vmatpush2.xpose.msra.mxu0 0.0
    %6547 = vmatprep.subr.mxu0 0.0
    %6548 = vmatpush2.xpose.msra.mxu0 0.0
    %6549 = vmatprep.subr.mxu0 0.0
    %6550 = vmatpush2.xpose.msra.mxu0 0.0
    %6551 = vmatprep.subr.mxu0 0.0
    %6552 = vmatpush2.xpose.msra.mxu0 0.0
    %6553 = vmatprep.subr.mxu0 0.0
    %6554 = vmatpush2.xpose.msra.mxu0 0.0
    %6555 = vmatprep.subr.mxu0 0.0
    %6556 = vmatpush2.xpose.msra.mxu0 0.0
    %6557 = vmatprep.subr.mxu0 0.0
    %6558 = vmatpush2.xpose.msra.mxu0 0.0
    %6559 = vmatprep.subr.mxu0 0.0
    %6560 = vmatpush2.xpose.msra.mxu0 0.0
    %6561 = vmatprep.subr.mxu0 0.0
    %6562 = vmatpush2.xpose.msra.mxu0 0.0
    %6563 = vmatprep.mubr.f32.mxu0 0.0
    %6564 = vmatmul.mubr.f32.gmra.mxu0 %v6495
    %v6565 = vpop.f32.mrf.mxu0
    %v6566 = vadd.f32 0.0, %v6565
    %v6567 = vpop.f32.mrf.mxu0
    %6568 = vdwg.mxu0
    %v6569 = vmul.f32 %v6566, %v432
    %v6570 = vsel %vm1933, %v6569, -inf
    %6571 = vmax.xlane.f32.xlu0 %v6570
    %v6572 = vpop.xlane.xlu0 %6571
    %v6573 = vsub.f32 %v6569, %v6572
    %v6574 = vmul.f32 %v6573, 1.442695
    %v6575 = vpow.pop %v6574
    %v6576 = vsel %vm1933, %v6575, 0.0
    %6577 = vadd.xlane.f32.xlu0 %v6576
    %v6578 = vpop.xlane.xlu0 %6577
    %v6579 = vrcp.pop %v6578
    %v6580 = vmul.f32 %v6575, %v6579
    %6581 = vrot.lane.b32.xlu0 %v6009, 48
    %v6582 = vpop.permute.xlu0 %6581
    %v6584 = vsel %vm1947, %v6580, 0
    %v6586 = vsel %vm1951, %v6582, 0
    %6588 = vmatprep.subr.mxu0 0.0
    %6589 = vmatpush1.msra.mxu0 0.0
    %6590 = vmatprep.subr.mxu0 0.0
    %6591 = vmatpush1.msra.mxu0 0.0
    %6592 = vmatprep.subr.mxu0 0.0
    %6593 = vmatpush1.msra.mxu0 0.0
    %6594 = vmatprep.subr.mxu0 0.0
    %6595 = vmatpush1.msra.mxu0 0.0
    %6596 = vmatprep.subr.mxu0 0.0
    %6597 = vmatpush1.msra.mxu0 0.0
    %6598 = vmatprep.subr.mxu0 0.0
    %6599 = vmatpush1.msra.mxu0 0.0
    %6600 = vmatprep.subr.mxu0 0.0
    %6601 = vmatpush1.msra.mxu0 0.0
    %6602 = vmatprep.subr.mxu0 0.0
    %6603 = vmatpush1.msra.mxu0 0.0
    %6604 = vmatprep.subr.mxu0 0.0
    %6605 = vmatpush1.msra.mxu0 0.0
    %6606 = vmatprep.subr.mxu0 0.0
    %6607 = vmatpush1.msra.mxu0 0.0
    %6608 = vmatprep.subr.mxu0 0.0
    %6609 = vmatpush1.msra.mxu0 0.0
    %6610 = vmatprep.subr.mxu0 0.0
    %6611 = vmatpush1.msra.mxu0 0.0
    %6612 = vmatprep.subr.mxu0 0.0
    %6613 = vmatpush1.msra.mxu0 0.0
    %6614 = vmatprep.subr.mxu0 0.0
    %6615 = vmatpush1.msra.mxu0 0.0
    %6616 = vmatprep.subr.mxu0 0.0
    %6617 = vmatpush1.msra.mxu0 0.0
    %6618 = vmatprep.subr.mxu0 0.0
    %6619 = vmatpush1.msra.mxu0 %v6586
    %6620 = vmatprep.subr.mxu0 0.0
    %6621 = vmatpush2.msra.mxu0 0.0
    %6622 = vmatprep.subr.mxu0 0.0
    %6623 = vmatpush2.msra.mxu0 0.0
    %6624 = vmatprep.subr.mxu0 0.0
    %6625 = vmatpush2.msra.mxu0 0.0
    %6626 = vmatprep.subr.mxu0 0.0
    %6627 = vmatpush2.msra.mxu0 0.0
    %6628 = vmatprep.subr.mxu0 0.0
    %6629 = vmatpush2.msra.mxu0 0.0
    %6630 = vmatprep.subr.mxu0 0.0
    %6631 = vmatpush2.msra.mxu0 0.0
    %6632 = vmatprep.subr.mxu0 0.0
    %6633 = vmatpush2.msra.mxu0 0.0
    %6634 = vmatprep.subr.mxu0 0.0
    %6635 = vmatpush2.msra.mxu0 0.0
    %6636 = vmatprep.subr.mxu0 0.0
    %6637 = vmatpush2.msra.mxu0 0.0
    %6638 = vmatprep.subr.mxu0 0.0
    %6639 = vmatpush2.msra.mxu0 0.0
    %6640 = vmatprep.subr.mxu0 0.0
    %6641 = vmatpush2.msra.mxu0 0.0
    %6642 = vmatprep.subr.mxu0 0.0
    %6643 = vmatpush2.msra.mxu0 0.0
    %6644 = vmatprep.subr.mxu0 0.0
    %6645 = vmatpush2.msra.mxu0 0.0
    %6646 = vmatprep.subr.mxu0 0.0
    %6647 = vmatpush2.msra.mxu0 0.0
    %6648 = vmatprep.subr.mxu0 0.0
    %6649 = vmatpush2.msra.mxu0 0.0
    %6650 = vmatprep.subr.mxu0 0.0
    %6651 = vmatpush2.msra.mxu0 0.0
    %6652 = vmatprep.mubr.f32.mxu0 0.0
    %6653 = vmatmul.mubr.f32.gmra.mxu0 %v6584
    %v6654 = vpop.f32.mrf.mxu0
    %v6655 = vadd.f32 0.0, %v6654
    %v6656 = vpop.f32.mrf.mxu0
    %6657 = vdwg.mxu0
    %v6659 = vsel %vm440, %v6655, 0
    %6661 = vmatprep.subr.mxu0 0.0
    %6662 = vmatpush1.msra.mxu0 0.0
    %6663 = vmatprep.subr.mxu0 0.0
    %6664 = vmatpush1.msra.mxu0 0.0
    %6665 = vmatprep.subr.mxu0 0.0
    %6666 = vmatpush1.msra.mxu0 0.0
    %6667 = vmatprep.subr.mxu0 0.0
    %6668 = vmatpush1.msra.mxu0 0.0
    %6669 = vmatprep.subr.mxu0 0.0
    %6670 = vmatpush1.msra.mxu0 0.0
    %6671 = vmatprep.subr.mxu0 0.0
    %6672 = vmatpush1.msra.mxu0 0.0
    %6673 = vmatprep.subr.mxu0 0.0
    %6674 = vmatpush1.msra.mxu0 0.0
    %6675 = vmatprep.subr.mxu0 0.0
    %6676 = vmatpush1.msra.mxu0 0.0
    %6677 = vmatprep.subr.mxu0 0.0
    %6678 = vmatpush1.msra.mxu0 0.0
    %6679 = vmatprep.subr.mxu0 0.0
    %6680 = vmatpush1.msra.mxu0 0.0
    %6681 = vmatprep.subr.mxu0 0.0
    %6682 = vmatpush1.msra.mxu0 0.0
    %6683 = vmatprep.subr.mxu0 0.0
    %6684 = vmatpush1.msra.mxu0 0.0
    %6685 = vmatprep.subr.mxu0 0.0
    %6686 = vmatpush1.msra.mxu0 0.0
    %6687 = vmatprep.subr.mxu0 0.0
    %6688 = vmatpush1.msra.mxu0 0.0
    %6689 = vmatprep.subr.mxu0 0.0
    %6690 = vmatpush1.msra.mxu0 0.0
    %6691 = vmatprep.subr.mxu0 0.0
    %6692 = vmatpush1.msra.mxu0 %v5917
    %6693 = vmatprep.subr.mxu0 0.0
    %6694 = vmatpush2.msra.mxu0 0.0
    %6695 = vmatprep.subr.mxu0 0.0
    %6696 = vmatpush2.msra.mxu0 0.0
    %6697 = vmatprep.subr.mxu0 0.0
    %6698 = vmatpush2.msra.mxu0 0.0
    %6699 = vmatprep.subr.mxu0 0.0
    %6700 = vmatpush2.msra.mxu0 0.0
    %6701 = vmatprep.subr.mxu0 0.0
    %6702 = vmatpush2.msra.mxu0 0.0
    %6703 = vmatprep.subr.mxu0 0.0
    %6704 = vmatpush2.msra.mxu0 0.0
    %6705 = vmatprep.subr.mxu0 0.0
    %6706 = vmatpush2.msra.mxu0 0.0
    %6707 = vmatprep.subr.mxu0 0.0
    %6708 = vmatpush2.msra.mxu0 0.0
    %6709 = vmatprep.subr.mxu0 0.0
    %6710 = vmatpush2.msra.mxu0 0.0
    %6711 = vmatprep.subr.mxu0 0.0
    %6712 = vmatpush2.msra.mxu0 0.0
    %6713 = vmatprep.subr.mxu0 0.0
    %6714 = vmatpush2.msra.mxu0 0.0
    %6715 = vmatprep.subr.mxu0 0.0
    %6716 = vmatpush2.msra.mxu0 0.0
    %6717 = vmatprep.subr.mxu0 0.0
    %6718 = vmatpush2.msra.mxu0 0.0
    %6719 = vmatprep.subr.mxu0 0.0
    %6720 = vmatpush2.msra.mxu0 0.0
    %6721 = vmatprep.subr.mxu0 0.0
    %6722 = vmatpush2.msra.mxu0 0.0
    %6723 = vmatprep.subr.mxu0 0.0
    %6724 = vmatpush2.msra.mxu0 0.0
    %6725 = vmatprep.mubr.f32.mxu0 0.0
    %6726 = vmatmul.mubr.f32.gmra.mxu0 %v6659
    %v6727 = vpop.f32.mrf.mxu0
    %v6728 = vadd.f32 0.0, %v6727
    %v6729 = vpop.f32.mrf.mxu0
    %6730 = vdwg.mxu0
    %v6731 = vadd.f32 %v6488, %v6728
    %6732 = vrot.lane.b32.xlu0 %v6009, 104
    %v6733 = vpop.permute.xlu0 %6732
    %6734 = vrot.lane.b32.xlu0 %v6009, 72
    %v6735 = vpop.permute.xlu0 %6734
    %v6736 = vsel %vm440, %v6733, 0
    %v6738 = vsel %vm440, %v6735, 0
    %6740 = vmatprep.subr.mxu0 0.0
    %6741 = vmatpush1.xpose.msra.mxu0 0.0
    %6742 = vmatprep.subr.mxu0 0.0
    %6743 = vmatpush1.xpose.msra.mxu0 0.0
    %6744 = vmatprep.subr.mxu0 0.0
    %6745 = vmatpush1.xpose.msra.mxu0 0.0
    %6746 = vmatprep.subr.mxu0 0.0
    %6747 = vmatpush1.xpose.msra.mxu0 0.0
    %6748 = vmatprep.subr.mxu0 0.0
    %6749 = vmatpush1.xpose.msra.mxu0 0.0
    %6750 = vmatprep.subr.mxu0 0.0
    %6751 = vmatpush1.xpose.msra.mxu0 0.0
    %6752 = vmatprep.subr.mxu0 0.0
    %6753 = vmatpush1.xpose.msra.mxu0 0.0
    %6754 = vmatprep.subr.mxu0 0.0
    %6755 = vmatpush1.xpose.msra.mxu0 0.0
    %6756 = vmatprep.subr.mxu0 0.0
    %6757 = vmatpush1.xpose.msra.mxu0 0.0
    %6758 = vmatprep.subr.mxu0 0.0
    %6759 = vmatpush1.xpose.msra.mxu0 0.0
    %6760 = vmatprep.subr.mxu0 0.0
    %6761 = vmatpush1.xpose.msra.mxu0 0.0
    %6762 = vmatprep.subr.mxu0 0.0
    %6763 = vmatpush1.xpose.msra.mxu0 0.0
    %6764 = vmatprep.subr.mxu0 0.0
    %6765 = vmatpush1.xpose.msra.mxu0 0.0
    %6766 = vmatprep.subr.mxu0 0.0
    %6767 = vmatpush1.xpose.msra.mxu0 0.0
    %6768 = vmatprep.subr.mxu0 0.0
    %6769 = vmatpush1.xpose.msra.mxu0 0.0
    %6770 = vmatprep.subr.mxu0 0.0
    %6771 = vmatpush1.xpose.msra.mxu0 %v6738
    %6772 = vmatprep.subr.mxu0 0.0
    %6773 = vmatpush2.xpose.msra.mxu0 0.0
    %6774 = vmatprep.subr.mxu0 0.0
    %6775 = vmatpush2.xpose.msra.mxu0 0.0
    %6776 = vmatprep.subr.mxu0 0.0
    %6777 = vmatpush2.xpose.msra.mxu0 0.0
    %6778 = vmatprep.subr.mxu0 0.0
    %6779 = vmatpush2.xpose.msra.mxu0 0.0
    %6780 = vmatprep.subr.mxu0 0.0
    %6781 = vmatpush2.xpose.msra.mxu0 0.0
    %6782 = vmatprep.subr.mxu0 0.0
    %6783 = vmatpush2.xpose.msra.mxu0 0.0
    %6784 = vmatprep.subr.mxu0 0.0
    %6785 = vmatpush2.xpose.msra.mxu0 0.0
    %6786 = vmatprep.subr.mxu0 0.0
    %6787 = vmatpush2.xpose.msra.mxu0 0.0
    %6788 = vmatprep.subr.mxu0 0.0
    %6789 = vmatpush2.xpose.msra.mxu0 0.0
    %6790 = vmatprep.subr.mxu0 0.0
    %6791 = vmatpush2.xpose.msra.mxu0 0.0
    %6792 = vmatprep.subr.mxu0 0.0
    %6793 = vmatpush2.xpose.msra.mxu0 0.0
    %6794 = vmatprep.subr.mxu0 0.0
    %6795 = vmatpush2.xpose.msra.mxu0 0.0
    %6796 = vmatprep.subr.mxu0 0.0
    %6797 = vmatpush2.xpose.msra.mxu0 0.0
    %6798 = vmatprep.subr.mxu0 0.0
    %6799 = vmatpush2.xpose.msra.mxu0 0.0
    %6800 = vmatprep.subr.mxu0 0.0
    %6801 = vmatpush2.xpose.msra.mxu0 0.0
    %6802 = vmatprep.subr.mxu0 0.0
    %6803 = vmatpush2.xpose.msra.mxu0 0.0
    %6804 = vmatprep.mubr.f32.mxu0 0.0
    %6805 = vmatmul.mubr.f32.gmra.mxu0 %v6736
    %v6806 = vpop.f32.mrf.mxu0
    %v6807 = vadd.f32 0.0, %v6806
    %v6808 = vpop.f32.mrf.mxu0
    %6809 = vdwg.mxu0
    %v6810 = vmul.f32 %v6807, %v432
    %v6811 = vsel %vm1933, %v6810, -inf
    %6812 = vmax.xlane.f32.xlu0 %v6811
    %v6813 = vpop.xlane.xlu0 %6812
    %v6814 = vsub.f32 %v6810, %v6813
    %v6815 = vmul.f32 %v6814, 1.442695
    %v6816 = vpow.pop %v6815
    %v6817 = vsel %vm1933, %v6816, 0.0
    %6818 = vadd.xlane.f32.xlu0 %v6817
    %v6819 = vpop.xlane.xlu0 %6818
    %v6820 = vrcp.pop %v6819
    %v6821 = vmul.f32 %v6816, %v6820
    %6822 = vrot.lane.b32.xlu0 %v6009, 40
    %v6823 = vpop.permute.xlu0 %6822
    %v6825 = vsel %vm1947, %v6821, 0
    %v6827 = vsel %vm1951, %v6823, 0
    %6829 = vmatprep.subr.mxu0 0.0
    %6830 = vmatpush1.msra.mxu0 0.0
    %6831 = vmatprep.subr.mxu0 0.0
    %6832 = vmatpush1.msra.mxu0 0.0
    %6833 = vmatprep.subr.mxu0 0.0
    %6834 = vmatpush1.msra.mxu0 0.0
    %6835 = vmatprep.subr.mxu0 0.0
    %6836 = vmatpush1.msra.mxu0 0.0
    %6837 = vmatprep.subr.mxu0 0.0
    %6838 = vmatpush1.msra.mxu0 0.0
    %6839 = vmatprep.subr.mxu0 0.0
    %6840 = vmatpush1.msra.mxu0 0.0
    %6841 = vmatprep.subr.mxu0 0.0
    %6842 = vmatpush1.msra.mxu0 0.0
    %6843 = vmatprep.subr.mxu0 0.0
    %6844 = vmatpush1.msra.mxu0 0.0
    %6845 = vmatprep.subr.mxu0 0.0
    %6846 = vmatpush1.msra.mxu0 0.0
    %6847 = vmatprep.subr.mxu0 0.0
    %6848 = vmatpush1.msra.mxu0 0.0
    %6849 = vmatprep.subr.mxu0 0.0
    %6850 = vmatpush1.msra.mxu0 0.0
    %6851 = vmatprep.subr.mxu0 0.0
    %6852 = vmatpush1.msra.mxu0 0.0
    %6853 = vmatprep.subr.mxu0 0.0
    %6854 = vmatpush1.msra.mxu0 0.0
    %6855 = vmatprep.subr.mxu0 0.0
    %6856 = vmatpush1.msra.mxu0 0.0
    %6857 = vmatprep.subr.mxu0 0.0
    %6858 = vmatpush1.msra.mxu0 0.0
    %6859 = vmatprep.subr.mxu0 0.0
    %6860 = vmatpush1.msra.mxu0 %v6827
    %6861 = vmatprep.subr.mxu0 0.0
    %6862 = vmatpush2.msra.mxu0 0.0
    %6863 = vmatprep.subr.mxu0 0.0
    %6864 = vmatpush2.msra.mxu0 0.0
    %6865 = vmatprep.subr.mxu0 0.0
    %6866 = vmatpush2.msra.mxu0 0.0
    %6867 = vmatprep.subr.mxu0 0.0
    %6868 = vmatpush2.msra.mxu0 0.0
    %6869 = vmatprep.subr.mxu0 0.0
    %6870 = vmatpush2.msra.mxu0 0.0
    %6871 = vmatprep.subr.mxu0 0.0
    %6872 = vmatpush2.msra.mxu0 0.0
    %6873 = vmatprep.subr.mxu0 0.0
    %6874 = vmatpush2.msra.mxu0 0.0
    %6875 = vmatprep.subr.mxu0 0.0
    %6876 = vmatpush2.msra.mxu0 0.0
    %6877 = vmatprep.subr.mxu0 0.0
    %6878 = vmatpush2.msra.mxu0 0.0
    %6879 = vmatprep.subr.mxu0 0.0
    %6880 = vmatpush2.msra.mxu0 0.0
    %6881 = vmatprep.subr.mxu0 0.0
    %6882 = vmatpush2.msra.mxu0 0.0
    %6883 = vmatprep.subr.mxu0 0.0
    %6884 = vmatpush2.msra.mxu0 0.0
    %6885 = vmatprep.subr.mxu0 0.0
    %6886 = vmatpush2.msra.mxu0 0.0
    %6887 = vmatprep.subr.mxu0 0.0
    %6888 = vmatpush2.msra.mxu0 0.0
    %6889 = vmatprep.subr.mxu0 0.0
    %6890 = vmatpush2.msra.mxu0 0.0
    %6891 = vmatprep.subr.mxu0 0.0
    %6892 = vmatpush2.msra.mxu0 0.0
    %6893 = vmatprep.mubr.f32.mxu0 0.0
    %6894 = vmatmul.mubr.f32.gmra.mxu0 %v6825
    %v6895 = vpop.f32.mrf.mxu0
    %v6896 = vadd.f32 0.0, %v6895
    %v6897 = vpop.f32.mrf.mxu0
    %6898 = vdwg.mxu0
    %v6900 = vsel %vm440, %v6896, 0
    %6902 = vmatprep.subr.mxu0 0.0
    %6903 = vmatpush1.msra.mxu0 0.0
    %6904 = vmatprep.subr.mxu0 0.0
    %6905 = vmatpush1.msra.mxu0 0.0
    %6906 = vmatprep.subr.mxu0 0.0
    %6907 = vmatpush1.msra.mxu0 0.0
    %6908 = vmatprep.subr.mxu0 0.0
    %6909 = vmatpush1.msra.mxu0 0.0
    %6910 = vmatprep.subr.mxu0 0.0
    %6911 = vmatpush1.msra.mxu0 0.0
    %6912 = vmatprep.subr.mxu0 0.0
    %6913 = vmatpush1.msra.mxu0 0.0
    %6914 = vmatprep.subr.mxu0 0.0
    %6915 = vmatpush1.msra.mxu0 0.0
    %6916 = vmatprep.subr.mxu0 0.0
    %6917 = vmatpush1.msra.mxu0 0.0
    %6918 = vmatprep.subr.mxu0 0.0
    %6919 = vmatpush1.msra.mxu0 0.0
    %6920 = vmatprep.subr.mxu0 0.0
    %6921 = vmatpush1.msra.mxu0 0.0
    %6922 = vmatprep.subr.mxu0 0.0
    %6923 = vmatpush1.msra.mxu0 0.0
    %6924 = vmatprep.subr.mxu0 0.0
    %6925 = vmatpush1.msra.mxu0 0.0
    %6926 = vmatprep.subr.mxu0 0.0
    %6927 = vmatpush1.msra.mxu0 0.0
    %6928 = vmatprep.subr.mxu0 0.0
    %6929 = vmatpush1.msra.mxu0 0.0
    %6930 = vmatprep.subr.mxu0 0.0
    %6931 = vmatpush1.msra.mxu0 0.0
    %6932 = vmatprep.subr.mxu0 0.0
    %6933 = vmatpush1.msra.mxu0 %v5918
    %6934 = vmatprep.subr.mxu0 0.0
    %6935 = vmatpush2.msra.mxu0 0.0
    %6936 = vmatprep.subr.mxu0 0.0
    %6937 = vmatpush2.msra.mxu0 0.0
    %6938 = vmatprep.subr.mxu0 0.0
    %6939 = vmatpush2.msra.mxu0 0.0
    %6940 = vmatprep.subr.mxu0 0.0
    %6941 = vmatpush2.msra.mxu0 0.0
    %6942 = vmatprep.subr.mxu0 0.0
    %6943 = vmatpush2.msra.mxu0 0.0
    %6944 = vmatprep.subr.mxu0 0.0
    %6945 = vmatpush2.msra.mxu0 0.0
    %6946 = vmatprep.subr.mxu0 0.0
    %6947 = vmatpush2.msra.mxu0 0.0
    %6948 = vmatprep.subr.mxu0 0.0
    %6949 = vmatpush2.msra.mxu0 0.0
    %6950 = vmatprep.subr.mxu0 0.0
    %6951 = vmatpush2.msra.mxu0 0.0
    %6952 = vmatprep.subr.mxu0 0.0
    %6953 = vmatpush2.msra.mxu0 0.0
    %6954 = vmatprep.subr.mxu0 0.0
    %6955 = vmatpush2.msra.mxu0 0.0
    %6956 = vmatprep.subr.mxu0 0.0
    %6957 = vmatpush2.msra.mxu0 0.0
    %6958 = vmatprep.subr.mxu0 0.0
    %6959 = vmatpush2.msra.mxu0 0.0
    %6960 = vmatprep.subr.mxu0 0.0
    %6961 = vmatpush2.msra.mxu0 0.0
    %6962 = vmatprep.subr.mxu0 0.0
    %6963 = vmatpush2.msra.mxu0 0.0
    %6964 = vmatprep.subr.mxu0 0.0
    %6965 = vmatpush2.msra.mxu0 0.0
    %6966 = vmatprep.mubr.f32.mxu0 0.0
    %6967 = vmatmul.mubr.f32.gmra.mxu0 %v6900
    %v6968 = vpop.f32.mrf.mxu0
    %v6969 = vadd.f32 0.0, %v6968
    %v6970 = vpop.f32.mrf.mxu0
    %6971 = vdwg.mxu0
    %v6972 = vadd.f32 %v6731, %v6969
    %v6974 = vlaneseq
    %v6975 = vshrl.u32 %v6974, 7
    %v6976 = vsub.s32 0, %v6975
    %v6977 = vrot.slane %v5919, %v6976
    %v6979 = vadd.f32 %v6972, %v6977
    %v6980 = vadd.f32 %v6979, %v5907
    %v6981 = vld [vmem:[%s20] sm:$0x1]
    %v6982 = vld [vmem:[%s19] sm:$0xff]
    %v6983 = vld [vmem:[%s19 + $0x8] sm:$0xff]
    %v6984 = vld [vmem:[%s19 + $0x10] sm:$0xff]
    %v6985 = vld [vmem:[%s19 + $0x18] sm:$0xff]
    %v6987 = vsel %vm201, %v5734, 0
    %6989 = vmatprep.subr.mxu0 0.0
    %6990 = vmatpush1.msra.mxu0 0.0
    %6991 = vmatprep.subr.mxu0 0.0
    %6992 = vmatpush1.msra.mxu0 0.0
    %6993 = vmatprep.subr.mxu0 0.0
    %6994 = vmatpush1.msra.mxu0 0.0
    %6995 = vmatprep.subr.mxu0 0.0
    %6996 = vmatpush1.msra.mxu0 0.0
    %6997 = vmatprep.subr.mxu0 0.0
    %6998 = vmatpush1.msra.mxu0 0.0
    %6999 = vmatprep.subr.mxu0 0.0
    %7000 = vmatpush1.msra.mxu0 0.0
    %7001 = vmatprep.subr.mxu0 0.0
    %7002 = vmatpush1.msra.mxu0 0.0
    %7003 = vmatprep.subr.mxu0 0.0
    %7004 = vmatpush1.msra.mxu0 0.0
    %7005 = vmatprep.subr.mxu0 0.0
    %7006 = vmatpush1.msra.mxu0 0.0
    %7007 = vmatprep.subr.mxu0 0.0
    %7008 = vmatpush1.msra.mxu0 0.0
    %7009 = vmatprep.subr.mxu0 0.0
    %7010 = vmatpush1.msra.mxu0 0.0
    %7011 = vmatprep.subr.mxu0 0.0
    %7012 = vmatpush1.msra.mxu0 0.0
    %7013 = vmatprep.subr.mxu0 0.0
    %7014 = vmatpush1.msra.mxu0 %v6985
    %7015 = vmatprep.subr.mxu0 0.0
    %7016 = vmatpush1.msra.mxu0 %v6984
    %7017 = vmatprep.subr.mxu0 0.0
    %7018 = vmatpush1.msra.mxu0 %v6983
    %7019 = vmatprep.subr.mxu0 0.0
    %7020 = vmatpush1.msra.mxu0 %v6982
    %7021 = vmatprep.subr.mxu0 0.0
    %7022 = vmatpush2.msra.mxu0 0.0
    %7023 = vmatprep.subr.mxu0 0.0
    %7024 = vmatpush2.msra.mxu0 0.0
    %7025 = vmatprep.subr.mxu0 0.0
    %7026 = vmatpush2.msra.mxu0 0.0
    %7027 = vmatprep.subr.mxu0 0.0
    %7028 = vmatpush2.msra.mxu0 0.0
    %7029 = vmatprep.subr.mxu0 0.0
    %7030 = vmatpush2.msra.mxu0 0.0
    %7031 = vmatprep.subr.mxu0 0.0
    %7032 = vmatpush2.msra.mxu0 0.0
    %7033 = vmatprep.subr.mxu0 0.0
    %7034 = vmatpush2.msra.mxu0 0.0
    %7035 = vmatprep.subr.mxu0 0.0
    %7036 = vmatpush2.msra.mxu0 0.0
    %7037 = vmatprep.subr.mxu0 0.0
    %7038 = vmatpush2.msra.mxu0 0.0
    %7039 = vmatprep.subr.mxu0 0.0
    %7040 = vmatpush2.msra.mxu0 0.0
    %7041 = vmatprep.subr.mxu0 0.0
    %7042 = vmatpush2.msra.mxu0 0.0
    %7043 = vmatprep.subr.mxu0 0.0
    %7044 = vmatpush2.msra.mxu0 0.0
    %7045 = vmatprep.subr.mxu0 0.0
    %7046 = vmatpush2.msra.mxu0 0.0
    %7047 = vmatprep.subr.mxu0 0.0
    %7048 = vmatpush2.msra.mxu0 0.0
    %7049 = vmatprep.subr.mxu0 0.0
    %7050 = vmatpush2.msra.mxu0 0.0
    %7051 = vmatprep.subr.mxu0 0.0
    %7052 = vmatpush2.msra.mxu0 0.0
    %7053 = vmatprep.mubr.f32.mxu0 0.0
    %7054 = vmatmul.mubr.f32.gmra.mxu0 %v6987
    %v7055 = vpop.f32.mrf.mxu0
    %v7056 = vadd.f32 0.0, %v7055
    %v7057 = vpop.f32.mrf.mxu0
    %7058 = vdwg.mxu0
    %v7059 = vadd.f32 %v6981, %v7056
    %v7060 = vld [vmem:[%s19 + $0x20] sm:$0xff]
    %v7061 = vld [vmem:[%s19 + $0x28] sm:$0xff]
    %v7062 = vld [vmem:[%s19 + $0x30] sm:$0xff]
    %v7063 = vld [vmem:[%s19 + $0x38] sm:$0xff]
    %v7064 = vrot.slane %v5734, 1
    %v7065 = vsel %vm201, %v7064, 0
    %7067 = vmatprep.subr.mxu0 0.0
    %7068 = vmatpush1.msra.mxu0 0.0
    %7069 = vmatprep.subr.mxu0 0.0
    %7070 = vmatpush1.msra.mxu0 0.0
    %7071 = vmatprep.subr.mxu0 0.0
    %7072 = vmatpush1.msra.mxu0 0.0
    %7073 = vmatprep.subr.mxu0 0.0
    %7074 = vmatpush1.msra.mxu0 0.0
    %7075 = vmatprep.subr.mxu0 0.0
    %7076 = vmatpush1.msra.mxu0 0.0
    %7077 = vmatprep.subr.mxu0 0.0
    %7078 = vmatpush1.msra.mxu0 0.0
    %7079 = vmatprep.subr.mxu0 0.0
    %7080 = vmatpush1.msra.mxu0 0.0
    %7081 = vmatprep.subr.mxu0 0.0
    %7082 = vmatpush1.msra.mxu0 0.0
    %7083 = vmatprep.subr.mxu0 0.0
    %7084 = vmatpush1.msra.mxu0 0.0
    %7085 = vmatprep.subr.mxu0 0.0
    %7086 = vmatpush1.msra.mxu0 0.0
    %7087 = vmatprep.subr.mxu0 0.0
    %7088 = vmatpush1.msra.mxu0 0.0
    %7089 = vmatprep.subr.mxu0 0.0
    %7090 = vmatpush1.msra.mxu0 0.0
    %7091 = vmatprep.subr.mxu0 0.0
    %7092 = vmatpush1.msra.mxu0 %v7063
    %7093 = vmatprep.subr.mxu0 0.0
    %7094 = vmatpush1.msra.mxu0 %v7062
    %7095 = vmatprep.subr.mxu0 0.0
    %7096 = vmatpush1.msra.mxu0 %v7061
    %7097 = vmatprep.subr.mxu0 0.0
    %7098 = vmatpush1.msra.mxu0 %v7060
    %7099 = vmatprep.subr.mxu0 0.0
    %7100 = vmatpush2.msra.mxu0 0.0
    %7101 = vmatprep.subr.mxu0 0.0
    %7102 = vmatpush2.msra.mxu0 0.0
    %7103 = vmatprep.subr.mxu0 0.0
    %7104 = vmatpush2.msra.mxu0 0.0
    %7105 = vmatprep.subr.mxu0 0.0
    %7106 = vmatpush2.msra.mxu0 0.0
    %7107 = vmatprep.subr.mxu0 0.0
    %7108 = vmatpush2.msra.mxu0 0.0
    %7109 = vmatprep.subr.mxu0 0.0
    %7110 = vmatpush2.msra.mxu0 0.0
    %7111 = vmatprep.subr.mxu0 0.0
    %7112 = vmatpush2.msra.mxu0 0.0
    %7113 = vmatprep.subr.mxu0 0.0
    %7114 = vmatpush2.msra.mxu0 0.0
    %7115 = vmatprep.subr.mxu0 0.0
    %7116 = vmatpush2.msra.mxu0 0.0
    %7117 = vmatprep.subr.mxu0 0.0
    %7118 = vmatpush2.msra.mxu0 0.0
    %7119 = vmatprep.subr.mxu0 0.0
    %7120 = vmatpush2.msra.mxu0 0.0
    %7121 = vmatprep.subr.mxu0 0.0
    %7122 = vmatpush2.msra.mxu0 0.0
    %7123 = vmatprep.subr.mxu0 0.0
    %7124 = vmatpush2.msra.mxu0 0.0
    %7125 = vmatprep.subr.mxu0 0.0
    %7126 = vmatpush2.msra.mxu0 0.0
    %7127 = vmatprep.subr.mxu0 0.0
    %7128 = vmatpush2.msra.mxu0 0.0
    %7129 = vmatprep.subr.mxu0 0.0
    %7130 = vmatpush2.msra.mxu0 0.0
    %7131 = vmatprep.mubr.f32.mxu0 0.0
    %7132 = vmatmul.mubr.f32.gmra.mxu0 %v7065
    %v7133 = vpop.f32.mrf.mxu0
    %v7134 = vadd.f32 0.0, %v7133
    %v7135 = vpop.f32.mrf.mxu0
    %7136 = vdwg.mxu0
    %v7137 = vadd.f32 %v7059, %v7134
    %v7138 = vld [vmem:[%s19 + $0x40] sm:$0xff]
    %v7139 = vld [vmem:[%s19 + $0x48] sm:$0xff]
    %v7140 = vld [vmem:[%s19 + $0x50] sm:$0xff]
    %v7141 = vld [vmem:[%s19 + $0x58] sm:$0xff]
    %v7142 = vrot.slane %v5734, 2
    %v7143 = vsel %vm201, %v7142, 0
    %7145 = vmatprep.subr.mxu0 0.0
    %7146 = vmatpush1.msra.mxu0 0.0
    %7147 = vmatprep.subr.mxu0 0.0
    %7148 = vmatpush1.msra.mxu0 0.0
    %7149 = vmatprep.subr.mxu0 0.0
    %7150 = vmatpush1.msra.mxu0 0.0
    %7151 = vmatprep.subr.mxu0 0.0
    %7152 = vmatpush1.msra.mxu0 0.0
    %7153 = vmatprep.subr.mxu0 0.0
    %7154 = vmatpush1.msra.mxu0 0.0
    %7155 = vmatprep.subr.mxu0 0.0
    %7156 = vmatpush1.msra.mxu0 0.0
    %7157 = vmatprep.subr.mxu0 0.0
    %7158 = vmatpush1.msra.mxu0 0.0
    %7159 = vmatprep.subr.mxu0 0.0
    %7160 = vmatpush1.msra.mxu0 0.0
    %7161 = vmatprep.subr.mxu0 0.0
    %7162 = vmatpush1.msra.mxu0 0.0
    %7163 = vmatprep.subr.mxu0 0.0
    %7164 = vmatpush1.msra.mxu0 0.0
    %7165 = vmatprep.subr.mxu0 0.0
    %7166 = vmatpush1.msra.mxu0 0.0
    %7167 = vmatprep.subr.mxu0 0.0
    %7168 = vmatpush1.msra.mxu0 0.0
    %7169 = vmatprep.subr.mxu0 0.0
    %7170 = vmatpush1.msra.mxu0 %v7141
    %7171 = vmatprep.subr.mxu0 0.0
    %7172 = vmatpush1.msra.mxu0 %v7140
    %7173 = vmatprep.subr.mxu0 0.0
    %7174 = vmatpush1.msra.mxu0 %v7139
    %7175 = vmatprep.subr.mxu0 0.0
    %7176 = vmatpush1.msra.mxu0 %v7138
    %7177 = vmatprep.subr.mxu0 0.0
    %7178 = vmatpush2.msra.mxu0 0.0
    %7179 = vmatprep.subr.mxu0 0.0
    %7180 = vmatpush2.msra.mxu0 0.0
    %7181 = vmatprep.subr.mxu0 0.0
    %7182 = vmatpush2.msra.mxu0 0.0
    %7183 = vmatprep.subr.mxu0 0.0
    %7184 = vmatpush2.msra.mxu0 0.0
    %7185 = vmatprep.subr.mxu0 0.0
    %7186 = vmatpush2.msra.mxu0 0.0
    %7187 = vmatprep.subr.mxu0 0.0
    %7188 = vmatpush2.msra.mxu0 0.0
    %7189 = vmatprep.subr.mxu0 0.0
    %7190 = vmatpush2.msra.mxu0 0.0
    %7191 = vmatprep.subr.mxu0 0.0
    %7192 = vmatpush2.msra.mxu0 0.0
    %7193 = vmatprep.subr.mxu0 0.0
    %7194 = vmatpush2.msra.mxu0 0.0
    %7195 = vmatprep.subr.mxu0 0.0
    %7196 = vmatpush2.msra.mxu0 0.0
    %7197 = vmatprep.subr.mxu0 0.0
    %7198 = vmatpush2.msra.mxu0 0.0
    %7199 = vmatprep.subr.mxu0 0.0
    %7200 = vmatpush2.msra.mxu0 0.0
    %7201 = vmatprep.subr.mxu0 0.0
    %7202 = vmatpush2.msra.mxu0 0.0
    %7203 = vmatprep.subr.mxu0 0.0
    %7204 = vmatpush2.msra.mxu0 0.0
    %7205 = vmatprep.subr.mxu0 0.0
    %7206 = vmatpush2.msra.mxu0 0.0
    %7207 = vmatprep.subr.mxu0 0.0
    %7208 = vmatpush2.msra.mxu0 0.0
    %7209 = vmatprep.mubr.f32.mxu0 0.0
    %7210 = vmatmul.mubr.f32.gmra.mxu0 %v7143
    %v7211 = vpop.f32.mrf.mxu0
    %v7212 = vadd.f32 0.0, %v7211
    %v7213 = vpop.f32.mrf.mxu0
    %7214 = vdwg.mxu0
    %v7215 = vadd.f32 %v7137, %v7212
    %v7216 = vld [vmem:[%s19 + $0x60] sm:$0xff]
    %v7217 = vld [vmem:[%s19 + $0x68] sm:$0xff]
    %v7218 = vld [vmem:[%s19 + $0x70] sm:$0xff]
    %v7219 = vld [vmem:[%s19 + $0x78] sm:$0xff]
    %v7220 = vrot.slane %v5734, 3
    %v7221 = vsel %vm201, %v7220, 0
    %7223 = vmatprep.subr.mxu0 0.0
    %7224 = vmatpush1.msra.mxu0 0.0
    %7225 = vmatprep.subr.mxu0 0.0
    %7226 = vmatpush1.msra.mxu0 0.0
    %7227 = vmatprep.subr.mxu0 0.0
    %7228 = vmatpush1.msra.mxu0 0.0
    %7229 = vmatprep.subr.mxu0 0.0
    %7230 = vmatpush1.msra.mxu0 0.0
    %7231 = vmatprep.subr.mxu0 0.0
    %7232 = vmatpush1.msra.mxu0 0.0
    %7233 = vmatprep.subr.mxu0 0.0
    %7234 = vmatpush1.msra.mxu0 0.0
    %7235 = vmatprep.subr.mxu0 0.0
    %7236 = vmatpush1.msra.mxu0 0.0
    %7237 = vmatprep.subr.mxu0 0.0
    %7238 = vmatpush1.msra.mxu0 0.0
    %7239 = vmatprep.subr.mxu0 0.0
    %7240 = vmatpush1.msra.mxu0 0.0
    %7241 = vmatprep.subr.mxu0 0.0
    %7242 = vmatpush1.msra.mxu0 0.0
    %7243 = vmatprep.subr.mxu0 0.0
    %7244 = vmatpush1.msra.mxu0 0.0
    %7245 = vmatprep.subr.mxu0 0.0
    %7246 = vmatpush1.msra.mxu0 0.0
    %7247 = vmatprep.subr.mxu0 0.0
    %7248 = vmatpush1.msra.mxu0 %v7219
    %7249 = vmatprep.subr.mxu0 0.0
    %7250 = vmatpush1.msra.mxu0 %v7218
    %7251 = vmatprep.subr.mxu0 0.0
    %7252 = vmatpush1.msra.mxu0 %v7217
    %7253 = vmatprep.subr.mxu0 0.0
    %7254 = vmatpush1.msra.mxu0 %v7216
    %7255 = vmatprep.subr.mxu0 0.0
    %7256 = vmatpush2.msra.mxu0 0.0
    %7257 = vmatprep.subr.mxu0 0.0
    %7258 = vmatpush2.msra.mxu0 0.0
    %7259 = vmatprep.subr.mxu0 0.0
    %7260 = vmatpush2.msra.mxu0 0.0
    %7261 = vmatprep.subr.mxu0 0.0
    %7262 = vmatpush2.msra.mxu0 0.0
    %7263 = vmatprep.subr.mxu0 0.0
    %7264 = vmatpush2.msra.mxu0 0.0
    %7265 = vmatprep.subr.mxu0 0.0
    %7266 = vmatpush2.msra.mxu0 0.0
    %7267 = vmatprep.subr.mxu0 0.0
    %7268 = vmatpush2.msra.mxu0 0.0
    %7269 = vmatprep.subr.mxu0 0.0
    %7270 = vmatpush2.msra.mxu0 0.0
    %7271 = vmatprep.subr.mxu0 0.0
    %7272 = vmatpush2.msra.mxu0 0.0
    %7273 = vmatprep.subr.mxu0 0.0
    %7274 = vmatpush2.msra.mxu0 0.0
    %7275 = vmatprep.subr.mxu0 0.0
    %7276 = vmatpush2.msra.mxu0 0.0
    %7277 = vmatprep.subr.mxu0 0.0
    %7278 = vmatpush2.msra.mxu0 0.0
    %7279 = vmatprep.subr.mxu0 0.0
    %7280 = vmatpush2.msra.mxu0 0.0
    %7281 = vmatprep.subr.mxu0 0.0
    %7282 = vmatpush2.msra.mxu0 0.0
    %7283 = vmatprep.subr.mxu0 0.0
    %7284 = vmatpush2.msra.mxu0 0.0
    %7285 = vmatprep.subr.mxu0 0.0
    %7286 = vmatpush2.msra.mxu0 0.0
    %7287 = vmatprep.mubr.f32.mxu0 0.0
    %7288 = vmatmul.mubr.f32.gmra.mxu0 %v7221
    %v7289 = vpop.f32.mrf.mxu0
    %v7290 = vadd.f32 0.0, %v7289
    %v7291 = vpop.f32.mrf.mxu0
    %7292 = vdwg.mxu0
    %v7293 = vadd.f32 %v7215, %v7290
    %v7294 = vld [vmem:[%s19 + $0x80] sm:$0xff]
    %v7295 = vld [vmem:[%s19 + $0x88] sm:$0xff]
    %v7296 = vld [vmem:[%s19 + $0x90] sm:$0xff]
    %v7297 = vld [vmem:[%s19 + $0x98] sm:$0xff]
    %v7298 = vrot.slane %v5734, 4
    %v7299 = vsel %vm201, %v7298, 0
    %7301 = vmatprep.subr.mxu0 0.0
    %7302 = vmatpush1.msra.mxu0 0.0
    %7303 = vmatprep.subr.mxu0 0.0
    %7304 = vmatpush1.msra.mxu0 0.0
    %7305 = vmatprep.subr.mxu0 0.0
    %7306 = vmatpush1.msra.mxu0 0.0
    %7307 = vmatprep.subr.mxu0 0.0
    %7308 = vmatpush1.msra.mxu0 0.0
    %7309 = vmatprep.subr.mxu0 0.0
    %7310 = vmatpush1.msra.mxu0 0.0
    %7311 = vmatprep.subr.mxu0 0.0
    %7312 = vmatpush1.msra.mxu0 0.0
    %7313 = vmatprep.subr.mxu0 0.0
    %7314 = vmatpush1.msra.mxu0 0.0
    %7315 = vmatprep.subr.mxu0 0.0
    %7316 = vmatpush1.msra.mxu0 0.0
    %7317 = vmatprep.subr.mxu0 0.0
    %7318 = vmatpush1.msra.mxu0 0.0
    %7319 = vmatprep.subr.mxu0 0.0
    %7320 = vmatpush1.msra.mxu0 0.0
    %7321 = vmatprep.subr.mxu0 0.0
    %7322 = vmatpush1.msra.mxu0 0.0
    %7323 = vmatprep.subr.mxu0 0.0
    %7324 = vmatpush1.msra.mxu0 0.0
    %7325 = vmatprep.subr.mxu0 0.0
    %7326 = vmatpush1.msra.mxu0 %v7297
    %7327 = vmatprep.subr.mxu0 0.0
    %7328 = vmatpush1.msra.mxu0 %v7296
    %7329 = vmatprep.subr.mxu0 0.0
    %7330 = vmatpush1.msra.mxu0 %v7295
    %7331 = vmatprep.subr.mxu0 0.0
    %7332 = vmatpush1.msra.mxu0 %v7294
    %7333 = vmatprep.subr.mxu0 0.0
    %7334 = vmatpush2.msra.mxu0 0.0
    %7335 = vmatprep.subr.mxu0 0.0
    %7336 = vmatpush2.msra.mxu0 0.0
    %7337 = vmatprep.subr.mxu0 0.0
    %7338 = vmatpush2.msra.mxu0 0.0
    %7339 = vmatprep.subr.mxu0 0.0
    %7340 = vmatpush2.msra.mxu0 0.0
    %7341 = vmatprep.subr.mxu0 0.0
    %7342 = vmatpush2.msra.mxu0 0.0
    %7343 = vmatprep.subr.mxu0 0.0
    %7344 = vmatpush2.msra.mxu0 0.0
    %7345 = vmatprep.subr.mxu0 0.0
    %7346 = vmatpush2.msra.mxu0 0.0
    %7347 = vmatprep.subr.mxu0 0.0
    %7348 = vmatpush2.msra.mxu0 0.0
    %7349 = vmatprep.subr.mxu0 0.0
    %7350 = vmatpush2.msra.mxu0 0.0
    %7351 = vmatprep.subr.mxu0 0.0
    %7352 = vmatpush2.msra.mxu0 0.0
    %7353 = vmatprep.subr.mxu0 0.0
    %7354 = vmatpush2.msra.mxu0 0.0
    %7355 = vmatprep.subr.mxu0 0.0
    %7356 = vmatpush2.msra.mxu0 0.0
    %7357 = vmatprep.subr.mxu0 0.0
    %7358 = vmatpush2.msra.mxu0 0.0
    %7359 = vmatprep.subr.mxu0 0.0
    %7360 = vmatpush2.msra.mxu0 0.0
    %7361 = vmatprep.subr.mxu0 0.0
    %7362 = vmatpush2.msra.mxu0 0.0
    %7363 = vmatprep.subr.mxu0 0.0
    %7364 = vmatpush2.msra.mxu0 0.0
    %7365 = vmatprep.mubr.f32.mxu0 0.0
    %7366 = vmatmul.mubr.f32.gmra.mxu0 %v7299
    %v7367 = vpop.f32.mrf.mxu0
    %v7368 = vadd.f32 0.0, %v7367
    %v7369 = vpop.f32.mrf.mxu0
    %7370 = vdwg.mxu0
    %v7371 = vadd.f32 %v7293, %v7368
    %v7372 = vld [vmem:[%s19 + $0xa0] sm:$0xff]
    %v7373 = vld [vmem:[%s19 + $0xa8] sm:$0xff]
    %v7374 = vld [vmem:[%s19 + $0xb0] sm:$0xff]
    %v7375 = vld [vmem:[%s19 + $0xb8] sm:$0xff]
    %v7376 = vrot.slane %v5734, 5
    %v7377 = vsel %vm201, %v7376, 0
    %7379 = vmatprep.subr.mxu0 0.0
    %7380 = vmatpush1.msra.mxu0 0.0
    %7381 = vmatprep.subr.mxu0 0.0
    %7382 = vmatpush1.msra.mxu0 0.0
    %7383 = vmatprep.subr.mxu0 0.0
    %7384 = vmatpush1.msra.mxu0 0.0
    %7385 = vmatprep.subr.mxu0 0.0
    %7386 = vmatpush1.msra.mxu0 0.0
    %7387 = vmatprep.subr.mxu0 0.0
    %7388 = vmatpush1.msra.mxu0 0.0
    %7389 = vmatprep.subr.mxu0 0.0
    %7390 = vmatpush1.msra.mxu0 0.0
    %7391 = vmatprep.subr.mxu0 0.0
    %7392 = vmatpush1.msra.mxu0 0.0
    %7393 = vmatprep.subr.mxu0 0.0
    %7394 = vmatpush1.msra.mxu0 0.0
    %7395 = vmatprep.subr.mxu0 0.0
    %7396 = vmatpush1.msra.mxu0 0.0
    %7397 = vmatprep.subr.mxu0 0.0
    %7398 = vmatpush1.msra.mxu0 0.0
    %7399 = vmatprep.subr.mxu0 0.0
    %7400 = vmatpush1.msra.mxu0 0.0
    %7401 = vmatprep.subr.mxu0 0.0
    %7402 = vmatpush1.msra.mxu0 0.0
    %7403 = vmatprep.subr.mxu0 0.0
    %7404 = vmatpush1.msra.mxu0 %v7375
    %7405 = vmatprep.subr.mxu0 0.0
    %7406 = vmatpush1.msra.mxu0 %v7374
    %7407 = vmatprep.subr.mxu0 0.0
    %7408 = vmatpush1.msra.mxu0 %v7373
    %7409 = vmatprep.subr.mxu0 0.0
    %7410 = vmatpush1.msra.mxu0 %v7372
    %7411 = vmatprep.subr.mxu0 0.0
    %7412 = vmatpush2.msra.mxu0 0.0
    %7413 = vmatprep.subr.mxu0 0.0
    %7414 = vmatpush2.msra.mxu0 0.0
    %7415 = vmatprep.subr.mxu0 0.0
    %7416 = vmatpush2.msra.mxu0 0.0
    %7417 = vmatprep.subr.mxu0 0.0
    %7418 = vmatpush2.msra.mxu0 0.0
    %7419 = vmatprep.subr.mxu0 0.0
    %7420 = vmatpush2.msra.mxu0 0.0
    %7421 = vmatprep.subr.mxu0 0.0
    %7422 = vmatpush2.msra.mxu0 0.0
    %7423 = vmatprep.subr.mxu0 0.0
    %7424 = vmatpush2.msra.mxu0 0.0
    %7425 = vmatprep.subr.mxu0 0.0
    %7426 = vmatpush2.msra.mxu0 0.0
    %7427 = vmatprep.subr.mxu0 0.0
    %7428 = vmatpush2.msra.mxu0 0.0
    %7429 = vmatprep.subr.mxu0 0.0
    %7430 = vmatpush2.msra.mxu0 0.0
    %7431 = vmatprep.subr.mxu0 0.0
    %7432 = vmatpush2.msra.mxu0 0.0
    %7433 = vmatprep.subr.mxu0 0.0
    %7434 = vmatpush2.msra.mxu0 0.0
    %7435 = vmatprep.subr.mxu0 0.0
    %7436 = vmatpush2.msra.mxu0 0.0
    %7437 = vmatprep.subr.mxu0 0.0
    %7438 = vmatpush2.msra.mxu0 0.0
    %7439 = vmatprep.subr.mxu0 0.0
    %7440 = vmatpush2.msra.mxu0 0.0
    %7441 = vmatprep.subr.mxu0 0.0
    %7442 = vmatpush2.msra.mxu0 0.0
    %7443 = vmatprep.mubr.f32.mxu0 0.0
    %7444 = vmatmul.mubr.f32.gmra.mxu0 %v7377
    %v7445 = vpop.f32.mrf.mxu0
    %v7446 = vadd.f32 0.0, %v7445
    %v7447 = vpop.f32.mrf.mxu0
    %7448 = vdwg.mxu0
    %v7449 = vadd.f32 %v7371, %v7446
    %v7450 = vld [vmem:[%s19 + $0xc0] sm:$0xff]
    %v7451 = vld [vmem:[%s19 + $0xc8] sm:$0xff]
    %v7452 = vld [vmem:[%s19 + $0xd0] sm:$0xff]
    %v7453 = vld [vmem:[%s19 + $0xd8] sm:$0xff]
    %v7454 = vrot.slane %v5734, 6
    %v7455 = vsel %vm201, %v7454, 0
    %7457 = vmatprep.subr.mxu0 0.0
    %7458 = vmatpush1.msra.mxu0 0.0
    %7459 = vmatprep.subr.mxu0 0.0
    %7460 = vmatpush1.msra.mxu0 0.0
    %7461 = vmatprep.subr.mxu0 0.0
    %7462 = vmatpush1.msra.mxu0 0.0
    %7463 = vmatprep.subr.mxu0 0.0
    %7464 = vmatpush1.msra.mxu0 0.0
    %7465 = vmatprep.subr.mxu0 0.0
    %7466 = vmatpush1.msra.mxu0 0.0
    %7467 = vmatprep.subr.mxu0 0.0
    %7468 = vmatpush1.msra.mxu0 0.0
    %7469 = vmatprep.subr.mxu0 0.0
    %7470 = vmatpush1.msra.mxu0 0.0
    %7471 = vmatprep.subr.mxu0 0.0
    %7472 = vmatpush1.msra.mxu0 0.0
    %7473 = vmatprep.subr.mxu0 0.0
    %7474 = vmatpush1.msra.mxu0 0.0
    %7475 = vmatprep.subr.mxu0 0.0
    %7476 = vmatpush1.msra.mxu0 0.0
    %7477 = vmatprep.subr.mxu0 0.0
    %7478 = vmatpush1.msra.mxu0 0.0
    %7479 = vmatprep.subr.mxu0 0.0
    %7480 = vmatpush1.msra.mxu0 0.0
    %7481 = vmatprep.subr.mxu0 0.0
    %7482 = vmatpush1.msra.mxu0 %v7453
    %7483 = vmatprep.subr.mxu0 0.0
    %7484 = vmatpush1.msra.mxu0 %v7452
    %7485 = vmatprep.subr.mxu0 0.0
    %7486 = vmatpush1.msra.mxu0 %v7451
    %7487 = vmatprep.subr.mxu0 0.0
    %7488 = vmatpush1.msra.mxu0 %v7450
    %7489 = vmatprep.subr.mxu0 0.0
    %7490 = vmatpush2.msra.mxu0 0.0
    %7491 = vmatprep.subr.mxu0 0.0
    %7492 = vmatpush2.msra.mxu0 0.0
    %7493 = vmatprep.subr.mxu0 0.0
    %7494 = vmatpush2.msra.mxu0 0.0
    %7495 = vmatprep.subr.mxu0 0.0
    %7496 = vmatpush2.msra.mxu0 0.0
    %7497 = vmatprep.subr.mxu0 0.0
    %7498 = vmatpush2.msra.mxu0 0.0
    %7499 = vmatprep.subr.mxu0 0.0
    %7500 = vmatpush2.msra.mxu0 0.0
    %7501 = vmatprep.subr.mxu0 0.0
    %7502 = vmatpush2.msra.mxu0 0.0
    %7503 = vmatprep.subr.mxu0 0.0
    %7504 = vmatpush2.msra.mxu0 0.0
    %7505 = vmatprep.subr.mxu0 0.0
    %7506 = vmatpush2.msra.mxu0 0.0
    %7507 = vmatprep.subr.mxu0 0.0
    %7508 = vmatpush2.msra.mxu0 0.0
    %7509 = vmatprep.subr.mxu0 0.0
    %7510 = vmatpush2.msra.mxu0 0.0
    %7511 = vmatprep.subr.mxu0 0.0
    %7512 = vmatpush2.msra.mxu0 0.0
    %7513 = vmatprep.subr.mxu0 0.0
    %7514 = vmatpush2.msra.mxu0 0.0
    %7515 = vmatprep.subr.mxu0 0.0
    %7516 = vmatpush2.msra.mxu0 0.0
    %7517 = vmatprep.subr.mxu0 0.0
    %7518 = vmatpush2.msra.mxu0 0.0
    %7519 = vmatprep.subr.mxu0 0.0
    %7520 = vmatpush2.msra.mxu0 0.0
    %7521 = vmatprep.mubr.f32.mxu0 0.0
    %7522 = vmatmul.mubr.f32.gmra.mxu0 %v7455
    %v7523 = vpop.f32.mrf.mxu0
    %v7524 = vadd.f32 0.0, %v7523
    %v7525 = vpop.f32.mrf.mxu0
    %7526 = vdwg.mxu0
    %v7527 = vadd.f32 %v7449, %v7524
    %v7528 = vld [vmem:[%s19 + $0xe0] sm:$0xff]
    %v7529 = vld [vmem:[%s19 + $0xe8] sm:$0xff]
    %v7530 = vld [vmem:[%s19 + $0xf0] sm:$0xff]
    %v7531 = vld [vmem:[%s19 + $0xf8] sm:$0xff]
    %v7532 = vrot.slane %v5734, 7
    %v7533 = vsel %vm201, %v7532, 0
    %7535 = vmatprep.subr.mxu0 0.0
    %7536 = vmatpush1.msra.mxu0 0.0
    %7537 = vmatprep.subr.mxu0 0.0
    %7538 = vmatpush1.msra.mxu0 0.0
    %7539 = vmatprep.subr.mxu0 0.0
    %7540 = vmatpush1.msra.mxu0 0.0
    %7541 = vmatprep.subr.mxu0 0.0
    %7542 = vmatpush1.msra.mxu0 0.0
    %7543 = vmatprep.subr.mxu0 0.0
    %7544 = vmatpush1.msra.mxu0 0.0
    %7545 = vmatprep.subr.mxu0 0.0
    %7546 = vmatpush1.msra.mxu0 0.0
    %7547 = vmatprep.subr.mxu0 0.0
    %7548 = vmatpush1.msra.mxu0 0.0
    %7549 = vmatprep.subr.mxu0 0.0
    %7550 = vmatpush1.msra.mxu0 0.0
    %7551 = vmatprep.subr.mxu0 0.0
    %7552 = vmatpush1.msra.mxu0 0.0
    %7553 = vmatprep.subr.mxu0 0.0
    %7554 = vmatpush1.msra.mxu0 0.0
    %7555 = vmatprep.subr.mxu0 0.0
    %7556 = vmatpush1.msra.mxu0 0.0
    %7557 = vmatprep.subr.mxu0 0.0
    %7558 = vmatpush1.msra.mxu0 0.0
    %7559 = vmatprep.subr.mxu0 0.0
    %7560 = vmatpush1.msra.mxu0 %v7531
    %7561 = vmatprep.subr.mxu0 0.0
    %7562 = vmatpush1.msra.mxu0 %v7530
    %7563 = vmatprep.subr.mxu0 0.0
    %7564 = vmatpush1.msra.mxu0 %v7529
    %7565 = vmatprep.subr.mxu0 0.0
    %7566 = vmatpush1.msra.mxu0 %v7528
    %7567 = vmatprep.subr.mxu0 0.0
    %7568 = vmatpush2.msra.mxu0 0.0
    %7569 = vmatprep.subr.mxu0 0.0
    %7570 = vmatpush2.msra.mxu0 0.0
    %7571 = vmatprep.subr.mxu0 0.0
    %7572 = vmatpush2.msra.mxu0 0.0
    %7573 = vmatprep.subr.mxu0 0.0
    %7574 = vmatpush2.msra.mxu0 0.0
    %7575 = vmatprep.subr.mxu0 0.0
    %7576 = vmatpush2.msra.mxu0 0.0
    %7577 = vmatprep.subr.mxu0 0.0
    %7578 = vmatpush2.msra.mxu0 0.0
    %7579 = vmatprep.subr.mxu0 0.0
    %7580 = vmatpush2.msra.mxu0 0.0
    %7581 = vmatprep.subr.mxu0 0.0
    %7582 = vmatpush2.msra.mxu0 0.0
    %7583 = vmatprep.subr.mxu0 0.0
    %7584 = vmatpush2.msra.mxu0 0.0
    %7585 = vmatprep.subr.mxu0 0.0
    %7586 = vmatpush2.msra.mxu0 0.0
    %7587 = vmatprep.subr.mxu0 0.0
    %7588 = vmatpush2.msra.mxu0 0.0
    %7589 = vmatprep.subr.mxu0 0.0
    %7590 = vmatpush2.msra.mxu0 0.0
    %7591 = vmatprep.subr.mxu0 0.0
    %7592 = vmatpush2.msra.mxu0 0.0
    %7593 = vmatprep.subr.mxu0 0.0
    %7594 = vmatpush2.msra.mxu0 0.0
    %7595 = vmatprep.subr.mxu0 0.0
    %7596 = vmatpush2.msra.mxu0 0.0
    %7597 = vmatprep.subr.mxu0 0.0
    %7598 = vmatpush2.msra.mxu0 0.0
    %7599 = vmatprep.mubr.f32.mxu0 0.0
    %7600 = vmatmul.mubr.f32.gmra.mxu0 %v7533
    %v7601 = vpop.f32.mrf.mxu0
    %v7602 = vadd.f32 0.0, %v7601
    %v7603 = vpop.f32.mrf.mxu0
    %7604 = vdwg.mxu0
    %v7605 = vadd.f32 %v7527, %v7602
    %v7606 = vld [vmem:[%s19 + $0x100] sm:$0xff]
    %v7607 = vld [vmem:[%s19 + $0x108] sm:$0xff]
    %v7608 = vld [vmem:[%s19 + $0x110] sm:$0xff]
    %v7609 = vld [vmem:[%s19 + $0x118] sm:$0xff]
    %v7611 = vsel %vm201, %v5735, 0
    %7613 = vmatprep.subr.mxu0 0.0
    %7614 = vmatpush1.msra.mxu0 0.0
    %7615 = vmatprep.subr.mxu0 0.0
    %7616 = vmatpush1.msra.mxu0 0.0
    %7617 = vmatprep.subr.mxu0 0.0
    %7618 = vmatpush1.msra.mxu0 0.0
    %7619 = vmatprep.subr.mxu0 0.0
    %7620 = vmatpush1.msra.mxu0 0.0
    %7621 = vmatprep.subr.mxu0 0.0
    %7622 = vmatpush1.msra.mxu0 0.0
    %7623 = vmatprep.subr.mxu0 0.0
    %7624 = vmatpush1.msra.mxu0 0.0
    %7625 = vmatprep.subr.mxu0 0.0
    %7626 = vmatpush1.msra.mxu0 0.0
    %7627 = vmatprep.subr.mxu0 0.0
    %7628 = vmatpush1.msra.mxu0 0.0
    %7629 = vmatprep.subr.mxu0 0.0
    %7630 = vmatpush1.msra.mxu0 0.0
    %7631 = vmatprep.subr.mxu0 0.0
    %7632 = vmatpush1.msra.mxu0 0.0
    %7633 = vmatprep.subr.mxu0 0.0
    %7634 = vmatpush1.msra.mxu0 0.0
    %7635 = vmatprep.subr.mxu0 0.0
    %7636 = vmatpush1.msra.mxu0 0.0
    %7637 = vmatprep.subr.mxu0 0.0
    %7638 = vmatpush1.msra.mxu0 %v7609
    %7639 = vmatprep.subr.mxu0 0.0
    %7640 = vmatpush1.msra.mxu0 %v7608
    %7641 = vmatprep.subr.mxu0 0.0
    %7642 = vmatpush1.msra.mxu0 %v7607
    %7643 = vmatprep.subr.mxu0 0.0
    %7644 = vmatpush1.msra.mxu0 %v7606
    %7645 = vmatprep.subr.mxu0 0.0
    %7646 = vmatpush2.msra.mxu0 0.0
    %7647 = vmatprep.subr.mxu0 0.0
    %7648 = vmatpush2.msra.mxu0 0.0
    %7649 = vmatprep.subr.mxu0 0.0
    %7650 = vmatpush2.msra.mxu0 0.0
    %7651 = vmatprep.subr.mxu0 0.0
    %7652 = vmatpush2.msra.mxu0 0.0
    %7653 = vmatprep.subr.mxu0 0.0
    %7654 = vmatpush2.msra.mxu0 0.0
    %7655 = vmatprep.subr.mxu0 0.0
    %7656 = vmatpush2.msra.mxu0 0.0
    %7657 = vmatprep.subr.mxu0 0.0
    %7658 = vmatpush2.msra.mxu0 0.0
    %7659 = vmatprep.subr.mxu0 0.0
    %7660 = vmatpush2.msra.mxu0 0.0
    %7661 = vmatprep.subr.mxu0 0.0
    %7662 = vmatpush2.msra.mxu0 0.0
    %7663 = vmatprep.subr.mxu0 0.0
    %7664 = vmatpush2.msra.mxu0 0.0
    %7665 = vmatprep.subr.mxu0 0.0
    %7666 = vmatpush2.msra.mxu0 0.0
    %7667 = vmatprep.subr.mxu0 0.0
    %7668 = vmatpush2.msra.mxu0 0.0
    %7669 = vmatprep.subr.mxu0 0.0
    %7670 = vmatpush2.msra.mxu0 0.0
    %7671 = vmatprep.subr.mxu0 0.0
    %7672 = vmatpush2.msra.mxu0 0.0
    %7673 = vmatprep.subr.mxu0 0.0
    %7674 = vmatpush2.msra.mxu0 0.0
    %7675 = vmatprep.subr.mxu0 0.0
    %7676 = vmatpush2.msra.mxu0 0.0
    %7677 = vmatprep.mubr.f32.mxu0 0.0
    %7678 = vmatmul.mubr.f32.gmra.mxu0 %v7611
    %v7679 = vpop.f32.mrf.mxu0
    %v7680 = vadd.f32 0.0, %v7679
    %v7681 = vpop.f32.mrf.mxu0
    %7682 = vdwg.mxu0
    %v7683 = vadd.f32 %v7605, %v7680
    %v7684 = vld [vmem:[%s19 + $0x120] sm:$0xff]
    %v7685 = vld [vmem:[%s19 + $0x128] sm:$0xff]
    %v7686 = vld [vmem:[%s19 + $0x130] sm:$0xff]
    %v7687 = vld [vmem:[%s19 + $0x138] sm:$0xff]
    %v7688 = vrot.slane %v5735, 1
    %v7689 = vsel %vm201, %v7688, 0
    %7691 = vmatprep.subr.mxu0 0.0
    %7692 = vmatpush1.msra.mxu0 0.0
    %7693 = vmatprep.subr.mxu0 0.0
    %7694 = vmatpush1.msra.mxu0 0.0
    %7695 = vmatprep.subr.mxu0 0.0
    %7696 = vmatpush1.msra.mxu0 0.0
    %7697 = vmatprep.subr.mxu0 0.0
    %7698 = vmatpush1.msra.mxu0 0.0
    %7699 = vmatprep.subr.mxu0 0.0
    %7700 = vmatpush1.msra.mxu0 0.0
    %7701 = vmatprep.subr.mxu0 0.0
    %7702 = vmatpush1.msra.mxu0 0.0
    %7703 = vmatprep.subr.mxu0 0.0
    %7704 = vmatpush1.msra.mxu0 0.0
    %7705 = vmatprep.subr.mxu0 0.0
    %7706 = vmatpush1.msra.mxu0 0.0
    %7707 = vmatprep.subr.mxu0 0.0
    %7708 = vmatpush1.msra.mxu0 0.0
    %7709 = vmatprep.subr.mxu0 0.0
    %7710 = vmatpush1.msra.mxu0 0.0
    %7711 = vmatprep.subr.mxu0 0.0
    %7712 = vmatpush1.msra.mxu0 0.0
    %7713 = vmatprep.subr.mxu0 0.0
    %7714 = vmatpush1.msra.mxu0 0.0
    %7715 = vmatprep.subr.mxu0 0.0
    %7716 = vmatpush1.msra.mxu0 %v7687
    %7717 = vmatprep.subr.mxu0 0.0
    %7718 = vmatpush1.msra.mxu0 %v7686
    %7719 = vmatprep.subr.mxu0 0.0
    %7720 = vmatpush1.msra.mxu0 %v7685
    %7721 = vmatprep.subr.mxu0 0.0
    %7722 = vmatpush1.msra.mxu0 %v7684
    %7723 = vmatprep.subr.mxu0 0.0
    %7724 = vmatpush2.msra.mxu0 0.0
    %7725 = vmatprep.subr.mxu0 0.0
    %7726 = vmatpush2.msra.mxu0 0.0
    %7727 = vmatprep.subr.mxu0 0.0
    %7728 = vmatpush2.msra.mxu0 0.0
    %7729 = vmatprep.subr.mxu0 0.0
    %7730 = vmatpush2.msra.mxu0 0.0
    %7731 = vmatprep.subr.mxu0 0.0
    %7732 = vmatpush2.msra.mxu0 0.0
    %7733 = vmatprep.subr.mxu0 0.0
    %7734 = vmatpush2.msra.mxu0 0.0
    %7735 = vmatprep.subr.mxu0 0.0
    %7736 = vmatpush2.msra.mxu0 0.0
    %7737 = vmatprep.subr.mxu0 0.0
    %7738 = vmatpush2.msra.mxu0 0.0
    %7739 = vmatprep.subr.mxu0 0.0
    %7740 = vmatpush2.msra.mxu0 0.0
    %7741 = vmatprep.subr.mxu0 0.0
    %7742 = vmatpush2.msra.mxu0 0.0
    %7743 = vmatprep.subr.mxu0 0.0
    %7744 = vmatpush2.msra.mxu0 0.0
    %7745 = vmatprep.subr.mxu0 0.0
    %7746 = vmatpush2.msra.mxu0 0.0
    %7747 = vmatprep.subr.mxu0 0.0
    %7748 = vmatpush2.msra.mxu0 0.0
    %7749 = vmatprep.subr.mxu0 0.0
    %7750 = vmatpush2.msra.mxu0 0.0
    %7751 = vmatprep.subr.mxu0 0.0
    %7752 = vmatpush2.msra.mxu0 0.0
    %7753 = vmatprep.subr.mxu0 0.0
    %7754 = vmatpush2.msra.mxu0 0.0
    %7755 = vmatprep.mubr.f32.mxu0 0.0
    %7756 = vmatmul.mubr.f32.gmra.mxu0 %v7689
    %v7757 = vpop.f32.mrf.mxu0
    %v7758 = vadd.f32 0.0, %v7757
    %v7759 = vpop.f32.mrf.mxu0
    %7760 = vdwg.mxu0
    %v7761 = vadd.f32 %v7683, %v7758
    %v7762 = vld [vmem:[%s19 + $0x140] sm:$0xff]
    %v7763 = vld [vmem:[%s19 + $0x148] sm:$0xff]
    %v7764 = vld [vmem:[%s19 + $0x150] sm:$0xff]
    %v7765 = vld [vmem:[%s19 + $0x158] sm:$0xff]
    %v7766 = vrot.slane %v5735, 2
    %v7767 = vsel %vm201, %v7766, 0
    %7769 = vmatprep.subr.mxu0 0.0
    %7770 = vmatpush1.msra.mxu0 0.0
    %7771 = vmatprep.subr.mxu0 0.0
    %7772 = vmatpush1.msra.mxu0 0.0
    %7773 = vmatprep.subr.mxu0 0.0
    %7774 = vmatpush1.msra.mxu0 0.0
    %7775 = vmatprep.subr.mxu0 0.0
    %7776 = vmatpush1.msra.mxu0 0.0
    %7777 = vmatprep.subr.mxu0 0.0
    %7778 = vmatpush1.msra.mxu0 0.0
    %7779 = vmatprep.subr.mxu0 0.0
    %7780 = vmatpush1.msra.mxu0 0.0
    %7781 = vmatprep.subr.mxu0 0.0
    %7782 = vmatpush1.msra.mxu0 0.0
    %7783 = vmatprep.subr.mxu0 0.0
    %7784 = vmatpush1.msra.mxu0 0.0
    %7785 = vmatprep.subr.mxu0 0.0
    %7786 = vmatpush1.msra.mxu0 0.0
    %7787 = vmatprep.subr.mxu0 0.0
    %7788 = vmatpush1.msra.mxu0 0.0
    %7789 = vmatprep.subr.mxu0 0.0
    %7790 = vmatpush1.msra.mxu0 0.0
    %7791 = vmatprep.subr.mxu0 0.0
    %7792 = vmatpush1.msra.mxu0 0.0
    %7793 = vmatprep.subr.mxu0 0.0
    %7794 = vmatpush1.msra.mxu0 %v7765
    %7795 = vmatprep.subr.mxu0 0.0
    %7796 = vmatpush1.msra.mxu0 %v7764
    %7797 = vmatprep.subr.mxu0 0.0
    %7798 = vmatpush1.msra.mxu0 %v7763
    %7799 = vmatprep.subr.mxu0 0.0
    %7800 = vmatpush1.msra.mxu0 %v7762
    %7801 = vmatprep.subr.mxu0 0.0
    %7802 = vmatpush2.msra.mxu0 0.0
    %7803 = vmatprep.subr.mxu0 0.0
    %7804 = vmatpush2.msra.mxu0 0.0
    %7805 = vmatprep.subr.mxu0 0.0
    %7806 = vmatpush2.msra.mxu0 0.0
    %7807 = vmatprep.subr.mxu0 0.0
    %7808 = vmatpush2.msra.mxu0 0.0
    %7809 = vmatprep.subr.mxu0 0.0
    %7810 = vmatpush2.msra.mxu0 0.0
    %7811 = vmatprep.subr.mxu0 0.0
    %7812 = vmatpush2.msra.mxu0 0.0
    %7813 = vmatprep.subr.mxu0 0.0
    %7814 = vmatpush2.msra.mxu0 0.0
    %7815 = vmatprep.subr.mxu0 0.0
    %7816 = vmatpush2.msra.mxu0 0.0
    %7817 = vmatprep.subr.mxu0 0.0
    %7818 = vmatpush2.msra.mxu0 0.0
    %7819 = vmatprep.subr.mxu0 0.0
    %7820 = vmatpush2.msra.mxu0 0.0
    %7821 = vmatprep.subr.mxu0 0.0
    %7822 = vmatpush2.msra.mxu0 0.0
    %7823 = vmatprep.subr.mxu0 0.0
    %7824 = vmatpush2.msra.mxu0 0.0
    %7825 = vmatprep.subr.mxu0 0.0
    %7826 = vmatpush2.msra.mxu0 0.0
    %7827 = vmatprep.subr.mxu0 0.0
    %7828 = vmatpush2.msra.mxu0 0.0
    %7829 = vmatprep.subr.mxu0 0.0
    %7830 = vmatpush2.msra.mxu0 0.0
    %7831 = vmatprep.subr.mxu0 0.0
    %7832 = vmatpush2.msra.mxu0 0.0
    %7833 = vmatprep.mubr.f32.mxu0 0.0
    %7834 = vmatmul.mubr.f32.gmra.mxu0 %v7767
    %v7835 = vpop.f32.mrf.mxu0
    %v7836 = vadd.f32 0.0, %v7835
    %v7837 = vpop.f32.mrf.mxu0
    %7838 = vdwg.mxu0
    %v7839 = vadd.f32 %v7761, %v7836
    %v7840 = vld [vmem:[%s19 + $0x160] sm:$0xff]
    %v7841 = vld [vmem:[%s19 + $0x168] sm:$0xff]
    %v7842 = vld [vmem:[%s19 + $0x170] sm:$0xff]
    %v7843 = vld [vmem:[%s19 + $0x178] sm:$0xff]
    %v7844 = vrot.slane %v5735, 3
    %v7845 = vsel %vm201, %v7844, 0
    %7847 = vmatprep.subr.mxu0 0.0
    %7848 = vmatpush1.msra.mxu0 0.0
    %7849 = vmatprep.subr.mxu0 0.0
    %7850 = vmatpush1.msra.mxu0 0.0
    %7851 = vmatprep.subr.mxu0 0.0
    %7852 = vmatpush1.msra.mxu0 0.0
    %7853 = vmatprep.subr.mxu0 0.0
    %7854 = vmatpush1.msra.mxu0 0.0
    %7855 = vmatprep.subr.mxu0 0.0
    %7856 = vmatpush1.msra.mxu0 0.0
    %7857 = vmatprep.subr.mxu0 0.0
    %7858 = vmatpush1.msra.mxu0 0.0
    %7859 = vmatprep.subr.mxu0 0.0
    %7860 = vmatpush1.msra.mxu0 0.0
    %7861 = vmatprep.subr.mxu0 0.0
    %7862 = vmatpush1.msra.mxu0 0.0
    %7863 = vmatprep.subr.mxu0 0.0
    %7864 = vmatpush1.msra.mxu0 0.0
    %7865 = vmatprep.subr.mxu0 0.0
    %7866 = vmatpush1.msra.mxu0 0.0
    %7867 = vmatprep.subr.mxu0 0.0
    %7868 = vmatpush1.msra.mxu0 0.0
    %7869 = vmatprep.subr.mxu0 0.0
    %7870 = vmatpush1.msra.mxu0 0.0
    %7871 = vmatprep.subr.mxu0 0.0
    %7872 = vmatpush1.msra.mxu0 %v7843
    %7873 = vmatprep.subr.mxu0 0.0
    %7874 = vmatpush1.msra.mxu0 %v7842
    %7875 = vmatprep.subr.mxu0 0.0
    %7876 = vmatpush1.msra.mxu0 %v7841
    %7877 = vmatprep.subr.mxu0 0.0
    %7878 = vmatpush1.msra.mxu0 %v7840
    %7879 = vmatprep.subr.mxu0 0.0
    %7880 = vmatpush2.msra.mxu0 0.0
    %7881 = vmatprep.subr.mxu0 0.0
    %7882 = vmatpush2.msra.mxu0 0.0
    %7883 = vmatprep.subr.mxu0 0.0
    %7884 = vmatpush2.msra.mxu0 0.0
    %7885 = vmatprep.subr.mxu0 0.0
    %7886 = vmatpush2.msra.mxu0 0.0
    %7887 = vmatprep.subr.mxu0 0.0
    %7888 = vmatpush2.msra.mxu0 0.0
    %7889 = vmatprep.subr.mxu0 0.0
    %7890 = vmatpush2.msra.mxu0 0.0
    %7891 = vmatprep.subr.mxu0 0.0
    %7892 = vmatpush2.msra.mxu0 0.0
    %7893 = vmatprep.subr.mxu0 0.0
    %7894 = vmatpush2.msra.mxu0 0.0
    %7895 = vmatprep.subr.mxu0 0.0
    %7896 = vmatpush2.msra.mxu0 0.0
    %7897 = vmatprep.subr.mxu0 0.0
    %7898 = vmatpush2.msra.mxu0 0.0
    %7899 = vmatprep.subr.mxu0 0.0
    %7900 = vmatpush2.msra.mxu0 0.0
    %7901 = vmatprep.subr.mxu0 0.0
    %7902 = vmatpush2.msra.mxu0 0.0
    %7903 = vmatprep.subr.mxu0 0.0
    %7904 = vmatpush2.msra.mxu0 0.0
    %7905 = vmatprep.subr.mxu0 0.0
    %7906 = vmatpush2.msra.mxu0 0.0
    %7907 = vmatprep.subr.mxu0 0.0
    %7908 = vmatpush2.msra.mxu0 0.0
    %7909 = vmatprep.subr.mxu0 0.0
    %7910 = vmatpush2.msra.mxu0 0.0
    %7911 = vmatprep.mubr.f32.mxu0 0.0
    %7912 = vmatmul.mubr.f32.gmra.mxu0 %v7845
    %v7913 = vpop.f32.mrf.mxu0
    %v7914 = vadd.f32 0.0, %v7913
    %v7915 = vpop.f32.mrf.mxu0
    %7916 = vdwg.mxu0
    %v7917 = vadd.f32 %v7839, %v7914
    %v7918 = vld [vmem:[%s19 + $0x180] sm:$0xff]
    %v7919 = vld [vmem:[%s19 + $0x188] sm:$0xff]
    %v7920 = vld [vmem:[%s19 + $0x190] sm:$0xff]
    %v7921 = vld [vmem:[%s19 + $0x198] sm:$0xff]
    %v7922 = vrot.slane %v5735, 4
    %v7923 = vsel %vm201, %v7922, 0
    %7925 = vmatprep.subr.mxu0 0.0
    %7926 = vmatpush1.msra.mxu0 0.0
    %7927 = vmatprep.subr.mxu0 0.0
    %7928 = vmatpush1.msra.mxu0 0.0
    %7929 = vmatprep.subr.mxu0 0.0
    %7930 = vmatpush1.msra.mxu0 0.0
    %7931 = vmatprep.subr.mxu0 0.0
    %7932 = vmatpush1.msra.mxu0 0.0
    %7933 = vmatprep.subr.mxu0 0.0
    %7934 = vmatpush1.msra.mxu0 0.0
    %7935 = vmatprep.subr.mxu0 0.0
    %7936 = vmatpush1.msra.mxu0 0.0
    %7937 = vmatprep.subr.mxu0 0.0
    %7938 = vmatpush1.msra.mxu0 0.0
    %7939 = vmatprep.subr.mxu0 0.0
    %7940 = vmatpush1.msra.mxu0 0.0
    %7941 = vmatprep.subr.mxu0 0.0
    %7942 = vmatpush1.msra.mxu0 0.0
    %7943 = vmatprep.subr.mxu0 0.0
    %7944 = vmatpush1.msra.mxu0 0.0
    %7945 = vmatprep.subr.mxu0 0.0
    %7946 = vmatpush1.msra.mxu0 0.0
    %7947 = vmatprep.subr.mxu0 0.0
    %7948 = vmatpush1.msra.mxu0 0.0
    %7949 = vmatprep.subr.mxu0 0.0
    %7950 = vmatpush1.msra.mxu0 %v7921
    %7951 = vmatprep.subr.mxu0 0.0
    %7952 = vmatpush1.msra.mxu0 %v7920
    %7953 = vmatprep.subr.mxu0 0.0
    %7954 = vmatpush1.msra.mxu0 %v7919
    %7955 = vmatprep.subr.mxu0 0.0
    %7956 = vmatpush1.msra.mxu0 %v7918
    %7957 = vmatprep.subr.mxu0 0.0
    %7958 = vmatpush2.msra.mxu0 0.0
    %7959 = vmatprep.subr.mxu0 0.0
    %7960 = vmatpush2.msra.mxu0 0.0
    %7961 = vmatprep.subr.mxu0 0.0
    %7962 = vmatpush2.msra.mxu0 0.0
    %7963 = vmatprep.subr.mxu0 0.0
    %7964 = vmatpush2.msra.mxu0 0.0
    %7965 = vmatprep.subr.mxu0 0.0
    %7966 = vmatpush2.msra.mxu0 0.0
    %7967 = vmatprep.subr.mxu0 0.0
    %7968 = vmatpush2.msra.mxu0 0.0
    %7969 = vmatprep.subr.mxu0 0.0
    %7970 = vmatpush2.msra.mxu0 0.0
    %7971 = vmatprep.subr.mxu0 0.0
    %7972 = vmatpush2.msra.mxu0 0.0
    %7973 = vmatprep.subr.mxu0 0.0
    %7974 = vmatpush2.msra.mxu0 0.0
    %7975 = vmatprep.subr.mxu0 0.0
    %7976 = vmatpush2.msra.mxu0 0.0
    %7977 = vmatprep.subr.mxu0 0.0
    %7978 = vmatpush2.msra.mxu0 0.0
    %7979 = vmatprep.subr.mxu0 0.0
    %7980 = vmatpush2.msra.mxu0 0.0
    %7981 = vmatprep.subr.mxu0 0.0
    %7982 = vmatpush2.msra.mxu0 0.0
    %7983 = vmatprep.subr.mxu0 0.0
    %7984 = vmatpush2.msra.mxu0 0.0
    %7985 = vmatprep.subr.mxu0 0.0
    %7986 = vmatpush2.msra.mxu0 0.0
    %7987 = vmatprep.subr.mxu0 0.0
    %7988 = vmatpush2.msra.mxu0 0.0
    %7989 = vmatprep.mubr.f32.mxu0 0.0
    %7990 = vmatmul.mubr.f32.gmra.mxu0 %v7923
    %v7991 = vpop.f32.mrf.mxu0
    %v7992 = vadd.f32 0.0, %v7991
    %v7993 = vpop.f32.mrf.mxu0
    %7994 = vdwg.mxu0
    %v7995 = vadd.f32 %v7917, %v7992
    %v7996 = vld [vmem:[%s19 + $0x1a0] sm:$0xff]
    %v7997 = vld [vmem:[%s19 + $0x1a8] sm:$0xff]
    %v7998 = vld [vmem:[%s19 + $0x1b0] sm:$0xff]
    %v7999 = vld [vmem:[%s19 + $0x1b8] sm:$0xff]
    %v8000 = vrot.slane %v5735, 5
    %v8001 = vsel %vm201, %v8000, 0
    %8003 = vmatprep.subr.mxu0 0.0
    %8004 = vmatpush1.msra.mxu0 0.0
    %8005 = vmatprep.subr.mxu0 0.0
    %8006 = vmatpush1.msra.mxu0 0.0
    %8007 = vmatprep.subr.mxu0 0.0
    %8008 = vmatpush1.msra.mxu0 0.0
    %8009 = vmatprep.subr.mxu0 0.0
    %8010 = vmatpush1.msra.mxu0 0.0
    %8011 = vmatprep.subr.mxu0 0.0
    %8012 = vmatpush1.msra.mxu0 0.0
    %8013 = vmatprep.subr.mxu0 0.0
    %8014 = vmatpush1.msra.mxu0 0.0
    %8015 = vmatprep.subr.mxu0 0.0
    %8016 = vmatpush1.msra.mxu0 0.0
    %8017 = vmatprep.subr.mxu0 0.0
    %8018 = vmatpush1.msra.mxu0 0.0
    %8019 = vmatprep.subr.mxu0 0.0
    %8020 = vmatpush1.msra.mxu0 0.0
    %8021 = vmatprep.subr.mxu0 0.0
    %8022 = vmatpush1.msra.mxu0 0.0
    %8023 = vmatprep.subr.mxu0 0.0
    %8024 = vmatpush1.msra.mxu0 0.0
    %8025 = vmatprep.subr.mxu0 0.0
    %8026 = vmatpush1.msra.mxu0 0.0
    %8027 = vmatprep.subr.mxu0 0.0
    %8028 = vmatpush1.msra.mxu0 %v7999
    %8029 = vmatprep.subr.mxu0 0.0
    %8030 = vmatpush1.msra.mxu0 %v7998
    %8031 = vmatprep.subr.mxu0 0.0
    %8032 = vmatpush1.msra.mxu0 %v7997
    %8033 = vmatprep.subr.mxu0 0.0
    %8034 = vmatpush1.msra.mxu0 %v7996
    %8035 = vmatprep.subr.mxu0 0.0
    %8036 = vmatpush2.msra.mxu0 0.0
    %8037 = vmatprep.subr.mxu0 0.0
    %8038 = vmatpush2.msra.mxu0 0.0
    %8039 = vmatprep.subr.mxu0 0.0
    %8040 = vmatpush2.msra.mxu0 0.0
    %8041 = vmatprep.subr.mxu0 0.0
    %8042 = vmatpush2.msra.mxu0 0.0
    %8043 = vmatprep.subr.mxu0 0.0
    %8044 = vmatpush2.msra.mxu0 0.0
    %8045 = vmatprep.subr.mxu0 0.0
    %8046 = vmatpush2.msra.mxu0 0.0
    %8047 = vmatprep.subr.mxu0 0.0
    %8048 = vmatpush2.msra.mxu0 0.0
    %8049 = vmatprep.subr.mxu0 0.0
    %8050 = vmatpush2.msra.mxu0 0.0
    %8051 = vmatprep.subr.mxu0 0.0
    %8052 = vmatpush2.msra.mxu0 0.0
    %8053 = vmatprep.subr.mxu0 0.0
    %8054 = vmatpush2.msra.mxu0 0.0
    %8055 = vmatprep.subr.mxu0 0.0
    %8056 = vmatpush2.msra.mxu0 0.0
    %8057 = vmatprep.subr.mxu0 0.0
    %8058 = vmatpush2.msra.mxu0 0.0
    %8059 = vmatprep.subr.mxu0 0.0
    %8060 = vmatpush2.msra.mxu0 0.0
    %8061 = vmatprep.subr.mxu0 0.0
    %8062 = vmatpush2.msra.mxu0 0.0
    %8063 = vmatprep.subr.mxu0 0.0
    %8064 = vmatpush2.msra.mxu0 0.0
    %8065 = vmatprep.subr.mxu0 0.0
    %8066 = vmatpush2.msra.mxu0 0.0
    %8067 = vmatprep.mubr.f32.mxu0 0.0
    %8068 = vmatmul.mubr.f32.gmra.mxu0 %v8001
    %v8069 = vpop.f32.mrf.mxu0
    %v8070 = vadd.f32 0.0, %v8069
    %v8071 = vpop.f32.mrf.mxu0
    %8072 = vdwg.mxu0
    %v8073 = vadd.f32 %v7995, %v8070
    %v8074 = vld [vmem:[%s19 + $0x1c0] sm:$0xff]
    %v8075 = vld [vmem:[%s19 + $0x1c8] sm:$0xff]
    %v8076 = vld [vmem:[%s19 + $0x1d0] sm:$0xff]
    %v8077 = vld [vmem:[%s19 + $0x1d8] sm:$0xff]
    %v8078 = vrot.slane %v5735, 6
    %v8079 = vsel %vm201, %v8078, 0
    %8081 = vmatprep.subr.mxu0 0.0
    %8082 = vmatpush1.msra.mxu0 0.0
    %8083 = vmatprep.subr.mxu0 0.0
    %8084 = vmatpush1.msra.mxu0 0.0
    %8085 = vmatprep.subr.mxu0 0.0
    %8086 = vmatpush1.msra.mxu0 0.0
    %8087 = vmatprep.subr.mxu0 0.0
    %8088 = vmatpush1.msra.mxu0 0.0
    %8089 = vmatprep.subr.mxu0 0.0
    %8090 = vmatpush1.msra.mxu0 0.0
    %8091 = vmatprep.subr.mxu0 0.0
    %8092 = vmatpush1.msra.mxu0 0.0
    %8093 = vmatprep.subr.mxu0 0.0
    %8094 = vmatpush1.msra.mxu0 0.0
    %8095 = vmatprep.subr.mxu0 0.0
    %8096 = vmatpush1.msra.mxu0 0.0
    %8097 = vmatprep.subr.mxu0 0.0
    %8098 = vmatpush1.msra.mxu0 0.0
    %8099 = vmatprep.subr.mxu0 0.0
    %8100 = vmatpush1.msra.mxu0 0.0
    %8101 = vmatprep.subr.mxu0 0.0
    %8102 = vmatpush1.msra.mxu0 0.0
    %8103 = vmatprep.subr.mxu0 0.0
    %8104 = vmatpush1.msra.mxu0 0.0
    %8105 = vmatprep.subr.mxu0 0.0
    %8106 = vmatpush1.msra.mxu0 %v8077
    %8107 = vmatprep.subr.mxu0 0.0
    %8108 = vmatpush1.msra.mxu0 %v8076
    %8109 = vmatprep.subr.mxu0 0.0
    %8110 = vmatpush1.msra.mxu0 %v8075
    %8111 = vmatprep.subr.mxu0 0.0
    %8112 = vmatpush1.msra.mxu0 %v8074
    %8113 = vmatprep.subr.mxu0 0.0
    %8114 = vmatpush2.msra.mxu0 0.0
    %8115 = vmatprep.subr.mxu0 0.0
    %8116 = vmatpush2.msra.mxu0 0.0
    %8117 = vmatprep.subr.mxu0 0.0
    %8118 = vmatpush2.msra.mxu0 0.0
    %8119 = vmatprep.subr.mxu0 0.0
    %8120 = vmatpush2.msra.mxu0 0.0
    %8121 = vmatprep.subr.mxu0 0.0
    %8122 = vmatpush2.msra.mxu0 0.0
    %8123 = vmatprep.subr.mxu0 0.0
    %8124 = vmatpush2.msra.mxu0 0.0
    %8125 = vmatprep.subr.mxu0 0.0
    %8126 = vmatpush2.msra.mxu0 0.0
    %8127 = vmatprep.subr.mxu0 0.0
    %8128 = vmatpush2.msra.mxu0 0.0
    %8129 = vmatprep.subr.mxu0 0.0
    %8130 = vmatpush2.msra.mxu0 0.0
    %8131 = vmatprep.subr.mxu0 0.0
    %8132 = vmatpush2.msra.mxu0 0.0
    %8133 = vmatprep.subr.mxu0 0.0
    %8134 = vmatpush2.msra.mxu0 0.0
    %8135 = vmatprep.subr.mxu0 0.0
    %8136 = vmatpush2.msra.mxu0 0.0
    %8137 = vmatprep.subr.mxu0 0.0
    %8138 = vmatpush2.msra.mxu0 0.0
    %8139 = vmatprep.subr.mxu0 0.0
    %8140 = vmatpush2.msra.mxu0 0.0
    %8141 = vmatprep.subr.mxu0 0.0
    %8142 = vmatpush2.msra.mxu0 0.0
    %8143 = vmatprep.subr.mxu0 0.0
    %8144 = vmatpush2.msra.mxu0 0.0
    %8145 = vmatprep.mubr.f32.mxu0 0.0
    %8146 = vmatmul.mubr.f32.gmra.mxu0 %v8079
    %v8147 = vpop.f32.mrf.mxu0
    %v8148 = vadd.f32 0.0, %v8147
    %v8149 = vpop.f32.mrf.mxu0
    %8150 = vdwg.mxu0
    %v8151 = vadd.f32 %v8073, %v8148
    %v8152 = vld [vmem:[%s19 + $0x1e0] sm:$0xff]
    %v8153 = vld [vmem:[%s19 + $0x1e8] sm:$0xff]
    %v8154 = vld [vmem:[%s19 + $0x1f0] sm:$0xff]
    %v8155 = vld [vmem:[%s19 + $0x1f8] sm:$0xff]
    %v8156 = vrot.slane %v5735, 7
    %v8157 = vsel %vm201, %v8156, 0
    %8159 = vmatprep.subr.mxu0 0.0
    %8160 = vmatpush1.msra.mxu0 0.0
    %8161 = vmatprep.subr.mxu0 0.0
    %8162 = vmatpush1.msra.mxu0 0.0
    %8163 = vmatprep.subr.mxu0 0.0
    %8164 = vmatpush1.msra.mxu0 0.0
    %8165 = vmatprep.subr.mxu0 0.0
    %8166 = vmatpush1.msra.mxu0 0.0
    %8167 = vmatprep.subr.mxu0 0.0
    %8168 = vmatpush1.msra.mxu0 0.0
    %8169 = vmatprep.subr.mxu0 0.0
    %8170 = vmatpush1.msra.mxu0 0.0
    %8171 = vmatprep.subr.mxu0 0.0
    %8172 = vmatpush1.msra.mxu0 0.0
    %8173 = vmatprep.subr.mxu0 0.0
    %8174 = vmatpush1.msra.mxu0 0.0
    %8175 = vmatprep.subr.mxu0 0.0
    %8176 = vmatpush1.msra.mxu0 0.0
    %8177 = vmatprep.subr.mxu0 0.0
    %8178 = vmatpush1.msra.mxu0 0.0
    %8179 = vmatprep.subr.mxu0 0.0
    %8180 = vmatpush1.msra.mxu0 0.0
    %8181 = vmatprep.subr.mxu0 0.0
    %8182 = vmatpush1.msra.mxu0 0.0
    %8183 = vmatprep.subr.mxu0 0.0
    %8184 = vmatpush1.msra.mxu0 %v8155
    %8185 = vmatprep.subr.mxu0 0.0
    %8186 = vmatpush1.msra.mxu0 %v8154
    %8187 = vmatprep.subr.mxu0 0.0
    %8188 = vmatpush1.msra.mxu0 %v8153
    %8189 = vmatprep.subr.mxu0 0.0
    %8190 = vmatpush1.msra.mxu0 %v8152
    %8191 = vmatprep.subr.mxu0 0.0
    %8192 = vmatpush2.msra.mxu0 0.0
    %8193 = vmatprep.subr.mxu0 0.0
    %8194 = vmatpush2.msra.mxu0 0.0
    %8195 = vmatprep.subr.mxu0 0.0
    %8196 = vmatpush2.msra.mxu0 0.0
    %8197 = vmatprep.subr.mxu0 0.0
    %8198 = vmatpush2.msra.mxu0 0.0
    %8199 = vmatprep.subr.mxu0 0.0
    %8200 = vmatpush2.msra.mxu0 0.0
    %8201 = vmatprep.subr.mxu0 0.0
    %8202 = vmatpush2.msra.mxu0 0.0
    %8203 = vmatprep.subr.mxu0 0.0
    %8204 = vmatpush2.msra.mxu0 0.0
    %8205 = vmatprep.subr.mxu0 0.0
    %8206 = vmatpush2.msra.mxu0 0.0
    %8207 = vmatprep.subr.mxu0 0.0
    %8208 = vmatpush2.msra.mxu0 0.0
    %8209 = vmatprep.subr.mxu0 0.0
    %8210 = vmatpush2.msra.mxu0 0.0
    %8211 = vmatprep.subr.mxu0 0.0
    %8212 = vmatpush2.msra.mxu0 0.0
    %8213 = vmatprep.subr.mxu0 0.0
    %8214 = vmatpush2.msra.mxu0 0.0
    %8215 = vmatprep.subr.mxu0 0.0
    %8216 = vmatpush2.msra.mxu0 0.0
    %8217 = vmatprep.subr.mxu0 0.0
    %8218 = vmatpush2.msra.mxu0 0.0
    %8219 = vmatprep.subr.mxu0 0.0
    %8220 = vmatpush2.msra.mxu0 0.0
    %8221 = vmatprep.subr.mxu0 0.0
    %8222 = vmatpush2.msra.mxu0 0.0
    %8223 = vmatprep.mubr.f32.mxu0 0.0
    %8224 = vmatmul.mubr.f32.gmra.mxu0 %v8157
    %v8225 = vpop.f32.mrf.mxu0
    %v8226 = vadd.f32 0.0, %v8225
    %v8227 = vpop.f32.mrf.mxu0
    %8228 = vdwg.mxu0
    %v8229 = vadd.f32 %v8151, %v8226
    %v8230 = vld [vmem:[%s19 + $0x200] sm:$0xff]
    %v8231 = vld [vmem:[%s19 + $0x208] sm:$0xff]
    %v8232 = vld [vmem:[%s19 + $0x210] sm:$0xff]
    %v8233 = vld [vmem:[%s19 + $0x218] sm:$0xff]
    %v8235 = vsel %vm201, %v6980, 0
    %8237 = vmatprep.subr.mxu0 0.0
    %8238 = vmatpush1.msra.mxu0 0.0
    %8239 = vmatprep.subr.mxu0 0.0
    %8240 = vmatpush1.msra.mxu0 0.0
    %8241 = vmatprep.subr.mxu0 0.0
    %8242 = vmatpush1.msra.mxu0 0.0
    %8243 = vmatprep.subr.mxu0 0.0
    %8244 = vmatpush1.msra.mxu0 0.0
    %8245 = vmatprep.subr.mxu0 0.0
    %8246 = vmatpush1.msra.mxu0 0.0
    %8247 = vmatprep.subr.mxu0 0.0
    %8248 = vmatpush1.msra.mxu0 0.0
    %8249 = vmatprep.subr.mxu0 0.0
    %8250 = vmatpush1.msra.mxu0 0.0
    %8251 = vmatprep.subr.mxu0 0.0
    %8252 = vmatpush1.msra.mxu0 0.0
    %8253 = vmatprep.subr.mxu0 0.0
    %8254 = vmatpush1.msra.mxu0 0.0
    %8255 = vmatprep.subr.mxu0 0.0
    %8256 = vmatpush1.msra.mxu0 0.0
    %8257 = vmatprep.subr.mxu0 0.0
    %8258 = vmatpush1.msra.mxu0 0.0
    %8259 = vmatprep.subr.mxu0 0.0
    %8260 = vmatpush1.msra.mxu0 0.0
    %8261 = vmatprep.subr.mxu0 0.0
    %8262 = vmatpush1.msra.mxu0 %v8233
    %8263 = vmatprep.subr.mxu0 0.0
    %8264 = vmatpush1.msra.mxu0 %v8232
    %8265 = vmatprep.subr.mxu0 0.0
    %8266 = vmatpush1.msra.mxu0 %v8231
    %8267 = vmatprep.subr.mxu0 0.0
    %8268 = vmatpush1.msra.mxu0 %v8230
    %8269 = vmatprep.subr.mxu0 0.0
    %8270 = vmatpush2.msra.mxu0 0.0
    %8271 = vmatprep.subr.mxu0 0.0
    %8272 = vmatpush2.msra.mxu0 0.0
    %8273 = vmatprep.subr.mxu0 0.0
    %8274 = vmatpush2.msra.mxu0 0.0
    %8275 = vmatprep.subr.mxu0 0.0
    %8276 = vmatpush2.msra.mxu0 0.0
    %8277 = vmatprep.subr.mxu0 0.0
    %8278 = vmatpush2.msra.mxu0 0.0
    %8279 = vmatprep.subr.mxu0 0.0
    %8280 = vmatpush2.msra.mxu0 0.0
    %8281 = vmatprep.subr.mxu0 0.0
    %8282 = vmatpush2.msra.mxu0 0.0
    %8283 = vmatprep.subr.mxu0 0.0
    %8284 = vmatpush2.msra.mxu0 0.0
    %8285 = vmatprep.subr.mxu0 0.0
    %8286 = vmatpush2.msra.mxu0 0.0
    %8287 = vmatprep.subr.mxu0 0.0
    %8288 = vmatpush2.msra.mxu0 0.0
    %8289 = vmatprep.subr.mxu0 0.0
    %8290 = vmatpush2.msra.mxu0 0.0
    %8291 = vmatprep.subr.mxu0 0.0
    %8292 = vmatpush2.msra.mxu0 0.0
    %8293 = vmatprep.subr.mxu0 0.0
    %8294 = vmatpush2.msra.mxu0 0.0
    %8295 = vmatprep.subr.mxu0 0.0
    %8296 = vmatpush2.msra.mxu0 0.0
    %8297 = vmatprep.subr.mxu0 0.0
    %8298 = vmatpush2.msra.mxu0 0.0
    %8299 = vmatprep.subr.mxu0 0.0
    %8300 = vmatpush2.msra.mxu0 0.0
    %8301 = vmatprep.mubr.f32.mxu0 0.0
    %8302 = vmatmul.mubr.f32.gmra.mxu0 %v8235
    %v8303 = vpop.f32.mrf.mxu0
    %v8304 = vadd.f32 0.0, %v8303
    %v8305 = vpop.f32.mrf.mxu0
    %8306 = vdwg.mxu0
    %v8307 = vadd.f32 %v8229, %v8304
    %v8308 = vld [vmem:[%s19 + $0x220] sm:$0xff]
    %v8309 = vld [vmem:[%s19 + $0x228] sm:$0xff]
    %v8310 = vld [vmem:[%s19 + $0x230] sm:$0xff]
    %v8311 = vld [vmem:[%s19 + $0x238] sm:$0xff]
    %v8312 = vrot.slane %v6980, 1
    %v8313 = vsel %vm201, %v8312, 0
    %8315 = vmatprep.subr.mxu0 0.0
    %8316 = vmatpush1.msra.mxu0 0.0
    %8317 = vmatprep.subr.mxu0 0.0
    %8318 = vmatpush1.msra.mxu0 0.0
    %8319 = vmatprep.subr.mxu0 0.0
    %8320 = vmatpush1.msra.mxu0 0.0
    %8321 = vmatprep.subr.mxu0 0.0
    %8322 = vmatpush1.msra.mxu0 0.0
    %8323 = vmatprep.subr.mxu0 0.0
    %8324 = vmatpush1.msra.mxu0 0.0
    %8325 = vmatprep.subr.mxu0 0.0
    %8326 = vmatpush1.msra.mxu0 0.0
    %8327 = vmatprep.subr.mxu0 0.0
    %8328 = vmatpush1.msra.mxu0 0.0
    %8329 = vmatprep.subr.mxu0 0.0
    %8330 = vmatpush1.msra.mxu0 0.0
    %8331 = vmatprep.subr.mxu0 0.0
    %8332 = vmatpush1.msra.mxu0 0.0
    %8333 = vmatprep.subr.mxu0 0.0
    %8334 = vmatpush1.msra.mxu0 0.0
    %8335 = vmatprep.subr.mxu0 0.0
    %8336 = vmatpush1.msra.mxu0 0.0
    %8337 = vmatprep.subr.mxu0 0.0
    %8338 = vmatpush1.msra.mxu0 0.0
    %8339 = vmatprep.subr.mxu0 0.0
    %8340 = vmatpush1.msra.mxu0 %v8311
    %8341 = vmatprep.subr.mxu0 0.0
    %8342 = vmatpush1.msra.mxu0 %v8310
    %8343 = vmatprep.subr.mxu0 0.0
    %8344 = vmatpush1.msra.mxu0 %v8309
    %8345 = vmatprep.subr.mxu0 0.0
    %8346 = vmatpush1.msra.mxu0 %v8308
    %8347 = vmatprep.subr.mxu0 0.0
    %8348 = vmatpush2.msra.mxu0 0.0
    %8349 = vmatprep.subr.mxu0 0.0
    %8350 = vmatpush2.msra.mxu0 0.0
    %8351 = vmatprep.subr.mxu0 0.0
    %8352 = vmatpush2.msra.mxu0 0.0
    %8353 = vmatprep.subr.mxu0 0.0
    %8354 = vmatpush2.msra.mxu0 0.0
    %8355 = vmatprep.subr.mxu0 0.0
    %8356 = vmatpush2.msra.mxu0 0.0
    %8357 = vmatprep.subr.mxu0 0.0
    %8358 = vmatpush2.msra.mxu0 0.0
    %8359 = vmatprep.subr.mxu0 0.0
    %8360 = vmatpush2.msra.mxu0 0.0
    %8361 = vmatprep.subr.mxu0 0.0
    %8362 = vmatpush2.msra.mxu0 0.0
    %8363 = vmatprep.subr.mxu0 0.0
    %8364 = vmatpush2.msra.mxu0 0.0
    %8365 = vmatprep.subr.mxu0 0.0
    %8366 = vmatpush2.msra.mxu0 0.0
    %8367 = vmatprep.subr.mxu0 0.0
    %8368 = vmatpush2.msra.mxu0 0.0
    %8369 = vmatprep.subr.mxu0 0.0
    %8370 = vmatpush2.msra.mxu0 0.0
    %8371 = vmatprep.subr.mxu0 0.0
    %8372 = vmatpush2.msra.mxu0 0.0
    %8373 = vmatprep.subr.mxu0 0.0
    %8374 = vmatpush2.msra.mxu0 0.0
    %8375 = vmatprep.subr.mxu0 0.0
    %8376 = vmatpush2.msra.mxu0 0.0
    %8377 = vmatprep.subr.mxu0 0.0
    %8378 = vmatpush2.msra.mxu0 0.0
    %8379 = vmatprep.mubr.f32.mxu0 0.0
    %8380 = vmatmul.mubr.f32.gmra.mxu0 %v8313
    %v8381 = vpop.f32.mrf.mxu0
    %v8382 = vadd.f32 0.0, %v8381
    %v8383 = vpop.f32.mrf.mxu0
    %8384 = vdwg.mxu0
    %v8385 = vadd.f32 %v8307, %v8382
    %v8386 = vld [vmem:[%s19 + $0x240] sm:$0xff]
    %v8387 = vld [vmem:[%s19 + $0x248] sm:$0xff]
    %v8388 = vld [vmem:[%s19 + $0x250] sm:$0xff]
    %v8389 = vld [vmem:[%s19 + $0x258] sm:$0xff]
    %v8390 = vrot.slane %v6980, 2
    %v8391 = vsel %vm201, %v8390, 0
    %8393 = vmatprep.subr.mxu0 0.0
    %8394 = vmatpush1.msra.mxu0 0.0
    %8395 = vmatprep.subr.mxu0 0.0
    %8396 = vmatpush1.msra.mxu0 0.0
    %8397 = vmatprep.subr.mxu0 0.0
    %8398 = vmatpush1.msra.mxu0 0.0
    %8399 = vmatprep.subr.mxu0 0.0
    %8400 = vmatpush1.msra.mxu0 0.0
    %8401 = vmatprep.subr.mxu0 0.0
    %8402 = vmatpush1.msra.mxu0 0.0
    %8403 = vmatprep.subr.mxu0 0.0
    %8404 = vmatpush1.msra.mxu0 0.0
    %8405 = vmatprep.subr.mxu0 0.0
    %8406 = vmatpush1.msra.mxu0 0.0
    %8407 = vmatprep.subr.mxu0 0.0
    %8408 = vmatpush1.msra.mxu0 0.0
    %8409 = vmatprep.subr.mxu0 0.0
    %8410 = vmatpush1.msra.mxu0 0.0
    %8411 = vmatprep.subr.mxu0 0.0
    %8412 = vmatpush1.msra.mxu0 0.0
    %8413 = vmatprep.subr.mxu0 0.0
    %8414 = vmatpush1.msra.mxu0 0.0
    %8415 = vmatprep.subr.mxu0 0.0
    %8416 = vmatpush1.msra.mxu0 0.0
    %8417 = vmatprep.subr.mxu0 0.0
    %8418 = vmatpush1.msra.mxu0 %v8389
    %8419 = vmatprep.subr.mxu0 0.0
    %8420 = vmatpush1.msra.mxu0 %v8388
    %8421 = vmatprep.subr.mxu0 0.0
    %8422 = vmatpush1.msra.mxu0 %v8387
    %8423 = vmatprep.subr.mxu0 0.0
    %8424 = vmatpush1.msra.mxu0 %v8386
    %8425 = vmatprep.subr.mxu0 0.0
    %8426 = vmatpush2.msra.mxu0 0.0
    %8427 = vmatprep.subr.mxu0 0.0
    %8428 = vmatpush2.msra.mxu0 0.0
    %8429 = vmatprep.subr.mxu0 0.0
    %8430 = vmatpush2.msra.mxu0 0.0
    %8431 = vmatprep.subr.mxu0 0.0
    %8432 = vmatpush2.msra.mxu0 0.0
    %8433 = vmatprep.subr.mxu0 0.0
    %8434 = vmatpush2.msra.mxu0 0.0
    %8435 = vmatprep.subr.mxu0 0.0
    %8436 = vmatpush2.msra.mxu0 0.0
    %8437 = vmatprep.subr.mxu0 0.0
    %8438 = vmatpush2.msra.mxu0 0.0
    %8439 = vmatprep.subr.mxu0 0.0
    %8440 = vmatpush2.msra.mxu0 0.0
    %8441 = vmatprep.subr.mxu0 0.0
    %8442 = vmatpush2.msra.mxu0 0.0
    %8443 = vmatprep.subr.mxu0 0.0
    %8444 = vmatpush2.msra.mxu0 0.0
    %8445 = vmatprep.subr.mxu0 0.0
    %8446 = vmatpush2.msra.mxu0 0.0
    %8447 = vmatprep.subr.mxu0 0.0
    %8448 = vmatpush2.msra.mxu0 0.0
    %8449 = vmatprep.subr.mxu0 0.0
    %8450 = vmatpush2.msra.mxu0 0.0
    %8451 = vmatprep.subr.mxu0 0.0
    %8452 = vmatpush2.msra.mxu0 0.0
    %8453 = vmatprep.subr.mxu0 0.0
    %8454 = vmatpush2.msra.mxu0 0.0
    %8455 = vmatprep.subr.mxu0 0.0
    %8456 = vmatpush2.msra.mxu0 0.0
    %8457 = vmatprep.mubr.f32.mxu0 0.0
    %8458 = vmatmul.mubr.f32.gmra.mxu0 %v8391
    %v8459 = vpop.f32.mrf.mxu0
    %v8460 = vadd.f32 0.0, %v8459
    %v8461 = vpop.f32.mrf.mxu0
    %8462 = vdwg.mxu0
    %v8463 = vadd.f32 %v8385, %v8460
    %v8464 = vld [vmem:[%s19 + $0x260] sm:$0xff]
    %v8465 = vld [vmem:[%s19 + $0x268] sm:$0xff]
    %v8466 = vld [vmem:[%s19 + $0x270] sm:$0xff]
    %v8467 = vld [vmem:[%s19 + $0x278] sm:$0xff]
    %v8468 = vrot.slane %v6980, 3
    %v8469 = vsel %vm201, %v8468, 0
    %8471 = vmatprep.subr.mxu0 0.0
    %8472 = vmatpush1.msra.mxu0 0.0
    %8473 = vmatprep.subr.mxu0 0.0
    %8474 = vmatpush1.msra.mxu0 0.0
    %8475 = vmatprep.subr.mxu0 0.0
    %8476 = vmatpush1.msra.mxu0 0.0
    %8477 = vmatprep.subr.mxu0 0.0
    %8478 = vmatpush1.msra.mxu0 0.0
    %8479 = vmatprep.subr.mxu0 0.0
    %8480 = vmatpush1.msra.mxu0 0.0
    %8481 = vmatprep.subr.mxu0 0.0
    %8482 = vmatpush1.msra.mxu0 0.0
    %8483 = vmatprep.subr.mxu0 0.0
    %8484 = vmatpush1.msra.mxu0 0.0
    %8485 = vmatprep.subr.mxu0 0.0
    %8486 = vmatpush1.msra.mxu0 0.0
    %8487 = vmatprep.subr.mxu0 0.0
    %8488 = vmatpush1.msra.mxu0 0.0
    %8489 = vmatprep.subr.mxu0 0.0
    %8490 = vmatpush1.msra.mxu0 0.0
    %8491 = vmatprep.subr.mxu0 0.0
    %8492 = vmatpush1.msra.mxu0 0.0
    %8493 = vmatprep.subr.mxu0 0.0
    %8494 = vmatpush1.msra.mxu0 0.0
    %8495 = vmatprep.subr.mxu0 0.0
    %8496 = vmatpush1.msra.mxu0 %v8467
    %8497 = vmatprep.subr.mxu0 0.0
    %8498 = vmatpush1.msra.mxu0 %v8466
    %8499 = vmatprep.subr.mxu0 0.0
    %8500 = vmatpush1.msra.mxu0 %v8465
    %8501 = vmatprep.subr.mxu0 0.0
    %8502 = vmatpush1.msra.mxu0 %v8464
    %8503 = vmatprep.subr.mxu0 0.0
    %8504 = vmatpush2.msra.mxu0 0.0
    %8505 = vmatprep.subr.mxu0 0.0
    %8506 = vmatpush2.msra.mxu0 0.0
    %8507 = vmatprep.subr.mxu0 0.0
    %8508 = vmatpush2.msra.mxu0 0.0
    %8509 = vmatprep.subr.mxu0 0.0
    %8510 = vmatpush2.msra.mxu0 0.0
    %8511 = vmatprep.subr.mxu0 0.0
    %8512 = vmatpush2.msra.mxu0 0.0
    %8513 = vmatprep.subr.mxu0 0.0
    %8514 = vmatpush2.msra.mxu0 0.0
    %8515 = vmatprep.subr.mxu0 0.0
    %8516 = vmatpush2.msra.mxu0 0.0
    %8517 = vmatprep.subr.mxu0 0.0
    %8518 = vmatpush2.msra.mxu0 0.0
    %8519 = vmatprep.subr.mxu0 0.0
    %8520 = vmatpush2.msra.mxu0 0.0
    %8521 = vmatprep.subr.mxu0 0.0
    %8522 = vmatpush2.msra.mxu0 0.0
    %8523 = vmatprep.subr.mxu0 0.0
    %8524 = vmatpush2.msra.mxu0 0.0
    %8525 = vmatprep.subr.mxu0 0.0
    %8526 = vmatpush2.msra.mxu0 0.0
    %8527 = vmatprep.subr.mxu0 0.0
    %8528 = vmatpush2.msra.mxu0 0.0
    %8529 = vmatprep.subr.mxu0 0.0
    %8530 = vmatpush2.msra.mxu0 0.0
    %8531 = vmatprep.subr.mxu0 0.0
    %8532 = vmatpush2.msra.mxu0 0.0
    %8533 = vmatprep.subr.mxu0 0.0
    %8534 = vmatpush2.msra.mxu0 0.0
    %8535 = vmatprep.mubr.f32.mxu0 0.0
    %8536 = vmatmul.mubr.f32.gmra.mxu0 %v8469
    %v8537 = vpop.f32.mrf.mxu0
    %v8538 = vadd.f32 0.0, %v8537
    %v8539 = vpop.f32.mrf.mxu0
    %8540 = vdwg.mxu0
    %v8541 = vadd.f32 %v8463, %v8538
    %v8542 = vmax.f32 %v8541, 0.0
    %v8543 = vld [vmem:[%s21] sm:$0xff]
    %v8544 = vld [vmem:[%s21 + $0x8] sm:$0xff]
    %v8545 = vld [vmem:[%s21 + $0x10] sm:$0xff]
    %v8546 = vld [vmem:[%s21 + $0x18] sm:$0xff]
    %v8547 = vld [vmem:[%s22] sm:$0x1]
    %v8549 = vsel %vm201, %v8542, 0
    %8551 = vmatprep.subr.mxu0 0.0
    %8552 = vmatpush1.msra.mxu0 0.0
    %8553 = vmatprep.subr.mxu0 0.0
    %8554 = vmatpush1.msra.mxu0 0.0
    %8555 = vmatprep.subr.mxu0 0.0
    %8556 = vmatpush1.msra.mxu0 0.0
    %8557 = vmatprep.subr.mxu0 0.0
    %8558 = vmatpush1.msra.mxu0 0.0
    %8559 = vmatprep.subr.mxu0 0.0
    %8560 = vmatpush1.msra.mxu0 0.0
    %8561 = vmatprep.subr.mxu0 0.0
    %8562 = vmatpush1.msra.mxu0 0.0
    %8563 = vmatprep.subr.mxu0 0.0
    %8564 = vmatpush1.msra.mxu0 0.0
    %8565 = vmatprep.subr.mxu0 0.0
    %8566 = vmatpush1.msra.mxu0 0.0
    %8567 = vmatprep.subr.mxu0 0.0
    %8568 = vmatpush1.msra.mxu0 0.0
    %8569 = vmatprep.subr.mxu0 0.0
    %8570 = vmatpush1.msra.mxu0 0.0
    %8571 = vmatprep.subr.mxu0 0.0
    %8572 = vmatpush1.msra.mxu0 0.0
    %8573 = vmatprep.subr.mxu0 0.0
    %8574 = vmatpush1.msra.mxu0 0.0
    %8575 = vmatprep.subr.mxu0 0.0
    %8576 = vmatpush1.msra.mxu0 %v8546
    %8577 = vmatprep.subr.mxu0 0.0
    %8578 = vmatpush1.msra.mxu0 %v8545
    %8579 = vmatprep.subr.mxu0 0.0
    %8580 = vmatpush1.msra.mxu0 %v8544
    %8581 = vmatprep.subr.mxu0 0.0
    %8582 = vmatpush1.msra.mxu0 %v8543
    %8583 = vmatprep.subr.mxu0 0.0
    %8584 = vmatpush2.msra.mxu0 0.0
    %8585 = vmatprep.subr.mxu0 0.0
    %8586 = vmatpush2.msra.mxu0 0.0
    %8587 = vmatprep.subr.mxu0 0.0
    %8588 = vmatpush2.msra.mxu0 0.0
    %8589 = vmatprep.subr.mxu0 0.0
    %8590 = vmatpush2.msra.mxu0 0.0
    %8591 = vmatprep.subr.mxu0 0.0
    %8592 = vmatpush2.msra.mxu0 0.0
    %8593 = vmatprep.subr.mxu0 0.0
    %8594 = vmatpush2.msra.mxu0 0.0
    %8595 = vmatprep.subr.mxu0 0.0
    %8596 = vmatpush2.msra.mxu0 0.0
    %8597 = vmatprep.subr.mxu0 0.0
    %8598 = vmatpush2.msra.mxu0 0.0
    %8599 = vmatprep.subr.mxu0 0.0
    %8600 = vmatpush2.msra.mxu0 0.0
    %8601 = vmatprep.subr.mxu0 0.0
    %8602 = vmatpush2.msra.mxu0 0.0
    %8603 = vmatprep.subr.mxu0 0.0
    %8604 = vmatpush2.msra.mxu0 0.0
    %8605 = vmatprep.subr.mxu0 0.0
    %8606 = vmatpush2.msra.mxu0 0.0
    %8607 = vmatprep.subr.mxu0 0.0
    %8608 = vmatpush2.msra.mxu0 0.0
    %8609 = vmatprep.subr.mxu0 0.0
    %8610 = vmatpush2.msra.mxu0 0.0
    %8611 = vmatprep.subr.mxu0 0.0
    %8612 = vmatpush2.msra.mxu0 0.0
    %8613 = vmatprep.subr.mxu0 0.0
    %8614 = vmatpush2.msra.mxu0 0.0
    %8615 = vmatprep.mubr.f32.mxu0 0.0
    %8616 = vmatmul.mubr.f32.gmra.mxu0 %v8549
    %v8617 = vpop.f32.mrf.mxu0
    %v8618 = vadd.f32 %v8547, %v8617
    %v8619 = vpop.f32.mrf.mxu0
    %8620 = vdwg.mxu0
    %s8621 = scalar_lea.vmem [#allocation2], 1
    %8622 = vst.msk [vmem:[%s8621] sm:$0x1] %vm4467, %v8618
    // Predicated region
    $region94: #{hhgraphformer_forward.1} parent=1 // pred_check
      _
    $region95: #{hhgraphformer_forward.1} parent=1 // pred_check_branch
      %8624 = sbr.rel (0) target = $region97
    $region96: #{hhgraphformer_forward.1} parent=1 // pred_region
      %s8626 = ssub.s32 32, 32
      %8627 = vsyncadd [#allocation3], %s8626
      %s8628 = sshll.u32 [#allocation2], 4
      %s8629 = int_to_ptr.vmem [resolvable:$true] %s8628
      %8634 = dma.vmem_to_hbm [thread:$0]  %s8629, 32, %s23, [#allocation3], 16, 16, 1
    $region97: #{hhgraphformer_forward.1} parent=1 // pred_fallthru
      _
    // Predicated region
    $region98: #{hhgraphformer_forward.1} parent=1 // pred_check
      _
    $region99: #{hhgraphformer_forward.1} parent=1 // pred_check_branch
      %8636 = sbr.rel (0) target = $region101
    $region100: #{hhgraphformer_forward.1} parent=1 // pred_region
      %8637 = dma.done [#allocation3], 32
    $region101: #{hhgraphformer_forward.1} parent=1 // pred_fallthru
      _
    %8638 = vsyncpa [#allocation3], 1

</llo_original>
